<compile_context>
chip_gen: v5e
topology: v5e:2x2
jax: 0.10.0
libtpu: 0.0.40
codegen_flags: <defaults>
</compile_context>

<pallas_src>
import functools

import jax
import jax.numpy as jnp
import numpy as np
from jax.experimental import pallas as pl
from jax.experimental.pallas import tpu as pltpu


# ----------------------------- kernel helpers ------------------------------

def _rmsnorm(v, gain, eps=1e-6):
    ms = jnp.mean(v * v, axis=-1, keepdims=True)
    return v * jax.lax.rsqrt(ms + eps) * gain


def _softmax(s):
    # s already carries the additive key-padding bias.
    m = jnp.max(s, axis=-1, keepdims=True)
    e = jnp.exp(s - m)
    inv = pl.reciprocal(jnp.sum(e, axis=-1, keepdims=True), approx=True)
    return e * inv


# ------------------------------- the kernel --------------------------------

def encoder_kernel(lam_ref,                       # (H,1,1)   per-head lambda
                   x_ref, mask_ref,               # (Bb,T,D), (Bb,1,T)
                   g1_ref, g2_ref,                # (1,D), (1,D)
                   wqkv_ref,                      # (D, 5*HH) bf16 fused q1|q2|k1|k2|v
                   wo_ref,                        # (HH, D)   bf16
                   wgu_ref,                       # (D, 2*D)  bf16 fused gate|up
                   wdown_ref,                     # (D, D)    bf16
                   out_ref,                       # (Bb,T,D)
                   *, num_heads, head_size, lambda_init, batched_heads):
    bblk, T, D = x_ref.shape
    H, HS = num_heads, head_size
    HH = H * HS

    x2 = x_ref[...].reshape(bblk * T, D)                          # f32
    # Key-padding mask hoisted once into an additive bias.
    bias = jnp.where(mask_ref[...] > 0.5, 0.0, jnp.float32(-1e30))  # (Bb,1,T)

    # ---- sublayer 1: RMSNorm -> fused QKV projection -> differential attention
    h1 = _rmsnorm(x2, g1_ref[...])                                # (Bb*T, D) f32
    qkv = jnp.dot(h1.astype(jnp.bfloat16), wqkv_ref[...],
                  preferred_element_type=jnp.float32)             # (Bb*T, 5*HH)
    qkv = qkv.astype(jnp.bfloat16)                                # single cast pass
    lam = lam_ref[...]                                            # (H,1,1) f32

    if batched_heads:
        # All heads in one batched matmul pair (heads folded into the batch dim).
        Z = bblk * H

        def heads_of(c0):
            t = qkv[:, c0:c0 + HH].reshape(bblk, T, H, HS)
            return pltpu.einshape("bthd->bhtd", t).reshape(Z, T, HS)

        q1, q2 = heads_of(0 * HH), heads_of(1 * HH)
        k1, k2 = heads_of(2 * HH), heads_of(3 * HH)
        v = heads_of(4 * HH)

        bias_z = jnp.broadcast_to(bias[:, None], (bblk, H, 1, T)).reshape(Z, 1, T)
        lam_z = jnp.broadcast_to(lam[None], (bblk, H, 1, 1)).reshape(Z, 1, 1)

        # 1/sqrt(HS) already folded into the q columns of wqkv (prepare_params).
        s1 = jnp.einsum("zqd,zkd->zqk", q1, k1,
                        preferred_element_type=jnp.float32) + bias_z
        s2 = jnp.einsum("zqd,zkd->zqk", q2, k2,
                        preferred_element_type=jnp.float32) + bias_z
        a = _softmax(s1) - lam_z * _softmax(s2)                   # differential attn
        oh = jnp.einsum("zqk,zkd->zqd", a.astype(jnp.bfloat16), v,
                        preferred_element_type=jnp.float32)       # (Z,T,HS)
        oh = _rmsnorm(oh, 1.0) * (1.0 - lambda_init)              # head-wise norm
        oh = pltpu.einshape("bhtd->bthd", oh.reshape(bblk, H, T, HS))
        attn = oh.reshape(bblk * T, HH)
    else:
        # Fallback path: statically unrolled per-head loop (known-good lowering).
        heads = []
        for h in range(H):
            def sl(base, _h=h):
                c = base + _h * HS
                return qkv[:, c:c + HS].reshape(bblk, T, HS)
            q1h, q2h = sl(0 * HH), sl(1 * HH)
            k1h, k2h = sl(2 * HH), sl(3 * HH)
            vh = sl(4 * HH)
            s1 = jnp.einsum("bqd,bkd->bqk", q1h, k1h,
                            preferred_element_type=jnp.float32) + bias
            s2 = jnp.einsum("bqd,bkd->bqk", q2h, k2h,
                            preferred_element_type=jnp.float32) + bias
            a = _softmax(s1) - lam[h] * _softmax(s2)
            oh = jnp.einsum("bqk,bkd->bqd", a.astype(jnp.bfloat16), vh,
                            preferred_element_type=jnp.float32)
            heads.append(_rmsnorm(oh, 1.0) * (1.0 - lambda_init))
        attn = jnp.concatenate(heads, axis=-1).reshape(bblk * T, HH)

    attn = jnp.dot(attn.astype(jnp.bfloat16), wo_ref[...],
                   preferred_element_type=jnp.float32)            # (Bb*T, D)
    r1 = attn + h1           # residual is RMSNorm1(x), per the PyTorch Encoder

    # ---- sublayer 2: RMSNorm -> SwiGLU (fused gate|up matmul) ----
    h2 = _rmsnorm(r1, g2_ref[...])
    gu = jnp.dot(h2.astype(jnp.bfloat16), wgu_ref[...],
                 preferred_element_type=jnp.float32)              # (Bb*T, 2*D)
    gate, up = gu[:, :D], gu[:, D:]
    ff = (gate * jax.nn.sigmoid(gate)) * up                       # SiLU(gate)*up
    ff = jnp.dot(ff.astype(jnp.bfloat16), wdown_ref[...],
                 preferred_element_type=jnp.float32)

    out_ref[...] = (ff + r1).reshape(bblk, T, D).astype(out_ref.dtype)


# ------------------------- one-time weight preparation ----------------------

def prepare_params(params, *, num_heads, head_size):
    """Fuse / cast weights once (hoisted out of the forward call)."""
    H = num_heads
    scale = jnp.float32(1.0 / float(np.sqrt(head_size)))
    wqkv = jnp.concatenate(
        [params["wq1"] * scale, params["wq2"] * scale,        # fold softmax scale
         params["wk1"], params["wk2"], params["wv"]],
        axis=1).astype(jnp.bfloat16)                           # (D, 5*HH)
    wgu = jnp.concatenate([params["wgate"], params["wup"]],
                          axis=1).astype(jnp.bfloat16)         # (D, 2*D)
    return dict(
        lam3=params["lam"].reshape(H, 1, 1).astype(jnp.float32),
        g1=params["g1"].astype(jnp.float32),
        g2=params["g2"].astype(jnp.float32),
        wqkv=wqkv,
        wo=params["wo"].astype(jnp.bfloat16),
        wgu=wgu,
        wdown=params["wdown"].astype(jnp.bfloat16),
    )


# ------------------------------ JAX wrapper --------------------------------

def _vmem_budget_bytes():
    """Generation-aware VMEM budget with headroom for compiler scratch."""
    try:
        cap = int(pltpu.get_tpu_info().vmem_capacity_bytes)
    except Exception:
        cap = 64 * 1024 * 1024
    return max(int(cap * 0.85), 16 * 1024 * 1024)


def _pick_block_b(B, T, D, H, HS, weight_bytes, budget, out_itemsize):
    HH = H * HS

    def step_bytes(bb):
        rows = bb * T
        act = rows * (5 * HH * 6 + 8 * D * 4 + HH * 6)     # qkv f32+bf16, h1/r1/h2/gu/ff, attn
        scores = 5 * bb * H * T * T * 4                    # s1,s2,e1,e2,diff worst-case live
        io = 2 * (rows * D * 4 + rows * D * out_itemsize + bb * T * 4)
        return act + scores + io + 2 * weight_bytes

    divisors = [d for d in range(1, B + 1) if B % d == 0]
    fitting = [d for d in divisors if step_bytes(d) <= budget] or [divisors[0]]
    best = fitting[-1]
    # Keep >= 2 grid steps when possible so the "parallel" axis can feed both
    # v7x TensorCores; on single-TC v5e/v6e this costs one extra (cheap) step.
    if best == B and B > 1 and len(fitting) >= 2:
        best = fitting[-2]
    return best


def encoder_forward(x, pad_mask, prepared, *, num_heads, head_size, lambda_init,
                    block_b=None, out_dtype=None):
    B, T, D = x.shape
    H, HS = num_heads, head_size
    HH = H * HS
    out_dtype = out_dtype or x.dtype            # pass jnp.bfloat16 to halve out DMA
    out_itemsize = jnp.dtype(out_dtype).itemsize

    lam3, g1, g2 = prepared["lam3"], prepared["g1"], prepared["g2"]
    wqkv, wo, wgu, wdown = (prepared["wqkv"], prepared["wo"],
                            prepared["wgu"], prepared["wdown"])

    weight_bytes = sum(int(w.size) * w.dtype.itemsize
                       for w in (lam3, g1, g2, wqkv, wo, wgu, wdown))
    budget = _vmem_budget_bytes()
    if block_b is None:
        block_b = _pick_block_b(B, T, D, H, HS, weight_bytes, budget, out_itemsize)
    assert B % block_b == 0, "block_b must divide batch"
    grid_b = B // block_b

    # Advisory cost estimate for the XLA scheduler.
    flops = int(2 * B * T * D * 5 * HH           # fused qkv projection
                + 6 * B * H * T * T * HS         # two score matmuls + a@v
                + 2 * B * T * HH * D             # output projection
                + 2 * B * T * D * 2 * D          # gate|up
                + 2 * B * T * D * D)             # down
    transcendentals = int(2 * B * H * T * T + B * T * D)
    bytes_accessed = int(x.size * 4 + B * T * D * out_itemsize
                         + pad_mask.size * 4 + weight_bytes)
    cost = pl.CostEstimate(flops=flops, transcendentals=transcendentals,
                           bytes_accessed=bytes_accessed)

    def build(batched_heads, single_buffer_weights):
        kernel = functools.partial(
            encoder_kernel, num_heads=H, head_size=HS,
            lambda_init=lambda_init, batched_heads=batched_heads)

        wkw = ({"pipeline_mode": pl.Buffered(1)} if single_buffer_weights else {})

        def const_spec(shape):
            return pl.BlockSpec(shape, lambda b: (0,) * len(shape), **wkw)

        in_specs = [
            const_spec((H, 1, 1)),                               # lambda
            pl.BlockSpec((block_b, T, D), lambda b: (b, 0, 0)),  # x
            pl.BlockSpec((block_b, 1, T), lambda b: (b, 0, 0)),  # pad_mask
            const_spec((1, D)), const_spec((1, D)),              # g1, g2
            const_spec((D, 5 * HH)),                             # fused wqkv
            const_spec((HH, D)),                                 # wo
            const_spec((D, 2 * D)),                              # fused wgate|wup
            const_spec((D, D)),                                  # wdown
        ]
        return pl.pallas_call(
            kernel,
            out_shape=jax.ShapeDtypeStruct((B, T, D), out_dtype),
            grid=(grid_b,),
            in_specs=in_specs,
            out_specs=pl.BlockSpec((block_b, T, D), lambda b: (b, 0, 0)),
            compiler_params=pltpu.CompilerParams(
                dimension_semantics=("parallel",),
                vmem_limit_bytes=budget),
            cost_estimate=cost,
        )

    args = (lam3, x, pad_mask, g1, g2, wqkv, wo, wgu, wdown)
    # Attempt the most aggressive configuration first; fall back only on a
    # lowering/compile failure (keeps the script runnable across jax versions).
    configs = ((True, True), (True, False), (False, True), (False, False))
    last_err = None
    for batched_heads, single_buffer in configs:
        try:
            out = build(batched_heads, single_buffer)(*args)
            return jax.block_until_ready(out)
        except Exception as e:       # noqa: BLE001 - fallback on lowering errors
            last_err = e
    raise last_err


# --------------------------- pure-JAX reference ----------------------------

def encoder_reference(x, pad_mask, params, *, num_heads, head_size, lambda_init):
    def rms(v, g):
        return v * jax.lax.rsqrt(jnp.mean(v * v, -1, keepdims=True) + 1e-6) * g

    h1 = rms(x, params["g1"])
    q1, q2 = h1 @ params["wq1"], h1 @ params["wq2"]
    k1, k2 = h1 @ params["wk1"], h1 @ params["wk2"]
    v = h1 @ params["wv"]
    scale = 1.0 / np.sqrt(head_size)
    mask = pad_mask  # (B,1,T), 1.0 = valid
    heads = []
    for h in range(num_heads):
        sl = slice(h * head_size, (h + 1) * head_size)
        s1 = jnp.einsum("bqd,bkd->bqk", q1[..., sl], k1[..., sl]) * scale
        s2 = jnp.einsum("bqd,bkd->bqk", q2[..., sl], k2[..., sl]) * scale
        s1 = jnp.where(mask > 0.5, s1, -1e30)
        s2 = jnp.where(mask > 0.5, s2, -1e30)
        a = jax.nn.softmax(s1, -1) - params["lam"][h] * jax.nn.softmax(s2, -1)
        oh = jnp.einsum("bqk,bkd->bqd", a, v[..., sl])
        oh = rms(oh, 1.0) * (1.0 - lambda_init)
        heads.append(oh)
    attn = jnp.concatenate(heads, -1) @ params["wo"]
    r1 = attn + h1                              # residual = RMSNorm1(x)
    h2 = rms(r1, params["g2"])
    gate, up = h2 @ params["wgate"], h2 @ params["wup"]
    return (gate * jax.nn.sigmoid(gate) * up) @ params["wdown"] + r1


# ----------------------------------- main -----------------------------------

if __name__ == "__main__":
    # Small shapes consistent with the module constructor.
    B, T, D = 4, 8, 32           # batch, context_length, embedding_dimension
    H, HS = 2, 8                 # num_heads, head_size
    lambda_init = 0.8
    HH = H * HS

    key = jax.random.PRNGKey(0)
    keys = jax.random.split(key, 16)

    def w(k, shape, scale=0.05):
        return jax.random.normal(k, shape, jnp.float32) * scale

    # per-head lambda = exp(lq1.lk1) - exp(lq2.lk2) + lambda_init
    lq1 = w(keys[0], (H, HS), 0.1); lk1 = w(keys[1], (H, HS), 0.1)
    lq2 = w(keys[2], (H, HS), 0.1); lk2 = w(keys[3], (H, HS), 0.1)
    lam = (jnp.exp(jnp.sum(lq1 * lk1, -1)) - jnp.exp(jnp.sum(lq2 * lk2, -1))
           + lambda_init).astype(jnp.float32)

    params = dict(
        lam=lam,
        g1=jnp.ones((1, D), jnp.float32),
        g2=jnp.ones((1, D), jnp.float32),
        wq1=w(keys[4], (D, HH)), wq2=w(keys[5], (D, HH)),
        wk1=w(keys[6], (D, HH)), wk2=w(keys[7], (D, HH)),
        wv=w(keys[8], (D, HH)), wo=w(keys[9], (HH, D)),
        wgate=w(keys[10], (D, D)), wup=w(keys[11], (D, D)),
        wdown=w(keys[12], (D, D)),
    )

    x = jax.random.normal(keys[13], (B, T, D), jnp.float32)
    pad_mask = jnp.ones((B, 1, T), jnp.float32)              # 1.0 = valid token
    pad_mask = pad_mask.at[1, :, T - 2:].set(0.0)            # pad tail of batch 1
    pad_mask = pad_mask.at[3, :, T - 3:].set(0.0)            # pad tail of batch 3

    prepared = prepare_params(params, num_heads=H, head_size=HS)
    out = encoder_forward(x, pad_mask, prepared,
                          num_heads=H, head_size=HS, lambda_init=lambda_init)
    out = jax.block_until_ready(out)

    ref = encoder_reference(x, pad_mask, params,
                            num_heads=H, head_size=HS, lambda_init=lambda_init)
    np.testing.assert_allclose(np.asarray(out, np.float32), np.asarray(ref),
                               rtol=2e-2, atol=2e-2)

    print("KERNEL_OK")
</pallas_src>

<mosaic_0001>
module attributes {stable_mosaic.version = 11 : i64} {
  func.func @encoder_kernel(%arg0: i32, %arg1: memref<2x1x1xf32, #tpu.memory_space<vmem>>, %arg2: memref<2x8x32xf32, #tpu.memory_space<vmem>>, %arg3: memref<2x1x8xf32, #tpu.memory_space<vmem>>, %arg4: memref<1x32xf32, #tpu.memory_space<vmem>>, %arg5: memref<1x32xf32, #tpu.memory_space<vmem>>, %arg6: memref<32x80xbf16, #tpu.memory_space<vmem>>, %arg7: memref<16x32xbf16, #tpu.memory_space<vmem>>, %arg8: memref<32x64xbf16, #tpu.memory_space<vmem>>, %arg9: memref<32x32xbf16, #tpu.memory_space<vmem>>, %arg10: memref<2x8x32xf32, #tpu.memory_space<vmem>>) attributes {dimension_semantics = [#tpu.dimension_semantics<parallel>], iteration_bounds = array<i64: 2>, scalar_prefetch = 0 : i64, scratch_operands = 0 : i64, tpu.core_type = #tpu.core_type<tc>, window_params = [{pipeline_mode = #tpu.pipeline_mode<synchronous>, transform_indices = @transform_0, window_bounds = array<i64: 2, 1, 1>}, {transform_indices = @transform_1, window_bounds = array<i64: 2, 8, 32>}, {transform_indices = @transform_2, window_bounds = array<i64: 2, 1, 8>}, {pipeline_mode = #tpu.pipeline_mode<synchronous>, transform_indices = @transform_3, window_bounds = array<i64: 1, 32>}, {pipeline_mode = #tpu.pipeline_mode<synchronous>, transform_indices = @transform_4, window_bounds = array<i64: 1, 32>}, {pipeline_mode = #tpu.pipeline_mode<synchronous>, transform_indices = @transform_5, window_bounds = array<i64: 32, 80>}, {pipeline_mode = #tpu.pipeline_mode<synchronous>, transform_indices = @transform_6, window_bounds = array<i64: 16, 32>}, {pipeline_mode = #tpu.pipeline_mode<synchronous>, transform_indices = @transform_7, window_bounds = array<i64: 32, 64>}, {pipeline_mode = #tpu.pipeline_mode<synchronous>, transform_indices = @transform_8, window_bounds = array<i64: 32, 32>}, {transform_indices = @transform_9, window_bounds = array<i64: 2, 8, 32>}]} {
    %c0 = arith.constant 0 : index
    %c0_0 = arith.constant 0 : index
    %c0_1 = arith.constant 0 : index
    %0 = vector.load %arg2[%c0, %c0_0, %c0_1] : memref<2x8x32xf32, #tpu.memory_space<vmem>>, vector<2x8x32xf32>
    %1 = vector.shape_cast %0 : vector<2x8x32xf32> to vector<16x32xf32>
    %c0_2 = arith.constant 0 : index
    %c0_3 = arith.constant 0 : index
    %c0_4 = arith.constant 0 : index
    %2 = vector.load %arg3[%c0_2, %c0_3, %c0_4] : memref<2x1x8xf32, #tpu.memory_space<vmem>>, vector<2x1x8xf32>
    %cst = arith.constant 5.000000e-01 : f32
    %3 = vector.broadcast %cst : f32 to vector<2x1x8xf32>
    %4 = arith.cmpf ogt, %2, %3 : vector<2x1x8xf32>
    %cst_5 = arith.constant 0.000000e+00 : f32
    %cst_6 = arith.constant -1.000000e+30 : f32
    %5 = vector.broadcast %cst_5 : f32 to vector<2x1x8xf32>
    %6 = vector.broadcast %cst_6 : f32 to vector<2x1x8xf32>
    %7 = arith.select %4, %5, %6 : vector<2x1x8xi1>, vector<2x1x8xf32>
    %c0_7 = arith.constant 0 : index
    %c0_8 = arith.constant 0 : index
    %8 = vector.load %arg4[%c0_7, %c0_8] : memref<1x32xf32, #tpu.memory_space<vmem>>, vector<1x32xf32>
    %9 = arith.mulf %1, %1 : vector<16x32xf32>
    %cst_9 = arith.constant dense<0.000000e+00> : vector<16xf32>
    %10 = vector.multi_reduction <add>, %9, %cst_9 [1] : vector<16x32xf32> to vector<16xf32>
    %11 = vector.shape_cast %10 : vector<16xf32> to vector<16x1xf32>
    %cst_10 = arith.constant 3.200000e+01 : f32
    %12 = vector.broadcast %cst_10 : f32 to vector<16x1xf32>
    %13 = arith.divf %11, %12 : vector<16x1xf32>
    %cst_11 = arith.constant 9.99999997E-7 : f32
    %14 = vector.broadcast %cst_11 : f32 to vector<16x1xf32>
    %15 = arith.addf %13, %14 : vector<16x1xf32>
    %16 = math.rsqrt %15 : vector<16x1xf32>
    %17 = vector.broadcast %16 : vector<16x1xf32> to vector<16x32xf32>
    %18 = arith.mulf %1, %17 : vector<16x32xf32>
    %19 = vector.broadcast %8 : vector<1x32xf32> to vector<16x32xf32>
    %20 = arith.mulf %18, %19 : vector<16x32xf32>
    %21 = arith.truncf %20 : vector<16x32xf32> to vector<16x32xbf16>
    %c0_12 = arith.constant 0 : index
    %c0_13 = arith.constant 0 : index
    %22 = vector.load %arg6[%c0_12, %c0_13] : memref<32x80xbf16, #tpu.memory_space<vmem>>, vector<32x80xbf16>
    %cst_14 = arith.constant dense<0.000000e+00> : vector<16x80xf32>
    %23 = tpu.matmul %21, %22, %cst_14 {dimension_numbers = #tpu.dot_dimension_numbers<[1], [0], [0], [1], [0, 0, 1, 1], [], []>} : vector<16x32xbf16>, vector<32x80xbf16>, vector<16x80xf32> -> vector<16x80xf32>
    %24 = arith.truncf %23 : vector<16x80xf32> to vector<16x80xbf16>
    %c0_15 = arith.constant 0 : index
    %c0_16 = arith.constant 0 : index
    %c0_17 = arith.constant 0 : index
    %25 = vector.load %arg1[%c0_15, %c0_16, %c0_17] : memref<2x1x1xf32, #tpu.memory_space<vmem>>, vector<2x1x1xf32>
    %26 = vector.extract_strided_slice %24 {offsets = [0, 0], sizes = [16, 16], strides = [1, 1]} : vector<16x80xbf16> to vector<16x16xbf16>
    %27 = vector.shape_cast %26 : vector<16x16xbf16> to vector<2x8x2x8xbf16>
    %28 = tpu.transpose %27, [0, 2, 1, 3] : vector<2x8x2x8xbf16> -> vector<2x2x8x8xbf16>
    %29 = vector.shape_cast %28 : vector<2x2x8x8xbf16> to vector<4x8x8xbf16>
    %30 = vector.extract_strided_slice %24 {offsets = [0, 16], sizes = [16, 16], strides = [1, 1]} : vector<16x80xbf16> to vector<16x16xbf16>
    %31 = vector.shape_cast %30 : vector<16x16xbf16> to vector<2x8x2x8xbf16>
    %32 = tpu.transpose %31, [0, 2, 1, 3] : vector<2x8x2x8xbf16> -> vector<2x2x8x8xbf16>
    %33 = vector.shape_cast %32 : vector<2x2x8x8xbf16> to vector<4x8x8xbf16>
    %34 = vector.extract_strided_slice %24 {offsets = [0, 32], sizes = [16, 16], strides = [1, 1]} : vector<16x80xbf16> to vector<16x16xbf16>
    %35 = vector.shape_cast %34 : vector<16x16xbf16> to vector<2x8x2x8xbf16>
    %36 = tpu.transpose %35, [0, 2, 1, 3] : vector<2x8x2x8xbf16> -> vector<2x2x8x8xbf16>
    %37 = vector.shape_cast %36 : vector<2x2x8x8xbf16> to vector<4x8x8xbf16>
    %38 = vector.extract_strided_slice %24 {offsets = [0, 48], sizes = [16, 16], strides = [1, 1]} : vector<16x80xbf16> to vector<16x16xbf16>
    %39 = vector.shape_cast %38 : vector<16x16xbf16> to vector<2x8x2x8xbf16>
    %40 = tpu.transpose %39, [0, 2, 1, 3] : vector<2x8x2x8xbf16> -> vector<2x2x8x8xbf16>
    %41 = vector.shape_cast %40 : vector<2x2x8x8xbf16> to vector<4x8x8xbf16>
    %42 = vector.extract_strided_slice %24 {offsets = [0, 64], sizes = [16, 16], strides = [1, 1]} : vector<16x80xbf16> to vector<16x16xbf16>
    %43 = vector.shape_cast %42 : vector<16x16xbf16> to vector<2x8x2x8xbf16>
    %44 = tpu.transpose %43, [0, 2, 1, 3] : vector<2x8x2x8xbf16> -> vector<2x2x8x8xbf16>
    %45 = vector.shape_cast %44 : vector<2x2x8x8xbf16> to vector<4x8x8xbf16>
    %46 = vector.shape_cast %7 : vector<2x1x8xf32> to vector<2x1x1x8xf32>
    %47 = vector.shape_cast %46 : vector<2x1x1x8xf32> to vector<2x1x1x8xf32>
    %48 = vector.broadcast %47 : vector<2x1x1x8xf32> to vector<2x2x1x8xf32>
    %49 = vector.shape_cast %48 : vector<2x2x1x8xf32> to vector<4x1x8xf32>
    %50 = vector.shape_cast %25 : vector<2x1x1xf32> to vector<1x2x1x1xf32>
    %51 = vector.shape_cast %50 : vector<1x2x1x1xf32> to vector<1x2x1x1xf32>
    %52 = vector.broadcast %51 : vector<1x2x1x1xf32> to vector<2x2x1x1xf32>
    %53 = vector.shape_cast %52 : vector<2x2x1x1xf32> to vector<4x1x1xf32>
    "tpu.trace_start"() <{level = 10 : i32, message = "zqd,zkd->zqk"}> : () -> ()
    %cst_18 = arith.constant dense<0.000000e+00> : vector<4x8x8xf32>
    %54 = tpu.matmul %29, %37, %cst_18 {dimension_numbers = #tpu.dot_dimension_numbers<[2], [2], [1], [1], [0, 0, 0, 1, 1, 1], [0], [0]>} : vector<4x8x8xbf16>, vector<4x8x8xbf16>, vector<4x8x8xf32> -> vector<4x8x8xf32>
    "tpu.trace_stop"() : () -> ()
    %55 = vector.broadcast %49 : vector<4x1x8xf32> to vector<4x8x8xf32>
    %56 = arith.addf %54, %55 : vector<4x8x8xf32>
    "tpu.trace_start"() <{level = 10 : i32, message = "zqd,zkd->zqk"}> : () -> ()
    %cst_19 = arith.constant dense<0.000000e+00> : vector<4x8x8xf32>
    %57 = tpu.matmul %33, %41, %cst_19 {dimension_numbers = #tpu.dot_dimension_numbers<[2], [2], [1], [1], [0, 0, 0, 1, 1, 1], [0], [0]>} : vector<4x8x8xbf16>, vector<4x8x8xbf16>, vector<4x8x8xf32> -> vector<4x8x8xf32>
    "tpu.trace_stop"() : () -> ()
    %58 = vector.broadcast %49 : vector<4x1x8xf32> to vector<4x8x8xf32>
    %59 = arith.addf %57, %58 : vector<4x8x8xf32>
    %cst_20 = arith.constant dense<0xFF800000> : vector<4x8xf32>
    %60 = vector.multi_reduction <maximumf>, %56, %cst_20 [2] : vector<4x8x8xf32> to vector<4x8xf32>
    %61 = vector.shape_cast %60 : vector<4x8xf32> to vector<4x8x1xf32>
    %62 = vector.broadcast %61 : vector<4x8x1xf32> to vector<4x8x8xf32>
    %63 = arith.subf %56, %62 : vector<4x8x8xf32>
    %64 = math.exp %63 : vector<4x8x8xf32>
    %cst_21 = arith.constant dense<0.000000e+00> : vector<4x8xf32>
    %65 = vector.multi_reduction <add>, %64, %cst_21 [2] : vector<4x8x8xf32> to vector<4x8xf32>
    %66 = vector.shape_cast %65 : vector<4x8xf32> to vector<4x8x1xf32>
    %67 = tpu.reciprocal %66 {approx = true} : vector<4x8x1xf32> -> vector<4x8x1xf32>
    %68 = vector.broadcast %67 : vector<4x8x1xf32> to vector<4x8x8xf32>
    %69 = arith.mulf %64, %68 : vector<4x8x8xf32>
    %cst_22 = arith.constant dense<0xFF800000> : vector<4x8xf32>
    %70 = vector.multi_reduction <maximumf>, %59, %cst_22 [2] : vector<4x8x8xf32> to vector<4x8xf32>
    %71 = vector.shape_cast %70 : vector<4x8xf32> to vector<4x8x1xf32>
    %72 = vector.broadcast %71 : vector<4x8x1xf32> to vector<4x8x8xf32>
    %73 = arith.subf %59, %72 : vector<4x8x8xf32>
    %74 = math.exp %73 : vector<4x8x8xf32>
    %cst_23 = arith.constant dense<0.000000e+00> : vector<4x8xf32>
    %75 = vector.multi_reduction <add>, %74, %cst_23 [2] : vector<4x8x8xf32> to vector<4x8xf32>
    %76 = vector.shape_cast %75 : vector<4x8xf32> to vector<4x8x1xf32>
    %77 = tpu.reciprocal %76 {approx = true} : vector<4x8x1xf32> -> vector<4x8x1xf32>
    %78 = vector.broadcast %77 : vector<4x8x1xf32> to vector<4x8x8xf32>
    %79 = arith.mulf %74, %78 : vector<4x8x8xf32>
    %80 = vector.broadcast %53 : vector<4x1x1xf32> to vector<4x8x8xf32>
    %81 = arith.mulf %80, %79 : vector<4x8x8xf32>
    %82 = arith.subf %69, %81 : vector<4x8x8xf32>
    %83 = arith.truncf %82 : vector<4x8x8xf32> to vector<4x8x8xbf16>
    "tpu.trace_start"() <{level = 10 : i32, message = "zqk,zkd->zqd"}> : () -> ()
    %cst_24 = arith.constant dense<0.000000e+00> : vector<4x8x8xf32>
    %84 = tpu.matmul %83, %45, %cst_24 {dimension_numbers = #tpu.dot_dimension_numbers<[2], [1], [1], [2], [0, 0, 0, 1, 1, 2], [0], [0]>} : vector<4x8x8xbf16>, vector<4x8x8xbf16>, vector<4x8x8xf32> -> vector<4x8x8xf32>
    "tpu.trace_stop"() : () -> ()
    %85 = arith.mulf %84, %84 : vector<4x8x8xf32>
    %cst_25 = arith.constant dense<0.000000e+00> : vector<4x8xf32>
    %86 = vector.multi_reduction <add>, %85, %cst_25 [2] : vector<4x8x8xf32> to vector<4x8xf32>
    %87 = vector.shape_cast %86 : vector<4x8xf32> to vector<4x8x1xf32>
    %cst_26 = arith.constant 8.000000e+00 : f32
    %88 = vector.broadcast %cst_26 : f32 to vector<4x8x1xf32>
    %89 = arith.divf %87, %88 : vector<4x8x1xf32>
    %cst_27 = arith.constant 9.99999997E-7 : f32
    %90 = vector.broadcast %cst_27 : f32 to vector<4x8x1xf32>
    %91 = arith.addf %89, %90 : vector<4x8x1xf32>
    %92 = math.rsqrt %91 : vector<4x8x1xf32>
    %93 = vector.broadcast %92 : vector<4x8x1xf32> to vector<4x8x8xf32>
    %94 = arith.mulf %84, %93 : vector<4x8x8xf32>
    %cst_28 = arith.constant 1.000000e+00 : f32
    %95 = vector.broadcast %cst_28 : f32 to vector<4x8x8xf32>
    %96 = arith.mulf %94, %95 : vector<4x8x8xf32>
    %cst_29 = arith.constant 2.000000e-01 : f32
    %97 = vector.broadcast %cst_29 : f32 to vector<4x8x8xf32>
    %98 = arith.mulf %96, %97 : vector<4x8x8xf32>
    %99 = vector.shape_cast %98 : vector<4x8x8xf32> to vector<2x2x8x8xf32>
    %100 = tpu.transpose %99, [0, 2, 1, 3] : vector<2x2x8x8xf32> -> vector<2x8x2x8xf32>
    %101 = vector.shape_cast %100 : vector<2x8x2x8xf32> to vector<16x16xf32>
    %102 = arith.truncf %101 : vector<16x16xf32> to vector<16x16xbf16>
    %c0_30 = arith.constant 0 : index
    %c0_31 = arith.constant 0 : index
    %103 = vector.load %arg7[%c0_30, %c0_31] : memref<16x32xbf16, #tpu.memory_space<vmem>>, vector<16x32xbf16>
    %cst_32 = arith.constant dense<0.000000e+00> : vector<16x32xf32>
    %104 = tpu.matmul %102, %103, %cst_32 {dimension_numbers = #tpu.dot_dimension_numbers<[1], [0], [0], [1], [0, 0, 1, 1], [], []>} : vector<16x16xbf16>, vector<16x32xbf16>, vector<16x32xf32> -> vector<16x32xf32>
    %105 = arith.addf %104, %20 : vector<16x32xf32>
    %c0_33 = arith.constant 0 : index
    %c0_34 = arith.constant 0 : index
    %106 = vector.load %arg5[%c0_33, %c0_34] : memref<1x32xf32, #tpu.memory_space<vmem>>, vector<1x32xf32>
    %107 = arith.mulf %105, %105 : vector<16x32xf32>
    %cst_35 = arith.constant dense<0.000000e+00> : vector<16xf32>
    %108 = vector.multi_reduction <add>, %107, %cst_35 [1] : vector<16x32xf32> to vector<16xf32>
    %109 = vector.shape_cast %108 : vector<16xf32> to vector<16x1xf32>
    %cst_36 = arith.constant 3.200000e+01 : f32
    %110 = vector.broadcast %cst_36 : f32 to vector<16x1xf32>
    %111 = arith.divf %109, %110 : vector<16x1xf32>
    %cst_37 = arith.constant 9.99999997E-7 : f32
    %112 = vector.broadcast %cst_37 : f32 to vector<16x1xf32>
    %113 = arith.addf %111, %112 : vector<16x1xf32>
    %114 = math.rsqrt %113 : vector<16x1xf32>
    %115 = vector.broadcast %114 : vector<16x1xf32> to vector<16x32xf32>
    %116 = arith.mulf %105, %115 : vector<16x32xf32>
    %117 = vector.broadcast %106 : vector<1x32xf32> to vector<16x32xf32>
    %118 = arith.mulf %116, %117 : vector<16x32xf32>
    %119 = arith.truncf %118 : vector<16x32xf32> to vector<16x32xbf16>
    %c0_38 = arith.constant 0 : index
    %c0_39 = arith.constant 0 : index
    %120 = vector.load %arg8[%c0_38, %c0_39] : memref<32x64xbf16, #tpu.memory_space<vmem>>, vector<32x64xbf16>
    %cst_40 = arith.constant dense<0.000000e+00> : vector<16x64xf32>
    %121 = tpu.matmul %119, %120, %cst_40 {dimension_numbers = #tpu.dot_dimension_numbers<[1], [0], [0], [1], [0, 0, 1, 1], [], []>} : vector<16x32xbf16>, vector<32x64xbf16>, vector<16x64xf32> -> vector<16x64xf32>
    %122 = vector.extract_strided_slice %121 {offsets = [0, 0], sizes = [16, 32], strides = [1, 1]} : vector<16x64xf32> to vector<16x32xf32>
    %123 = vector.extract_strided_slice %121 {offsets = [0, 32], sizes = [16, 32], strides = [1, 1]} : vector<16x64xf32> to vector<16x32xf32>
    %124 = arith.negf %122 : vector<16x32xf32>
    %125 = math.exp %124 : vector<16x32xf32>
    %cst_41 = arith.constant 1.000000e+00 : f32
    %126 = vector.broadcast %cst_41 : f32 to vector<16x32xf32>
    %127 = arith.addf %126, %125 : vector<16x32xf32>
    %128 = arith.divf %126, %127 : vector<16x32xf32>
    %129 = arith.mulf %122, %128 : vector<16x32xf32>
    %130 = arith.mulf %129, %123 : vector<16x32xf32>
    %131 = arith.truncf %130 : vector<16x32xf32> to vector<16x32xbf16>
    %c0_42 = arith.constant 0 : index
    %c0_43 = arith.constant 0 : index
    %132 = vector.load %arg9[%c0_42, %c0_43] : memref<32x32xbf16, #tpu.memory_space<vmem>>, vector<32x32xbf16>
    %cst_44 = arith.constant dense<0.000000e+00> : vector<16x32xf32>
    %133 = tpu.matmul %131, %132, %cst_44 {dimension_numbers = #tpu.dot_dimension_numbers<[1], [0], [0], [1], [0, 0, 1, 1], [], []>} : vector<16x32xbf16>, vector<32x32xbf16>, vector<16x32xf32> -> vector<16x32xf32>
    %134 = arith.addf %133, %105 : vector<16x32xf32>
    %135 = vector.shape_cast %134 : vector<16x32xf32> to vector<2x8x32xf32>
    %c0_45 = arith.constant 0 : index
    %c0_46 = arith.constant 0 : index
    %c0_47 = arith.constant 0 : index
    %136 = vector.load %arg10[%c0_45, %c0_46, %c0_47] : memref<2x8x32xf32, #tpu.memory_space<vmem>>, vector<2x8x32xf32>
    tpu.vector_store %arg10[%c0_45, %c0_46, %c0_47], %135 {strides = array<i32>} : memref<2x8x32xf32, #tpu.memory_space<vmem>>, vector<2x8x32xf32>,
    return
  }
  func.func @transform_0(%arg0: i32) -> (i32, i32, i32) {
    %c0_i32 = arith.constant 0 : i32
    %c0_i32_0 = arith.constant 0 : i32
    %c0_i32_1 = arith.constant 0 : i32
    %c0_i32_2 = arith.constant 0 : i32
    return %c0_i32, %c0_i32_0, %c0_i32_1 : i32, i32, i32
  }
  func.func @transform_1(%arg0: i32) -> (i32, i32, i32) {
    %c0_i32 = arith.constant 0 : i32
    %c0_i32_0 = arith.constant 0 : i32
    %c0_i32_1 = arith.constant 0 : i32
    return %arg0, %c0_i32, %c0_i32_0 : i32, i32, i32
  }
  func.func @transform_2(%arg0: i32) -> (i32, i32, i32) {
    %c0_i32 = arith.constant 0 : i32
    %c0_i32_0 = arith.constant 0 : i32
    %c0_i32_1 = arith.constant 0 : i32
    return %arg0, %c0_i32, %c0_i32_0 : i32, i32, i32
  }
  func.func @transform_3(%arg0: i32) -> (i32, i32) {
    %c0_i32 = arith.constant 0 : i32
    %c0_i32_0 = arith.constant 0 : i32
    %c0_i32_1 = arith.constant 0 : i32
    return %c0_i32, %c0_i32_0 : i32, i32
  }
  func.func @transform_4(%arg0: i32) -> (i32, i32) {
    %c0_i32 = arith.constant 0 : i32
    %c0_i32_0 = arith.constant 0 : i32
    %c0_i32_1 = arith.constant 0 : i32
    return %c0_i32, %c0_i32_0 : i32, i32
  }
  func.func @transform_5(%arg0: i32) -> (i32, i32) {
    %c0_i32 = arith.constant 0 : i32
    %c0_i32_0 = arith.constant 0 : i32
    %c0_i32_1 = arith.constant 0 : i32
    return %c0_i32, %c0_i32_0 : i32, i32
  }
  func.func @transform_6(%arg0: i32) -> (i32, i32) {
    %c0_i32 = arith.constant 0 : i32
    %c0_i32_0 = arith.constant 0 : i32
    %c0_i32_1 = arith.constant 0 : i32
    return %c0_i32, %c0_i32_0 : i32, i32
  }
  func.func @transform_7(%arg0: i32) -> (i32, i32) {
    %c0_i32 = arith.constant 0 : i32
    %c0_i32_0 = arith.constant 0 : i32
    %c0_i32_1 = arith.constant 0 : i32
    return %c0_i32, %c0_i32_0 : i32, i32
  }
  func.func @transform_8(%arg0: i32) -> (i32, i32) {
    %c0_i32 = arith.constant 0 : i32
    %c0_i32_0 = arith.constant 0 : i32
    %c0_i32_1 = arith.constant 0 : i32
    return %c0_i32, %c0_i32_0 : i32, i32
  }
  func.func @transform_9(%arg0: i32) -> (i32, i32, i32) {
    %c0_i32 = arith.constant 0 : i32
    %c0_i32_0 = arith.constant 0 : i32
    %c0_i32_1 = arith.constant 0 : i32
    return %arg0, %c0_i32, %c0_i32_0 : i32, i32, i32
  }
}

module attributes {stable_mosaic.version = 11 : i64} {
  func.func @encoder_kernel(%arg0: i32, %arg1: memref<2x1x1xf32, #tpu.memory_space<vmem>>, %arg2: memref<2x8x32xf32, #tpu.memory_space<vmem>>, %arg3: memref<2x1x8xf32, #tpu.memory_space<vmem>>, %arg4: memref<1x32xf32, #tpu.memory_space<vmem>>, %arg5: memref<1x32xf32, #tpu.memory_space<vmem>>, %arg6: memref<32x80xbf16, #tpu.memory_space<vmem>>, %arg7: memref<16x32xbf16, #tpu.memory_space<vmem>>, %arg8: memref<32x64xbf16, #tpu.memory_space<vmem>>, %arg9: memref<32x32xbf16, #tpu.memory_space<vmem>>, %arg10: memref<2x8x32xf32, #tpu.memory_space<vmem>>) attributes {dimension_semantics = [#tpu.dimension_semantics<parallel>], iteration_bounds = array<i64: 2>, scalar_prefetch = 0 : i64, scratch_operands = 0 : i64, tpu.core_type = #tpu.core_type<tc>, window_params = [{pipeline_mode = #tpu.pipeline_mode<synchronous>, transform_indices = @transform_0, window_bounds = array<i64: 2, 1, 1>}, {transform_indices = @transform_1, window_bounds = array<i64: 2, 8, 32>}, {transform_indices = @transform_2, window_bounds = array<i64: 2, 1, 8>}, {pipeline_mode = #tpu.pipeline_mode<synchronous>, transform_indices = @transform_3, window_bounds = array<i64: 1, 32>}, {pipeline_mode = #tpu.pipeline_mode<synchronous>, transform_indices = @transform_4, window_bounds = array<i64: 1, 32>}, {pipeline_mode = #tpu.pipeline_mode<synchronous>, transform_indices = @transform_5, window_bounds = array<i64: 32, 80>}, {pipeline_mode = #tpu.pipeline_mode<synchronous>, transform_indices = @transform_6, window_bounds = array<i64: 16, 32>}, {pipeline_mode = #tpu.pipeline_mode<synchronous>, transform_indices = @transform_7, window_bounds = array<i64: 32, 64>}, {pipeline_mode = #tpu.pipeline_mode<synchronous>, transform_indices = @transform_8, window_bounds = array<i64: 32, 32>}, {transform_indices = @transform_9, window_bounds = array<i64: 2, 8, 32>}]} {
    %c0 = arith.constant 0 : index
    %c0_0 = arith.constant 0 : index
    %c0_1 = arith.constant 0 : index
    %0 = vector.load %arg2[%c0, %c0_0, %c0_1] : memref<2x8x32xf32, #tpu.memory_space<vmem>>, vector<2x8x32xf32>
    %1 = vector.shape_cast %0 : vector<2x8x32xf32> to vector<16x32xf32>
    %c0_2 = arith.constant 0 : index
    %c0_3 = arith.constant 0 : index
    %c0_4 = arith.constant 0 : index
    %2 = vector.load %arg3[%c0_2, %c0_3, %c0_4] : memref<2x1x8xf32, #tpu.memory_space<vmem>>, vector<2x1x8xf32>
    %cst = arith.constant 5.000000e-01 : f32
    %3 = vector.broadcast %cst : f32 to vector<2x1x8xf32>
    %4 = arith.cmpf ogt, %2, %3 : vector<2x1x8xf32>
    %cst_5 = arith.constant 0.000000e+00 : f32
    %cst_6 = arith.constant -1.000000e+30 : f32
    %5 = vector.broadcast %cst_5 : f32 to vector<2x1x8xf32>
    %6 = vector.broadcast %cst_6 : f32 to vector<2x1x8xf32>
    %7 = arith.select %4, %5, %6 : vector<2x1x8xi1>, vector<2x1x8xf32>
    %c0_7 = arith.constant 0 : index
    %c0_8 = arith.constant 0 : index
    %8 = vector.load %arg4[%c0_7, %c0_8] : memref<1x32xf32, #tpu.memory_space<vmem>>, vector<1x32xf32>
    %9 = arith.mulf %1, %1 : vector<16x32xf32>
    %cst_9 = arith.constant dense<0.000000e+00> : vector<16xf32>
    %10 = vector.multi_reduction <add>, %9, %cst_9 [1] : vector<16x32xf32> to vector<16xf32>
    %11 = vector.shape_cast %10 : vector<16xf32> to vector<16x1xf32>
    %cst_10 = arith.constant 3.200000e+01 : f32
    %12 = vector.broadcast %cst_10 : f32 to vector<16x1xf32>
    %13 = arith.divf %11, %12 : vector<16x1xf32>
    %cst_11 = arith.constant 9.99999997E-7 : f32
    %14 = vector.broadcast %cst_11 : f32 to vector<16x1xf32>
    %15 = arith.addf %13, %14 : vector<16x1xf32>
    %16 = math.rsqrt %15 : vector<16x1xf32>
    %17 = vector.broadcast %16 : vector<16x1xf32> to vector<16x32xf32>
    %18 = arith.mulf %1, %17 : vector<16x32xf32>
    %19 = vector.broadcast %8 : vector<1x32xf32> to vector<16x32xf32>
    %20 = arith.mulf %18, %19 : vector<16x32xf32>
    %21 = arith.truncf %20 : vector<16x32xf32> to vector<16x32xbf16>
    %c0_12 = arith.constant 0 : index
    %c0_13 = arith.constant 0 : index
    %22 = vector.load %arg6[%c0_12, %c0_13] : memref<32x80xbf16, #tpu.memory_space<vmem>>, vector<32x80xbf16>
    %cst_14 = arith.constant dense<0.000000e+00> : vector<16x80xf32>
    %23 = tpu.matmul %21, %22, %cst_14 {dimension_numbers = #tpu.dot_dimension_numbers<[1], [0], [0], [1], [0, 0, 1, 1], [], []>} : vector<16x32xbf16>, vector<32x80xbf16>, vector<16x80xf32> -> vector<16x80xf32>
    %24 = arith.truncf %23 : vector<16x80xf32> to vector<16x80xbf16>
    %c0_15 = arith.constant 0 : index
    %c0_16 = arith.constant 0 : index
    %c0_17 = arith.constant 0 : index
    %25 = vector.load %arg1[%c0_15, %c0_16, %c0_17] : memref<2x1x1xf32, #tpu.memory_space<vmem>>, vector<2x1x1xf32>
    %26 = vector.extract_strided_slice %24 {offsets = [0, 0], sizes = [16, 16], strides = [1, 1]} : vector<16x80xbf16> to vector<16x16xbf16>
    %27 = vector.shape_cast %26 : vector<16x16xbf16> to vector<2x8x2x8xbf16>
    %28 = tpu.transpose %27, [0, 2, 1, 3] : vector<2x8x2x8xbf16> -> vector<2x2x8x8xbf16>
    %29 = vector.shape_cast %28 : vector<2x2x8x8xbf16> to vector<4x8x8xbf16>
    %30 = vector.extract_strided_slice %24 {offsets = [0, 16], sizes = [16, 16], strides = [1, 1]} : vector<16x80xbf16> to vector<16x16xbf16>
    %31 = vector.shape_cast %30 : vector<16x16xbf16> to vector<2x8x2x8xbf16>
    %32 = tpu.transpose %31, [0, 2, 1, 3] : vector<2x8x2x8xbf16> -> vector<2x2x8x8xbf16>
    %33 = vector.shape_cast %32 : vector<2x2x8x8xbf16> to vector<4x8x8xbf16>
    %34 = vector.extract_strided_slice %24 {offsets = [0, 32], sizes = [16, 16], strides = [1, 1]} : vector<16x80xbf16> to vector<16x16xbf16>
    %35 = vector.shape_cast %34 : vector<16x16xbf16> to vector<2x8x2x8xbf16>
    %36 = tpu.transpose %35, [0, 2, 1, 3] : vector<2x8x2x8xbf16> -> vector<2x2x8x8xbf16>
    %37 = vector.shape_cast %36 : vector<2x2x8x8xbf16> to vector<4x8x8xbf16>
    %38 = vector.extract_strided_slice %24 {offsets = [0, 48], sizes = [16, 16], strides = [1, 1]} : vector<16x80xbf16> to vector<16x16xbf16>
    %39 = vector.shape_cast %38 : vector<16x16xbf16> to vector<2x8x2x8xbf16>
    %40 = tpu.transpose %39, [0, 2, 1, 3] : vector<2x8x2x8xbf16> -> vector<2x2x8x8xbf16>
    %41 = vector.shape_cast %40 : vector<2x2x8x8xbf16> to vector<4x8x8xbf16>
    %42 = vector.extract_strided_slice %24 {offsets = [0, 64], sizes = [16, 16], strides = [1, 1]} : vector<16x80xbf16> to vector<16x16xbf16>
    %43 = vector.shape_cast %42 : vector<16x16xbf16> to vector<2x8x2x8xbf16>
    %44 = tpu.transpose %43, [0, 2, 1, 3] : vector<2x8x2x8xbf16> -> vector<2x2x8x8xbf16>
    %45 = vector.shape_cast %44 : vector<2x2x8x8xbf16> to vector<4x8x8xbf16>
    %46 = vector.shape_cast %7 : vector<2x1x8xf32> to vector<2x1x1x8xf32>
    %47 = vector.shape_cast %46 : vector<2x1x1x8xf32> to vector<2x1x1x8xf32>
    %48 = vector.broadcast %47 : vector<2x1x1x8xf32> to vector<2x2x1x8xf32>
    %49 = vector.shape_cast %48 : vector<2x2x1x8xf32> to vector<4x1x8xf32>
    %50 = vector.shape_cast %25 : vector<2x1x1xf32> to vector<1x2x1x1xf32>
    %51 = vector.shape_cast %50 : vector<1x2x1x1xf32> to vector<1x2x1x1xf32>
    %52 = vector.broadcast %51 : vector<1x2x1x1xf32> to vector<2x2x1x1xf32>
    %53 = vector.shape_cast %52 : vector<2x2x1x1xf32> to vector<4x1x1xf32>
    "tpu.trace_start"() <{level = 10 : i32, message = "zqd,zkd->zqk"}> : () -> ()
    %cst_18 = arith.constant dense<0.000000e+00> : vector<4x8x8xf32>
    %54 = tpu.matmul %29, %37, %cst_18 {dimension_numbers = #tpu.dot_dimension_numbers<[2], [2], [1], [1], [0, 0, 0, 1, 1, 1], [0], [0]>} : vector<4x8x8xbf16>, vector<4x8x8xbf16>, vector<4x8x8xf32> -> vector<4x8x8xf32>
    "tpu.trace_stop"() : () -> ()
    %55 = vector.broadcast %49 : vector<4x1x8xf32> to vector<4x8x8xf32>
    %56 = arith.addf %54, %55 : vector<4x8x8xf32>
    "tpu.trace_start"() <{level = 10 : i32, message = "zqd,zkd->zqk"}> : () -> ()
    %cst_19 = arith.constant dense<0.000000e+00> : vector<4x8x8xf32>
    %57 = tpu.matmul %33, %41, %cst_19 {dimension_numbers = #tpu.dot_dimension_numbers<[2], [2], [1], [1], [0, 0, 0, 1, 1, 1], [0], [0]>} : vector<4x8x8xbf16>, vector<4x8x8xbf16>, vector<4x8x8xf32> -> vector<4x8x8xf32>
    "tpu.trace_stop"() : () -> ()
    %58 = vector.broadcast %49 : vector<4x1x8xf32> to vector<4x8x8xf32>
    %59 = arith.addf %57, %58 : vector<4x8x8xf32>
    %cst_20 = arith.constant dense<0xFF800000> : vector<4x8xf32>
    %60 = vector.multi_reduction <maximumf>, %56, %cst_20 [2] : vector<4x8x8xf32> to vector<4x8xf32>
    %61 = vector.shape_cast %60 : vector<4x8xf32> to vector<4x8x1xf32>
    %62 = vector.broadcast %61 : vector<4x8x1xf32> to vector<4x8x8xf32>
    %63 = arith.subf %56, %62 : vector<4x8x8xf32>
    %64 = math.exp %63 : vector<4x8x8xf32>
    %cst_21 = arith.constant dense<0.000000e+00> : vector<4x8xf32>
    %65 = vector.multi_reduction <add>, %64, %cst_21 [2] : vector<4x8x8xf32> to vector<4x8xf32>
    %66 = vector.shape_cast %65 : vector<4x8xf32> to vector<4x8x1xf32>
    %67 = tpu.reciprocal %66 {approx = true} : vector<4x8x1xf32> -> vector<4x8x1xf32>
    %68 = vector.broadcast %67 : vector<4x8x1xf32> to vector<4x8x8xf32>
    %69 = arith.mulf %64, %68 : vector<4x8x8xf32>
    %cst_22 = arith.constant dense<0xFF800000> : vector<4x8xf32>
    %70 = vector.multi_reduction <maximumf>, %59, %cst_22 [2] : vector<4x8x8xf32> to vector<4x8xf32>
    %71 = vector.shape_cast %70 : vector<4x8xf32> to vector<4x8x1xf32>
    %72 = vector.broadcast %71 : vector<4x8x1xf32> to vector<4x8x8xf32>
    %73 = arith.subf %59, %72 : vector<4x8x8xf32>
    %74 = math.exp %73 : vector<4x8x8xf32>
    %cst_23 = arith.constant dense<0.000000e+00> : vector<4x8xf32>
    %75 = vector.multi_reduction <add>, %74, %cst_23 [2] : vector<4x8x8xf32> to vector<4x8xf32>
    %76 = vector.shape_cast %75 : vector<4x8xf32> to vector<4x8x1xf32>
    %77 = tpu.reciprocal %76 {approx = true} : vector<4x8x1xf32> -> vector<4x8x1xf32>
    %78 = vector.broadcast %77 : vector<4x8x1xf32> to vector<4x8x8xf32>
    %79 = arith.mulf %74, %78 : vector<4x8x8xf32>
    %80 = vector.broadcast %53 : vector<4x1x1xf32> to vector<4x8x8xf32>
    %81 = arith.mulf %80, %79 : vector<4x8x8xf32>
    %82 = arith.subf %69, %81 : vector<4x8x8xf32>
    %83 = arith.truncf %82 : vector<4x8x8xf32> to vector<4x8x8xbf16>
    "tpu.trace_start"() <{level = 10 : i32, message = "zqk,zkd->zqd"}> : () -> ()
    %cst_24 = arith.constant dense<0.000000e+00> : vector<4x8x8xf32>
    %84 = tpu.matmul %83, %45, %cst_24 {dimension_numbers = #tpu.dot_dimension_numbers<[2], [1], [1], [2], [0, 0, 0, 1, 1, 2], [0], [0]>} : vector<4x8x8xbf16>, vector<4x8x8xbf16>, vector<4x8x8xf32> -> vector<4x8x8xf32>
    "tpu.trace_stop"() : () -> ()
    %85 = arith.mulf %84, %84 : vector<4x8x8xf32>
    %cst_25 = arith.constant dense<0.000000e+00> : vector<4x8xf32>
    %86 = vector.multi_reduction <add>, %85, %cst_25 [2] : vector<4x8x8xf32> to vector<4x8xf32>
    %87 = vector.shape_cast %86 : vector<4x8xf32> to vector<4x8x1xf32>
    %cst_26 = arith.constant 8.000000e+00 : f32
    %88 = vector.broadcast %cst_26 : f32 to vector<4x8x1xf32>
    %89 = arith.divf %87, %88 : vector<4x8x1xf32>
    %cst_27 = arith.constant 9.99999997E-7 : f32
    %90 = vector.broadcast %cst_27 : f32 to vector<4x8x1xf32>
    %91 = arith.addf %89, %90 : vector<4x8x1xf32>
    %92 = math.rsqrt %91 : vector<4x8x1xf32>
    %93 = vector.broadcast %92 : vector<4x8x1xf32> to vector<4x8x8xf32>
    %94 = arith.mulf %84, %93 : vector<4x8x8xf32>
    %cst_28 = arith.constant 1.000000e+00 : f32
    %95 = vector.broadcast %cst_28 : f32 to vector<4x8x8xf32>
    %96 = arith.mulf %94, %95 : vector<4x8x8xf32>
    %cst_29 = arith.constant 2.000000e-01 : f32
    %97 = vector.broadcast %cst_29 : f32 to vector<4x8x8xf32>
    %98 = arith.mulf %96, %97 : vector<4x8x8xf32>
    %99 = vector.shape_cast %98 : vector<4x8x8xf32> to vector<2x2x8x8xf32>
    %100 = tpu.transpose %99, [0, 2, 1, 3] : vector<2x2x8x8xf32> -> vector<2x8x2x8xf32>
    %101 = vector.shape_cast %100 : vector<2x8x2x8xf32> to vector<16x16xf32>
    %102 = arith.truncf %101 : vector<16x16xf32> to vector<16x16xbf16>
    %c0_30 = arith.constant 0 : index
    %c0_31 = arith.constant 0 : index
    %103 = vector.load %arg7[%c0_30, %c0_31] : memref<16x32xbf16, #tpu.memory_space<vmem>>, vector<16x32xbf16>
    %cst_32 = arith.constant dense<0.000000e+00> : vector<16x32xf32>
    %104 = tpu.matmul %102, %103, %cst_32 {dimension_numbers = #tpu.dot_dimension_numbers<[1], [0], [0], [1], [0, 0, 1, 1], [], []>} : vector<16x16xbf16>, vector<16x32xbf16>, vector<16x32xf32> -> vector<16x32xf32>
    %105 = arith.addf %104, %20 : vector<16x32xf32>
    %c0_33 = arith.constant 0 : index
    %c0_34 = arith.constant 0 : index
    %106 = vector.load %arg5[%c0_33, %c0_34] : memref<1x32xf32, #tpu.memory_space<vmem>>, vector<1x32xf32>
    %107 = arith.mulf %105, %105 : vector<16x32xf32>
    %cst_35 = arith.constant dense<0.000000e+00> : vector<16xf32>
    %108 = vector.multi_reduction <add>, %107, %cst_35 [1] : vector<16x32xf32> to vector<16xf32>
    %109 = vector.shape_cast %108 : vector<16xf32> to vector<16x1xf32>
    %cst_36 = arith.constant 3.200000e+01 : f32
    %110 = vector.broadcast %cst_36 : f32 to vector<16x1xf32>
    %111 = arith.divf %109, %110 : vector<16x1xf32>
    %cst_37 = arith.constant 9.99999997E-7 : f32
    %112 = vector.broadcast %cst_37 : f32 to vector<16x1xf32>
    %113 = arith.addf %111, %112 : vector<16x1xf32>
    %114 = math.rsqrt %113 : vector<16x1xf32>
    %115 = vector.broadcast %114 : vector<16x1xf32> to vector<16x32xf32>
    %116 = arith.mulf %105, %115 : vector<16x32xf32>
    %117 = vector.broadcast %106 : vector<1x32xf32> to vector<16x32xf32>
    %118 = arith.mulf %116, %117 : vector<16x32xf32>
    %119 = arith.truncf %118 : vector<16x32xf32> to vector<16x32xbf16>
    %c0_38 = arith.constant 0 : index
    %c0_39 = arith.constant 0 : index
    %120 = vector.load %arg8[%c0_38, %c0_39] : memref<32x64xbf16, #tpu.memory_space<vmem>>, vector<32x64xbf16>
    %cst_40 = arith.constant dense<0.000000e+00> : vector<16x64xf32>
    %121 = tpu.matmul %119, %120, %cst_40 {dimension_numbers = #tpu.dot_dimension_numbers<[1], [0], [0], [1], [0, 0, 1, 1], [], []>} : vector<16x32xbf16>, vector<32x64xbf16>, vector<16x64xf32> -> vector<16x64xf32>
    %122 = vector.extract_strided_slice %121 {offsets = [0, 0], sizes = [16, 32], strides = [1, 1]} : vector<16x64xf32> to vector<16x32xf32>
    %123 = vector.extract_strided_slice %121 {offsets = [0, 32], sizes = [16, 32], strides = [1, 1]} : vector<16x64xf32> to vector<16x32xf32>
    %124 = arith.negf %122 : vector<16x32xf32>
    %125 = math.exp %124 : vector<16x32xf32>
    %cst_41 = arith.constant 1.000000e+00 : f32
    %126 = vector.broadcast %cst_41 : f32 to vector<16x32xf32>
    %127 = arith.addf %126, %125 : vector<16x32xf32>
    %128 = arith.divf %126, %127 : vector<16x32xf32>
    %129 = arith.mulf %122, %128 : vector<16x32xf32>
    %130 = arith.mulf %129, %123 : vector<16x32xf32>
    %131 = arith.truncf %130 : vector<16x32xf32> to vector<16x32xbf16>
    %c0_42 = arith.constant 0 : index
    %c0_43 = arith.constant 0 : index
    %132 = vector.load %arg9[%c0_42, %c0_43] : memref<32x32xbf16, #tpu.memory_space<vmem>>, vector<32x32xbf16>
    %cst_44 = arith.constant dense<0.000000e+00> : vector<16x32xf32>
    %133 = tpu.matmul %131, %132, %cst_44 {dimension_numbers = #tpu.dot_dimension_numbers<[1], [0], [0], [1], [0, 0, 1, 1], [], []>} : vector<16x32xbf16>, vector<32x32xbf16>, vector<16x32xf32> -> vector<16x32xf32>
    %134 = arith.addf %133, %105 : vector<16x32xf32>
    %135 = vector.shape_cast %134 : vector<16x32xf32> to vector<2x8x32xf32>
    %c0_45 = arith.constant 0 : index
    %c0_46 = arith.constant 0 : index
    %c0_47 = arith.constant 0 : index
    %136 = vector.load %arg10[%c0_45, %c0_46, %c0_47] : memref<2x8x32xf32, #tpu.memory_space<vmem>>, vector<2x8x32xf32>
    tpu.vector_store %arg10[%c0_45, %c0_46, %c0_47], %135 {strides = array<i32>} : memref<2x8x32xf32, #tpu.memory_space<vmem>>, vector<2x8x32xf32>,
    return
  }
  func.func @transform_0(%arg0: i32) -> (i32, i32, i32) {
    %c0_i32 = arith.constant 0 : i32
    %c0_i32_0 = arith.constant 0 : i32
    %c0_i32_1 = arith.constant 0 : i32
    %c0_i32_2 = arith.constant 0 : i32
    return %c0_i32, %c0_i32_0, %c0_i32_1 : i32, i32, i32
  }
  func.func @transform_1(%arg0: i32) -> (i32, i32, i32) {
    %c0_i32 = arith.constant 0 : i32
    %c0_i32_0 = arith.constant 0 : i32
    %c0_i32_1 = arith.constant 0 : i32
    return %arg0, %c0_i32, %c0_i32_0 : i32, i32, i32
  }
  func.func @transform_2(%arg0: i32) -> (i32, i32, i32) {
    %c0_i32 = arith.constant 0 : i32
    %c0_i32_0 = arith.constant 0 : i32
    %c0_i32_1 = arith.constant 0 : i32
    return %arg0, %c0_i32, %c0_i32_0 : i32, i32, i32
  }
  func.func @transform_3(%arg0: i32) -> (i32, i32) {
    %c0_i32 = arith.constant 0 : i32
    %c0_i32_0 = arith.constant 0 : i32
    %c0_i32_1 = arith.constant 0 : i32
    return %c0_i32, %c0_i32_0 : i32, i32
  }
  func.func @transform_4(%arg0: i32) -> (i32, i32) {
    %c0_i32 = arith.constant 0 : i32
    %c0_i32_0 = arith.constant 0 : i32
    %c0_i32_1 = arith.constant 0 : i32
    return %c0_i32, %c0_i32_0 : i32, i32
  }
  func.func @transform_5(%arg0: i32) -> (i32, i32) {
    %c0_i32 = arith.constant 0 : i32
    %c0_i32_0 = arith.constant 0 : i32
    %c0_i32_1 = arith.constant 0 : i32
    return %c0_i32, %c0_i32_0 : i32, i32
  }
  func.func @transform_6(%arg0: i32) -> (i32, i32) {
    %c0_i32 = arith.constant 0 : i32
    %c0_i32_0 = arith.constant 0 : i32
    %c0_i32_1 = arith.constant 0 : i32
    return %c0_i32, %c0_i32_0 : i32, i32
  }
  func.func @transform_7(%arg0: i32) -> (i32, i32) {
    %c0_i32 = arith.constant 0 : i32
    %c0_i32_0 = arith.constant 0 : i32
    %c0_i32_1 = arith.constant 0 : i32
    return %c0_i32, %c0_i32_0 : i32, i32
  }
  func.func @transform_8(%arg0: i32) -> (i32, i32) {
    %c0_i32 = arith.constant 0 : i32
    %c0_i32_0 = arith.constant 0 : i32
    %c0_i32_1 = arith.constant 0 : i32
    return %c0_i32, %c0_i32_0 : i32, i32
  }
  func.func @transform_9(%arg0: i32) -> (i32, i32, i32) {
    %c0_i32 = arith.constant 0 : i32
    %c0_i32_0 = arith.constant 0 : i32
    %c0_i32_1 = arith.constant 0 : i32
    return %arg0, %c0_i32, %c0_i32_0 : i32, i32, i32
  }
}

module attributes {stable_mosaic.version = 11 : i64} {
  func.func @encoder_kernel(%arg0: i32, %arg1: memref<2x1x1xf32, #tpu.memory_space<vmem>>, %arg2: memref<2x8x32xf32, #tpu.memory_space<vmem>>, %arg3: memref<2x1x8xf32, #tpu.memory_space<vmem>>, %arg4: memref<1x32xf32, #tpu.memory_space<vmem>>, %arg5: memref<1x32xf32, #tpu.memory_space<vmem>>, %arg6: memref<32x80xbf16, #tpu.memory_space<vmem>>, %arg7: memref<16x32xbf16, #tpu.memory_space<vmem>>, %arg8: memref<32x64xbf16, #tpu.memory_space<vmem>>, %arg9: memref<32x32xbf16, #tpu.memory_space<vmem>>, %arg10: memref<2x8x32xf32, #tpu.memory_space<vmem>>) attributes {dimension_semantics = [#tpu.dimension_semantics<parallel>], iteration_bounds = array<i64: 2>, scalar_prefetch = 0 : i64, scratch_operands = 0 : i64, tpu.core_type = #tpu.core_type<tc>, window_params = [{pipeline_mode = #tpu.pipeline_mode<synchronous>, transform_indices = @transform_0, window_bounds = array<i64: 2, 1, 1>}, {transform_indices = @transform_1, window_bounds = array<i64: 2, 8, 32>}, {transform_indices = @transform_2, window_bounds = array<i64: 2, 1, 8>}, {pipeline_mode = #tpu.pipeline_mode<synchronous>, transform_indices = @transform_3, window_bounds = array<i64: 1, 32>}, {pipeline_mode = #tpu.pipeline_mode<synchronous>, transform_indices = @transform_4, window_bounds = array<i64: 1, 32>}, {pipeline_mode = #tpu.pipeline_mode<synchronous>, transform_indices = @transform_5, window_bounds = array<i64: 32, 80>}, {pipeline_mode = #tpu.pipeline_mode<synchronous>, transform_indices = @transform_6, window_bounds = array<i64: 16, 32>}, {pipeline_mode = #tpu.pipeline_mode<synchronous>, transform_indices = @transform_7, window_bounds = array<i64: 32, 64>}, {pipeline_mode = #tpu.pipeline_mode<synchronous>, transform_indices = @transform_8, window_bounds = array<i64: 32, 32>}, {transform_indices = @transform_9, window_bounds = array<i64: 2, 8, 32>}]} {
    %c0 = arith.constant 0 : index
    %c0_0 = arith.constant 0 : index
    %c0_1 = arith.constant 0 : index
    %0 = vector.load %arg2[%c0, %c0_0, %c0_1] : memref<2x8x32xf32, #tpu.memory_space<vmem>>, vector<2x8x32xf32>
    %1 = vector.shape_cast %0 : vector<2x8x32xf32> to vector<16x32xf32>
    %c0_2 = arith.constant 0 : index
    %c0_3 = arith.constant 0 : index
    %c0_4 = arith.constant 0 : index
    %2 = vector.load %arg3[%c0_2, %c0_3, %c0_4] : memref<2x1x8xf32, #tpu.memory_space<vmem>>, vector<2x1x8xf32>
    %cst = arith.constant 5.000000e-01 : f32
    %3 = vector.broadcast %cst : f32 to vector<2x1x8xf32>
    %4 = arith.cmpf ogt, %2, %3 : vector<2x1x8xf32>
    %cst_5 = arith.constant 0.000000e+00 : f32
    %cst_6 = arith.constant -1.000000e+30 : f32
    %5 = vector.broadcast %cst_5 : f32 to vector<2x1x8xf32>
    %6 = vector.broadcast %cst_6 : f32 to vector<2x1x8xf32>
    %7 = arith.select %4, %5, %6 : vector<2x1x8xi1>, vector<2x1x8xf32>
    %c0_7 = arith.constant 0 : index
    %c0_8 = arith.constant 0 : index
    %8 = vector.load %arg4[%c0_7, %c0_8] : memref<1x32xf32, #tpu.memory_space<vmem>>, vector<1x32xf32>
    %9 = arith.mulf %1, %1 : vector<16x32xf32>
    %cst_9 = arith.constant dense<0.000000e+00> : vector<16xf32>
    %10 = vector.multi_reduction <add>, %9, %cst_9 [1] : vector<16x32xf32> to vector<16xf32>
    %11 = vector.shape_cast %10 : vector<16xf32> to vector<16x1xf32>
    %cst_10 = arith.constant 3.200000e+01 : f32
    %12 = vector.broadcast %cst_10 : f32 to vector<16x1xf32>
    %13 = arith.divf %11, %12 : vector<16x1xf32>
    %cst_11 = arith.constant 9.99999997E-7 : f32
    %14 = vector.broadcast %cst_11 : f32 to vector<16x1xf32>
    %15 = arith.addf %13, %14 : vector<16x1xf32>
    %16 = math.rsqrt %15 : vector<16x1xf32>
    %17 = vector.broadcast %16 : vector<16x1xf32> to vector<16x32xf32>
    %18 = arith.mulf %1, %17 : vector<16x32xf32>
    %19 = vector.broadcast %8 : vector<1x32xf32> to vector<16x32xf32>
    %20 = arith.mulf %18, %19 : vector<16x32xf32>
    %21 = arith.truncf %20 : vector<16x32xf32> to vector<16x32xbf16>
    %c0_12 = arith.constant 0 : index
    %c0_13 = arith.constant 0 : index
    %22 = vector.load %arg6[%c0_12, %c0_13] : memref<32x80xbf16, #tpu.memory_space<vmem>>, vector<32x80xbf16>
    %cst_14 = arith.constant dense<0.000000e+00> : vector<16x80xf32>
    %23 = tpu.matmul %21, %22, %cst_14 {dimension_numbers = #tpu.dot_dimension_numbers<[1], [0], [0], [1], [0, 0, 1, 1], [], []>} : vector<16x32xbf16>, vector<32x80xbf16>, vector<16x80xf32> -> vector<16x80xf32>
    %24 = arith.truncf %23 : vector<16x80xf32> to vector<16x80xbf16>
    %c0_15 = arith.constant 0 : index
    %c0_16 = arith.constant 0 : index
    %c0_17 = arith.constant 0 : index
    %25 = vector.load %arg1[%c0_15, %c0_16, %c0_17] : memref<2x1x1xf32, #tpu.memory_space<vmem>>, vector<2x1x1xf32>
    %26 = vector.extract_strided_slice %24 {offsets = [0, 0], sizes = [16, 8], strides = [1, 1]} : vector<16x80xbf16> to vector<16x8xbf16>
    %27 = vector.shape_cast %26 : vector<16x8xbf16> to vector<2x8x8xbf16>
    %28 = vector.extract_strided_slice %24 {offsets = [0, 16], sizes = [16, 8], strides = [1, 1]} : vector<16x80xbf16> to vector<16x8xbf16>
    %29 = vector.shape_cast %28 : vector<16x8xbf16> to vector<2x8x8xbf16>
    %30 = vector.extract_strided_slice %24 {offsets = [0, 32], sizes = [16, 8], strides = [1, 1]} : vector<16x80xbf16> to vector<16x8xbf16>
    %31 = vector.shape_cast %30 : vector<16x8xbf16> to vector<2x8x8xbf16>
    %32 = vector.extract_strided_slice %24 {offsets = [0, 48], sizes = [16, 8], strides = [1, 1]} : vector<16x80xbf16> to vector<16x8xbf16>
    %33 = vector.shape_cast %32 : vector<16x8xbf16> to vector<2x8x8xbf16>
    %34 = vector.extract_strided_slice %24 {offsets = [0, 64], sizes = [16, 8], strides = [1, 1]} : vector<16x80xbf16> to vector<16x8xbf16>
    %35 = vector.shape_cast %34 : vector<16x8xbf16> to vector<2x8x8xbf16>
    "tpu.trace_start"() <{level = 10 : i32, message = "bqd,bkd->bqk"}> : () -> ()
    %cst_18 = arith.constant dense<0.000000e+00> : vector<2x8x8xf32>
    %36 = tpu.matmul %27, %31, %cst_18 {dimension_numbers = #tpu.dot_dimension_numbers<[2], [2], [1], [1], [0, 0, 0, 1, 1, 1], [0], [0]>} : vector<2x8x8xbf16>, vector<2x8x8xbf16>, vector<2x8x8xf32> -> vector<2x8x8xf32>
    "tpu.trace_stop"() : () -> ()
    %37 = vector.broadcast %7 : vector<2x1x8xf32> to vector<2x8x8xf32>
    %38 = arith.addf %36, %37 : vector<2x8x8xf32>
    "tpu.trace_start"() <{level = 10 : i32, message = "bqd,bkd->bqk"}> : () -> ()
    %cst_19 = arith.constant dense<0.000000e+00> : vector<2x8x8xf32>
    %39 = tpu.matmul %29, %33, %cst_19 {dimension_numbers = #tpu.dot_dimension_numbers<[2], [2], [1], [1], [0, 0, 0, 1, 1, 1], [0], [0]>} : vector<2x8x8xbf16>, vector<2x8x8xbf16>, vector<2x8x8xf32> -> vector<2x8x8xf32>
    "tpu.trace_stop"() : () -> ()
    %40 = vector.broadcast %7 : vector<2x1x8xf32> to vector<2x8x8xf32>
    %41 = arith.addf %39, %40 : vector<2x8x8xf32>
    %cst_20 = arith.constant dense<0xFF800000> : vector<2x8xf32>
    %42 = vector.multi_reduction <maximumf>, %38, %cst_20 [2] : vector<2x8x8xf32> to vector<2x8xf32>
    %43 = vector.shape_cast %42 : vector<2x8xf32> to vector<2x8x1xf32>
    %44 = vector.broadcast %43 : vector<2x8x1xf32> to vector<2x8x8xf32>
    %45 = arith.subf %38, %44 : vector<2x8x8xf32>
    %46 = math.exp %45 : vector<2x8x8xf32>
    %cst_21 = arith.constant dense<0.000000e+00> : vector<2x8xf32>
    %47 = vector.multi_reduction <add>, %46, %cst_21 [2] : vector<2x8x8xf32> to vector<2x8xf32>
    %48 = vector.shape_cast %47 : vector<2x8xf32> to vector<2x8x1xf32>
    %49 = tpu.reciprocal %48 {approx = true} : vector<2x8x1xf32> -> vector<2x8x1xf32>
    %50 = vector.broadcast %49 : vector<2x8x1xf32> to vector<2x8x8xf32>
    %51 = arith.mulf %46, %50 : vector<2x8x8xf32>
    %52 = vector.extract_strided_slice %25 {offsets = [0, 0, 0], sizes = [1, 1, 1], strides = [1, 1, 1]} : vector<2x1x1xf32> to vector<1x1x1xf32>
    %53 = vector.shape_cast %52 : vector<1x1x1xf32> to vector<1x1xf32>
    %cst_22 = arith.constant dense<0xFF800000> : vector<2x8xf32>
    %54 = vector.multi_reduction <maximumf>, %41, %cst_22 [2] : vector<2x8x8xf32> to vector<2x8xf32>
    %55 = vector.shape_cast %54 : vector<2x8xf32> to vector<2x8x1xf32>
    %56 = vector.broadcast %55 : vector<2x8x1xf32> to vector<2x8x8xf32>
    %57 = arith.subf %41, %56 : vector<2x8x8xf32>
    %58 = math.exp %57 : vector<2x8x8xf32>
    %cst_23 = arith.constant dense<0.000000e+00> : vector<2x8xf32>
    %59 = vector.multi_reduction <add>, %58, %cst_23 [2] : vector<2x8x8xf32> to vector<2x8xf32>
    %60 = vector.shape_cast %59 : vector<2x8xf32> to vector<2x8x1xf32>
    %61 = tpu.reciprocal %60 {approx = true} : vector<2x8x1xf32> -> vector<2x8x1xf32>
    %62 = vector.broadcast %61 : vector<2x8x1xf32> to vector<2x8x8xf32>
    %63 = arith.mulf %58, %62 : vector<2x8x8xf32>
    %64 = vector.shape_cast %53 : vector<1x1xf32> to vector<1x1x1xf32>
    %65 = vector.broadcast %64 : vector<1x1x1xf32> to vector<2x8x8xf32>
    %66 = arith.mulf %65, %63 : vector<2x8x8xf32>
    %67 = arith.subf %51, %66 : vector<2x8x8xf32>
    %68 = arith.truncf %67 : vector<2x8x8xf32> to vector<2x8x8xbf16>
    "tpu.trace_start"() <{level = 10 : i32, message = "bqk,bkd->bqd"}> : () -> ()
    %cst_24 = arith.constant dense<0.000000e+00> : vector<2x8x8xf32>
    %69 = tpu.matmul %68, %35, %cst_24 {dimension_numbers = #tpu.dot_dimension_numbers<[2], [1], [1], [2], [0, 0, 0, 1, 1, 2], [0], [0]>} : vector<2x8x8xbf16>, vector<2x8x8xbf16>, vector<2x8x8xf32> -> vector<2x8x8xf32>
    "tpu.trace_stop"() : () -> ()
    %70 = arith.mulf %69, %69 : vector<2x8x8xf32>
    %cst_25 = arith.constant dense<0.000000e+00> : vector<2x8xf32>
    %71 = vector.multi_reduction <add>, %70, %cst_25 [2] : vector<2x8x8xf32> to vector<2x8xf32>
    %72 = vector.shape_cast %71 : vector<2x8xf32> to vector<2x8x1xf32>
    %cst_26 = arith.constant 8.000000e+00 : f32
    %73 = vector.broadcast %cst_26 : f32 to vector<2x8x1xf32>
    %74 = arith.divf %72, %73 : vector<2x8x1xf32>
    %cst_27 = arith.constant 9.99999997E-7 : f32
    %75 = vector.broadcast %cst_27 : f32 to vector<2x8x1xf32>
    %76 = arith.addf %74, %75 : vector<2x8x1xf32>
    %77 = math.rsqrt %76 : vector<2x8x1xf32>
    %78 = vector.broadcast %77 : vector<2x8x1xf32> to vector<2x8x8xf32>
    %79 = arith.mulf %69, %78 : vector<2x8x8xf32>
    %cst_28 = arith.constant 1.000000e+00 : f32
    %80 = vector.broadcast %cst_28 : f32 to vector<2x8x8xf32>
    %81 = arith.mulf %79, %80 : vector<2x8x8xf32>
    %cst_29 = arith.constant 2.000000e-01 : f32
    %82 = vector.broadcast %cst_29 : f32 to vector<2x8x8xf32>
    %83 = arith.mulf %81, %82 : vector<2x8x8xf32>
    %84 = vector.extract_strided_slice %24 {offsets = [0, 8], sizes = [16, 8], strides = [1, 1]} : vector<16x80xbf16> to vector<16x8xbf16>
    %85 = vector.shape_cast %84 : vector<16x8xbf16> to vector<2x8x8xbf16>
    %86 = vector.extract_strided_slice %24 {offsets = [0, 24], sizes = [16, 8], strides = [1, 1]} : vector<16x80xbf16> to vector<16x8xbf16>
    %87 = vector.shape_cast %86 : vector<16x8xbf16> to vector<2x8x8xbf16>
    %88 = vector.extract_strided_slice %24 {offsets = [0, 40], sizes = [16, 8], strides = [1, 1]} : vector<16x80xbf16> to vector<16x8xbf16>
    %89 = vector.shape_cast %88 : vector<16x8xbf16> to vector<2x8x8xbf16>
    %90 = vector.extract_strided_slice %24 {offsets = [0, 56], sizes = [16, 8], strides = [1, 1]} : vector<16x80xbf16> to vector<16x8xbf16>
    %91 = vector.shape_cast %90 : vector<16x8xbf16> to vector<2x8x8xbf16>
    %92 = vector.extract_strided_slice %24 {offsets = [0, 72], sizes = [16, 8], strides = [1, 1]} : vector<16x80xbf16> to vector<16x8xbf16>
    %93 = vector.shape_cast %92 : vector<16x8xbf16> to vector<2x8x8xbf16>
    "tpu.trace_start"() <{level = 10 : i32, message = "bqd,bkd->bqk"}> : () -> ()
    %cst_30 = arith.constant dense<0.000000e+00> : vector<2x8x8xf32>
    %94 = tpu.matmul %85, %89, %cst_30 {dimension_numbers = #tpu.dot_dimension_numbers<[2], [2], [1], [1], [0, 0, 0, 1, 1, 1], [0], [0]>} : vector<2x8x8xbf16>, vector<2x8x8xbf16>, vector<2x8x8xf32> -> vector<2x8x8xf32>
    "tpu.trace_stop"() : () -> ()
    %95 = vector.broadcast %7 : vector<2x1x8xf32> to vector<2x8x8xf32>
    %96 = arith.addf %94, %95 : vector<2x8x8xf32>
    "tpu.trace_start"() <{level = 10 : i32, message = "bqd,bkd->bqk"}> : () -> ()
    %cst_31 = arith.constant dense<0.000000e+00> : vector<2x8x8xf32>
    %97 = tpu.matmul %87, %91, %cst_31 {dimension_numbers = #tpu.dot_dimension_numbers<[2], [2], [1], [1], [0, 0, 0, 1, 1, 1], [0], [0]>} : vector<2x8x8xbf16>, vector<2x8x8xbf16>, vector<2x8x8xf32> -> vector<2x8x8xf32>
    "tpu.trace_stop"() : () -> ()
    %98 = vector.broadcast %7 : vector<2x1x8xf32> to vector<2x8x8xf32>
    %99 = arith.addf %97, %98 : vector<2x8x8xf32>
    %cst_32 = arith.constant dense<0xFF800000> : vector<2x8xf32>
    %100 = vector.multi_reduction <maximumf>, %96, %cst_32 [2] : vector<2x8x8xf32> to vector<2x8xf32>
    %101 = vector.shape_cast %100 : vector<2x8xf32> to vector<2x8x1xf32>
    %102 = vector.broadcast %101 : vector<2x8x1xf32> to vector<2x8x8xf32>
    %103 = arith.subf %96, %102 : vector<2x8x8xf32>
    %104 = math.exp %103 : vector<2x8x8xf32>
    %cst_33 = arith.constant dense<0.000000e+00> : vector<2x8xf32>
    %105 = vector.multi_reduction <add>, %104, %cst_33 [2] : vector<2x8x8xf32> to vector<2x8xf32>
    %106 = vector.shape_cast %105 : vector<2x8xf32> to vector<2x8x1xf32>
    %107 = tpu.reciprocal %106 {approx = true} : vector<2x8x1xf32> -> vector<2x8x1xf32>
    %108 = vector.broadcast %107 : vector<2x8x1xf32> to vector<2x8x8xf32>
    %109 = arith.mulf %104, %108 : vector<2x8x8xf32>
    %110 = vector.extract_strided_slice %25 {offsets = [1, 0, 0], sizes = [1, 1, 1], strides = [1, 1, 1]} : vector<2x1x1xf32> to vector<1x1x1xf32>
    %111 = vector.shape_cast %110 : vector<1x1x1xf32> to vector<1x1xf32>
    %cst_34 = arith.constant dense<0xFF800000> : vector<2x8xf32>
    %112 = vector.multi_reduction <maximumf>, %99, %cst_34 [2] : vector<2x8x8xf32> to vector<2x8xf32>
    %113 = vector.shape_cast %112 : vector<2x8xf32> to vector<2x8x1xf32>
    %114 = vector.broadcast %113 : vector<2x8x1xf32> to vector<2x8x8xf32>
    %115 = arith.subf %99, %114 : vector<2x8x8xf32>
    %116 = math.exp %115 : vector<2x8x8xf32>
    %cst_35 = arith.constant dense<0.000000e+00> : vector<2x8xf32>
    %117 = vector.multi_reduction <add>, %116, %cst_35 [2] : vector<2x8x8xf32> to vector<2x8xf32>
    %118 = vector.shape_cast %117 : vector<2x8xf32> to vector<2x8x1xf32>
    %119 = tpu.reciprocal %118 {approx = true} : vector<2x8x1xf32> -> vector<2x8x1xf32>
    %120 = vector.broadcast %119 : vector<2x8x1xf32> to vector<2x8x8xf32>
    %121 = arith.mulf %116, %120 : vector<2x8x8xf32>
    %122 = vector.shape_cast %111 : vector<1x1xf32> to vector<1x1x1xf32>
    %123 = vector.broadcast %122 : vector<1x1x1xf32> to vector<2x8x8xf32>
    %124 = arith.mulf %123, %121 : vector<2x8x8xf32>
    %125 = arith.subf %109, %124 : vector<2x8x8xf32>
    %126 = arith.truncf %125 : vector<2x8x8xf32> to vector<2x8x8xbf16>
    "tpu.trace_start"() <{level = 10 : i32, message = "bqk,bkd->bqd"}> : () -> ()
    %cst_36 = arith.constant dense<0.000000e+00> : vector<2x8x8xf32>
    %127 = tpu.matmul %126, %93, %cst_36 {dimension_numbers = #tpu.dot_dimension_numbers<[2], [1], [1], [2], [0, 0, 0, 1, 1, 2], [0], [0]>} : vector<2x8x8xbf16>, vector<2x8x8xbf16>, vector<2x8x8xf32> -> vector<2x8x8xf32>
    "tpu.trace_stop"() : () -> ()
    %128 = arith.mulf %127, %127 : vector<2x8x8xf32>
    %cst_37 = arith.constant dense<0.000000e+00> : vector<2x8xf32>
    %129 = vector.multi_reduction <add>, %128, %cst_37 [2] : vector<2x8x8xf32> to vector<2x8xf32>
    %130 = vector.shape_cast %129 : vector<2x8xf32> to vector<2x8x1xf32>
    %cst_38 = arith.constant 8.000000e+00 : f32
    %131 = vector.broadcast %cst_38 : f32 to vector<2x8x1xf32>
    %132 = arith.divf %130, %131 : vector<2x8x1xf32>
    %cst_39 = arith.constant 9.99999997E-7 : f32
    %133 = vector.broadcast %cst_39 : f32 to vector<2x8x1xf32>
    %134 = arith.addf %132, %133 : vector<2x8x1xf32>
    %135 = math.rsqrt %134 : vector<2x8x1xf32>
    %136 = vector.broadcast %135 : vector<2x8x1xf32> to vector<2x8x8xf32>
    %137 = arith.mulf %127, %136 : vector<2x8x8xf32>
    %cst_40 = arith.constant 1.000000e+00 : f32
    %138 = vector.broadcast %cst_40 : f32 to vector<2x8x8xf32>
    %139 = arith.mulf %137, %138 : vector<2x8x8xf32>
    %cst_41 = arith.constant 2.000000e-01 : f32
    %140 = vector.broadcast %cst_41 : f32 to vector<2x8x8xf32>
    %141 = arith.mulf %139, %140 : vector<2x8x8xf32>
    %142 = tpu.concatenate %83, %141 in 2 : vector<2x8x8xf32>, vector<2x8x8xf32> -> vector<2x8x16xf32>
    %143 = vector.shape_cast %142 : vector<2x8x16xf32> to vector<16x16xf32>
    %144 = arith.truncf %143 : vector<16x16xf32> to vector<16x16xbf16>
    %c0_42 = arith.constant 0 : index
    %c0_43 = arith.constant 0 : index
    %145 = vector.load %arg7[%c0_42, %c0_43] : memref<16x32xbf16, #tpu.memory_space<vmem>>, vector<16x32xbf16>
    %cst_44 = arith.constant dense<0.000000e+00> : vector<16x32xf32>
    %146 = tpu.matmul %144, %145, %cst_44 {dimension_numbers = #tpu.dot_dimension_numbers<[1], [0], [0], [1], [0, 0, 1, 1], [], []>} : vector<16x16xbf16>, vector<16x32xbf16>, vector<16x32xf32> -> vector<16x32xf32>
    %147 = arith.addf %146, %20 : vector<16x32xf32>
    %c0_45 = arith.constant 0 : index
    %c0_46 = arith.constant 0 : index
    %148 = vector.load %arg5[%c0_45, %c0_46] : memref<1x32xf32, #tpu.memory_space<vmem>>, vector<1x32xf32>
    %149 = arith.mulf %147, %147 : vector<16x32xf32>
    %cst_47 = arith.constant dense<0.000000e+00> : vector<16xf32>
    %150 = vector.multi_reduction <add>, %149, %cst_47 [1] : vector<16x32xf32> to vector<16xf32>
    %151 = vector.shape_cast %150 : vector<16xf32> to vector<16x1xf32>
    %cst_48 = arith.constant 3.200000e+01 : f32
    %152 = vector.broadcast %cst_48 : f32 to vector<16x1xf32>
    %153 = arith.divf %151, %152 : vector<16x1xf32>
    %cst_49 = arith.constant 9.99999997E-7 : f32
    %154 = vector.broadcast %cst_49 : f32 to vector<16x1xf32>
    %155 = arith.addf %153, %154 : vector<16x1xf32>
    %156 = math.rsqrt %155 : vector<16x1xf32>
    %157 = vector.broadcast %156 : vector<16x1xf32> to vector<16x32xf32>
    %158 = arith.mulf %147, %157 : vector<16x32xf32>
    %159 = vector.broadcast %148 : vector<1x32xf32> to vector<16x32xf32>
    %160 = arith.mulf %158, %159 : vector<16x32xf32>
    %161 = arith.truncf %160 : vector<16x32xf32> to vector<16x32xbf16>
    %c0_50 = arith.constant 0 : index
    %c0_51 = arith.constant 0 : index
    %162 = vector.load %arg8[%c0_50, %c0_51] : memref<32x64xbf16, #tpu.memory_space<vmem>>, vector<32x64xbf16>
    %cst_52 = arith.constant dense<0.000000e+00> : vector<16x64xf32>
    %163 = tpu.matmul %161, %162, %cst_52 {dimension_numbers = #tpu.dot_dimension_numbers<[1], [0], [0], [1], [0, 0, 1, 1], [], []>} : vector<16x32xbf16>, vector<32x64xbf16>, vector<16x64xf32> -> vector<16x64xf32>
    %164 = vector.extract_strided_slice %163 {offsets = [0, 0], sizes = [16, 32], strides = [1, 1]} : vector<16x64xf32> to vector<16x32xf32>
    %165 = vector.extract_strided_slice %163 {offsets = [0, 32], sizes = [16, 32], strides = [1, 1]} : vector<16x64xf32> to vector<16x32xf32>
    %166 = arith.negf %164 : vector<16x32xf32>
    %167 = math.exp %166 : vector<16x32xf32>
    %cst_53 = arith.constant 1.000000e+00 : f32
    %168 = vector.broadcast %cst_53 : f32 to vector<16x32xf32>
    %169 = arith.addf %168, %167 : vector<16x32xf32>
    %170 = arith.divf %168, %169 : vector<16x32xf32>
    %171 = arith.mulf %164, %170 : vector<16x32xf32>
    %172 = arith.mulf %171, %165 : vector<16x32xf32>
    %173 = arith.truncf %172 : vector<16x32xf32> to vector<16x32xbf16>
    %c0_54 = arith.constant 0 : index
    %c0_55 = arith.constant 0 : index
    %174 = vector.load %arg9[%c0_54, %c0_55] : memref<32x32xbf16, #tpu.memory_space<vmem>>, vector<32x32xbf16>
    %cst_56 = arith.constant dense<0.000000e+00> : vector<16x32xf32>
    %175 = tpu.matmul %173, %174, %cst_56 {dimension_numbers = #tpu.dot_dimension_numbers<[1], [0], [0], [1], [0, 0, 1, 1], [], []>} : vector<16x32xbf16>, vector<32x32xbf16>, vector<16x32xf32> -> vector<16x32xf32>
    %176 = arith.addf %175, %147 : vector<16x32xf32>
    %177 = vector.shape_cast %176 : vector<16x32xf32> to vector<2x8x32xf32>
    %c0_57 = arith.constant 0 : index
    %c0_58 = arith.constant 0 : index
    %c0_59 = arith.constant 0 : index
    %178 = vector.load %arg10[%c0_57, %c0_58, %c0_59] : memref<2x8x32xf32, #tpu.memory_space<vmem>>, vector<2x8x32xf32>
    tpu.vector_store %arg10[%c0_57, %c0_58, %c0_59], %177 {strides = array<i32>} : memref<2x8x32xf32, #tpu.memory_space<vmem>>, vector<2x8x32xf32>,
    return
  }
  func.func @transform_0(%arg0: i32) -> (i32, i32, i32) {
    %c0_i32 = arith.constant 0 : i32
    %c0_i32_0 = arith.constant 0 : i32
    %c0_i32_1 = arith.constant 0 : i32
    %c0_i32_2 = arith.constant 0 : i32
    return %c0_i32, %c0_i32_0, %c0_i32_1 : i32, i32, i32
  }
  func.func @transform_1(%arg0: i32) -> (i32, i32, i32) {
    %c0_i32 = arith.constant 0 : i32
    %c0_i32_0 = arith.constant 0 : i32
    %c0_i32_1 = arith.constant 0 : i32
    return %arg0, %c0_i32, %c0_i32_0 : i32, i32, i32
  }
  func.func @transform_2(%arg0: i32) -> (i32, i32, i32) {
    %c0_i32 = arith.constant 0 : i32
    %c0_i32_0 = arith.constant 0 : i32
    %c0_i32_1 = arith.constant 0 : i32
    return %arg0, %c0_i32, %c0_i32_0 : i32, i32, i32
  }
  func.func @transform_3(%arg0: i32) -> (i32, i32) {
    %c0_i32 = arith.constant 0 : i32
    %c0_i32_0 = arith.constant 0 : i32
    %c0_i32_1 = arith.constant 0 : i32
    return %c0_i32, %c0_i32_0 : i32, i32
  }
  func.func @transform_4(%arg0: i32) -> (i32, i32) {
    %c0_i32 = arith.constant 0 : i32
    %c0_i32_0 = arith.constant 0 : i32
    %c0_i32_1 = arith.constant 0 : i32
    return %c0_i32, %c0_i32_0 : i32, i32
  }
  func.func @transform_5(%arg0: i32) -> (i32, i32) {
    %c0_i32 = arith.constant 0 : i32
    %c0_i32_0 = arith.constant 0 : i32
    %c0_i32_1 = arith.constant 0 : i32
    return %c0_i32, %c0_i32_0 : i32, i32
  }
  func.func @transform_6(%arg0: i32) -> (i32, i32) {
    %c0_i32 = arith.constant 0 : i32
    %c0_i32_0 = arith.constant 0 : i32
    %c0_i32_1 = arith.constant 0 : i32
    return %c0_i32, %c0_i32_0 : i32, i32
  }
  func.func @transform_7(%arg0: i32) -> (i32, i32) {
    %c0_i32 = arith.constant 0 : i32
    %c0_i32_0 = arith.constant 0 : i32
    %c0_i32_1 = arith.constant 0 : i32
    return %c0_i32, %c0_i32_0 : i32, i32
  }
  func.func @transform_8(%arg0: i32) -> (i32, i32) {
    %c0_i32 = arith.constant 0 : i32
    %c0_i32_0 = arith.constant 0 : i32
    %c0_i32_1 = arith.constant 0 : i32
    return %c0_i32, %c0_i32_0 : i32, i32
  }
  func.func @transform_9(%arg0: i32) -> (i32, i32, i32) {
    %c0_i32 = arith.constant 0 : i32
    %c0_i32_0 = arith.constant 0 : i32
    %c0_i32_1 = arith.constant 0 : i32
    return %arg0, %c0_i32, %c0_i32_0 : i32, i32, i32
  }
}

module attributes {stable_mosaic.version = 11 : i64} {
  func.func @encoder_kernel(%arg0: i32, %arg1: memref<2x1x1xf32, #tpu.memory_space<vmem>>, %arg2: memref<2x8x32xf32, #tpu.memory_space<vmem>>, %arg3: memref<2x1x8xf32, #tpu.memory_space<vmem>>, %arg4: memref<1x32xf32, #tpu.memory_space<vmem>>, %arg5: memref<1x32xf32, #tpu.memory_space<vmem>>, %arg6: memref<32x80xbf16, #tpu.memory_space<vmem>>, %arg7: memref<16x32xbf16, #tpu.memory_space<vmem>>, %arg8: memref<32x64xbf16, #tpu.memory_space<vmem>>, %arg9: memref<32x32xbf16, #tpu.memory_space<vmem>>, %arg10: memref<2x8x32xf32, #tpu.memory_space<vmem>>) attributes {dimension_semantics = [#tpu.dimension_semantics<parallel>], iteration_bounds = array<i64: 2>, scalar_prefetch = 0 : i64, scratch_operands = 0 : i64, tpu.core_type = #tpu.core_type<tc>, window_params = [{pipeline_mode = #tpu.pipeline_mode<synchronous>, transform_indices = @transform_0, window_bounds = array<i64: 2, 1, 1>}, {transform_indices = @transform_1, window_bounds = array<i64: 2, 8, 32>}, {transform_indices = @transform_2, window_bounds = array<i64: 2, 1, 8>}, {pipeline_mode = #tpu.pipeline_mode<synchronous>, transform_indices = @transform_3, window_bounds = array<i64: 1, 32>}, {pipeline_mode = #tpu.pipeline_mode<synchronous>, transform_indices = @transform_4, window_bounds = array<i64: 1, 32>}, {pipeline_mode = #tpu.pipeline_mode<synchronous>, transform_indices = @transform_5, window_bounds = array<i64: 32, 80>}, {pipeline_mode = #tpu.pipeline_mode<synchronous>, transform_indices = @transform_6, window_bounds = array<i64: 16, 32>}, {pipeline_mode = #tpu.pipeline_mode<synchronous>, transform_indices = @transform_7, window_bounds = array<i64: 32, 64>}, {pipeline_mode = #tpu.pipeline_mode<synchronous>, transform_indices = @transform_8, window_bounds = array<i64: 32, 32>}, {transform_indices = @transform_9, window_bounds = array<i64: 2, 8, 32>}]} {
    %c0 = arith.constant 0 : index
    %c0_0 = arith.constant 0 : index
    %c0_1 = arith.constant 0 : index
    %0 = vector.load %arg2[%c0, %c0_0, %c0_1] : memref<2x8x32xf32, #tpu.memory_space<vmem>>, vector<2x8x32xf32>
    %1 = vector.shape_cast %0 : vector<2x8x32xf32> to vector<16x32xf32>
    %c0_2 = arith.constant 0 : index
    %c0_3 = arith.constant 0 : index
    %c0_4 = arith.constant 0 : index
    %2 = vector.load %arg3[%c0_2, %c0_3, %c0_4] : memref<2x1x8xf32, #tpu.memory_space<vmem>>, vector<2x1x8xf32>
    %cst = arith.constant 5.000000e-01 : f32
    %3 = vector.broadcast %cst : f32 to vector<2x1x8xf32>
    %4 = arith.cmpf ogt, %2, %3 : vector<2x1x8xf32>
    %cst_5 = arith.constant 0.000000e+00 : f32
    %cst_6 = arith.constant -1.000000e+30 : f32
    %5 = vector.broadcast %cst_5 : f32 to vector<2x1x8xf32>
    %6 = vector.broadcast %cst_6 : f32 to vector<2x1x8xf32>
    %7 = arith.select %4, %5, %6 : vector<2x1x8xi1>, vector<2x1x8xf32>
    %c0_7 = arith.constant 0 : index
    %c0_8 = arith.constant 0 : index
    %8 = vector.load %arg4[%c0_7, %c0_8] : memref<1x32xf32, #tpu.memory_space<vmem>>, vector<1x32xf32>
    %9 = arith.mulf %1, %1 : vector<16x32xf32>
    %cst_9 = arith.constant dense<0.000000e+00> : vector<16xf32>
    %10 = vector.multi_reduction <add>, %9, %cst_9 [1] : vector<16x32xf32> to vector<16xf32>
    %11 = vector.shape_cast %10 : vector<16xf32> to vector<16x1xf32>
    %cst_10 = arith.constant 3.200000e+01 : f32
    %12 = vector.broadcast %cst_10 : f32 to vector<16x1xf32>
    %13 = arith.divf %11, %12 : vector<16x1xf32>
    %cst_11 = arith.constant 9.99999997E-7 : f32
    %14 = vector.broadcast %cst_11 : f32 to vector<16x1xf32>
    %15 = arith.addf %13, %14 : vector<16x1xf32>
    %16 = math.rsqrt %15 : vector<16x1xf32>
    %17 = vector.broadcast %16 : vector<16x1xf32> to vector<16x32xf32>
    %18 = arith.mulf %1, %17 : vector<16x32xf32>
    %19 = vector.broadcast %8 : vector<1x32xf32> to vector<16x32xf32>
    %20 = arith.mulf %18, %19 : vector<16x32xf32>
    %21 = arith.truncf %20 : vector<16x32xf32> to vector<16x32xbf16>
    %c0_12 = arith.constant 0 : index
    %c0_13 = arith.constant 0 : index
    %22 = vector.load %arg6[%c0_12, %c0_13] : memref<32x80xbf16, #tpu.memory_space<vmem>>, vector<32x80xbf16>
    %cst_14 = arith.constant dense<0.000000e+00> : vector<16x80xf32>
    %23 = tpu.matmul %21, %22, %cst_14 {dimension_numbers = #tpu.dot_dimension_numbers<[1], [0], [0], [1], [0, 0, 1, 1], [], []>} : vector<16x32xbf16>, vector<32x80xbf16>, vector<16x80xf32> -> vector<16x80xf32>
    %24 = arith.truncf %23 : vector<16x80xf32> to vector<16x80xbf16>
    %c0_15 = arith.constant 0 : index
    %c0_16 = arith.constant 0 : index
    %c0_17 = arith.constant 0 : index
    %25 = vector.load %arg1[%c0_15, %c0_16, %c0_17] : memref<2x1x1xf32, #tpu.memory_space<vmem>>, vector<2x1x1xf32>
    %26 = vector.extract_strided_slice %24 {offsets = [0, 0], sizes = [16, 8], strides = [1, 1]} : vector<16x80xbf16> to vector<16x8xbf16>
    %27 = vector.shape_cast %26 : vector<16x8xbf16> to vector<2x8x8xbf16>
    %28 = vector.extract_strided_slice %24 {offsets = [0, 16], sizes = [16, 8], strides = [1, 1]} : vector<16x80xbf16> to vector<16x8xbf16>
    %29 = vector.shape_cast %28 : vector<16x8xbf16> to vector<2x8x8xbf16>
    %30 = vector.extract_strided_slice %24 {offsets = [0, 32], sizes = [16, 8], strides = [1, 1]} : vector<16x80xbf16> to vector<16x8xbf16>
    %31 = vector.shape_cast %30 : vector<16x8xbf16> to vector<2x8x8xbf16>
    %32 = vector.extract_strided_slice %24 {offsets = [0, 48], sizes = [16, 8], strides = [1, 1]} : vector<16x80xbf16> to vector<16x8xbf16>
    %33 = vector.shape_cast %32 : vector<16x8xbf16> to vector<2x8x8xbf16>
    %34 = vector.extract_strided_slice %24 {offsets = [0, 64], sizes = [16, 8], strides = [1, 1]} : vector<16x80xbf16> to vector<16x8xbf16>
    %35 = vector.shape_cast %34 : vector<16x8xbf16> to vector<2x8x8xbf16>
    "tpu.trace_start"() <{level = 10 : i32, message = "bqd,bkd->bqk"}> : () -> ()
    %cst_18 = arith.constant dense<0.000000e+00> : vector<2x8x8xf32>
    %36 = tpu.matmul %27, %31, %cst_18 {dimension_numbers = #tpu.dot_dimension_numbers<[2], [2], [1], [1], [0, 0, 0, 1, 1, 1], [0], [0]>} : vector<2x8x8xbf16>, vector<2x8x8xbf16>, vector<2x8x8xf32> -> vector<2x8x8xf32>
    "tpu.trace_stop"() : () -> ()
    %37 = vector.broadcast %7 : vector<2x1x8xf32> to vector<2x8x8xf32>
    %38 = arith.addf %36, %37 : vector<2x8x8xf32>
    "tpu.trace_start"() <{level = 10 : i32, message = "bqd,bkd->bqk"}> : () -> ()
    %cst_19 = arith.constant dense<0.000000e+00> : vector<2x8x8xf32>
    %39 = tpu.matmul %29, %33, %cst_19 {dimension_numbers = #tpu.dot_dimension_numbers<[2], [2], [1], [1], [0, 0, 0, 1, 1, 1], [0], [0]>} : vector<2x8x8xbf16>, vector<2x8x8xbf16>, vector<2x8x8xf32> -> vector<2x8x8xf32>
    "tpu.trace_stop"() : () -> ()
    %40 = vector.broadcast %7 : vector<2x1x8xf32> to vector<2x8x8xf32>
    %41 = arith.addf %39, %40 : vector<2x8x8xf32>
    %cst_20 = arith.constant dense<0xFF800000> : vector<2x8xf32>
    %42 = vector.multi_reduction <maximumf>, %38, %cst_20 [2] : vector<2x8x8xf32> to vector<2x8xf32>
    %43 = vector.shape_cast %42 : vector<2x8xf32> to vector<2x8x1xf32>
    %44 = vector.broadcast %43 : vector<2x8x1xf32> to vector<2x8x8xf32>
    %45 = arith.subf %38, %44 : vector<2x8x8xf32>
    %46 = math.exp %45 : vector<2x8x8xf32>
    %cst_21 = arith.constant dense<0.000000e+00> : vector<2x8xf32>
    %47 = vector.multi_reduction <add>, %46, %cst_21 [2] : vector<2x8x8xf32> to vector<2x8xf32>
    %48 = vector.shape_cast %47 : vector<2x8xf32> to vector<2x8x1xf32>
    %49 = tpu.reciprocal %48 {approx = true} : vector<2x8x1xf32> -> vector<2x8x1xf32>
    %50 = vector.broadcast %49 : vector<2x8x1xf32> to vector<2x8x8xf32>
    %51 = arith.mulf %46, %50 : vector<2x8x8xf32>
    %52 = vector.extract_strided_slice %25 {offsets = [0, 0, 0], sizes = [1, 1, 1], strides = [1, 1, 1]} : vector<2x1x1xf32> to vector<1x1x1xf32>
    %53 = vector.shape_cast %52 : vector<1x1x1xf32> to vector<1x1xf32>
    %cst_22 = arith.constant dense<0xFF800000> : vector<2x8xf32>
    %54 = vector.multi_reduction <maximumf>, %41, %cst_22 [2] : vector<2x8x8xf32> to vector<2x8xf32>
    %55 = vector.shape_cast %54 : vector<2x8xf32> to vector<2x8x1xf32>
    %56 = vector.broadcast %55 : vector<2x8x1xf32> to vector<2x8x8xf32>
    %57 = arith.subf %41, %56 : vector<2x8x8xf32>
    %58 = math.exp %57 : vector<2x8x8xf32>
    %cst_23 = arith.constant dense<0.000000e+00> : vector<2x8xf32>
    %59 = vector.multi_reduction <add>, %58, %cst_23 [2] : vector<2x8x8xf32> to vector<2x8xf32>
    %60 = vector.shape_cast %59 : vector<2x8xf32> to vector<2x8x1xf32>
    %61 = tpu.reciprocal %60 {approx = true} : vector<2x8x1xf32> -> vector<2x8x1xf32>
    %62 = vector.broadcast %61 : vector<2x8x1xf32> to vector<2x8x8xf32>
    %63 = arith.mulf %58, %62 : vector<2x8x8xf32>
    %64 = vector.shape_cast %53 : vector<1x1xf32> to vector<1x1x1xf32>
    %65 = vector.broadcast %64 : vector<1x1x1xf32> to vector<2x8x8xf32>
    %66 = arith.mulf %65, %63 : vector<2x8x8xf32>
    %67 = arith.subf %51, %66 : vector<2x8x8xf32>
    %68 = arith.truncf %67 : vector<2x8x8xf32> to vector<2x8x8xbf16>
    "tpu.trace_start"() <{level = 10 : i32, message = "bqk,bkd->bqd"}> : () -> ()
    %cst_24 = arith.constant dense<0.000000e+00> : vector<2x8x8xf32>
    %69 = tpu.matmul %68, %35, %cst_24 {dimension_numbers = #tpu.dot_dimension_numbers<[2], [1], [1], [2], [0, 0, 0, 1, 1, 2], [0], [0]>} : vector<2x8x8xbf16>, vector<2x8x8xbf16>, vector<2x8x8xf32> -> vector<2x8x8xf32>
    "tpu.trace_stop"() : () -> ()
    %70 = arith.mulf %69, %69 : vector<2x8x8xf32>
    %cst_25 = arith.constant dense<0.000000e+00> : vector<2x8xf32>
    %71 = vector.multi_reduction <add>, %70, %cst_25 [2] : vector<2x8x8xf32> to vector<2x8xf32>
    %72 = vector.shape_cast %71 : vector<2x8xf32> to vector<2x8x1xf32>
    %cst_26 = arith.constant 8.000000e+00 : f32
    %73 = vector.broadcast %cst_26 : f32 to vector<2x8x1xf32>
    %74 = arith.divf %72, %73 : vector<2x8x1xf32>
    %cst_27 = arith.constant 9.99999997E-7 : f32
    %75 = vector.broadcast %cst_27 : f32 to vector<2x8x1xf32>
    %76 = arith.addf %74, %75 : vector<2x8x1xf32>
    %77 = math.rsqrt %76 : vector<2x8x1xf32>
    %78 = vector.broadcast %77 : vector<2x8x1xf32> to vector<2x8x8xf32>
    %79 = arith.mulf %69, %78 : vector<2x8x8xf32>
    %cst_28 = arith.constant 1.000000e+00 : f32
    %80 = vector.broadcast %cst_28 : f32 to vector<2x8x8xf32>
    %81 = arith.mulf %79, %80 : vector<2x8x8xf32>
    %cst_29 = arith.constant 2.000000e-01 : f32
    %82 = vector.broadcast %cst_29 : f32 to vector<2x8x8xf32>
    %83 = arith.mulf %81, %82 : vector<2x8x8xf32>
    %84 = vector.extract_strided_slice %24 {offsets = [0, 8], sizes = [16, 8], strides = [1, 1]} : vector<16x80xbf16> to vector<16x8xbf16>
    %85 = vector.shape_cast %84 : vector<16x8xbf16> to vector<2x8x8xbf16>
    %86 = vector.extract_strided_slice %24 {offsets = [0, 24], sizes = [16, 8], strides = [1, 1]} : vector<16x80xbf16> to vector<16x8xbf16>
    %87 = vector.shape_cast %86 : vector<16x8xbf16> to vector<2x8x8xbf16>
    %88 = vector.extract_strided_slice %24 {offsets = [0, 40], sizes = [16, 8], strides = [1, 1]} : vector<16x80xbf16> to vector<16x8xbf16>
    %89 = vector.shape_cast %88 : vector<16x8xbf16> to vector<2x8x8xbf16>
    %90 = vector.extract_strided_slice %24 {offsets = [0, 56], sizes = [16, 8], strides = [1, 1]} : vector<16x80xbf16> to vector<16x8xbf16>
    %91 = vector.shape_cast %90 : vector<16x8xbf16> to vector<2x8x8xbf16>
    %92 = vector.extract_strided_slice %24 {offsets = [0, 72], sizes = [16, 8], strides = [1, 1]} : vector<16x80xbf16> to vector<16x8xbf16>
    %93 = vector.shape_cast %92 : vector<16x8xbf16> to vector<2x8x8xbf16>
    "tpu.trace_start"() <{level = 10 : i32, message = "bqd,bkd->bqk"}> : () -> ()
    %cst_30 = arith.constant dense<0.000000e+00> : vector<2x8x8xf32>
    %94 = tpu.matmul %85, %89, %cst_30 {dimension_numbers = #tpu.dot_dimension_numbers<[2], [2], [1], [1], [0, 0, 0, 1, 1, 1], [0], [0]>} : vector<2x8x8xbf16>, vector<2x8x8xbf16>, vector<2x8x8xf32> -> vector<2x8x8xf32>
    "tpu.trace_stop"() : () -> ()
    %95 = vector.broadcast %7 : vector<2x1x8xf32> to vector<2x8x8xf32>
    %96 = arith.addf %94, %95 : vector<2x8x8xf32>
    "tpu.trace_start"() <{level = 10 : i32, message = "bqd,bkd->bqk"}> : () -> ()
    %cst_31 = arith.constant dense<0.000000e+00> : vector<2x8x8xf32>
    %97 = tpu.matmul %87, %91, %cst_31 {dimension_numbers = #tpu.dot_dimension_numbers<[2], [2], [1], [1], [0, 0, 0, 1, 1, 1], [0], [0]>} : vector<2x8x8xbf16>, vector<2x8x8xbf16>, vector<2x8x8xf32> -> vector<2x8x8xf32>
    "tpu.trace_stop"() : () -> ()
    %98 = vector.broadcast %7 : vector<2x1x8xf32> to vector<2x8x8xf32>
    %99 = arith.addf %97, %98 : vector<2x8x8xf32>
    %cst_32 = arith.constant dense<0xFF800000> : vector<2x8xf32>
    %100 = vector.multi_reduction <maximumf>, %96, %cst_32 [2] : vector<2x8x8xf32> to vector<2x8xf32>
    %101 = vector.shape_cast %100 : vector<2x8xf32> to vector<2x8x1xf32>
    %102 = vector.broadcast %101 : vector<2x8x1xf32> to vector<2x8x8xf32>
    %103 = arith.subf %96, %102 : vector<2x8x8xf32>
    %104 = math.exp %103 : vector<2x8x8xf32>
    %cst_33 = arith.constant dense<0.000000e+00> : vector<2x8xf32>
    %105 = vector.multi_reduction <add>, %104, %cst_33 [2] : vector<2x8x8xf32> to vector<2x8xf32>
    %106 = vector.shape_cast %105 : vector<2x8xf32> to vector<2x8x1xf32>
    %107 = tpu.reciprocal %106 {approx = true} : vector<2x8x1xf32> -> vector<2x8x1xf32>
    %108 = vector.broadcast %107 : vector<2x8x1xf32> to vector<2x8x8xf32>
    %109 = arith.mulf %104, %108 : vector<2x8x8xf32>
    %110 = vector.extract_strided_slice %25 {offsets = [1, 0, 0], sizes = [1, 1, 1], strides = [1, 1, 1]} : vector<2x1x1xf32> to vector<1x1x1xf32>
    %111 = vector.shape_cast %110 : vector<1x1x1xf32> to vector<1x1xf32>
    %cst_34 = arith.constant dense<0xFF800000> : vector<2x8xf32>
    %112 = vector.multi_reduction <maximumf>, %99, %cst_34 [2] : vector<2x8x8xf32> to vector<2x8xf32>
    %113 = vector.shape_cast %112 : vector<2x8xf32> to vector<2x8x1xf32>
    %114 = vector.broadcast %113 : vector<2x8x1xf32> to vector<2x8x8xf32>
    %115 = arith.subf %99, %114 : vector<2x8x8xf32>
    %116 = math.exp %115 : vector<2x8x8xf32>
    %cst_35 = arith.constant dense<0.000000e+00> : vector<2x8xf32>
    %117 = vector.multi_reduction <add>, %116, %cst_35 [2] : vector<2x8x8xf32> to vector<2x8xf32>
    %118 = vector.shape_cast %117 : vector<2x8xf32> to vector<2x8x1xf32>
    %119 = tpu.reciprocal %118 {approx = true} : vector<2x8x1xf32> -> vector<2x8x1xf32>
    %120 = vector.broadcast %119 : vector<2x8x1xf32> to vector<2x8x8xf32>
    %121 = arith.mulf %116, %120 : vector<2x8x8xf32>
    %122 = vector.shape_cast %111 : vector<1x1xf32> to vector<1x1x1xf32>
    %123 = vector.broadcast %122 : vector<1x1x1xf32> to vector<2x8x8xf32>
    %124 = arith.mulf %123, %121 : vector<2x8x8xf32>
    %125 = arith.subf %109, %124 : vector<2x8x8xf32>
    %126 = arith.truncf %125 : vector<2x8x8xf32> to vector<2x8x8xbf16>
    "tpu.trace_start"() <{level = 10 : i32, message = "bqk,bkd->bqd"}> : () -> ()
    %cst_36 = arith.constant dense<0.000000e+00> : vector<2x8x8xf32>
    %127 = tpu.matmul %126, %93, %cst_36 {dimension_numbers = #tpu.dot_dimension_numbers<[2], [1], [1], [2], [0, 0, 0, 1, 1, 2], [0], [0]>} : vector<2x8x8xbf16>, vector<2x8x8xbf16>, vector<2x8x8xf32> -> vector<2x8x8xf32>
    "tpu.trace_stop"() : () -> ()
    %128 = arith.mulf %127, %127 : vector<2x8x8xf32>
    %cst_37 = arith.constant dense<0.000000e+00> : vector<2x8xf32>
    %129 = vector.multi_reduction <add>, %128, %cst_37 [2] : vector<2x8x8xf32> to vector<2x8xf32>
    %130 = vector.shape_cast %129 : vector<2x8xf32> to vector<2x8x1xf32>
    %cst_38 = arith.constant 8.000000e+00 : f32
    %131 = vector.broadcast %cst_38 : f32 to vector<2x8x1xf32>
    %132 = arith.divf %130, %131 : vector<2x8x1xf32>
    %cst_39 = arith.constant 9.99999997E-7 : f32
    %133 = vector.broadcast %cst_39 : f32 to vector<2x8x1xf32>
    %134 = arith.addf %132, %133 : vector<2x8x1xf32>
    %135 = math.rsqrt %134 : vector<2x8x1xf32>
    %136 = vector.broadcast %135 : vector<2x8x1xf32> to vector<2x8x8xf32>
    %137 = arith.mulf %127, %136 : vector<2x8x8xf32>
    %cst_40 = arith.constant 1.000000e+00 : f32
    %138 = vector.broadcast %cst_40 : f32 to vector<2x8x8xf32>
    %139 = arith.mulf %137, %138 : vector<2x8x8xf32>
    %cst_41 = arith.constant 2.000000e-01 : f32
    %140 = vector.broadcast %cst_41 : f32 to vector<2x8x8xf32>
    %141 = arith.mulf %139, %140 : vector<2x8x8xf32>
    %142 = tpu.concatenate %83, %141 in 2 : vector<2x8x8xf32>, vector<2x8x8xf32> -> vector<2x8x16xf32>
    %143 = vector.shape_cast %142 : vector<2x8x16xf32> to vector<16x16xf32>
    %144 = arith.truncf %143 : vector<16x16xf32> to vector<16x16xbf16>
    %c0_42 = arith.constant 0 : index
    %c0_43 = arith.constant 0 : index
    %145 = vector.load %arg7[%c0_42, %c0_43] : memref<16x32xbf16, #tpu.memory_space<vmem>>, vector<16x32xbf16>
    %cst_44 = arith.constant dense<0.000000e+00> : vector<16x32xf32>
    %146 = tpu.matmul %144, %145, %cst_44 {dimension_numbers = #tpu.dot_dimension_numbers<[1], [0], [0], [1], [0, 0, 1, 1], [], []>} : vector<16x16xbf16>, vector<16x32xbf16>, vector<16x32xf32> -> vector<16x32xf32>
    %147 = arith.addf %146, %20 : vector<16x32xf32>
    %c0_45 = arith.constant 0 : index
    %c0_46 = arith.constant 0 : index
    %148 = vector.load %arg5[%c0_45, %c0_46] : memref<1x32xf32, #tpu.memory_space<vmem>>, vector<1x32xf32>
    %149 = arith.mulf %147, %147 : vector<16x32xf32>
    %cst_47 = arith.constant dense<0.000000e+00> : vector<16xf32>
    %150 = vector.multi_reduction <add>, %149, %cst_47 [1] : vector<16x32xf32> to vector<16xf32>
    %151 = vector.shape_cast %150 : vector<16xf32> to vector<16x1xf32>
    %cst_48 = arith.constant 3.200000e+01 : f32
    %152 = vector.broadcast %cst_48 : f32 to vector<16x1xf32>
    %153 = arith.divf %151, %152 : vector<16x1xf32>
    %cst_49 = arith.constant 9.99999997E-7 : f32
    %154 = vector.broadcast %cst_49 : f32 to vector<16x1xf32>
    %155 = arith.addf %153, %154 : vector<16x1xf32>
    %156 = math.rsqrt %155 : vector<16x1xf32>
    %157 = vector.broadcast %156 : vector<16x1xf32> to vector<16x32xf32>
    %158 = arith.mulf %147, %157 : vector<16x32xf32>
    %159 = vector.broadcast %148 : vector<1x32xf32> to vector<16x32xf32>
    %160 = arith.mulf %158, %159 : vector<16x32xf32>
    %161 = arith.truncf %160 : vector<16x32xf32> to vector<16x32xbf16>
    %c0_50 = arith.constant 0 : index
    %c0_51 = arith.constant 0 : index
    %162 = vector.load %arg8[%c0_50, %c0_51] : memref<32x64xbf16, #tpu.memory_space<vmem>>, vector<32x64xbf16>
    %cst_52 = arith.constant dense<0.000000e+00> : vector<16x64xf32>
    %163 = tpu.matmul %161, %162, %cst_52 {dimension_numbers = #tpu.dot_dimension_numbers<[1], [0], [0], [1], [0, 0, 1, 1], [], []>} : vector<16x32xbf16>, vector<32x64xbf16>, vector<16x64xf32> -> vector<16x64xf32>
    %164 = vector.extract_strided_slice %163 {offsets = [0, 0], sizes = [16, 32], strides = [1, 1]} : vector<16x64xf32> to vector<16x32xf32>
    %165 = vector.extract_strided_slice %163 {offsets = [0, 32], sizes = [16, 32], strides = [1, 1]} : vector<16x64xf32> to vector<16x32xf32>
    %166 = arith.negf %164 : vector<16x32xf32>
    %167 = math.exp %166 : vector<16x32xf32>
    %cst_53 = arith.constant 1.000000e+00 : f32
    %168 = vector.broadcast %cst_53 : f32 to vector<16x32xf32>
    %169 = arith.addf %168, %167 : vector<16x32xf32>
    %170 = arith.divf %168, %169 : vector<16x32xf32>
    %171 = arith.mulf %164, %170 : vector<16x32xf32>
    %172 = arith.mulf %171, %165 : vector<16x32xf32>
    %173 = arith.truncf %172 : vector<16x32xf32> to vector<16x32xbf16>
    %c0_54 = arith.constant 0 : index
    %c0_55 = arith.constant 0 : index
    %174 = vector.load %arg9[%c0_54, %c0_55] : memref<32x32xbf16, #tpu.memory_space<vmem>>, vector<32x32xbf16>
    %cst_56 = arith.constant dense<0.000000e+00> : vector<16x32xf32>
    %175 = tpu.matmul %173, %174, %cst_56 {dimension_numbers = #tpu.dot_dimension_numbers<[1], [0], [0], [1], [0, 0, 1, 1], [], []>} : vector<16x32xbf16>, vector<32x32xbf16>, vector<16x32xf32> -> vector<16x32xf32>
    %176 = arith.addf %175, %147 : vector<16x32xf32>
    %177 = vector.shape_cast %176 : vector<16x32xf32> to vector<2x8x32xf32>
    %c0_57 = arith.constant 0 : index
    %c0_58 = arith.constant 0 : index
    %c0_59 = arith.constant 0 : index
    %178 = vector.load %arg10[%c0_57, %c0_58, %c0_59] : memref<2x8x32xf32, #tpu.memory_space<vmem>>, vector<2x8x32xf32>
    tpu.vector_store %arg10[%c0_57, %c0_58, %c0_59], %177 {strides = array<i32>} : memref<2x8x32xf32, #tpu.memory_space<vmem>>, vector<2x8x32xf32>,
    return
  }
  func.func @transform_0(%arg0: i32) -> (i32, i32, i32) {
    %c0_i32 = arith.constant 0 : i32
    %c0_i32_0 = arith.constant 0 : i32
    %c0_i32_1 = arith.constant 0 : i32
    %c0_i32_2 = arith.constant 0 : i32
    return %c0_i32, %c0_i32_0, %c0_i32_1 : i32, i32, i32
  }
  func.func @transform_1(%arg0: i32) -> (i32, i32, i32) {
    %c0_i32 = arith.constant 0 : i32
    %c0_i32_0 = arith.constant 0 : i32
    %c0_i32_1 = arith.constant 0 : i32
    return %arg0, %c0_i32, %c0_i32_0 : i32, i32, i32
  }
  func.func @transform_2(%arg0: i32) -> (i32, i32, i32) {
    %c0_i32 = arith.constant 0 : i32
    %c0_i32_0 = arith.constant 0 : i32
    %c0_i32_1 = arith.constant 0 : i32
    return %arg0, %c0_i32, %c0_i32_0 : i32, i32, i32
  }
  func.func @transform_3(%arg0: i32) -> (i32, i32) {
    %c0_i32 = arith.constant 0 : i32
    %c0_i32_0 = arith.constant 0 : i32
    %c0_i32_1 = arith.constant 0 : i32
    return %c0_i32, %c0_i32_0 : i32, i32
  }
  func.func @transform_4(%arg0: i32) -> (i32, i32) {
    %c0_i32 = arith.constant 0 : i32
    %c0_i32_0 = arith.constant 0 : i32
    %c0_i32_1 = arith.constant 0 : i32
    return %c0_i32, %c0_i32_0 : i32, i32
  }
  func.func @transform_5(%arg0: i32) -> (i32, i32) {
    %c0_i32 = arith.constant 0 : i32
    %c0_i32_0 = arith.constant 0 : i32
    %c0_i32_1 = arith.constant 0 : i32
    return %c0_i32, %c0_i32_0 : i32, i32
  }
  func.func @transform_6(%arg0: i32) -> (i32, i32) {
    %c0_i32 = arith.constant 0 : i32
    %c0_i32_0 = arith.constant 0 : i32
    %c0_i32_1 = arith.constant 0 : i32
    return %c0_i32, %c0_i32_0 : i32, i32
  }
  func.func @transform_7(%arg0: i32) -> (i32, i32) {
    %c0_i32 = arith.constant 0 : i32
    %c0_i32_0 = arith.constant 0 : i32
    %c0_i32_1 = arith.constant 0 : i32
    return %c0_i32, %c0_i32_0 : i32, i32
  }
  func.func @transform_8(%arg0: i32) -> (i32, i32) {
    %c0_i32 = arith.constant 0 : i32
    %c0_i32_0 = arith.constant 0 : i32
    %c0_i32_1 = arith.constant 0 : i32
    return %c0_i32, %c0_i32_0 : i32, i32
  }
  func.func @transform_9(%arg0: i32) -> (i32, i32, i32) {
    %c0_i32 = arith.constant 0 : i32
    %c0_i32_0 = arith.constant 0 : i32
    %c0_i32_1 = arith.constant 0 : i32
    return %arg0, %c0_i32, %c0_i32_0 : i32, i32, i32
  }
}

</mosaic_0001>

<llo_original>
// kernel: tpu_custom_call.1
$region0: #{tpu_custom_call.1}
  #allocation0 [shape = 'u32[]', space=smem, size = 0x4, offset = 0x4, fixed_abs, tag = 'smem constant byte address 0x4 - core index']
  #allocation1 [shape = 'u32[72,128]{1,0:T(1,128)}', space=vmem, size = 0x9000, scoped, tag = 'internal scratch']
  %s0 = inlined_call_operand.vmem [shape: f32[2,1,1], index: 0, kind: input, shape index: {}]
  %s1 = inlined_call_operand.hbm [shape: f32[4,8,32], index: 1, kind: input, shape index: {}]
  %s2 = inlined_call_operand.hbm [shape: f32[4,1,8], index: 2, kind: input, shape index: {}]
  %s3 = inlined_call_operand.hbm [shape: f32[1,32], index: 3, kind: input, shape index: {}]
  %s4 = inlined_call_operand.hbm [shape: f32[1,32], index: 4, kind: input, shape index: {}]
  %s5 = inlined_call_operand.hbm [shape: bf16[32,80], index: 5, kind: input, shape index: {}]
  %s6 = inlined_call_operand.vmem [shape: bf16[16,32], index: 6, kind: input, shape index: {}]
  %s7 = inlined_call_operand.hbm [shape: bf16[32,64], index: 7, kind: input, shape index: {}]
  %s8 = inlined_call_operand.hbm [shape: bf16[32,32], index: 8, kind: input, shape index: {}]
  %s9 = inlined_call_operand.hbm [shape: f32[4,8,32], index: 9, kind: output, shape index: {}]
  %s10 = sld [smem:[#allocation0]]
  $region97: #{tpu_custom_call.1} parent=0
    _
  %s12 = ssub.s32 1, %s10
  %s13 = scalar_select 0, %s12, %s10
  $region1: #{tpu_custom_call.1} parent=0
    #allocation2 [shape = 'u8[16384]{0}', space=vmem, size = 0x4000, scoped, tag = 'input window, operand 1']
    #allocation3 [shape = 's32[2]{0}', space=sflag, size = 0x8, scoped, tag = 'scoped memory for tpu_custom_call.1']
    #allocation4 [shape = 's32[2]{0}', space=sflag, size = 0x8, scoped, tag = 'scoped memory for tpu_custom_call.1']
    #allocation5 [shape = 'u8[2048]{0}', space=vmem, size = 0x800, scoped, tag = 'input window, operand 2']
    #allocation6 [shape = 's32[2]{0}', space=sflag, size = 0x8, scoped, tag = 'scoped memory for tpu_custom_call.1']
    #allocation7 [shape = 'u8[512]{0}', space=vmem, size = 0x400, scoped, tag = 'input window, operand 3, single buffered']
    #allocation8 [shape = 'u8[512]{0}', space=vmem, size = 0x400, scoped, tag = 'input window, operand 4, single buffered']
    #allocation9 [shape = 's32[1]{0}', space=sflag, size = 0x4, scoped, tag = 'scoped memory for tpu_custom_call.1']
    #allocation10 [shape = 'u8[8192]{0}', space=vmem, size = 0x2000, scoped, tag = 'input window, operand 5, single buffered']
    #allocation11 [shape = 'u8[8192]{0}', space=vmem, size = 0x2000, scoped, tag = 'input window, operand 7, single buffered']
    #allocation12 [shape = 's32[1]{0}', space=sflag, size = 0x4, scoped, tag = 'scoped memory for tpu_custom_call.1']
    #allocation13 [shape = 'u8[8192]{0}', space=vmem, size = 0x2000, scoped, tag = 'input window, operand 8, single buffered']
    #allocation14 [shape = 'u8[16384]{0}', space=vmem, size = 0x4000, scoped, tag = 'output window, operand 0']
    %14 = vsyncpa [#allocation3], 0
    %s15 = scalar_lea.sflag [#allocation3], 1
    %16 = vsyncpa %s15, 0
    %17 = vsyncpa [#allocation6], 0
    %s18 = scalar_lea.sflag [#allocation6], 1
    %19 = vsyncpa %s18, 0
    %20 = vsyncpa [#allocation9], 0
    %21 = vsyncpa [#allocation12], 0
    %22 = vsyncpa [#allocation4], 0
    %s23 = scalar_lea.sflag [#allocation4], 1
    %24 = vsyncpa %s23, 0
    loop: start=0, step=1, limit=4
    $region2: #{tpu_custom_call.1} parent=1 // loop_pre_header
      _
    $region3: #{tpu_custom_call.1} parent=1 // loop_header
      %s26 = sphi 0, %s30
      %p27 = scmp.ge.s32.totalorder %s26, 4
      %s34 = sphi 0, %s34
      %s36 = sphi 0, %s34
      %s37 = sphi 0, %s36
      %s51 = sphi 0, %s37
      %s57 = sphi 0, %s59
      %s60 = sphi 0, %s57
      %s61 = sphi 0, %s60
      %s77 = sphi 0, %s61
      %s83 = sphi 0, %s85
      %s86 = sphi 0, %s83
      %s87 = sphi 0, %s86
      %s103 = sphi 0, %s87
      %s107 = sphi 0, %s107
      %s109 = sphi 0, %s107
      %s110 = sphi 0, %s109
      %s124 = sphi 0, %s110
      %s128 = sphi 0, %s128
      %s130 = sphi 0, %s128
      %s131 = sphi 0, %s130
      %s145 = sphi 0, %s131
      %s149 = sphi 0, %s149
      %s151 = sphi 0, %s149
      %s152 = sphi 0, %s151
      %s166 = sphi 0, %s152
      %s170 = sphi 0, %s170
      %s172 = sphi 0, %s170
      %s173 = sphi 0, %s172
      %s187 = sphi 0, %s173
      %s191 = sphi 0, %s191
      %s193 = sphi 0, %s191
      %s194 = sphi 0, %s193
      %s208 = sphi 0, %s194
      %s212 = sphi 0, %s212
      %s214 = sphi 0, %s212
      %s215 = sphi 0, %s214
      %s229 = sphi 0, %s215
      %s235 = sphi 0, %s237
      %s238 = sphi 0, %s235
      %s239 = sphi 0, %s238
      %s255 = sphi 0, %s239
    $region4: #{tpu_custom_call.1} parent=1 // loop_header_branch
      %29 = sbr.rel (%p27) target = $region8
    $region5: #{tpu_custom_call.1} parent=1 // loop_body
      %s31 = ssub.s32 %s26, 1
      %s32 = ssub.s32 %s26, 2
      %s33 = sadd.s32 %s26, 1
      %s35 = sadd.s32 %s34, 1
      %p38 = scmp.eq.s32.totalorder %s26, 1
      %p39 = scmp.ne.s32.totalorder %s34, %s36
      %p40 = scmp.eq.s32.totalorder %s26, 0
      %p41 = por %p39, %p40
      %p42 = scmp.ne.s32.totalorder %s34, %s36
      %p43 = scmp.eq.s32.totalorder %s31, 1
      %p44 = por %p42, %p43
      %p45 = scmp.ne.s32.totalorder %s36, %s37
      %p46 = scmp.eq.s32.totalorder %s31, 0
      %p47 = por %p45, %p46
      %p48 = scmp.ne.s32.totalorder %s36, %s37
      %p49 = scmp.eq.s32.totalorder %s32, 1
      %p50 = por %p48, %p49
      %p52 = scmp.ne.s32.totalorder %s37, %s51
      %p53 = scmp.eq.s32.totalorder %s32, 0
      %p54 = por %p52, %p53
      %s55 = ssub.s32 %s26, %s33
      %p56 = scmp.eq.s32.totalorder %s55, 0
      %s58 = sadd.s32 %s57, 1
      %s59 = scalar_select %p56, %s57, %s58
      %p62 = pneg %p56
      %p63 = scmp.eq.s32.totalorder %s26, 1
      %p64 = por %p62, %p63
      %p65 = scmp.ne.s32.totalorder %s57, %s60
      %p66 = scmp.eq.s32.totalorder %s26, 0
      %p67 = por %p65, %p66
      %p68 = scmp.ne.s32.totalorder %s57, %s60
      %p69 = scmp.eq.s32.totalorder %s31, 1
      %p70 = por %p68, %p69
      %p71 = scmp.ne.s32.totalorder %s60, %s61
      %p72 = scmp.eq.s32.totalorder %s31, 0
      %p73 = por %p71, %p72
      %p74 = scmp.ne.s32.totalorder %s60, %s61
      %p75 = scmp.eq.s32.totalorder %s32, 1
      %p76 = por %p74, %p75
      %p78 = scmp.ne.s32.totalorder %s61, %s77
      %p79 = scmp.eq.s32.totalorder %s32, 0
      %p80 = por %p78, %p79
      %s81 = ssub.s32 %s26, %s33
      %p82 = scmp.eq.s32.totalorder %s81, 0
      %s84 = sadd.s32 %s83, 1
      %s85 = scalar_select %p82, %s83, %s84
      %p88 = pneg %p82
      %p89 = scmp.eq.s32.totalorder %s26, 1
      %p90 = por %p88, %p89
      %p91 = scmp.ne.s32.totalorder %s83, %s86
      %p92 = scmp.eq.s32.totalorder %s26, 0
      %p93 = por %p91, %p92
      %p94 = scmp.ne.s32.totalorder %s83, %s86
      %p95 = scmp.eq.s32.totalorder %s31, 1
      %p96 = por %p94, %p95
      %p97 = scmp.ne.s32.totalorder %s86, %s87
      %p98 = scmp.eq.s32.totalorder %s31, 0
      %p99 = por %p97, %p98
      %p100 = scmp.ne.s32.totalorder %s86, %s87
      %p101 = scmp.eq.s32.totalorder %s32, 1
      %p102 = por %p100, %p101
      %p104 = scmp.ne.s32.totalorder %s87, %s103
      %p105 = scmp.eq.s32.totalorder %s32, 0
      %p106 = por %p104, %p105
      %s108 = sadd.s32 %s107, 1
      %p111 = scmp.eq.s32.totalorder %s26, 1
      %p112 = scmp.ne.s32.totalorder %s107, %s109
      %p113 = scmp.eq.s32.totalorder %s26, 0
      %p114 = por %p112, %p113
      %p115 = scmp.ne.s32.totalorder %s107, %s109
      %p116 = scmp.eq.s32.totalorder %s31, 1
      %p117 = por %p115, %p116
      %p118 = scmp.ne.s32.totalorder %s109, %s110
      %p119 = scmp.eq.s32.totalorder %s31, 0
      %p120 = por %p118, %p119
      %p121 = scmp.ne.s32.totalorder %s109, %s110
      %p122 = scmp.eq.s32.totalorder %s32, 1
      %p123 = por %p121, %p122
      %p125 = scmp.ne.s32.totalorder %s110, %s124
      %p126 = scmp.eq.s32.totalorder %s32, 0
      %p127 = por %p125, %p126
      %s129 = sadd.s32 %s128, 1
      %p132 = scmp.eq.s32.totalorder %s26, 1
      %p133 = scmp.ne.s32.totalorder %s128, %s130
      %p134 = scmp.eq.s32.totalorder %s26, 0
      %p135 = por %p133, %p134
      %p136 = scmp.ne.s32.totalorder %s128, %s130
      %p137 = scmp.eq.s32.totalorder %s31, 1
      %p138 = por %p136, %p137
      %p139 = scmp.ne.s32.totalorder %s130, %s131
      %p140 = scmp.eq.s32.totalorder %s31, 0
      %p141 = por %p139, %p140
      %p142 = scmp.ne.s32.totalorder %s130, %s131
      %p143 = scmp.eq.s32.totalorder %s32, 1
      %p144 = por %p142, %p143
      %p146 = scmp.ne.s32.totalorder %s131, %s145
      %p147 = scmp.eq.s32.totalorder %s32, 0
      %p148 = por %p146, %p147
      %s150 = sadd.s32 %s149, 1
      %p153 = scmp.eq.s32.totalorder %s26, 1
      %p154 = scmp.ne.s32.totalorder %s149, %s151
      %p155 = scmp.eq.s32.totalorder %s26, 0
      %p156 = por %p154, %p155
      %p157 = scmp.ne.s32.totalorder %s149, %s151
      %p158 = scmp.eq.s32.totalorder %s31, 1
      %p159 = por %p157, %p158
      %p160 = scmp.ne.s32.totalorder %s151, %s152
      %p161 = scmp.eq.s32.totalorder %s31, 0
      %p162 = por %p160, %p161
      %p163 = scmp.ne.s32.totalorder %s151, %s152
      %p164 = scmp.eq.s32.totalorder %s32, 1
      %p165 = por %p163, %p164
      %p167 = scmp.ne.s32.totalorder %s152, %s166
      %p168 = scmp.eq.s32.totalorder %s32, 0
      %p169 = por %p167, %p168
      %s171 = sadd.s32 %s170, 1
      %p174 = scmp.eq.s32.totalorder %s26, 1
      %p175 = scmp.ne.s32.totalorder %s170, %s172
      %p176 = scmp.eq.s32.totalorder %s26, 0
      %p177 = por %p175, %p176
      %p178 = scmp.ne.s32.totalorder %s170, %s172
      %p179 = scmp.eq.s32.totalorder %s31, 1
      %p180 = por %p178, %p179
      %p181 = scmp.ne.s32.totalorder %s172, %s173
      %p182 = scmp.eq.s32.totalorder %s31, 0
      %p183 = por %p181, %p182
      %p184 = scmp.ne.s32.totalorder %s172, %s173
      %p185 = scmp.eq.s32.totalorder %s32, 1
      %p186 = por %p184, %p185
      %p188 = scmp.ne.s32.totalorder %s173, %s187
      %p189 = scmp.eq.s32.totalorder %s32, 0
      %p190 = por %p188, %p189
      %s192 = sadd.s32 %s191, 1
      %p195 = scmp.eq.s32.totalorder %s26, 1
      %p196 = scmp.ne.s32.totalorder %s191, %s193
      %p197 = scmp.eq.s32.totalorder %s26, 0
      %p198 = por %p196, %p197
      %p199 = scmp.ne.s32.totalorder %s191, %s193
      %p200 = scmp.eq.s32.totalorder %s31, 1
      %p201 = por %p199, %p200
      %p202 = scmp.ne.s32.totalorder %s193, %s194
      %p203 = scmp.eq.s32.totalorder %s31, 0
      %p204 = por %p202, %p203
      %p205 = scmp.ne.s32.totalorder %s193, %s194
      %p206 = scmp.eq.s32.totalorder %s32, 1
      %p207 = por %p205, %p206
      %p209 = scmp.ne.s32.totalorder %s194, %s208
      %p210 = scmp.eq.s32.totalorder %s32, 0
      %p211 = por %p209, %p210
      %s213 = sadd.s32 %s212, 1
      %p216 = scmp.eq.s32.totalorder %s26, 1
      %p217 = scmp.ne.s32.totalorder %s212, %s214
      %p218 = scmp.eq.s32.totalorder %s26, 0
      %p219 = por %p217, %p218
      %p220 = scmp.ne.s32.totalorder %s212, %s214
      %p221 = scmp.eq.s32.totalorder %s31, 1
      %p222 = por %p220, %p221
      %p223 = scmp.ne.s32.totalorder %s214, %s215
      %p224 = scmp.eq.s32.totalorder %s31, 0
      %p225 = por %p223, %p224
      %p226 = scmp.ne.s32.totalorder %s214, %s215
      %p227 = scmp.eq.s32.totalorder %s32, 1
      %p228 = por %p226, %p227
      %p230 = scmp.ne.s32.totalorder %s215, %s229
      %p231 = scmp.eq.s32.totalorder %s32, 0
      %p232 = por %p230, %p231
      %s233 = ssub.s32 %s26, %s33
      %p234 = scmp.eq.s32.totalorder %s233, 0
      %s236 = sadd.s32 %s235, 1
      %s237 = scalar_select %p234, %s235, %s236
      %p240 = pneg %p234
      %p241 = scmp.eq.s32.totalorder %s26, 1
      %p242 = por %p240, %p241
      %p243 = scmp.ne.s32.totalorder %s235, %s238
      %p244 = scmp.eq.s32.totalorder %s26, 0
      %p245 = por %p243, %p244
      %p246 = scmp.ne.s32.totalorder %s235, %s238
      %p247 = scmp.eq.s32.totalorder %s31, 1
      %p248 = por %p246, %p247
      %p249 = scmp.ne.s32.totalorder %s238, %s239
      %p250 = scmp.eq.s32.totalorder %s31, 0
      %p251 = por %p249, %p250
      %p252 = scmp.ne.s32.totalorder %s238, %s239
      %p253 = scmp.eq.s32.totalorder %s32, 1
      %p254 = por %p252, %p253
      %p256 = scmp.ne.s32.totalorder %s239, %s255
      %p257 = scmp.eq.s32.totalorder %s32, 0
      %p258 = por %p256, %p257
      %p259 = scmp.le.s32.totalorder 1, %s26
      %p260 = scmp.lt.s32.totalorder %s26, 3
      %p261 = pnand %p259, %p260
      %p262 = pneg %p261
      // Predicated region
      $region9: #{tpu_custom_call.1} parent=5 // pred_check
        _
      $region10: #{tpu_custom_call.1} parent=5 // pred_check_branch
        %264 = sbr.rel (%p261) target = $region12
      $region11: #{tpu_custom_call.1} parent=5 // pred_region
        %s265 = ssub.s32 %s26, 1
        // Predicated region
        $region13: #{tpu_custom_call.1} parent=11 // pred_check
          %p266 = pneg %p47
        $region14: #{tpu_custom_call.1} parent=11 // pred_check_branch
          %268 = sbr.rel (%p266) target = $region16
        $region15: #{tpu_custom_call.1} parent=11 // pred_region
          _
        $region16: #{tpu_custom_call.1} parent=11 // pred_fallthru
          _
        // Predicated region
        $region17: #{tpu_custom_call.1} parent=11 // pred_check
          %p269 = pneg %p120
        $region18: #{tpu_custom_call.1} parent=11 // pred_check_branch
          %271 = sbr.rel (%p269) target = $region20
        $region19: #{tpu_custom_call.1} parent=11 // pred_region
          %273 = vsyncadd [#allocation6], 0
          %s275 = sshll.u32 %s3, 4
          %s276 = int_to_ptr.hbm [resolvable:$true] %s275
          %s277 = sshll.u32 [#allocation7], 4
          %s278 = int_to_ptr.vmem [resolvable:$true] %s277
          %280 = dma.hbm_to_vmem [thread:$0]  %s276, 16, %s278, [#allocation6]
        $region20: #{tpu_custom_call.1} parent=11 // pred_fallthru
          _
        // Predicated region
        $region21: #{tpu_custom_call.1} parent=11 // pred_check
          %p281 = pneg %p141
        $region22: #{tpu_custom_call.1} parent=11 // pred_check_branch
          %283 = sbr.rel (%p281) target = $region24
        $region23: #{tpu_custom_call.1} parent=11 // pred_region
          %285 = vsyncadd [#allocation9], 0
          %s287 = sshll.u32 %s4, 4
          %s288 = int_to_ptr.hbm [resolvable:$true] %s287
          %s289 = sshll.u32 [#allocation8], 4
          %s290 = int_to_ptr.vmem [resolvable:$true] %s289
          %292 = dma.hbm_to_vmem [thread:$0]  %s288, 16, %s290, [#allocation9]
        $region24: #{tpu_custom_call.1} parent=11 // pred_fallthru
          _
        // Predicated region
        $region25: #{tpu_custom_call.1} parent=11 // pred_check
          %p293 = pneg %p162
        $region26: #{tpu_custom_call.1} parent=11 // pred_check_branch
          %295 = sbr.rel (%p293) target = $region28
        $region27: #{tpu_custom_call.1} parent=11 // pred_region
          %297 = vsyncadd [#allocation9], 0
          %s298 = sshll.u32 %s5, 4
          %s299 = int_to_ptr.hbm [resolvable:$true] %s298
          %s300 = sshll.u32 [#allocation10], 4
          %s301 = int_to_ptr.vmem [resolvable:$true] %s300
          %306 = dma.hbm_to_vmem [thread:$0]  %s299, 256, %s301, [#allocation9], 64, 64, 4
        $region28: #{tpu_custom_call.1} parent=11 // pred_fallthru
          _
        // Predicated region
        $region29: #{tpu_custom_call.1} parent=11 // pred_check
          %p307 = pneg %p183
        $region30: #{tpu_custom_call.1} parent=11 // pred_check_branch
          %309 = sbr.rel (%p307) target = $region32
        $region31: #{tpu_custom_call.1} parent=11 // pred_region
          _
        $region32: #{tpu_custom_call.1} parent=11 // pred_fallthru
          _
        // Predicated region
        $region33: #{tpu_custom_call.1} parent=11 // pred_check
          %p310 = pneg %p204
        $region34: #{tpu_custom_call.1} parent=11 // pred_check_branch
          %312 = sbr.rel (%p310) target = $region36
        $region35: #{tpu_custom_call.1} parent=11 // pred_region
          %314 = vsyncadd [#allocation12], 0
          %s315 = sshll.u32 %s7, 4
          %s316 = int_to_ptr.hbm [resolvable:$true] %s315
          %s317 = sshll.u32 [#allocation11], 4
          %s318 = int_to_ptr.vmem [resolvable:$true] %s317
          %323 = dma.hbm_to_vmem [thread:$0]  %s316, 256, %s318, [#allocation12], 64, 64, 4
        $region36: #{tpu_custom_call.1} parent=11 // pred_fallthru
          _
        // Predicated region
        $region37: #{tpu_custom_call.1} parent=11 // pred_check
          %p324 = pneg %p225
        $region38: #{tpu_custom_call.1} parent=11 // pred_check_branch
          %326 = sbr.rel (%p324) target = $region40
        $region39: #{tpu_custom_call.1} parent=11 // pred_region
          %328 = vsyncadd [#allocation12], 0
          %s329 = sshll.u32 %s8, 4
          %s330 = int_to_ptr.hbm [resolvable:$true] %s329
          %s331 = sshll.u32 [#allocation13], 4
          %s332 = int_to_ptr.vmem [resolvable:$true] %s331
          %337 = dma.hbm_to_vmem [thread:$0]  %s330, 256, %s332, [#allocation12], 64, 64, 4
        $region40: #{tpu_custom_call.1} parent=11 // pred_fallthru
          _
      $region12: #{tpu_custom_call.1} parent=5 // pred_fallthru
        _
      %p338 = scmp.lt.s32.totalorder %s26, 2
      // Predicated region
      $region41: #{tpu_custom_call.1} parent=5 // pred_check
        %p339 = pneg %p338
      $region42: #{tpu_custom_call.1} parent=5 // pred_check_branch
        %341 = sbr.rel (%p339) target = $region44
      $region43: #{tpu_custom_call.1} parent=5 // pred_region
        // Predicated region
        $region45: #{tpu_custom_call.1} parent=43 // pred_check
          %p342 = pneg %p67
        $region46: #{tpu_custom_call.1} parent=43 // pred_check_branch
          %344 = sbr.rel (%p342) target = $region48
        $region47: #{tpu_custom_call.1} parent=43 // pred_region
          %s345 = sand.u32 %s57, 1
          %s346 = scalar_lea.sflag [#allocation3], %s345
          %s347 = sand.u32 %s57, 1
          %s348 = smul.addr %s347, 16
          %s349 = scalar_lea.vmem [#allocation2], %s348
          %s350 = smul.u32 2, %s26
          %352 = vsyncadd %s346, 0
          %s353 = smul.addr %s350, 8
          %s354 = scalar_lea.hbm %s1, %s353
          %s355 = sshll.u32 %s354, 4
          %s356 = int_to_ptr.hbm [resolvable:$true] %s355
          %s357 = sshll.u32 %s349, 4
          %s358 = int_to_ptr.vmem [resolvable:$true] %s357
          %363 = dma.hbm_to_vmem [thread:$0]  %s356, 256, %s358, %s346, 128, 128, 8
        $region48: #{tpu_custom_call.1} parent=43 // pred_fallthru
          _
        // Predicated region
        $region49: #{tpu_custom_call.1} parent=43 // pred_check
          %p364 = pneg %p93
        $region50: #{tpu_custom_call.1} parent=43 // pred_check_branch
          %366 = sbr.rel (%p364) target = $region52
        $region51: #{tpu_custom_call.1} parent=43 // pred_region
          %s367 = sand.u32 %s26, 1
          %s368 = scalar_lea.sflag [#allocation6], %s367
          %s369 = sand.u32 %s83, 1
          %s370 = smul.addr %s369, 2
          %s371 = scalar_lea.vmem [#allocation5], %s370
          %s372 = smul.u32 2, %s26
          %374 = vsyncadd %s368, 0
          %s375 = scalar_lea.hbm %s2, %s372
          %s376 = sshll.u32 %s375, 4
          %s377 = int_to_ptr.hbm [resolvable:$true] %s376
          %s378 = sshll.u32 %s371, 4
          %s379 = int_to_ptr.vmem [resolvable:$true] %s378
          %384 = dma.hbm_to_vmem [thread:$0]  %s377, 32, %s379, %s368, 16, 16, 1
        $region52: #{tpu_custom_call.1} parent=43 // pred_fallthru
          _
      $region44: #{tpu_custom_call.1} parent=5 // pred_fallthru
        _
      %p385 = scmp.le.s32.totalorder 1, %s26
      %p386 = scmp.lt.s32.totalorder %s26, 3
      %p387 = pnand %p385, %p386
      %p388 = pneg %p387
      // Predicated region
      $region53: #{tpu_custom_call.1} parent=5 // pred_check
        _
      $region54: #{tpu_custom_call.1} parent=5 // pred_check_branch
        %390 = sbr.rel (%p387) target = $region56
      $region55: #{tpu_custom_call.1} parent=5 // pred_region
        %s391 = ssub.s32 %s26, 1
        %s392 = sand.u32 %s60, 1
        %s393 = scalar_lea.sflag [#allocation3], %s392
        %s394 = sand.u32 %s60, 1
        %s395 = smul.addr %s394, 16
        %s396 = scalar_lea.vmem [#allocation2], %s395
        // Predicated region
        $region57: #{tpu_custom_call.1} parent=55 // pred_check
          %p397 = pneg %p73
        $region58: #{tpu_custom_call.1} parent=55 // pred_check_branch
          %399 = sbr.rel (%p397) target = $region60
        $region59: #{tpu_custom_call.1} parent=55 // pred_region
          %401 = dma.done %s393, 256
        $region60: #{tpu_custom_call.1} parent=55 // pred_fallthru
          _
        %s402 = sand.u32 %s31, 1
        %s403 = scalar_lea.sflag [#allocation6], %s402
        %s404 = sand.u32 %s86, 1
        %s405 = smul.addr %s404, 2
        %s406 = scalar_lea.vmem [#allocation5], %s405
        // Predicated region
        $region61: #{tpu_custom_call.1} parent=55 // pred_check
          %p407 = pneg %p99
        $region62: #{tpu_custom_call.1} parent=55 // pred_check_branch
          %409 = sbr.rel (%p407) target = $region64
        $region63: #{tpu_custom_call.1} parent=55 // pred_region
          %411 = dma.done %s403, 32
        $region64: #{tpu_custom_call.1} parent=55 // pred_fallthru
          _
        // Predicated region
        $region65: #{tpu_custom_call.1} parent=55 // pred_check
          %p412 = pneg %p120
        $region66: #{tpu_custom_call.1} parent=55 // pred_check_branch
          %414 = sbr.rel (%p412) target = $region68
        $region67: #{tpu_custom_call.1} parent=55 // pred_region
          %416 = dma.done [#allocation6], 16
        $region68: #{tpu_custom_call.1} parent=55 // pred_fallthru
          _
        // Predicated region
        $region69: #{tpu_custom_call.1} parent=55 // pred_check
          %p417 = pneg %p141
        $region70: #{tpu_custom_call.1} parent=55 // pred_check_branch
          %419 = sbr.rel (%p417) target = $region72
        $region71: #{tpu_custom_call.1} parent=55 // pred_region
          %421 = dma.done [#allocation9], 16
        $region72: #{tpu_custom_call.1} parent=55 // pred_fallthru
          _
        // Predicated region
        $region73: #{tpu_custom_call.1} parent=55 // pred_check
          %p422 = pneg %p162
        $region74: #{tpu_custom_call.1} parent=55 // pred_check_branch
          %424 = sbr.rel (%p422) target = $region76
        $region75: #{tpu_custom_call.1} parent=55 // pred_region
          %426 = dma.done [#allocation9], 256
        $region76: #{tpu_custom_call.1} parent=55 // pred_fallthru
          _
        // Predicated region
        $region77: #{tpu_custom_call.1} parent=55 // pred_check
          %p427 = pneg %p204
        $region78: #{tpu_custom_call.1} parent=55 // pred_check_branch
          %429 = sbr.rel (%p427) target = $region80
        $region79: #{tpu_custom_call.1} parent=55 // pred_region
          %431 = dma.done [#allocation12], 256
        $region80: #{tpu_custom_call.1} parent=55 // pred_fallthru
          _
        // Predicated region
        $region81: #{tpu_custom_call.1} parent=55 // pred_check
          %p432 = pneg %p225
        $region82: #{tpu_custom_call.1} parent=55 // pred_check_branch
          %434 = sbr.rel (%p432) target = $region84
        $region83: #{tpu_custom_call.1} parent=55 // pred_region
          %436 = dma.done [#allocation12], 256
        $region84: #{tpu_custom_call.1} parent=55 // pred_fallthru
          _
        %p437 = pneg %p47
        %p438 = pneg %p44
        %s439 = sand.u32 %s60, 1
        %s440 = scalar_lea.sflag [#allocation3], %s439
        %s441 = sand.u32 %s60, 1
        %s442 = smul.addr %s441, 16
        %s443 = scalar_lea.vmem [#allocation2], %s442
        %p444 = pneg %p73
        %p445 = pneg %p70
        %s446 = sand.u32 %s31, 1
        %s447 = scalar_lea.sflag [#allocation6], %s446
        %s448 = sand.u32 %s86, 1
        %s449 = smul.addr %s448, 2
        %s450 = scalar_lea.vmem [#allocation5], %s449
        %p451 = pneg %p99
        %p452 = pneg %p96
        %p453 = pneg %p120
        %p454 = pneg %p117
        %p455 = pneg %p141
        %p456 = pneg %p138
        %p457 = pneg %p162
        %p458 = pneg %p159
        %p459 = pneg %p183
        %p460 = pneg %p180
        %p461 = pneg %p204
        %p462 = pneg %p201
        %p463 = pneg %p225
        %p464 = pneg %p222
        %p465 = pneg %p251
        %p466 = pneg %p248
        %s467 = sand.u32 %s238, 1
        %s468 = scalar_lea.sflag [#allocation4], %s467
        %s469 = sand.u32 %s238, 1
        %s470 = smul.addr %s469, 16
        %s471 = scalar_lea.vmem [#allocation14], %s470
        %s472 = smul.u32 2, %s31
        %s473 = smul.u32 2, %s31
        %s474 = smul.u32 2, %s31
        %v476 = vld [vmem:[%s396] sm:$0xff]
        %v477 = vld [vmem:[%s396 + $0x8] sm:$0xff]
        %v478 = vld [vmem:[%s406] sm:$0x1]
        %v479 = vld [vmem:[%s406 + $0x1] sm:$0x1]
        %vm480 = vcmp.gt.f32.partialorder %v478, 0.5
        %vm481 = vcmp.gt.f32.partialorder %v479, 0.5
        %v482 = vsel %vm480, 0.0, -1e+30
        %v483 = vsel %vm481, 0.0, -1e+30
        %v484 = vld [vmem:[#allocation7] sm:$0x1]
        %v485 = vmul.f32 %v476, %v476
        %v486 = vmul.f32 %v477, %v477
        %vm487 = vcmask 261120
        %v488 = vsel %vm487, %v485, 0.0
        %489 = vadd.xlane.f32.xlu0 %v488
        %v490 = vpop.xlane.xlu0 %489
        %v491 = vsel %vm487, %v486, 0.0
        %492 = vadd.xlane.f32.xlu0 %v491
        %v493 = vpop.xlane.xlu0 %492
        %v494 = vrcp.pop 32.0
        %v495 = vmul.f32 32.0, %v494
        %v496 = vsub.f32 1.0, %v495
        %v497 = vmul.f32 %v494, %v496
        %v498 = vadd.f32 %v494, %v497
        %vm499 = vweird.f32 %v494
        %v500 = vsel %vm499, %v494, %v498
        %v501 = vmul.f32 %v490, %v500
        %v502 = vmul.f32 %v493, %v500
        %v503 = vadd.f32 %v501, 1e-06
        %v504 = vadd.f32 %v502, 1e-06
        %v505 = vrsqrt.pop %v503
        %v506 = vmul.f32 %v505, %v503
        %v507 = vmul.f32 %v506, %v505
        %v508 = vmul.f32 0.5, %v507
        %v509 = vsub.f32 1.5, %v508
        %v510 = vmul.f32 %v505, %v509
        %vm511 = vweird.f32 %v503
        %vm512 = vweird.f32 %v505
        %vm513 = vmor %vm511, %vm512
        %v514 = vsel %vm513, %v505, %v510
        %v515 = vrsqrt.pop %v504
        %v516 = vmul.f32 %v515, %v504
        %v517 = vmul.f32 %v516, %v515
        %v518 = vmul.f32 0.5, %v517
        %v519 = vsub.f32 1.5, %v518
        %v520 = vmul.f32 %v515, %v519
        %vm521 = vweird.f32 %v504
        %vm522 = vweird.f32 %v515
        %vm523 = vmor %vm521, %vm522
        %v524 = vsel %vm523, %v515, %v520
        %v525 = vmul.f32 %v476, %v514
        %v526 = vmul.f32 %v477, %v524
        %v528 = vperm.slane %v484, 0
        %v530 = vmul.f32 %v525, %v528
        %v531 = vmul.f32 %v526, %v528
        %v532 = vpack.c.bf16 %v531, %v530
        %v533 = vld [vmem:[#allocation10] sm:$0xf]
        %v534 = vld [vmem:[#allocation10 + $0x4] sm:$0xf]
        %v535 = vld [vmem:[#allocation10 + $0x8] sm:$0xf]
        %v536 = vld [vmem:[#allocation10 + $0xc] sm:$0xf]
        %v541 = vunpack.c.l.b16 %v533
        %v542 = vunpack.c.l.b16 %v534
        %v543 = vunpack.c.l.b16 %v535
        %v544 = vunpack.c.l.b16 %v536
        %v545 = vpack.c.b16 %v542, %v541
        %v546 = vpack.c.b16 %v544, %v543
        %v550 = vsel %vm487, %v532, 0
        %552 = vmatpush.bf16.msra.mxu0 0
        %553 = vmatpush.bf16.msra.mxu0 0
        %554 = vmatpush.bf16.msra.mxu0 0
        %555 = vmatpush.bf16.msra.mxu0 0
        %556 = vmatpush.bf16.msra.mxu0 0
        %557 = vmatpush.bf16.msra.mxu0 0
        %558 = vmatpush.bf16.msra.mxu0 %v546
        %559 = vmatpush.bf16.msra.mxu0 %v545
        %560 = vmatmul.bf16.gmra.mxu0 %v550
        %v561 = vpop.f32.mrf.mxu0
        %v562 = vadd.f32 0.0, %v561
        %v563 = vpop.f32.mrf.mxu0
        %v564 = vadd.f32 0.0, %v563
        %565 = vdwg.mxu0
        %v566 = vpack.c.bf16 %v562, %v562
        %v567 = vpack.c.bf16 %v564, %v564
        %v568 = vld [vmem:[%s0] sm:$0x1]
        %v569 = vld [vmem:[%s0 + $0x1] sm:$0x1]
        %572 = vrot.lane.b32.xlu0 %v566, 120
        %v573 = vpop.permute.xlu0 %572
        %574 = vrot.lane.b32.xlu0 %v567, 120
        %v575 = vpop.permute.xlu0 %574
        %v578 = vpack.i.b16 %v573, %v566
        %v579 = vshrl.u32 %v566, 16
        %v580 = vshrl.u32 %v573, 16
        %v581 = vpack.i.b16 %v580, %v579
        %v584 = vpack.i.b16 %v575, %v567
        %v585 = vshrl.u32 %v567, 16
        %v586 = vshrl.u32 %v575, 16
        %v587 = vpack.i.b16 %v586, %v585
        %v590 = vunpack.c.l.s4 1983009808
        %v591 = vunpack.c.0.s8 %v590
        %v592 = vperm.slane %v578, %v591
        %v593 = vrot.slane %v592, 4
        %vm594 = vcmask 1047556
        %v595 = vsel %vm594, 0, %v593
        %v597 = vunpack.c.l.s4 1934713408
        %v598 = vunpack.c.0.s8 %v597
        %v599 = vperm.slane %v592, %v598
        %v601 = vunpack.c.l.s4 1934713408
        %v602 = vunpack.c.0.s8 %v601
        %v603 = vperm.slane %v595, %v602
        %v604 = vrot.slane %v599, 4
        %v605 = vsel %vm594, 0, %v604
        %v606 = vrot.slane %v603, 4
        %v607 = vsel %vm594, 0, %v606
        %v610 = vunpack.c.l.s4 1983009808
        %v611 = vunpack.c.0.s8 %v610
        %v612 = vperm.slane %v581, %v611
        %v613 = vrot.slane %v612, 4
        %v614 = vsel %vm594, 0, %v613
        %v616 = vunpack.c.l.s4 1934713408
        %v617 = vunpack.c.0.s8 %v616
        %v618 = vperm.slane %v612, %v617
        %v620 = vunpack.c.l.s4 1934713408
        %v621 = vunpack.c.0.s8 %v620
        %v622 = vperm.slane %v614, %v621
        %v623 = vrot.slane %v618, 4
        %v624 = vsel %vm594, 0, %v623
        %v625 = vrot.slane %v622, 4
        %v626 = vsel %vm594, 0, %v625
        %v629 = vunpack.c.l.s4 1983009808
        %v630 = vunpack.c.0.s8 %v629
        %v631 = vperm.slane %v584, %v630
        %v632 = vrot.slane %v631, 4
        %v633 = vsel %vm594, 0, %v632
        %v635 = vunpack.c.l.s4 1934713408
        %v636 = vunpack.c.0.s8 %v635
        %v637 = vperm.slane %v631, %v636
        %v639 = vunpack.c.l.s4 1934713408
        %v640 = vunpack.c.0.s8 %v639
        %v641 = vperm.slane %v633, %v640
        %v642 = vrot.slane %v637, 4
        %v643 = vsel %vm594, 0, %v642
        %v644 = vrot.slane %v641, 4
        %v645 = vsel %vm594, 0, %v644
        %v648 = vunpack.c.l.s4 1983009808
        %v649 = vunpack.c.0.s8 %v648
        %v650 = vperm.slane %v587, %v649
        %v651 = vrot.slane %v650, 4
        %v652 = vsel %vm594, 0, %v651
        %v654 = vunpack.c.l.s4 1934713408
        %v655 = vunpack.c.0.s8 %v654
        %v656 = vperm.slane %v650, %v655
        %v658 = vunpack.c.l.s4 1934713408
        %v659 = vunpack.c.0.s8 %v658
        %v660 = vperm.slane %v652, %v659
        %v661 = vrot.slane %v656, 4
        %v662 = vsel %vm594, 0, %v661
        %v663 = vrot.slane %v660, 4
        %v664 = vsel %vm594, 0, %v663
        %v665 = vsel %vm594, %v606, %v599
        %v667 = vunpack.c.l.s4 1983009808
        %v668 = vunpack.c.0.s8 %v667
        %v669 = vperm.slane %v665, %v668
        %v670 = vrot.slane %v607, 4
        %v671 = vsel %vm594, %v670, %v605
        %v673 = vunpack.c.l.s4 1983009808
        %v674 = vunpack.c.0.s8 %v673
        %v675 = vperm.slane %v671, %v674
        %v676 = vrot.slane %v675, 4
        %v677 = vsel %vm594, %v676, %v669
        %v679 = vunpack.c.l.s4 1934713408
        %v680 = vunpack.c.0.s8 %v679
        %v681 = vperm.slane %v677, %v680
        %v682 = vsel %vm594, %v625, %v618
        %v684 = vunpack.c.l.s4 1983009808
        %v685 = vunpack.c.0.s8 %v684
        %v686 = vperm.slane %v682, %v685
        %v687 = vrot.slane %v626, 4
        %v688 = vsel %vm594, %v687, %v624
        %v690 = vunpack.c.l.s4 1983009808
        %v691 = vunpack.c.0.s8 %v690
        %v692 = vperm.slane %v688, %v691
        %v693 = vrot.slane %v692, 4
        %v694 = vsel %vm594, %v693, %v686
        %v696 = vunpack.c.l.s4 1934713408
        %v697 = vunpack.c.0.s8 %v696
        %v698 = vperm.slane %v694, %v697
        %v699 = vsel %vm594, %v644, %v637
        %v701 = vunpack.c.l.s4 1983009808
        %v702 = vunpack.c.0.s8 %v701
        %v703 = vperm.slane %v699, %v702
        %v704 = vrot.slane %v645, 4
        %v705 = vsel %vm594, %v704, %v643
        %v707 = vunpack.c.l.s4 1983009808
        %v708 = vunpack.c.0.s8 %v707
        %v709 = vperm.slane %v705, %v708
        %v710 = vrot.slane %v709, 4
        %v711 = vsel %vm594, %v710, %v703
        %v713 = vunpack.c.l.s4 1934713408
        %v714 = vunpack.c.0.s8 %v713
        %v715 = vperm.slane %v711, %v714
        %v716 = vsel %vm594, %v663, %v656
        %v718 = vunpack.c.l.s4 1983009808
        %v719 = vunpack.c.0.s8 %v718
        %v720 = vperm.slane %v716, %v719
        %v721 = vrot.slane %v664, 4
        %v722 = vsel %vm594, %v721, %v662
        %v724 = vunpack.c.l.s4 1983009808
        %v725 = vunpack.c.0.s8 %v724
        %v726 = vperm.slane %v722, %v725
        %v727 = vrot.slane %v726, 4
        %v728 = vsel %vm594, %v727, %v720
        %v730 = vunpack.c.l.s4 1934713408
        %v731 = vunpack.c.0.s8 %v730
        %v732 = vperm.slane %v728, %v731
        %v735 = vpack.i.b16 %v698, %v681
        %v736 = vshrl.u32 %v681, 16
        %v737 = vshrl.u32 %v698, 16
        %v738 = vpack.i.b16 %v737, %v736
        %v741 = vpack.i.b16 %v732, %v715
        %v742 = vshrl.u32 %v715, 16
        %v743 = vshrl.u32 %v732, 16
        %v744 = vpack.i.b16 %v743, %v742
        %745 = vrot.lane.b32.xlu0 %v566, 112
        %v746 = vpop.permute.xlu0 %745
        %747 = vrot.lane.b32.xlu0 %v567, 112
        %v748 = vpop.permute.xlu0 %747
        %749 = vrot.lane.b32.xlu0 %v573, 112
        %v750 = vpop.permute.xlu0 %749
        %751 = vrot.lane.b32.xlu0 %v575, 112
        %v752 = vpop.permute.xlu0 %751
        %v755 = vpack.i.b16 %v750, %v746
        %v756 = vshrl.u32 %v746, 16
        %v757 = vshrl.u32 %v750, 16
        %v758 = vpack.i.b16 %v757, %v756
        %v761 = vpack.i.b16 %v752, %v748
        %v762 = vshrl.u32 %v748, 16
        %v763 = vshrl.u32 %v752, 16
        %v764 = vpack.i.b16 %v763, %v762
        %v767 = vunpack.c.l.s4 1983009808
        %v768 = vunpack.c.0.s8 %v767
        %v769 = vperm.slane %v755, %v768
        %v770 = vrot.slane %v769, 4
        %v771 = vsel %vm594, 0, %v770
        %v773 = vunpack.c.l.s4 1934713408
        %v774 = vunpack.c.0.s8 %v773
        %v775 = vperm.slane %v769, %v774
        %v777 = vunpack.c.l.s4 1934713408
        %v778 = vunpack.c.0.s8 %v777
        %v779 = vperm.slane %v771, %v778
        %v780 = vrot.slane %v775, 4
        %v781 = vsel %vm594, 0, %v780
        %v782 = vrot.slane %v779, 4
        %v783 = vsel %vm594, 0, %v782
        %v786 = vunpack.c.l.s4 1983009808
        %v787 = vunpack.c.0.s8 %v786
        %v788 = vperm.slane %v758, %v787
        %v789 = vrot.slane %v788, 4
        %v790 = vsel %vm594, 0, %v789
        %v792 = vunpack.c.l.s4 1934713408
        %v793 = vunpack.c.0.s8 %v792
        %v794 = vperm.slane %v788, %v793
        %v796 = vunpack.c.l.s4 1934713408
        %v797 = vunpack.c.0.s8 %v796
        %v798 = vperm.slane %v790, %v797
        %v799 = vrot.slane %v794, 4
        %v800 = vsel %vm594, 0, %v799
        %v801 = vrot.slane %v798, 4
        %v802 = vsel %vm594, 0, %v801
        %v805 = vunpack.c.l.s4 1983009808
        %v806 = vunpack.c.0.s8 %v805
        %v807 = vperm.slane %v761, %v806
        %v808 = vrot.slane %v807, 4
        %v809 = vsel %vm594, 0, %v808
        %v811 = vunpack.c.l.s4 1934713408
        %v812 = vunpack.c.0.s8 %v811
        %v813 = vperm.slane %v807, %v812
        %v815 = vunpack.c.l.s4 1934713408
        %v816 = vunpack.c.0.s8 %v815
        %v817 = vperm.slane %v809, %v816
        %v818 = vrot.slane %v813, 4
        %v819 = vsel %vm594, 0, %v818
        %v820 = vrot.slane %v817, 4
        %v821 = vsel %vm594, 0, %v820
        %v824 = vunpack.c.l.s4 1983009808
        %v825 = vunpack.c.0.s8 %v824
        %v826 = vperm.slane %v764, %v825
        %v827 = vrot.slane %v826, 4
        %v828 = vsel %vm594, 0, %v827
        %v830 = vunpack.c.l.s4 1934713408
        %v831 = vunpack.c.0.s8 %v830
        %v832 = vperm.slane %v826, %v831
        %v834 = vunpack.c.l.s4 1934713408
        %v835 = vunpack.c.0.s8 %v834
        %v836 = vperm.slane %v828, %v835
        %v837 = vrot.slane %v832, 4
        %v838 = vsel %vm594, 0, %v837
        %v839 = vrot.slane %v836, 4
        %v840 = vsel %vm594, 0, %v839
        %v841 = vsel %vm594, %v782, %v775
        %v843 = vunpack.c.l.s4 1983009808
        %v844 = vunpack.c.0.s8 %v843
        %v845 = vperm.slane %v841, %v844
        %v846 = vrot.slane %v783, 4
        %v847 = vsel %vm594, %v846, %v781
        %v849 = vunpack.c.l.s4 1983009808
        %v850 = vunpack.c.0.s8 %v849
        %v851 = vperm.slane %v847, %v850
        %v852 = vrot.slane %v851, 4
        %v853 = vsel %vm594, %v852, %v845
        %v855 = vunpack.c.l.s4 1934713408
        %v856 = vunpack.c.0.s8 %v855
        %v857 = vperm.slane %v853, %v856
        %v858 = vsel %vm594, %v801, %v794
        %v860 = vunpack.c.l.s4 1983009808
        %v861 = vunpack.c.0.s8 %v860
        %v862 = vperm.slane %v858, %v861
        %v863 = vrot.slane %v802, 4
        %v864 = vsel %vm594, %v863, %v800
        %v866 = vunpack.c.l.s4 1983009808
        %v867 = vunpack.c.0.s8 %v866
        %v868 = vperm.slane %v864, %v867
        %v869 = vrot.slane %v868, 4
        %v870 = vsel %vm594, %v869, %v862
        %v872 = vunpack.c.l.s4 1934713408
        %v873 = vunpack.c.0.s8 %v872
        %v874 = vperm.slane %v870, %v873
        %v875 = vsel %vm594, %v820, %v813
        %v877 = vunpack.c.l.s4 1983009808
        %v878 = vunpack.c.0.s8 %v877
        %v879 = vperm.slane %v875, %v878
        %v880 = vrot.slane %v821, 4
        %v881 = vsel %vm594, %v880, %v819
        %v883 = vunpack.c.l.s4 1983009808
        %v884 = vunpack.c.0.s8 %v883
        %v885 = vperm.slane %v881, %v884
        %v886 = vrot.slane %v885, 4
        %v887 = vsel %vm594, %v886, %v879
        %v889 = vunpack.c.l.s4 1934713408
        %v890 = vunpack.c.0.s8 %v889
        %v891 = vperm.slane %v887, %v890
        %v892 = vsel %vm594, %v839, %v832
        %v894 = vunpack.c.l.s4 1983009808
        %v895 = vunpack.c.0.s8 %v894
        %v896 = vperm.slane %v892, %v895
        %v897 = vrot.slane %v840, 4
        %v898 = vsel %vm594, %v897, %v838
        %v900 = vunpack.c.l.s4 1983009808
        %v901 = vunpack.c.0.s8 %v900
        %v902 = vperm.slane %v898, %v901
        %v903 = vrot.slane %v902, 4
        %v904 = vsel %vm594, %v903, %v896
        %v906 = vunpack.c.l.s4 1934713408
        %v907 = vunpack.c.0.s8 %v906
        %v908 = vperm.slane %v904, %v907
        %v911 = vpack.i.b16 %v874, %v857
        %v912 = vshrl.u32 %v857, 16
        %v913 = vshrl.u32 %v874, 16
        %v914 = vpack.i.b16 %v913, %v912
        %v917 = vpack.i.b16 %v908, %v891
        %v918 = vshrl.u32 %v891, 16
        %v919 = vshrl.u32 %v908, 16
        %v920 = vpack.i.b16 %v919, %v918
        %921 = vrot.lane.b32.xlu0 %v566, 96
        %v922 = vpop.permute.xlu0 %921
        %923 = vrot.lane.b32.xlu0 %v567, 96
        %v924 = vpop.permute.xlu0 %923
        %925 = vrot.lane.b32.xlu0 %v573, 96
        %v926 = vpop.permute.xlu0 %925
        %927 = vrot.lane.b32.xlu0 %v575, 96
        %v928 = vpop.permute.xlu0 %927
        %v931 = vpack.i.b16 %v926, %v922
        %v932 = vshrl.u32 %v922, 16
        %v933 = vshrl.u32 %v926, 16
        %v934 = vpack.i.b16 %v933, %v932
        %v937 = vpack.i.b16 %v928, %v924
        %v938 = vshrl.u32 %v924, 16
        %v939 = vshrl.u32 %v928, 16
        %v940 = vpack.i.b16 %v939, %v938
        %v943 = vunpack.c.l.s4 1983009808
        %v944 = vunpack.c.0.s8 %v943
        %v945 = vperm.slane %v931, %v944
        %v946 = vrot.slane %v945, 4
        %v947 = vsel %vm594, 0, %v946
        %v949 = vunpack.c.l.s4 1934713408
        %v950 = vunpack.c.0.s8 %v949
        %v951 = vperm.slane %v945, %v950
        %v953 = vunpack.c.l.s4 1934713408
        %v954 = vunpack.c.0.s8 %v953
        %v955 = vperm.slane %v947, %v954
        %v956 = vrot.slane %v951, 4
        %v957 = vsel %vm594, 0, %v956
        %v958 = vrot.slane %v955, 4
        %v959 = vsel %vm594, 0, %v958
        %v962 = vunpack.c.l.s4 1983009808
        %v963 = vunpack.c.0.s8 %v962
        %v964 = vperm.slane %v934, %v963
        %v965 = vrot.slane %v964, 4
        %v966 = vsel %vm594, 0, %v965
        %v968 = vunpack.c.l.s4 1934713408
        %v969 = vunpack.c.0.s8 %v968
        %v970 = vperm.slane %v964, %v969
        %v972 = vunpack.c.l.s4 1934713408
        %v973 = vunpack.c.0.s8 %v972
        %v974 = vperm.slane %v966, %v973
        %v975 = vrot.slane %v970, 4
        %v976 = vsel %vm594, 0, %v975
        %v977 = vrot.slane %v974, 4
        %v978 = vsel %vm594, 0, %v977
        %v981 = vunpack.c.l.s4 1983009808
        %v982 = vunpack.c.0.s8 %v981
        %v983 = vperm.slane %v937, %v982
        %v984 = vrot.slane %v983, 4
        %v985 = vsel %vm594, 0, %v984
        %v987 = vunpack.c.l.s4 1934713408
        %v988 = vunpack.c.0.s8 %v987
        %v989 = vperm.slane %v983, %v988
        %v991 = vunpack.c.l.s4 1934713408
        %v992 = vunpack.c.0.s8 %v991
        %v993 = vperm.slane %v985, %v992
        %v994 = vrot.slane %v989, 4
        %v995 = vsel %vm594, 0, %v994
        %v996 = vrot.slane %v993, 4
        %v997 = vsel %vm594, 0, %v996
        %v1000 = vunpack.c.l.s4 1983009808
        %v1001 = vunpack.c.0.s8 %v1000
        %v1002 = vperm.slane %v940, %v1001
        %v1003 = vrot.slane %v1002, 4
        %v1004 = vsel %vm594, 0, %v1003
        %v1006 = vunpack.c.l.s4 1934713408
        %v1007 = vunpack.c.0.s8 %v1006
        %v1008 = vperm.slane %v1002, %v1007
        %v1010 = vunpack.c.l.s4 1934713408
        %v1011 = vunpack.c.0.s8 %v1010
        %v1012 = vperm.slane %v1004, %v1011
        %v1013 = vrot.slane %v1008, 4
        %v1014 = vsel %vm594, 0, %v1013
        %v1015 = vrot.slane %v1012, 4
        %v1016 = vsel %vm594, 0, %v1015
        %v1017 = vsel %vm594, %v958, %v951
        %v1019 = vunpack.c.l.s4 1983009808
        %v1020 = vunpack.c.0.s8 %v1019
        %v1021 = vperm.slane %v1017, %v1020
        %v1022 = vrot.slane %v959, 4
        %v1023 = vsel %vm594, %v1022, %v957
        %v1025 = vunpack.c.l.s4 1983009808
        %v1026 = vunpack.c.0.s8 %v1025
        %v1027 = vperm.slane %v1023, %v1026
        %v1028 = vrot.slane %v1027, 4
        %v1029 = vsel %vm594, %v1028, %v1021
        %v1031 = vunpack.c.l.s4 1934713408
        %v1032 = vunpack.c.0.s8 %v1031
        %v1033 = vperm.slane %v1029, %v1032
        %v1034 = vsel %vm594, %v977, %v970
        %v1036 = vunpack.c.l.s4 1983009808
        %v1037 = vunpack.c.0.s8 %v1036
        %v1038 = vperm.slane %v1034, %v1037
        %v1039 = vrot.slane %v978, 4
        %v1040 = vsel %vm594, %v1039, %v976
        %v1042 = vunpack.c.l.s4 1983009808
        %v1043 = vunpack.c.0.s8 %v1042
        %v1044 = vperm.slane %v1040, %v1043
        %v1045 = vrot.slane %v1044, 4
        %v1046 = vsel %vm594, %v1045, %v1038
        %v1048 = vunpack.c.l.s4 1934713408
        %v1049 = vunpack.c.0.s8 %v1048
        %v1050 = vperm.slane %v1046, %v1049
        %v1051 = vsel %vm594, %v996, %v989
        %v1053 = vunpack.c.l.s4 1983009808
        %v1054 = vunpack.c.0.s8 %v1053
        %v1055 = vperm.slane %v1051, %v1054
        %v1056 = vrot.slane %v997, 4
        %v1057 = vsel %vm594, %v1056, %v995
        %v1059 = vunpack.c.l.s4 1983009808
        %v1060 = vunpack.c.0.s8 %v1059
        %v1061 = vperm.slane %v1057, %v1060
        %v1062 = vrot.slane %v1061, 4
        %v1063 = vsel %vm594, %v1062, %v1055
        %v1065 = vunpack.c.l.s4 1934713408
        %v1066 = vunpack.c.0.s8 %v1065
        %v1067 = vperm.slane %v1063, %v1066
        %v1068 = vsel %vm594, %v1015, %v1008
        %v1070 = vunpack.c.l.s4 1983009808
        %v1071 = vunpack.c.0.s8 %v1070
        %v1072 = vperm.slane %v1068, %v1071
        %v1073 = vrot.slane %v1016, 4
        %v1074 = vsel %vm594, %v1073, %v1014
        %v1076 = vunpack.c.l.s4 1983009808
        %v1077 = vunpack.c.0.s8 %v1076
        %v1078 = vperm.slane %v1074, %v1077
        %v1079 = vrot.slane %v1078, 4
        %v1080 = vsel %vm594, %v1079, %v1072
        %v1082 = vunpack.c.l.s4 1934713408
        %v1083 = vunpack.c.0.s8 %v1082
        %v1084 = vperm.slane %v1080, %v1083
        %v1087 = vpack.i.b16 %v1050, %v1033
        %v1088 = vshrl.u32 %v1033, 16
        %v1089 = vshrl.u32 %v1050, 16
        %v1090 = vpack.i.b16 %v1089, %v1088
        %v1093 = vpack.i.b16 %v1084, %v1067
        %v1094 = vshrl.u32 %v1067, 16
        %v1095 = vshrl.u32 %v1084, 16
        %v1096 = vpack.i.b16 %v1095, %v1094
        %1097 = vrot.lane.b32.xlu0 %v566, 80
        %v1098 = vpop.permute.xlu0 %1097
        %1099 = vrot.lane.b32.xlu0 %v567, 80
        %v1100 = vpop.permute.xlu0 %1099
        %1101 = vrot.lane.b32.xlu0 %v573, 80
        %v1102 = vpop.permute.xlu0 %1101
        %1103 = vrot.lane.b32.xlu0 %v575, 80
        %v1104 = vpop.permute.xlu0 %1103
        %v1107 = vpack.i.b16 %v1102, %v1098
        %v1108 = vshrl.u32 %v1098, 16
        %v1109 = vshrl.u32 %v1102, 16
        %v1110 = vpack.i.b16 %v1109, %v1108
        %v1113 = vpack.i.b16 %v1104, %v1100
        %v1114 = vshrl.u32 %v1100, 16
        %v1115 = vshrl.u32 %v1104, 16
        %v1116 = vpack.i.b16 %v1115, %v1114
        %v1119 = vunpack.c.l.s4 1983009808
        %v1120 = vunpack.c.0.s8 %v1119
        %v1121 = vperm.slane %v1107, %v1120
        %v1122 = vrot.slane %v1121, 4
        %v1123 = vsel %vm594, 0, %v1122
        %v1125 = vunpack.c.l.s4 1934713408
        %v1126 = vunpack.c.0.s8 %v1125
        %v1127 = vperm.slane %v1121, %v1126
        %v1129 = vunpack.c.l.s4 1934713408
        %v1130 = vunpack.c.0.s8 %v1129
        %v1131 = vperm.slane %v1123, %v1130
        %v1132 = vrot.slane %v1127, 4
        %v1133 = vsel %vm594, 0, %v1132
        %v1134 = vrot.slane %v1131, 4
        %v1135 = vsel %vm594, 0, %v1134
        %v1138 = vunpack.c.l.s4 1983009808
        %v1139 = vunpack.c.0.s8 %v1138
        %v1140 = vperm.slane %v1110, %v1139
        %v1141 = vrot.slane %v1140, 4
        %v1142 = vsel %vm594, 0, %v1141
        %v1144 = vunpack.c.l.s4 1934713408
        %v1145 = vunpack.c.0.s8 %v1144
        %v1146 = vperm.slane %v1140, %v1145
        %v1148 = vunpack.c.l.s4 1934713408
        %v1149 = vunpack.c.0.s8 %v1148
        %v1150 = vperm.slane %v1142, %v1149
        %v1151 = vrot.slane %v1146, 4
        %v1152 = vsel %vm594, 0, %v1151
        %v1153 = vrot.slane %v1150, 4
        %v1154 = vsel %vm594, 0, %v1153
        %v1157 = vunpack.c.l.s4 1983009808
        %v1158 = vunpack.c.0.s8 %v1157
        %v1159 = vperm.slane %v1113, %v1158
        %v1160 = vrot.slane %v1159, 4
        %v1161 = vsel %vm594, 0, %v1160
        %v1163 = vunpack.c.l.s4 1934713408
        %v1164 = vunpack.c.0.s8 %v1163
        %v1165 = vperm.slane %v1159, %v1164
        %v1167 = vunpack.c.l.s4 1934713408
        %v1168 = vunpack.c.0.s8 %v1167
        %v1169 = vperm.slane %v1161, %v1168
        %v1170 = vrot.slane %v1165, 4
        %v1171 = vsel %vm594, 0, %v1170
        %v1172 = vrot.slane %v1169, 4
        %v1173 = vsel %vm594, 0, %v1172
        %v1176 = vunpack.c.l.s4 1983009808
        %v1177 = vunpack.c.0.s8 %v1176
        %v1178 = vperm.slane %v1116, %v1177
        %v1179 = vrot.slane %v1178, 4
        %v1180 = vsel %vm594, 0, %v1179
        %v1182 = vunpack.c.l.s4 1934713408
        %v1183 = vunpack.c.0.s8 %v1182
        %v1184 = vperm.slane %v1178, %v1183
        %v1186 = vunpack.c.l.s4 1934713408
        %v1187 = vunpack.c.0.s8 %v1186
        %v1188 = vperm.slane %v1180, %v1187
        %v1189 = vrot.slane %v1184, 4
        %v1190 = vsel %vm594, 0, %v1189
        %v1191 = vrot.slane %v1188, 4
        %v1192 = vsel %vm594, 0, %v1191
        %v1193 = vsel %vm594, %v1134, %v1127
        %v1195 = vunpack.c.l.s4 1983009808
        %v1196 = vunpack.c.0.s8 %v1195
        %v1197 = vperm.slane %v1193, %v1196
        %v1198 = vrot.slane %v1135, 4
        %v1199 = vsel %vm594, %v1198, %v1133
        %v1201 = vunpack.c.l.s4 1983009808
        %v1202 = vunpack.c.0.s8 %v1201
        %v1203 = vperm.slane %v1199, %v1202
        %v1204 = vrot.slane %v1203, 4
        %v1205 = vsel %vm594, %v1204, %v1197
        %v1207 = vunpack.c.l.s4 1934713408
        %v1208 = vunpack.c.0.s8 %v1207
        %v1209 = vperm.slane %v1205, %v1208
        %v1210 = vsel %vm594, %v1153, %v1146
        %v1212 = vunpack.c.l.s4 1983009808
        %v1213 = vunpack.c.0.s8 %v1212
        %v1214 = vperm.slane %v1210, %v1213
        %v1215 = vrot.slane %v1154, 4
        %v1216 = vsel %vm594, %v1215, %v1152
        %v1218 = vunpack.c.l.s4 1983009808
        %v1219 = vunpack.c.0.s8 %v1218
        %v1220 = vperm.slane %v1216, %v1219
        %v1221 = vrot.slane %v1220, 4
        %v1222 = vsel %vm594, %v1221, %v1214
        %v1224 = vunpack.c.l.s4 1934713408
        %v1225 = vunpack.c.0.s8 %v1224
        %v1226 = vperm.slane %v1222, %v1225
        %v1227 = vsel %vm594, %v1172, %v1165
        %v1229 = vunpack.c.l.s4 1983009808
        %v1230 = vunpack.c.0.s8 %v1229
        %v1231 = vperm.slane %v1227, %v1230
        %v1232 = vrot.slane %v1173, 4
        %v1233 = vsel %vm594, %v1232, %v1171
        %v1235 = vunpack.c.l.s4 1983009808
        %v1236 = vunpack.c.0.s8 %v1235
        %v1237 = vperm.slane %v1233, %v1236
        %v1238 = vrot.slane %v1237, 4
        %v1239 = vsel %vm594, %v1238, %v1231
        %v1241 = vunpack.c.l.s4 1934713408
        %v1242 = vunpack.c.0.s8 %v1241
        %v1243 = vperm.slane %v1239, %v1242
        %v1244 = vsel %vm594, %v1191, %v1184
        %v1246 = vunpack.c.l.s4 1983009808
        %v1247 = vunpack.c.0.s8 %v1246
        %v1248 = vperm.slane %v1244, %v1247
        %v1249 = vrot.slane %v1192, 4
        %v1250 = vsel %vm594, %v1249, %v1190
        %v1252 = vunpack.c.l.s4 1983009808
        %v1253 = vunpack.c.0.s8 %v1252
        %v1254 = vperm.slane %v1250, %v1253
        %v1255 = vrot.slane %v1254, 4
        %v1256 = vsel %vm594, %v1255, %v1248
        %v1258 = vunpack.c.l.s4 1934713408
        %v1259 = vunpack.c.0.s8 %v1258
        %v1260 = vperm.slane %v1256, %v1259
        %v1263 = vpack.i.b16 %v1226, %v1209
        %v1264 = vshrl.u32 %v1209, 16
        %v1265 = vshrl.u32 %v1226, 16
        %v1266 = vpack.i.b16 %v1265, %v1264
        %v1269 = vpack.i.b16 %v1260, %v1243
        %v1270 = vshrl.u32 %v1243, 16
        %v1271 = vshrl.u32 %v1260, 16
        %v1272 = vpack.i.b16 %v1271, %v1270
        %1273 = vrot.lane.b32.xlu0 %v566, 64
        %v1274 = vpop.permute.xlu0 %1273
        %1275 = vrot.lane.b32.xlu0 %v567, 64
        %v1276 = vpop.permute.xlu0 %1275
        %1277 = vrot.lane.b32.xlu0 %v573, 64
        %v1278 = vpop.permute.xlu0 %1277
        %1279 = vrot.lane.b32.xlu0 %v575, 64
        %v1280 = vpop.permute.xlu0 %1279
        %v1283 = vpack.i.b16 %v1278, %v1274
        %v1284 = vshrl.u32 %v1274, 16
        %v1285 = vshrl.u32 %v1278, 16
        %v1286 = vpack.i.b16 %v1285, %v1284
        %v1289 = vpack.i.b16 %v1280, %v1276
        %v1290 = vshrl.u32 %v1276, 16
        %v1291 = vshrl.u32 %v1280, 16
        %v1292 = vpack.i.b16 %v1291, %v1290
        %v1295 = vunpack.c.l.s4 1983009808
        %v1296 = vunpack.c.0.s8 %v1295
        %v1297 = vperm.slane %v1283, %v1296
        %v1298 = vrot.slane %v1297, 4
        %v1299 = vsel %vm594, 0, %v1298
        %v1301 = vunpack.c.l.s4 1934713408
        %v1302 = vunpack.c.0.s8 %v1301
        %v1303 = vperm.slane %v1297, %v1302
        %v1305 = vunpack.c.l.s4 1934713408
        %v1306 = vunpack.c.0.s8 %v1305
        %v1307 = vperm.slane %v1299, %v1306
        %v1308 = vrot.slane %v1303, 4
        %v1309 = vsel %vm594, 0, %v1308
        %v1310 = vrot.slane %v1307, 4
        %v1311 = vsel %vm594, 0, %v1310
        %v1314 = vunpack.c.l.s4 1983009808
        %v1315 = vunpack.c.0.s8 %v1314
        %v1316 = vperm.slane %v1286, %v1315
        %v1317 = vrot.slane %v1316, 4
        %v1318 = vsel %vm594, 0, %v1317
        %v1320 = vunpack.c.l.s4 1934713408
        %v1321 = vunpack.c.0.s8 %v1320
        %v1322 = vperm.slane %v1316, %v1321
        %v1324 = vunpack.c.l.s4 1934713408
        %v1325 = vunpack.c.0.s8 %v1324
        %v1326 = vperm.slane %v1318, %v1325
        %v1327 = vrot.slane %v1322, 4
        %v1328 = vsel %vm594, 0, %v1327
        %v1329 = vrot.slane %v1326, 4
        %v1330 = vsel %vm594, 0, %v1329
        %v1333 = vunpack.c.l.s4 1983009808
        %v1334 = vunpack.c.0.s8 %v1333
        %v1335 = vperm.slane %v1289, %v1334
        %v1336 = vrot.slane %v1335, 4
        %v1337 = vsel %vm594, 0, %v1336
        %v1339 = vunpack.c.l.s4 1934713408
        %v1340 = vunpack.c.0.s8 %v1339
        %v1341 = vperm.slane %v1335, %v1340
        %v1343 = vunpack.c.l.s4 1934713408
        %v1344 = vunpack.c.0.s8 %v1343
        %v1345 = vperm.slane %v1337, %v1344
        %v1346 = vrot.slane %v1341, 4
        %v1347 = vsel %vm594, 0, %v1346
        %v1348 = vrot.slane %v1345, 4
        %v1349 = vsel %vm594, 0, %v1348
        %v1352 = vunpack.c.l.s4 1983009808
        %v1353 = vunpack.c.0.s8 %v1352
        %v1354 = vperm.slane %v1292, %v1353
        %v1355 = vrot.slane %v1354, 4
        %v1356 = vsel %vm594, 0, %v1355
        %v1358 = vunpack.c.l.s4 1934713408
        %v1359 = vunpack.c.0.s8 %v1358
        %v1360 = vperm.slane %v1354, %v1359
        %v1362 = vunpack.c.l.s4 1934713408
        %v1363 = vunpack.c.0.s8 %v1362
        %v1364 = vperm.slane %v1356, %v1363
        %v1365 = vrot.slane %v1360, 4
        %v1366 = vsel %vm594, 0, %v1365
        %v1367 = vrot.slane %v1364, 4
        %v1368 = vsel %vm594, 0, %v1367
        %v1369 = vsel %vm594, %v1310, %v1303
        %v1371 = vunpack.c.l.s4 1983009808
        %v1372 = vunpack.c.0.s8 %v1371
        %v1373 = vperm.slane %v1369, %v1372
        %v1374 = vrot.slane %v1311, 4
        %v1375 = vsel %vm594, %v1374, %v1309
        %v1377 = vunpack.c.l.s4 1983009808
        %v1378 = vunpack.c.0.s8 %v1377
        %v1379 = vperm.slane %v1375, %v1378
        %v1380 = vrot.slane %v1379, 4
        %v1381 = vsel %vm594, %v1380, %v1373
        %v1383 = vunpack.c.l.s4 1934713408
        %v1384 = vunpack.c.0.s8 %v1383
        %v1385 = vperm.slane %v1381, %v1384
        %v1386 = vsel %vm594, %v1329, %v1322
        %v1388 = vunpack.c.l.s4 1983009808
        %v1389 = vunpack.c.0.s8 %v1388
        %v1390 = vperm.slane %v1386, %v1389
        %v1391 = vrot.slane %v1330, 4
        %v1392 = vsel %vm594, %v1391, %v1328
        %v1394 = vunpack.c.l.s4 1983009808
        %v1395 = vunpack.c.0.s8 %v1394
        %v1396 = vperm.slane %v1392, %v1395
        %v1397 = vrot.slane %v1396, 4
        %v1398 = vsel %vm594, %v1397, %v1390
        %v1400 = vunpack.c.l.s4 1934713408
        %v1401 = vunpack.c.0.s8 %v1400
        %v1402 = vperm.slane %v1398, %v1401
        %v1403 = vsel %vm594, %v1348, %v1341
        %v1405 = vunpack.c.l.s4 1983009808
        %v1406 = vunpack.c.0.s8 %v1405
        %v1407 = vperm.slane %v1403, %v1406
        %v1408 = vrot.slane %v1349, 4
        %v1409 = vsel %vm594, %v1408, %v1347
        %v1411 = vunpack.c.l.s4 1983009808
        %v1412 = vunpack.c.0.s8 %v1411
        %v1413 = vperm.slane %v1409, %v1412
        %v1414 = vrot.slane %v1413, 4
        %v1415 = vsel %vm594, %v1414, %v1407
        %v1417 = vunpack.c.l.s4 1934713408
        %v1418 = vunpack.c.0.s8 %v1417
        %v1419 = vperm.slane %v1415, %v1418
        %v1420 = vsel %vm594, %v1367, %v1360
        %v1422 = vunpack.c.l.s4 1983009808
        %v1423 = vunpack.c.0.s8 %v1422
        %v1424 = vperm.slane %v1420, %v1423
        %v1425 = vrot.slane %v1368, 4
        %v1426 = vsel %vm594, %v1425, %v1366
        %v1428 = vunpack.c.l.s4 1983009808
        %v1429 = vunpack.c.0.s8 %v1428
        %v1430 = vperm.slane %v1426, %v1429
        %v1431 = vrot.slane %v1430, 4
        %v1432 = vsel %vm594, %v1431, %v1424
        %v1434 = vunpack.c.l.s4 1934713408
        %v1435 = vunpack.c.0.s8 %v1434
        %v1436 = vperm.slane %v1432, %v1435
        %v1439 = vpack.i.b16 %v1402, %v1385
        %v1440 = vshrl.u32 %v1385, 16
        %v1441 = vshrl.u32 %v1402, 16
        %v1442 = vpack.i.b16 %v1441, %v1440
        %v1445 = vpack.i.b16 %v1436, %v1419
        %v1446 = vshrl.u32 %v1419, 16
        %v1447 = vshrl.u32 %v1436, 16
        %v1448 = vpack.i.b16 %v1447, %v1446
        %v1451 = vperm.slane %v482, 0
        %v1452 = vperm.slane %v483, 0
        %vm1455 = vcmask 64512
        %v1457 = vsel %vm1455, %v735, 0
        %v1460 = vsel %vm1455, %v1087, 0
        %1462 = vmatpush.bf16.xpose.msra.mxu0 0
        %1463 = vmatpush.bf16.xpose.msra.mxu0 0
        %1464 = vmatpush.bf16.xpose.msra.mxu0 0
        %1465 = vmatpush.bf16.xpose.msra.mxu0 0
        %1466 = vmatpush.bf16.xpose.msra.mxu0 0
        %1467 = vmatpush.bf16.xpose.msra.mxu0 0
        %1468 = vmatpush.bf16.xpose.msra.mxu0 0
        %1469 = vmatpush.bf16.xpose.msra.mxu0 %v1460
        %1470 = vmatmul.bf16.gmra.mxu0 %v1457
        %v1471 = vpop.f32.mrf.mxu0
        %v1472 = vadd.f32 %v1451, %v1471
        %v1473 = vpop.f32.mrf.mxu0
        %1474 = vdwg.mxu0
        %v1476 = vsel %vm1455, %v738, 0
        %v1479 = vsel %vm1455, %v1090, 0
        %1481 = vmatpush.bf16.xpose.msra.mxu0 0
        %1482 = vmatpush.bf16.xpose.msra.mxu0 0
        %1483 = vmatpush.bf16.xpose.msra.mxu0 0
        %1484 = vmatpush.bf16.xpose.msra.mxu0 0
        %1485 = vmatpush.bf16.xpose.msra.mxu0 0
        %1486 = vmatpush.bf16.xpose.msra.mxu0 0
        %1487 = vmatpush.bf16.xpose.msra.mxu0 0
        %1488 = vmatpush.bf16.xpose.msra.mxu0 %v1479
        %1489 = vmatmul.bf16.gmra.mxu0 %v1476
        %v1490 = vpop.f32.mrf.mxu0
        %v1491 = vadd.f32 %v1451, %v1490
        %v1492 = vpop.f32.mrf.mxu0
        %1493 = vdwg.mxu0
        %v1495 = vsel %vm1455, %v741, 0
        %v1498 = vsel %vm1455, %v1093, 0
        %1500 = vmatpush.bf16.xpose.msra.mxu0 0
        %1501 = vmatpush.bf16.xpose.msra.mxu0 0
        %1502 = vmatpush.bf16.xpose.msra.mxu0 0
        %1503 = vmatpush.bf16.xpose.msra.mxu0 0
        %1504 = vmatpush.bf16.xpose.msra.mxu0 0
        %1505 = vmatpush.bf16.xpose.msra.mxu0 0
        %1506 = vmatpush.bf16.xpose.msra.mxu0 0
        %1507 = vmatpush.bf16.xpose.msra.mxu0 %v1498
        %1508 = vmatmul.bf16.gmra.mxu0 %v1495
        %v1509 = vpop.f32.mrf.mxu0
        %v1510 = vadd.f32 %v1452, %v1509
        %v1511 = vpop.f32.mrf.mxu0
        %1512 = vdwg.mxu0
        %v1514 = vsel %vm1455, %v744, 0
        %v1517 = vsel %vm1455, %v1096, 0
        %1519 = vmatpush.bf16.xpose.msra.mxu0 0
        %1520 = vmatpush.bf16.xpose.msra.mxu0 0
        %1521 = vmatpush.bf16.xpose.msra.mxu0 0
        %1522 = vmatpush.bf16.xpose.msra.mxu0 0
        %1523 = vmatpush.bf16.xpose.msra.mxu0 0
        %1524 = vmatpush.bf16.xpose.msra.mxu0 0
        %1525 = vmatpush.bf16.xpose.msra.mxu0 0
        %1526 = vmatpush.bf16.xpose.msra.mxu0 %v1517
        %1527 = vmatmul.bf16.gmra.mxu0 %v1514
        %v1528 = vpop.f32.mrf.mxu0
        %v1529 = vadd.f32 %v1452, %v1528
        %v1530 = vpop.f32.mrf.mxu0
        %1531 = vdwg.mxu0
        %v1533 = vsel %vm1455, %v911, 0
        %v1536 = vsel %vm1455, %v1263, 0
        %1538 = vmatpush.bf16.xpose.msra.mxu0 0
        %1539 = vmatpush.bf16.xpose.msra.mxu0 0
        %1540 = vmatpush.bf16.xpose.msra.mxu0 0
        %1541 = vmatpush.bf16.xpose.msra.mxu0 0
        %1542 = vmatpush.bf16.xpose.msra.mxu0 0
        %1543 = vmatpush.bf16.xpose.msra.mxu0 0
        %1544 = vmatpush.bf16.xpose.msra.mxu0 0
        %1545 = vmatpush.bf16.xpose.msra.mxu0 %v1536
        %1546 = vmatmul.bf16.gmra.mxu0 %v1533
        %v1547 = vpop.f32.mrf.mxu0
        %v1548 = vadd.f32 %v1451, %v1547
        %v1549 = vpop.f32.mrf.mxu0
        %1550 = vdwg.mxu0
        %v1552 = vsel %vm1455, %v914, 0
        %v1555 = vsel %vm1455, %v1266, 0
        %1557 = vmatpush.bf16.xpose.msra.mxu0 0
        %1558 = vmatpush.bf16.xpose.msra.mxu0 0
        %1559 = vmatpush.bf16.xpose.msra.mxu0 0
        %1560 = vmatpush.bf16.xpose.msra.mxu0 0
        %1561 = vmatpush.bf16.xpose.msra.mxu0 0
        %1562 = vmatpush.bf16.xpose.msra.mxu0 0
        %1563 = vmatpush.bf16.xpose.msra.mxu0 0
        %1564 = vmatpush.bf16.xpose.msra.mxu0 %v1555
        %1565 = vmatmul.bf16.gmra.mxu0 %v1552
        %v1566 = vpop.f32.mrf.mxu0
        %v1567 = vadd.f32 %v1451, %v1566
        %v1568 = vpop.f32.mrf.mxu0
        %1569 = vdwg.mxu0
        %v1571 = vsel %vm1455, %v917, 0
        %v1574 = vsel %vm1455, %v1269, 0
        %1576 = vmatpush.bf16.xpose.msra.mxu0 0
        %1577 = vmatpush.bf16.xpose.msra.mxu0 0
        %1578 = vmatpush.bf16.xpose.msra.mxu0 0
        %1579 = vmatpush.bf16.xpose.msra.mxu0 0
        %1580 = vmatpush.bf16.xpose.msra.mxu0 0
        %1581 = vmatpush.bf16.xpose.msra.mxu0 0
        %1582 = vmatpush.bf16.xpose.msra.mxu0 0
        %1583 = vmatpush.bf16.xpose.msra.mxu0 %v1574
        %1584 = vmatmul.bf16.gmra.mxu0 %v1571
        %v1585 = vpop.f32.mrf.mxu0
        %v1586 = vadd.f32 %v1452, %v1585
        %v1587 = vpop.f32.mrf.mxu0
        %1588 = vdwg.mxu0
        %v1590 = vsel %vm1455, %v920, 0
        %v1593 = vsel %vm1455, %v1272, 0
        %1595 = vmatpush.bf16.xpose.msra.mxu0 0
        %1596 = vmatpush.bf16.xpose.msra.mxu0 0
        %1597 = vmatpush.bf16.xpose.msra.mxu0 0
        %1598 = vmatpush.bf16.xpose.msra.mxu0 0
        %1599 = vmatpush.bf16.xpose.msra.mxu0 0
        %1600 = vmatpush.bf16.xpose.msra.mxu0 0
        %1601 = vmatpush.bf16.xpose.msra.mxu0 0
        %1602 = vmatpush.bf16.xpose.msra.mxu0 %v1593
        %1603 = vmatmul.bf16.gmra.mxu0 %v1590
        %v1604 = vpop.f32.mrf.mxu0
        %v1605 = vadd.f32 %v1452, %v1604
        %v1606 = vpop.f32.mrf.mxu0
        %1607 = vdwg.mxu0
        %v1608 = vsel %vm1455, %v1472, -inf
        %1609 = vmax.xlane.f32.xlu0 %v1608
        %v1610 = vpop.xlane.xlu0 %1609
        %v1611 = vsel %vm1455, %v1491, -inf
        %1612 = vmax.xlane.f32.xlu0 %v1611
        %v1613 = vpop.xlane.xlu0 %1612
        %v1614 = vsel %vm1455, %v1510, -inf
        %1615 = vmax.xlane.f32.xlu0 %v1614
        %v1616 = vpop.xlane.xlu0 %1615
        %v1617 = vsel %vm1455, %v1529, -inf
        %1618 = vmax.xlane.f32.xlu0 %v1617
        %v1619 = vpop.xlane.xlu0 %1618
        %v1620 = vsub.f32 %v1472, %v1610
        %v1621 = vsub.f32 %v1491, %v1613
        %v1622 = vsub.f32 %v1510, %v1616
        %v1623 = vsub.f32 %v1529, %v1619
        %v1624 = vmul.f32 %v1620, 1.442695
        %v1625 = vpow.pop %v1624
        %v1626 = vmul.f32 %v1621, 1.442695
        %v1627 = vpow.pop %v1626
        %v1628 = vmul.f32 %v1622, 1.442695
        %v1629 = vpow.pop %v1628
        %v1630 = vmul.f32 %v1623, 1.442695
        %v1631 = vpow.pop %v1630
        %v1632 = vsel %vm1455, %v1625, 0.0
        %1633 = vadd.xlane.f32.xlu0 %v1632
        %v1634 = vpop.xlane.xlu0 %1633
        %v1635 = vsel %vm1455, %v1627, 0.0
        %1636 = vadd.xlane.f32.xlu0 %v1635
        %v1637 = vpop.xlane.xlu0 %1636
        %v1638 = vsel %vm1455, %v1629, 0.0
        %1639 = vadd.xlane.f32.xlu0 %v1638
        %v1640 = vpop.xlane.xlu0 %1639
        %v1641 = vsel %vm1455, %v1631, 0.0
        %1642 = vadd.xlane.f32.xlu0 %v1641
        %v1643 = vpop.xlane.xlu0 %1642
        %v1644 = vrcp.pop %v1634
        %v1645 = vrcp.pop %v1637
        %v1646 = vrcp.pop %v1640
        %v1647 = vrcp.pop %v1643
        %v1648 = vmul.f32 %v1625, %v1644
        %v1649 = vmul.f32 %v1627, %v1645
        %v1650 = vmul.f32 %v1629, %v1646
        %v1651 = vmul.f32 %v1631, %v1647
        %v1652 = vsel %vm1455, %v1548, -inf
        %1653 = vmax.xlane.f32.xlu0 %v1652
        %v1654 = vpop.xlane.xlu0 %1653
        %v1655 = vsel %vm1455, %v1567, -inf
        %1656 = vmax.xlane.f32.xlu0 %v1655
        %v1657 = vpop.xlane.xlu0 %1656
        %v1658 = vsel %vm1455, %v1586, -inf
        %1659 = vmax.xlane.f32.xlu0 %v1658
        %v1660 = vpop.xlane.xlu0 %1659
        %v1661 = vsel %vm1455, %v1605, -inf
        %1662 = vmax.xlane.f32.xlu0 %v1661
        %v1663 = vpop.xlane.xlu0 %1662
        %v1664 = vsub.f32 %v1548, %v1654
        %v1665 = vsub.f32 %v1567, %v1657
        %v1666 = vsub.f32 %v1586, %v1660
        %v1667 = vsub.f32 %v1605, %v1663
        %v1668 = vmul.f32 %v1664, 1.442695
        %v1669 = vpow.pop %v1668
        %v1670 = vmul.f32 %v1665, 1.442695
        %v1671 = vpow.pop %v1670
        %v1672 = vmul.f32 %v1666, 1.442695
        %v1673 = vpow.pop %v1672
        %v1674 = vmul.f32 %v1667, 1.442695
        %v1675 = vpow.pop %v1674
        %v1676 = vsel %vm1455, %v1669, 0.0
        %1677 = vadd.xlane.f32.xlu0 %v1676
        %v1678 = vpop.xlane.xlu0 %1677
        %v1679 = vsel %vm1455, %v1671, 0.0
        %1680 = vadd.xlane.f32.xlu0 %v1679
        %v1681 = vpop.xlane.xlu0 %1680
        %v1682 = vsel %vm1455, %v1673, 0.0
        %1683 = vadd.xlane.f32.xlu0 %v1682
        %v1684 = vpop.xlane.xlu0 %1683
        %v1685 = vsel %vm1455, %v1675, 0.0
        %1686 = vadd.xlane.f32.xlu0 %v1685
        %v1687 = vpop.xlane.xlu0 %1686
        %v1688 = vrcp.pop %v1678
        %v1689 = vrcp.pop %v1681
        %v1690 = vrcp.pop %v1684
        %v1691 = vrcp.pop %v1687
        %v1692 = vmul.f32 %v1669, %v1688
        %v1693 = vmul.f32 %v1671, %v1689
        %v1694 = vmul.f32 %v1673, %v1690
        %v1695 = vmul.f32 %v1675, %v1691
        %v1698 = vperm.slane %v568, 0
        %v1699 = vperm.slane %v569, 0
        %1700 = vset.pattern.permute.xlu0 0
        %1701 = vperm.xlu0 %1700, %v1698
        %v1702 = vpop.permute.xlu0 %1701
        %1704 = vset.pattern.permute.xlu0 0
        %1705 = vperm.xlu0 %1704, %v1699
        %v1706 = vpop.permute.xlu0 %1705
        %v1708 = vmul.f32 %v1702, %v1692
        %v1709 = vmul.f32 %v1706, %v1693
        %v1710 = vmul.f32 %v1702, %v1694
        %v1711 = vmul.f32 %v1706, %v1695
        %v1712 = vsub.f32 %v1648, %v1708
        %v1713 = vsub.f32 %v1649, %v1709
        %v1714 = vsub.f32 %v1650, %v1710
        %v1715 = vsub.f32 %v1651, %v1711
        %v1716 = vpack.c.bf16 %v1712, %v1712
        %v1717 = vpack.c.bf16 %v1713, %v1713
        %v1718 = vpack.c.bf16 %v1714, %v1714
        %v1719 = vpack.c.bf16 %v1715, %v1715
        %v1721 = vsel %vm1455, %v1716, 0
        %vm1723 = vcmask 1043456
        %v1725 = vsel %vm1723, %v1439, 0
        %1727 = vmatpush.bf16.msra.mxu0 0
        %1728 = vmatpush.bf16.msra.mxu0 0
        %1729 = vmatpush.bf16.msra.mxu0 0
        %1730 = vmatpush.bf16.msra.mxu0 0
        %1731 = vmatpush.bf16.msra.mxu0 0
        %1732 = vmatpush.bf16.msra.mxu0 0
        %1733 = vmatpush.bf16.msra.mxu0 0
        %1734 = vmatpush.bf16.msra.mxu0 %v1725
        %1735 = vmatmul.bf16.gmra.mxu0 %v1721
        %v1736 = vpop.f32.mrf.mxu0
        %v1737 = vadd.f32 0.0, %v1736
        %v1738 = vpop.f32.mrf.mxu0
        %1739 = vdwg.mxu0
        %v1741 = vsel %vm1455, %v1717, 0
        %v1744 = vsel %vm1723, %v1442, 0
        %1746 = vmatpush.bf16.msra.mxu0 0
        %1747 = vmatpush.bf16.msra.mxu0 0
        %1748 = vmatpush.bf16.msra.mxu0 0
        %1749 = vmatpush.bf16.msra.mxu0 0
        %1750 = vmatpush.bf16.msra.mxu0 0
        %1751 = vmatpush.bf16.msra.mxu0 0
        %1752 = vmatpush.bf16.msra.mxu0 0
        %1753 = vmatpush.bf16.msra.mxu0 %v1744
        %1754 = vmatmul.bf16.gmra.mxu0 %v1741
        %v1755 = vpop.f32.mrf.mxu0
        %v1756 = vadd.f32 0.0, %v1755
        %v1757 = vpop.f32.mrf.mxu0
        %1758 = vdwg.mxu0
        %v1760 = vsel %vm1455, %v1718, 0
        %v1763 = vsel %vm1723, %v1445, 0
        %1765 = vmatpush.bf16.msra.mxu0 0
        %1766 = vmatpush.bf16.msra.mxu0 0
        %1767 = vmatpush.bf16.msra.mxu0 0
        %1768 = vmatpush.bf16.msra.mxu0 0
        %1769 = vmatpush.bf16.msra.mxu0 0
        %1770 = vmatpush.bf16.msra.mxu0 0
        %1771 = vmatpush.bf16.msra.mxu0 0
        %1772 = vmatpush.bf16.msra.mxu0 %v1763
        %1773 = vmatmul.bf16.gmra.mxu0 %v1760
        %v1774 = vpop.f32.mrf.mxu0
        %v1775 = vadd.f32 0.0, %v1774
        %v1776 = vpop.f32.mrf.mxu0
        %1777 = vdwg.mxu0
        %v1779 = vsel %vm1455, %v1719, 0
        %v1782 = vsel %vm1723, %v1448, 0
        %1784 = vmatpush.bf16.msra.mxu0 0
        %1785 = vmatpush.bf16.msra.mxu0 0
        %1786 = vmatpush.bf16.msra.mxu0 0
        %1787 = vmatpush.bf16.msra.mxu0 0
        %1788 = vmatpush.bf16.msra.mxu0 0
        %1789 = vmatpush.bf16.msra.mxu0 0
        %1790 = vmatpush.bf16.msra.mxu0 0
        %1791 = vmatpush.bf16.msra.mxu0 %v1782
        %1792 = vmatmul.bf16.gmra.mxu0 %v1779
        %v1793 = vpop.f32.mrf.mxu0
        %v1794 = vadd.f32 0.0, %v1793
        %v1795 = vpop.f32.mrf.mxu0
        %1796 = vdwg.mxu0
        %v1797 = vmul.f32 %v1737, %v1737
        %v1798 = vmul.f32 %v1756, %v1756
        %v1799 = vmul.f32 %v1775, %v1775
        %v1800 = vmul.f32 %v1794, %v1794
        %v1801 = vsel %vm1455, %v1797, 0.0
        %1802 = vadd.xlane.f32.xlu0 %v1801
        %v1803 = vpop.xlane.xlu0 %1802
        %v1804 = vsel %vm1455, %v1798, 0.0
        %1805 = vadd.xlane.f32.xlu0 %v1804
        %v1806 = vpop.xlane.xlu0 %1805
        %v1807 = vsel %vm1455, %v1799, 0.0
        %1808 = vadd.xlane.f32.xlu0 %v1807
        %v1809 = vpop.xlane.xlu0 %1808
        %v1810 = vsel %vm1455, %v1800, 0.0
        %1811 = vadd.xlane.f32.xlu0 %v1810
        %v1812 = vpop.xlane.xlu0 %1811
        %v1813 = vrcp.pop 8.0
        %v1814 = vmul.f32 8.0, %v1813
        %v1815 = vsub.f32 1.0, %v1814
        %v1816 = vmul.f32 %v1813, %v1815
        %v1817 = vadd.f32 %v1813, %v1816
        %vm1818 = vweird.f32 %v1813
        %v1819 = vsel %vm1818, %v1813, %v1817
        %v1820 = vmul.f32 %v1803, %v1819
        %v1821 = vmul.f32 %v1806, %v1819
        %v1822 = vmul.f32 %v1809, %v1819
        %v1823 = vmul.f32 %v1812, %v1819
        %v1824 = vadd.f32 %v1820, 1e-06
        %v1825 = vadd.f32 %v1821, 1e-06
        %v1826 = vadd.f32 %v1822, 1e-06
        %v1827 = vadd.f32 %v1823, 1e-06
        %v1828 = vrsqrt.pop %v1824
        %v1829 = vmul.f32 %v1828, %v1824
        %v1830 = vmul.f32 %v1829, %v1828
        %v1831 = vmul.f32 0.5, %v1830
        %v1832 = vsub.f32 1.5, %v1831
        %v1833 = vmul.f32 %v1828, %v1832
        %vm1834 = vweird.f32 %v1824
        %vm1835 = vweird.f32 %v1828
        %vm1836 = vmor %vm1834, %vm1835
        %v1837 = vsel %vm1836, %v1828, %v1833
        %v1838 = vrsqrt.pop %v1825
        %v1839 = vmul.f32 %v1838, %v1825
        %v1840 = vmul.f32 %v1839, %v1838
        %v1841 = vmul.f32 0.5, %v1840
        %v1842 = vsub.f32 1.5, %v1841
        %v1843 = vmul.f32 %v1838, %v1842
        %vm1844 = vweird.f32 %v1825
        %vm1845 = vweird.f32 %v1838
        %vm1846 = vmor %vm1844, %vm1845
        %v1847 = vsel %vm1846, %v1838, %v1843
        %v1848 = vrsqrt.pop %v1826
        %v1849 = vmul.f32 %v1848, %v1826
        %v1850 = vmul.f32 %v1849, %v1848
        %v1851 = vmul.f32 0.5, %v1850
        %v1852 = vsub.f32 1.5, %v1851
        %v1853 = vmul.f32 %v1848, %v1852
        %vm1854 = vweird.f32 %v1826
        %vm1855 = vweird.f32 %v1848
        %vm1856 = vmor %vm1854, %vm1855
        %v1857 = vsel %vm1856, %v1848, %v1853
        %v1858 = vrsqrt.pop %v1827
        %v1859 = vmul.f32 %v1858, %v1827
        %v1860 = vmul.f32 %v1859, %v1858
        %v1861 = vmul.f32 0.5, %v1860
        %v1862 = vsub.f32 1.5, %v1861
        %v1863 = vmul.f32 %v1858, %v1862
        %vm1864 = vweird.f32 %v1827
        %vm1865 = vweird.f32 %v1858
        %vm1866 = vmor %vm1864, %vm1865
        %v1867 = vsel %vm1866, %v1858, %v1863
        %v1868 = vmul.f32 %v1737, %v1837
        %v1869 = vmul.f32 %v1756, %v1847
        %v1870 = vmul.f32 %v1775, %v1857
        %v1871 = vmul.f32 %v1794, %v1867
        %v1872 = vmul.f32 %v1868, 0.2
        %v1873 = vmul.f32 %v1869, 0.2
        %v1874 = vmul.f32 %v1870, 0.2
        %v1875 = vmul.f32 %v1871, 0.2
        %v1876 = vrot.slane %v1872, 4
        %vm1877 = vcmask 1047556
        %v1878 = vsel %vm1877, 0.0, %v1876
        %v1880 = vunpack.c.l.s4 1983009808
        %v1881 = vunpack.c.0.s8 %v1880
        %v1882 = vperm.slane %v1872, %v1881
        %v1884 = vunpack.c.l.s4 1983009808
        %v1885 = vunpack.c.0.s8 %v1884
        %v1886 = vperm.slane %v1878, %v1885
        %v1887 = vrot.slane %v1873, 4
        %v1888 = vsel %vm1877, 0.0, %v1887
        %v1890 = vunpack.c.l.s4 1983009808
        %v1891 = vunpack.c.0.s8 %v1890
        %v1892 = vperm.slane %v1873, %v1891
        %v1894 = vunpack.c.l.s4 1983009808
        %v1895 = vunpack.c.0.s8 %v1894
        %v1896 = vperm.slane %v1888, %v1895
        %v1897 = vrot.slane %v1892, 4
        %v1898 = vsel %vm1877, %v1897, %v1882
        %v1899 = vrot.slane %v1882, 4
        %v1900 = vsel %vm1877, %v1892, %v1899
        %v1902 = vunpack.c.l.s4 1934713408
        %v1903 = vunpack.c.0.s8 %v1902
        %v1904 = vperm.slane %v1898, %v1903
        %v1906 = vunpack.c.l.s4 1934713408
        %v1907 = vunpack.c.0.s8 %v1906
        %v1908 = vperm.slane %v1900, %v1907
        %v1909 = vrot.slane %v1896, 4
        %v1910 = vsel %vm1877, %v1909, %v1886
        %v1911 = vrot.slane %v1886, 4
        %v1912 = vsel %vm1877, %v1896, %v1911
        %v1914 = vunpack.c.l.s4 1934713408
        %v1915 = vunpack.c.0.s8 %v1914
        %v1916 = vperm.slane %v1910, %v1915
        %v1918 = vunpack.c.l.s4 1934713408
        %v1919 = vunpack.c.0.s8 %v1918
        %v1920 = vperm.slane %v1912, %v1919
        %v1921 = vrot.slane %v1904, 4
        %v1922 = vsel %vm1877, 0.0, %v1921
        %v1923 = vrot.slane %v1908, 4
        %v1924 = vsel %vm1877, 0.0, %v1923
        %v1925 = vrot.slane %v1916, 4
        %v1926 = vsel %vm1877, 0.0, %v1925
        %v1927 = vrot.slane %v1920, 4
        %v1928 = vsel %vm1877, 0.0, %v1927
        %v1929 = vrot.slane %v1874, 4
        %v1930 = vsel %vm1877, 0.0, %v1929
        %v1932 = vunpack.c.l.s4 1983009808
        %v1933 = vunpack.c.0.s8 %v1932
        %v1934 = vperm.slane %v1874, %v1933
        %v1936 = vunpack.c.l.s4 1983009808
        %v1937 = vunpack.c.0.s8 %v1936
        %v1938 = vperm.slane %v1930, %v1937
        %v1939 = vrot.slane %v1875, 4
        %v1940 = vsel %vm1877, 0.0, %v1939
        %v1942 = vunpack.c.l.s4 1983009808
        %v1943 = vunpack.c.0.s8 %v1942
        %v1944 = vperm.slane %v1875, %v1943
        %v1946 = vunpack.c.l.s4 1983009808
        %v1947 = vunpack.c.0.s8 %v1946
        %v1948 = vperm.slane %v1940, %v1947
        %v1949 = vrot.slane %v1944, 4
        %v1950 = vsel %vm1877, %v1949, %v1934
        %v1951 = vrot.slane %v1934, 4
        %v1952 = vsel %vm1877, %v1944, %v1951
        %v1954 = vunpack.c.l.s4 1934713408
        %v1955 = vunpack.c.0.s8 %v1954
        %v1956 = vperm.slane %v1950, %v1955
        %v1958 = vunpack.c.l.s4 1934713408
        %v1959 = vunpack.c.0.s8 %v1958
        %v1960 = vperm.slane %v1952, %v1959
        %v1961 = vrot.slane %v1948, 4
        %v1962 = vsel %vm1877, %v1961, %v1938
        %v1963 = vrot.slane %v1938, 4
        %v1964 = vsel %vm1877, %v1948, %v1963
        %v1966 = vunpack.c.l.s4 1934713408
        %v1967 = vunpack.c.0.s8 %v1966
        %v1968 = vperm.slane %v1962, %v1967
        %v1970 = vunpack.c.l.s4 1934713408
        %v1971 = vunpack.c.0.s8 %v1970
        %v1972 = vperm.slane %v1964, %v1971
        %v1973 = vrot.slane %v1956, 4
        %v1974 = vsel %vm1877, 0.0, %v1973
        %v1975 = vrot.slane %v1960, 4
        %v1976 = vsel %vm1877, 0.0, %v1975
        %v1977 = vrot.slane %v1968, 4
        %v1978 = vsel %vm1877, 0.0, %v1977
        %v1979 = vrot.slane %v1972, 4
        %v1980 = vsel %vm1877, 0.0, %v1979
        %v1981 = vsel %vm1877, %v1923, %v1904
        %v1983 = vunpack.c.l.s4 1983009808
        %v1984 = vunpack.c.0.s8 %v1983
        %v1985 = vperm.slane %v1981, %v1984
        %v1986 = vrot.slane %v1924, 4
        %v1987 = vsel %vm1877, %v1986, %v1922
        %v1989 = vunpack.c.l.s4 1983009808
        %v1990 = vunpack.c.0.s8 %v1989
        %v1991 = vperm.slane %v1987, %v1990
        %v1992 = vsel %vm1877, %v1927, %v1916
        %v1994 = vunpack.c.l.s4 1983009808
        %v1995 = vunpack.c.0.s8 %v1994
        %v1996 = vperm.slane %v1992, %v1995
        %v1997 = vrot.slane %v1928, 4
        %v1998 = vsel %vm1877, %v1997, %v1926
        %v2000 = vunpack.c.l.s4 1983009808
        %v2001 = vunpack.c.0.s8 %v2000
        %v2002 = vperm.slane %v1998, %v2001
        %v2003 = vrot.slane %v1991, 4
        %v2004 = vsel %vm1877, %v2003, %v1985
        %v2006 = vunpack.c.l.s4 1934713408
        %v2007 = vunpack.c.0.s8 %v2006
        %v2008 = vperm.slane %v2004, %v2007
        %v2009 = vrot.slane %v2002, 4
        %v2010 = vsel %vm1877, %v2009, %v1996
        %v2012 = vunpack.c.l.s4 1934713408
        %v2013 = vunpack.c.0.s8 %v2012
        %v2014 = vperm.slane %v2010, %v2013
        %v2015 = vrot.slane %v2014, 4
        %v2016 = vsel %vm1877, %v2015, %v2008
        %v2017 = vrot.slane %v2008, 4
        %v2018 = vsel %vm1877, %v2014, %v2017
        %v2019 = vsel %vm1877, %v1975, %v1956
        %v2021 = vunpack.c.l.s4 1983009808
        %v2022 = vunpack.c.0.s8 %v2021
        %v2023 = vperm.slane %v2019, %v2022
        %v2024 = vrot.slane %v1976, 4
        %v2025 = vsel %vm1877, %v2024, %v1974
        %v2027 = vunpack.c.l.s4 1983009808
        %v2028 = vunpack.c.0.s8 %v2027
        %v2029 = vperm.slane %v2025, %v2028
        %v2030 = vsel %vm1877, %v1979, %v1968
        %v2032 = vunpack.c.l.s4 1983009808
        %v2033 = vunpack.c.0.s8 %v2032
        %v2034 = vperm.slane %v2030, %v2033
        %v2035 = vrot.slane %v1980, 4
        %v2036 = vsel %vm1877, %v2035, %v1978
        %v2038 = vunpack.c.l.s4 1983009808
        %v2039 = vunpack.c.0.s8 %v2038
        %v2040 = vperm.slane %v2036, %v2039
        %v2041 = vrot.slane %v2029, 4
        %v2042 = vsel %vm1877, %v2041, %v2023
        %v2044 = vunpack.c.l.s4 1934713408
        %v2045 = vunpack.c.0.s8 %v2044
        %v2046 = vperm.slane %v2042, %v2045
        %v2047 = vrot.slane %v2040, 4
        %v2048 = vsel %vm1877, %v2047, %v2034
        %v2050 = vunpack.c.l.s4 1934713408
        %v2051 = vunpack.c.0.s8 %v2050
        %v2052 = vperm.slane %v2048, %v2051
        %v2053 = vrot.slane %v2052, 4
        %v2054 = vsel %vm1877, %v2053, %v2046
        %v2055 = vrot.slane %v2046, 4
        %v2056 = vsel %vm1877, %v2052, %v2055
        %2059 = vrot.lane.b32.xlu0 %v2018, 8
        %v2060 = vpop.permute.xlu0 %2059
        %2061 = vrot.lane.b32.xlu0 %v2056, 8
        %v2062 = vpop.permute.xlu0 %2061
        %v2065 = vsel %vm1455, %v2016, %v2060
        %v2066 = vsel %vm1455, %v2054, %v2062
        %v2067 = vpack.c.bf16 %v2066, %v2065
        %v2068 = vld [vmem:[%s6] sm:$0xf]
        %v2069 = vld [vmem:[%s6 + $0x4] sm:$0xf]
        %v2072 = vunpack.c.l.b16 %v2068
        %v2073 = vunpack.c.l.b16 %v2069
        %v2074 = vpack.c.b16 %v2073, %v2072
        %vm2076 = vcmask 130048
        %v2078 = vsel %vm2076, %v2067, 0
        %2080 = vmatpush.bf16.msra.mxu0 0
        %2081 = vmatpush.bf16.msra.mxu0 0
        %2082 = vmatpush.bf16.msra.mxu0 0
        %2083 = vmatpush.bf16.msra.mxu0 0
        %2084 = vmatpush.bf16.msra.mxu0 0
        %2085 = vmatpush.bf16.msra.mxu0 0
        %2086 = vmatpush.bf16.msra.mxu0 0
        %2087 = vmatpush.bf16.msra.mxu0 %v2074
        %2088 = vmatmul.bf16.gmra.mxu0 %v2078
        %v2089 = vpop.f32.mrf.mxu0
        %v2090 = vadd.f32 %v530, %v2089
        %v2091 = vpop.f32.mrf.mxu0
        %v2092 = vadd.f32 %v531, %v2091
        %2093 = vdwg.mxu0
        %v2094 = vld [vmem:[#allocation8] sm:$0x1]
        %v2095 = vmul.f32 %v2090, %v2090
        %v2096 = vmul.f32 %v2092, %v2092
        %v2097 = vsel %vm487, %v2095, 0.0
        %2098 = vadd.xlane.f32.xlu0 %v2097
        %v2099 = vpop.xlane.xlu0 %2098
        %v2100 = vsel %vm487, %v2096, 0.0
        %2101 = vadd.xlane.f32.xlu0 %v2100
        %v2102 = vpop.xlane.xlu0 %2101
        %v2103 = vmul.f32 %v2099, %v500
        %v2104 = vmul.f32 %v2102, %v500
        %v2105 = vadd.f32 %v2103, 1e-06
        %v2106 = vadd.f32 %v2104, 1e-06
        %v2107 = vrsqrt.pop %v2105
        %v2108 = vmul.f32 %v2107, %v2105
        %v2109 = vmul.f32 %v2108, %v2107
        %v2110 = vmul.f32 0.5, %v2109
        %v2111 = vsub.f32 1.5, %v2110
        %v2112 = vmul.f32 %v2107, %v2111
        %vm2113 = vweird.f32 %v2105
        %vm2114 = vweird.f32 %v2107
        %vm2115 = vmor %vm2113, %vm2114
        %v2116 = vsel %vm2115, %v2107, %v2112
        %v2117 = vrsqrt.pop %v2106
        %v2118 = vmul.f32 %v2117, %v2106
        %v2119 = vmul.f32 %v2118, %v2117
        %v2120 = vmul.f32 0.5, %v2119
        %v2121 = vsub.f32 1.5, %v2120
        %v2122 = vmul.f32 %v2117, %v2121
        %vm2123 = vweird.f32 %v2106
        %vm2124 = vweird.f32 %v2117
        %vm2125 = vmor %vm2123, %vm2124
        %v2126 = vsel %vm2125, %v2117, %v2122
        %v2127 = vmul.f32 %v2090, %v2116
        %v2128 = vmul.f32 %v2092, %v2126
        %v2130 = vperm.slane %v2094, 0
        %v2132 = vmul.f32 %v2127, %v2130
        %v2133 = vmul.f32 %v2128, %v2130
        %v2134 = vpack.c.bf16 %v2133, %v2132
        %v2135 = vld [vmem:[#allocation11] sm:$0xf]
        %v2136 = vld [vmem:[#allocation11 + $0x4] sm:$0xf]
        %v2137 = vld [vmem:[#allocation11 + $0x8] sm:$0xf]
        %v2138 = vld [vmem:[#allocation11 + $0xc] sm:$0xf]
        %v2143 = vunpack.c.l.b16 %v2135
        %v2144 = vunpack.c.l.b16 %v2136
        %v2145 = vunpack.c.l.b16 %v2137
        %v2146 = vunpack.c.l.b16 %v2138
        %v2147 = vpack.c.b16 %v2144, %v2143
        %v2148 = vpack.c.b16 %v2146, %v2145
        %v2152 = vsel %vm487, %v2134, 0
        %2154 = vmatpush.bf16.msra.mxu0 0
        %2155 = vmatpush.bf16.msra.mxu0 0
        %2156 = vmatpush.bf16.msra.mxu0 0
        %2157 = vmatpush.bf16.msra.mxu0 0
        %2158 = vmatpush.bf16.msra.mxu0 0
        %2159 = vmatpush.bf16.msra.mxu0 0
        %2160 = vmatpush.bf16.msra.mxu0 %v2148
        %2161 = vmatpush.bf16.msra.mxu0 %v2147
        %2162 = vmatmul.bf16.gmra.mxu0 %v2152
        %v2163 = vpop.f32.mrf.mxu0
        %v2164 = vadd.f32 0.0, %v2163
        %v2165 = vpop.f32.mrf.mxu0
        %v2166 = vadd.f32 0.0, %v2165
        %2167 = vdwg.mxu0
        %v2168 = vxor.u32 %v2164, 2147483648
        %v2169 = vxor.u32 %v2166, 2147483648
        %v2170 = vmul.f32 %v2168, 1.442695
        %v2171 = vpow.pop %v2170
        %v2172 = vmul.f32 %v2169, 1.442695
        %v2173 = vpow.pop %v2172
        %v2174 = vadd.f32 %v2171, 1.0
        %v2175 = vadd.f32 %v2173, 1.0
        %v2176 = vrcp.pop %v2174
        %v2177 = vmul.f32 %v2174, %v2176
        %v2178 = vsub.f32 1.0, %v2177
        %v2179 = vmul.f32 %v2176, %v2178
        %v2180 = vadd.f32 %v2176, %v2179
        %vm2181 = vweird.f32 %v2174
        %vm2182 = vweird.f32 %v2176
        %vm2183 = vmor %vm2181, %vm2182
        %v2184 = vsel %vm2183, %v2176, %v2180
        %v2185 = vand.u32 2147483647, %v2174
        %vm2186 = vcmp.eq.f32.partialorder %v2185, 8.507059e+37
        %v2187 = vand.u32 %v2174, 2147483648
        %v2188 = vor.u32 1.1754944e-38, %v2187
        %v2189 = vsel %vm2186, %v2188, %v2184
        %v2190 = vmul.f32 1.0, %v2189
        %v2191 = vrcp.pop %v2175
        %v2192 = vmul.f32 %v2175, %v2191
        %v2193 = vsub.f32 1.0, %v2192
        %v2194 = vmul.f32 %v2191, %v2193
        %v2195 = vadd.f32 %v2191, %v2194
        %vm2196 = vweird.f32 %v2175
        %vm2197 = vweird.f32 %v2191
        %vm2198 = vmor %vm2196, %vm2197
        %v2199 = vsel %vm2198, %v2191, %v2195
        %v2200 = vand.u32 2147483647, %v2175
        %vm2201 = vcmp.eq.f32.partialorder %v2200, 8.507059e+37
        %v2202 = vand.u32 %v2175, 2147483648
        %v2203 = vor.u32 1.1754944e-38, %v2202
        %v2204 = vsel %vm2201, %v2203, %v2199
        %v2205 = vmul.f32 1.0, %v2204
        %v2206 = vmul.f32 %v2164, %v2190
        %v2207 = vmul.f32 %v2166, %v2205
        %2210 = vrot.lane.b32.xlu0 %v2164, 96
        %v2211 = vpop.permute.xlu0 %2210
        %2212 = vrot.lane.b32.xlu0 %v2166, 96
        %v2213 = vpop.permute.xlu0 %2212
        %v2216 = vmul.f32 %v2206, %v2211
        %v2217 = vmul.f32 %v2207, %v2213
        %v2218 = vpack.c.bf16 %v2217, %v2216
        %v2219 = vld [vmem:[#allocation13] sm:$0xf]
        %v2220 = vld [vmem:[#allocation13 + $0x4] sm:$0xf]
        %v2221 = vld [vmem:[#allocation13 + $0x8] sm:$0xf]
        %v2222 = vld [vmem:[#allocation13 + $0xc] sm:$0xf]
        %v2227 = vunpack.c.l.b16 %v2219
        %v2228 = vunpack.c.l.b16 %v2220
        %v2229 = vunpack.c.l.b16 %v2221
        %v2230 = vunpack.c.l.b16 %v2222
        %v2231 = vpack.c.b16 %v2228, %v2227
        %v2232 = vpack.c.b16 %v2230, %v2229
        %v2236 = vsel %vm487, %v2218, 0
        %2238 = vmatpush.bf16.msra.mxu0 0
        %2239 = vmatpush.bf16.msra.mxu0 0
        %2240 = vmatpush.bf16.msra.mxu0 0
        %2241 = vmatpush.bf16.msra.mxu0 0
        %2242 = vmatpush.bf16.msra.mxu0 0
        %2243 = vmatpush.bf16.msra.mxu0 0
        %2244 = vmatpush.bf16.msra.mxu0 %v2232
        %2245 = vmatpush.bf16.msra.mxu0 %v2231
        %2246 = vmatmul.bf16.gmra.mxu0 %v2236
        %v2247 = vpop.f32.mrf.mxu0
        %v2248 = vadd.f32 %v2090, %v2247
        %v2249 = vpop.f32.mrf.mxu0
        %v2250 = vadd.f32 %v2092, %v2249
        %2251 = vdwg.mxu0
        %2252 = vst.msk [vmem:[%s471] sm:$0xff] %vm487, %v2248
        %2253 = vst.msk [vmem:[%s471 + $0x8] sm:$0xff] %vm487, %v2250
        %s2254 = sand.u32 %s238, 1
        %s2255 = scalar_lea.sflag [#allocation4], %s2254
        %s2256 = sand.u32 %s238, 1
        %s2257 = smul.addr %s2256, 16
        %s2258 = scalar_lea.vmem [#allocation14], %s2257
        // Predicated region
        $region85: #{tpu_custom_call.1} parent=55 // pred_check
          %p2259 = pneg %p248
        $region86: #{tpu_custom_call.1} parent=55 // pred_check_branch
          %2261 = sbr.rel (%p2259) target = $region88
        $region87: #{tpu_custom_call.1} parent=55 // pred_region
          %s2262 = smul.u32 2, %s31
          %2264 = vsyncadd %s2255, 0
          %s2265 = smul.addr %s2262, 8
          %s2266 = scalar_lea.hbm %s9, %s2265
          %s2267 = sshll.u32 %s2258, 4
          %s2268 = int_to_ptr.vmem [resolvable:$true] %s2267
          %s2269 = sshll.u32 %s2266, 4
          %s2270 = int_to_ptr.hbm [resolvable:$true] %s2269
          %2275 = dma.vmem_to_hbm [thread:$0]  %s2268, 256, %s2270, %s2255, 128, 128, 8
        $region88: #{tpu_custom_call.1} parent=55 // pred_fallthru
          _
      $region56: #{tpu_custom_call.1} parent=5 // pred_fallthru
        _
      %p2276 = scmp.le.s32.totalorder 2, %s26
      // Predicated region
      $region89: #{tpu_custom_call.1} parent=5 // pred_check
        %p2277 = pneg %p2276
      $region90: #{tpu_custom_call.1} parent=5 // pred_check_branch
        %2279 = sbr.rel (%p2277) target = $region92
      $region91: #{tpu_custom_call.1} parent=5 // pred_region
        %s2280 = ssub.s32 %s26, 2
        // Predicated region
        $region93: #{tpu_custom_call.1} parent=91 // pred_check
          %p2281 = pneg %p254
        $region94: #{tpu_custom_call.1} parent=91 // pred_check_branch
          %2283 = sbr.rel (%p2281) target = $region96
        $region95: #{tpu_custom_call.1} parent=91 // pred_region
          %s2284 = sand.u32 %s239, 1
          %s2285 = scalar_lea.sflag [#allocation4], %s2284
          %s2286 = sand.u32 %s239, 1
          %s2287 = smul.addr %s2286, 16
          %s2288 = scalar_lea.vmem [#allocation14], %s2287
          %2290 = dma.done %s2285, 256
        $region96: #{tpu_custom_call.1} parent=91 // pred_fallthru
          _
      $region92: #{tpu_custom_call.1} parent=5 // pred_fallthru
        _
    $region6: #{tpu_custom_call.1} parent=1 // loop_footer
      %s30 = sadd.s32 1, %s26
    $region7: #{tpu_custom_call.1} parent=1 // loop_footer_branch
      %25 = sbr.rel target = $region3
    $region8: #{tpu_custom_call.1} parent=1 // loop_exit
      _
    %2291 = vsyncpa [#allocation3], 1
    %s2292 = scalar_lea.sflag [#allocation3], 1
    %2293 = vsyncpa %s2292, 1
    %2294 = vsyncpa [#allocation6], 1
    %s2295 = scalar_lea.sflag [#allocation6], 1
    %2296 = vsyncpa %s2295, 1
    %2297 = vsyncpa [#allocation9], 1
    %2298 = vsyncpa [#allocation12], 1
    %2299 = vsyncpa [#allocation4], 1
    %s2300 = scalar_lea.sflag [#allocation4], 1
    %2301 = vsyncpa %s2300, 1

// kernel: tpu_custom_call.1
$region0: #{tpu_custom_call.1}
  #allocation0 [shape = 'u32[]', space=smem, size = 0x4, offset = 0x4, fixed_abs, tag = 'smem constant byte address 0x4 - core index']
  #allocation1 [shape = 'u32[72,128]{1,0:T(1,128)}', space=vmem, size = 0x9000, scoped, tag = 'internal scratch']
  %s0 = inlined_call_operand.vmem [shape: f32[2,1,1], index: 0, kind: input, shape index: {}]
  %s1 = inlined_call_operand.hbm [shape: f32[4,8,32], index: 1, kind: input, shape index: {}]
  %s2 = inlined_call_operand.hbm [shape: f32[4,1,8], index: 2, kind: input, shape index: {}]
  %s3 = inlined_call_operand.hbm [shape: f32[1,32], index: 3, kind: input, shape index: {}]
  %s4 = inlined_call_operand.hbm [shape: f32[1,32], index: 4, kind: input, shape index: {}]
  %s5 = inlined_call_operand.hbm [shape: bf16[32,80], index: 5, kind: input, shape index: {}]
  %s6 = inlined_call_operand.vmem [shape: bf16[16,32], index: 6, kind: input, shape index: {}]
  %s7 = inlined_call_operand.hbm [shape: bf16[32,64], index: 7, kind: input, shape index: {}]
  %s8 = inlined_call_operand.hbm [shape: bf16[32,32], index: 8, kind: input, shape index: {}]
  %s9 = inlined_call_operand.hbm [shape: f32[4,8,32], index: 9, kind: output, shape index: {}]
  %s10 = sld [smem:[#allocation0]]
  $region97: #{tpu_custom_call.1} parent=0
    _
  %s12 = ssub.s32 1, %s10
  %s13 = scalar_select 0, %s12, %s10
  $region1: #{tpu_custom_call.1} parent=0
    #allocation2 [shape = 'u8[16384]{0}', space=vmem, size = 0x4000, scoped, tag = 'input window, operand 1']
    #allocation3 [shape = 's32[2]{0}', space=sflag, size = 0x8, scoped, tag = 'scoped memory for tpu_custom_call.1']
    #allocation4 [shape = 's32[2]{0}', space=sflag, size = 0x8, scoped, tag = 'scoped memory for tpu_custom_call.1']
    #allocation5 [shape = 'u8[2048]{0}', space=vmem, size = 0x800, scoped, tag = 'input window, operand 2']
    #allocation6 [shape = 's32[2]{0}', space=sflag, size = 0x8, scoped, tag = 'scoped memory for tpu_custom_call.1']
    #allocation7 [shape = 'u8[512]{0}', space=vmem, size = 0x400, scoped, tag = 'input window, operand 3, single buffered']
    #allocation8 [shape = 'u8[512]{0}', space=vmem, size = 0x400, scoped, tag = 'input window, operand 4, single buffered']
    #allocation9 [shape = 's32[1]{0}', space=sflag, size = 0x4, scoped, tag = 'scoped memory for tpu_custom_call.1']
    #allocation10 [shape = 'u8[8192]{0}', space=vmem, size = 0x2000, scoped, tag = 'input window, operand 5, single buffered']
    #allocation11 [shape = 'u8[8192]{0}', space=vmem, size = 0x2000, scoped, tag = 'input window, operand 7, single buffered']
    #allocation12 [shape = 's32[1]{0}', space=sflag, size = 0x4, scoped, tag = 'scoped memory for tpu_custom_call.1']
    #allocation13 [shape = 'u8[8192]{0}', space=vmem, size = 0x2000, scoped, tag = 'input window, operand 8, single buffered']
    #allocation14 [shape = 'u8[16384]{0}', space=vmem, size = 0x4000, scoped, tag = 'output window, operand 0']
    %14 = vsyncpa [#allocation3], 0
    %s15 = scalar_lea.sflag [#allocation3], 1
    %16 = vsyncpa %s15, 0
    %17 = vsyncpa [#allocation6], 0
    %s18 = scalar_lea.sflag [#allocation6], 1
    %19 = vsyncpa %s18, 0
    %20 = vsyncpa [#allocation9], 0
    %21 = vsyncpa [#allocation12], 0
    %22 = vsyncpa [#allocation4], 0
    %s23 = scalar_lea.sflag [#allocation4], 1
    %24 = vsyncpa %s23, 0
    loop: start=0, step=1, limit=4
    $region2: #{tpu_custom_call.1} parent=1 // loop_pre_header
      _
    $region3: #{tpu_custom_call.1} parent=1 // loop_header
      %s26 = sphi 0, %s30
      %p27 = scmp.ge.s32.totalorder %s26, 4
      %s34 = sphi 0, %s34
      %s36 = sphi 0, %s34
      %s37 = sphi 0, %s36
      %s51 = sphi 0, %s37
      %s57 = sphi 0, %s59
      %s60 = sphi 0, %s57
      %s61 = sphi 0, %s60
      %s77 = sphi 0, %s61
      %s83 = sphi 0, %s85
      %s86 = sphi 0, %s83
      %s87 = sphi 0, %s86
      %s103 = sphi 0, %s87
      %s107 = sphi 0, %s107
      %s109 = sphi 0, %s107
      %s110 = sphi 0, %s109
      %s124 = sphi 0, %s110
      %s128 = sphi 0, %s128
      %s130 = sphi 0, %s128
      %s131 = sphi 0, %s130
      %s145 = sphi 0, %s131
      %s149 = sphi 0, %s149
      %s151 = sphi 0, %s149
      %s152 = sphi 0, %s151
      %s166 = sphi 0, %s152
      %s170 = sphi 0, %s170
      %s172 = sphi 0, %s170
      %s173 = sphi 0, %s172
      %s187 = sphi 0, %s173
      %s191 = sphi 0, %s191
      %s193 = sphi 0, %s191
      %s194 = sphi 0, %s193
      %s208 = sphi 0, %s194
      %s212 = sphi 0, %s212
      %s214 = sphi 0, %s212
      %s215 = sphi 0, %s214
      %s229 = sphi 0, %s215
      %s235 = sphi 0, %s237
      %s238 = sphi 0, %s235
      %s239 = sphi 0, %s238
      %s255 = sphi 0, %s239
    $region4: #{tpu_custom_call.1} parent=1 // loop_header_branch
      %29 = sbr.rel (%p27) target = $region8
    $region5: #{tpu_custom_call.1} parent=1 // loop_body
      %s31 = ssub.s32 %s26, 1
      %s32 = ssub.s32 %s26, 2
      %s33 = sadd.s32 %s26, 1
      %s35 = sadd.s32 %s34, 1
      %p38 = scmp.eq.s32.totalorder %s26, 1
      %p39 = scmp.ne.s32.totalorder %s34, %s36
      %p40 = scmp.eq.s32.totalorder %s26, 0
      %p41 = por %p39, %p40
      %p42 = scmp.ne.s32.totalorder %s34, %s36
      %p43 = scmp.eq.s32.totalorder %s31, 1
      %p44 = por %p42, %p43
      %p45 = scmp.ne.s32.totalorder %s36, %s37
      %p46 = scmp.eq.s32.totalorder %s31, 0
      %p47 = por %p45, %p46
      %p48 = scmp.ne.s32.totalorder %s36, %s37
      %p49 = scmp.eq.s32.totalorder %s32, 1
      %p50 = por %p48, %p49
      %p52 = scmp.ne.s32.totalorder %s37, %s51
      %p53 = scmp.eq.s32.totalorder %s32, 0
      %p54 = por %p52, %p53
      %s55 = ssub.s32 %s26, %s33
      %p56 = scmp.eq.s32.totalorder %s55, 0
      %s58 = sadd.s32 %s57, 1
      %s59 = scalar_select %p56, %s57, %s58
      %p62 = pneg %p56
      %p63 = scmp.eq.s32.totalorder %s26, 1
      %p64 = por %p62, %p63
      %p65 = scmp.ne.s32.totalorder %s57, %s60
      %p66 = scmp.eq.s32.totalorder %s26, 0
      %p67 = por %p65, %p66
      %p68 = scmp.ne.s32.totalorder %s57, %s60
      %p69 = scmp.eq.s32.totalorder %s31, 1
      %p70 = por %p68, %p69
      %p71 = scmp.ne.s32.totalorder %s60, %s61
      %p72 = scmp.eq.s32.totalorder %s31, 0
      %p73 = por %p71, %p72
      %p74 = scmp.ne.s32.totalorder %s60, %s61
      %p75 = scmp.eq.s32.totalorder %s32, 1
      %p76 = por %p74, %p75
      %p78 = scmp.ne.s32.totalorder %s61, %s77
      %p79 = scmp.eq.s32.totalorder %s32, 0
      %p80 = por %p78, %p79
      %s81 = ssub.s32 %s26, %s33
      %p82 = scmp.eq.s32.totalorder %s81, 0
      %s84 = sadd.s32 %s83, 1
      %s85 = scalar_select %p82, %s83, %s84
      %p88 = pneg %p82
      %p89 = scmp.eq.s32.totalorder %s26, 1
      %p90 = por %p88, %p89
      %p91 = scmp.ne.s32.totalorder %s83, %s86
      %p92 = scmp.eq.s32.totalorder %s26, 0
      %p93 = por %p91, %p92
      %p94 = scmp.ne.s32.totalorder %s83, %s86
      %p95 = scmp.eq.s32.totalorder %s31, 1
      %p96 = por %p94, %p95
      %p97 = scmp.ne.s32.totalorder %s86, %s87
      %p98 = scmp.eq.s32.totalorder %s31, 0
      %p99 = por %p97, %p98
      %p100 = scmp.ne.s32.totalorder %s86, %s87
      %p101 = scmp.eq.s32.totalorder %s32, 1
      %p102 = por %p100, %p101
      %p104 = scmp.ne.s32.totalorder %s87, %s103
      %p105 = scmp.eq.s32.totalorder %s32, 0
      %p106 = por %p104, %p105
      %s108 = sadd.s32 %s107, 1
      %p111 = scmp.eq.s32.totalorder %s26, 1
      %p112 = scmp.ne.s32.totalorder %s107, %s109
      %p113 = scmp.eq.s32.totalorder %s26, 0
      %p114 = por %p112, %p113
      %p115 = scmp.ne.s32.totalorder %s107, %s109
      %p116 = scmp.eq.s32.totalorder %s31, 1
      %p117 = por %p115, %p116
      %p118 = scmp.ne.s32.totalorder %s109, %s110
      %p119 = scmp.eq.s32.totalorder %s31, 0
      %p120 = por %p118, %p119
      %p121 = scmp.ne.s32.totalorder %s109, %s110
      %p122 = scmp.eq.s32.totalorder %s32, 1
      %p123 = por %p121, %p122
      %p125 = scmp.ne.s32.totalorder %s110, %s124
      %p126 = scmp.eq.s32.totalorder %s32, 0
      %p127 = por %p125, %p126
      %s129 = sadd.s32 %s128, 1
      %p132 = scmp.eq.s32.totalorder %s26, 1
      %p133 = scmp.ne.s32.totalorder %s128, %s130
      %p134 = scmp.eq.s32.totalorder %s26, 0
      %p135 = por %p133, %p134
      %p136 = scmp.ne.s32.totalorder %s128, %s130
      %p137 = scmp.eq.s32.totalorder %s31, 1
      %p138 = por %p136, %p137
      %p139 = scmp.ne.s32.totalorder %s130, %s131
      %p140 = scmp.eq.s32.totalorder %s31, 0
      %p141 = por %p139, %p140
      %p142 = scmp.ne.s32.totalorder %s130, %s131
      %p143 = scmp.eq.s32.totalorder %s32, 1
      %p144 = por %p142, %p143
      %p146 = scmp.ne.s32.totalorder %s131, %s145
      %p147 = scmp.eq.s32.totalorder %s32, 0
      %p148 = por %p146, %p147
      %s150 = sadd.s32 %s149, 1
      %p153 = scmp.eq.s32.totalorder %s26, 1
      %p154 = scmp.ne.s32.totalorder %s149, %s151
      %p155 = scmp.eq.s32.totalorder %s26, 0
      %p156 = por %p154, %p155
      %p157 = scmp.ne.s32.totalorder %s149, %s151
      %p158 = scmp.eq.s32.totalorder %s31, 1
      %p159 = por %p157, %p158
      %p160 = scmp.ne.s32.totalorder %s151, %s152
      %p161 = scmp.eq.s32.totalorder %s31, 0
      %p162 = por %p160, %p161
      %p163 = scmp.ne.s32.totalorder %s151, %s152
      %p164 = scmp.eq.s32.totalorder %s32, 1
      %p165 = por %p163, %p164
      %p167 = scmp.ne.s32.totalorder %s152, %s166
      %p168 = scmp.eq.s32.totalorder %s32, 0
      %p169 = por %p167, %p168
      %s171 = sadd.s32 %s170, 1
      %p174 = scmp.eq.s32.totalorder %s26, 1
      %p175 = scmp.ne.s32.totalorder %s170, %s172
      %p176 = scmp.eq.s32.totalorder %s26, 0
      %p177 = por %p175, %p176
      %p178 = scmp.ne.s32.totalorder %s170, %s172
      %p179 = scmp.eq.s32.totalorder %s31, 1
      %p180 = por %p178, %p179
      %p181 = scmp.ne.s32.totalorder %s172, %s173
      %p182 = scmp.eq.s32.totalorder %s31, 0
      %p183 = por %p181, %p182
      %p184 = scmp.ne.s32.totalorder %s172, %s173
      %p185 = scmp.eq.s32.totalorder %s32, 1
      %p186 = por %p184, %p185
      %p188 = scmp.ne.s32.totalorder %s173, %s187
      %p189 = scmp.eq.s32.totalorder %s32, 0
      %p190 = por %p188, %p189
      %s192 = sadd.s32 %s191, 1
      %p195 = scmp.eq.s32.totalorder %s26, 1
      %p196 = scmp.ne.s32.totalorder %s191, %s193
      %p197 = scmp.eq.s32.totalorder %s26, 0
      %p198 = por %p196, %p197
      %p199 = scmp.ne.s32.totalorder %s191, %s193
      %p200 = scmp.eq.s32.totalorder %s31, 1
      %p201 = por %p199, %p200
      %p202 = scmp.ne.s32.totalorder %s193, %s194
      %p203 = scmp.eq.s32.totalorder %s31, 0
      %p204 = por %p202, %p203
      %p205 = scmp.ne.s32.totalorder %s193, %s194
      %p206 = scmp.eq.s32.totalorder %s32, 1
      %p207 = por %p205, %p206
      %p209 = scmp.ne.s32.totalorder %s194, %s208
      %p210 = scmp.eq.s32.totalorder %s32, 0
      %p211 = por %p209, %p210
      %s213 = sadd.s32 %s212, 1
      %p216 = scmp.eq.s32.totalorder %s26, 1
      %p217 = scmp.ne.s32.totalorder %s212, %s214
      %p218 = scmp.eq.s32.totalorder %s26, 0
      %p219 = por %p217, %p218
      %p220 = scmp.ne.s32.totalorder %s212, %s214
      %p221 = scmp.eq.s32.totalorder %s31, 1
      %p222 = por %p220, %p221
      %p223 = scmp.ne.s32.totalorder %s214, %s215
      %p224 = scmp.eq.s32.totalorder %s31, 0
      %p225 = por %p223, %p224
      %p226 = scmp.ne.s32.totalorder %s214, %s215
      %p227 = scmp.eq.s32.totalorder %s32, 1
      %p228 = por %p226, %p227
      %p230 = scmp.ne.s32.totalorder %s215, %s229
      %p231 = scmp.eq.s32.totalorder %s32, 0
      %p232 = por %p230, %p231
      %s233 = ssub.s32 %s26, %s33
      %p234 = scmp.eq.s32.totalorder %s233, 0
      %s236 = sadd.s32 %s235, 1
      %s237 = scalar_select %p234, %s235, %s236
      %p240 = pneg %p234
      %p241 = scmp.eq.s32.totalorder %s26, 1
      %p242 = por %p240, %p241
      %p243 = scmp.ne.s32.totalorder %s235, %s238
      %p244 = scmp.eq.s32.totalorder %s26, 0
      %p245 = por %p243, %p244
      %p246 = scmp.ne.s32.totalorder %s235, %s238
      %p247 = scmp.eq.s32.totalorder %s31, 1
      %p248 = por %p246, %p247
      %p249 = scmp.ne.s32.totalorder %s238, %s239
      %p250 = scmp.eq.s32.totalorder %s31, 0
      %p251 = por %p249, %p250
      %p252 = scmp.ne.s32.totalorder %s238, %s239
      %p253 = scmp.eq.s32.totalorder %s32, 1
      %p254 = por %p252, %p253
      %p256 = scmp.ne.s32.totalorder %s239, %s255
      %p257 = scmp.eq.s32.totalorder %s32, 0
      %p258 = por %p256, %p257
      %p259 = scmp.le.s32.totalorder 1, %s26
      %p260 = scmp.lt.s32.totalorder %s26, 3
      %p261 = pnand %p259, %p260
      %p262 = pneg %p261
      // Predicated region
      $region9: #{tpu_custom_call.1} parent=5 // pred_check
        _
      $region10: #{tpu_custom_call.1} parent=5 // pred_check_branch
        %264 = sbr.rel (%p261) target = $region12
      $region11: #{tpu_custom_call.1} parent=5 // pred_region
        %s265 = ssub.s32 %s26, 1
        // Predicated region
        $region13: #{tpu_custom_call.1} parent=11 // pred_check
          %p266 = pneg %p47
        $region14: #{tpu_custom_call.1} parent=11 // pred_check_branch
          %268 = sbr.rel (%p266) target = $region16
        $region15: #{tpu_custom_call.1} parent=11 // pred_region
          _
        $region16: #{tpu_custom_call.1} parent=11 // pred_fallthru
          _
        // Predicated region
        $region17: #{tpu_custom_call.1} parent=11 // pred_check
          %p269 = pneg %p120
        $region18: #{tpu_custom_call.1} parent=11 // pred_check_branch
          %271 = sbr.rel (%p269) target = $region20
        $region19: #{tpu_custom_call.1} parent=11 // pred_region
          %273 = vsyncadd [#allocation6], 0
          %s275 = sshll.u32 %s3, 4
          %s276 = int_to_ptr.hbm [resolvable:$true] %s275
          %s277 = sshll.u32 [#allocation7], 4
          %s278 = int_to_ptr.vmem [resolvable:$true] %s277
          %280 = dma.hbm_to_vmem [thread:$0]  %s276, 16, %s278, [#allocation6]
        $region20: #{tpu_custom_call.1} parent=11 // pred_fallthru
          _
        // Predicated region
        $region21: #{tpu_custom_call.1} parent=11 // pred_check
          %p281 = pneg %p141
        $region22: #{tpu_custom_call.1} parent=11 // pred_check_branch
          %283 = sbr.rel (%p281) target = $region24
        $region23: #{tpu_custom_call.1} parent=11 // pred_region
          %285 = vsyncadd [#allocation9], 0
          %s287 = sshll.u32 %s4, 4
          %s288 = int_to_ptr.hbm [resolvable:$true] %s287
          %s289 = sshll.u32 [#allocation8], 4
          %s290 = int_to_ptr.vmem [resolvable:$true] %s289
          %292 = dma.hbm_to_vmem [thread:$0]  %s288, 16, %s290, [#allocation9]
        $region24: #{tpu_custom_call.1} parent=11 // pred_fallthru
          _
        // Predicated region
        $region25: #{tpu_custom_call.1} parent=11 // pred_check
          %p293 = pneg %p162
        $region26: #{tpu_custom_call.1} parent=11 // pred_check_branch
          %295 = sbr.rel (%p293) target = $region28
        $region27: #{tpu_custom_call.1} parent=11 // pred_region
          %297 = vsyncadd [#allocation9], 0
          %s298 = sshll.u32 %s5, 4
          %s299 = int_to_ptr.hbm [resolvable:$true] %s298
          %s300 = sshll.u32 [#allocation10], 4
          %s301 = int_to_ptr.vmem [resolvable:$true] %s300
          %306 = dma.hbm_to_vmem [thread:$0]  %s299, 256, %s301, [#allocation9], 64, 64, 4
        $region28: #{tpu_custom_call.1} parent=11 // pred_fallthru
          _
        // Predicated region
        $region29: #{tpu_custom_call.1} parent=11 // pred_check
          %p307 = pneg %p183
        $region30: #{tpu_custom_call.1} parent=11 // pred_check_branch
          %309 = sbr.rel (%p307) target = $region32
        $region31: #{tpu_custom_call.1} parent=11 // pred_region
          _
        $region32: #{tpu_custom_call.1} parent=11 // pred_fallthru
          _
        // Predicated region
        $region33: #{tpu_custom_call.1} parent=11 // pred_check
          %p310 = pneg %p204
        $region34: #{tpu_custom_call.1} parent=11 // pred_check_branch
          %312 = sbr.rel (%p310) target = $region36
        $region35: #{tpu_custom_call.1} parent=11 // pred_region
          %314 = vsyncadd [#allocation12], 0
          %s315 = sshll.u32 %s7, 4
          %s316 = int_to_ptr.hbm [resolvable:$true] %s315
          %s317 = sshll.u32 [#allocation11], 4
          %s318 = int_to_ptr.vmem [resolvable:$true] %s317
          %323 = dma.hbm_to_vmem [thread:$0]  %s316, 256, %s318, [#allocation12], 64, 64, 4
        $region36: #{tpu_custom_call.1} parent=11 // pred_fallthru
          _
        // Predicated region
        $region37: #{tpu_custom_call.1} parent=11 // pred_check
          %p324 = pneg %p225
        $region38: #{tpu_custom_call.1} parent=11 // pred_check_branch
          %326 = sbr.rel (%p324) target = $region40
        $region39: #{tpu_custom_call.1} parent=11 // pred_region
          %328 = vsyncadd [#allocation12], 0
          %s329 = sshll.u32 %s8, 4
          %s330 = int_to_ptr.hbm [resolvable:$true] %s329
          %s331 = sshll.u32 [#allocation13], 4
          %s332 = int_to_ptr.vmem [resolvable:$true] %s331
          %337 = dma.hbm_to_vmem [thread:$0]  %s330, 256, %s332, [#allocation12], 64, 64, 4
        $region40: #{tpu_custom_call.1} parent=11 // pred_fallthru
          _
      $region12: #{tpu_custom_call.1} parent=5 // pred_fallthru
        _
      %p338 = scmp.lt.s32.totalorder %s26, 2
      // Predicated region
      $region41: #{tpu_custom_call.1} parent=5 // pred_check
        %p339 = pneg %p338
      $region42: #{tpu_custom_call.1} parent=5 // pred_check_branch
        %341 = sbr.rel (%p339) target = $region44
      $region43: #{tpu_custom_call.1} parent=5 // pred_region
        // Predicated region
        $region45: #{tpu_custom_call.1} parent=43 // pred_check
          %p342 = pneg %p67
        $region46: #{tpu_custom_call.1} parent=43 // pred_check_branch
          %344 = sbr.rel (%p342) target = $region48
        $region47: #{tpu_custom_call.1} parent=43 // pred_region
          %s345 = sand.u32 %s57, 1
          %s346 = scalar_lea.sflag [#allocation3], %s345
          %s347 = sand.u32 %s57, 1
          %s348 = smul.addr %s347, 16
          %s349 = scalar_lea.vmem [#allocation2], %s348
          %s350 = smul.u32 2, %s26
          %352 = vsyncadd %s346, 0
          %s353 = smul.addr %s350, 8
          %s354 = scalar_lea.hbm %s1, %s353
          %s355 = sshll.u32 %s354, 4
          %s356 = int_to_ptr.hbm [resolvable:$true] %s355
          %s357 = sshll.u32 %s349, 4
          %s358 = int_to_ptr.vmem [resolvable:$true] %s357
          %363 = dma.hbm_to_vmem [thread:$0]  %s356, 256, %s358, %s346, 128, 128, 8
        $region48: #{tpu_custom_call.1} parent=43 // pred_fallthru
          _
        // Predicated region
        $region49: #{tpu_custom_call.1} parent=43 // pred_check
          %p364 = pneg %p93
        $region50: #{tpu_custom_call.1} parent=43 // pred_check_branch
          %366 = sbr.rel (%p364) target = $region52
        $region51: #{tpu_custom_call.1} parent=43 // pred_region
          %s367 = sand.u32 %s26, 1
          %s368 = scalar_lea.sflag [#allocation6], %s367
          %s369 = sand.u32 %s83, 1
          %s370 = smul.addr %s369, 2
          %s371 = scalar_lea.vmem [#allocation5], %s370
          %s372 = smul.u32 2, %s26
          %374 = vsyncadd %s368, 0
          %s375 = scalar_lea.hbm %s2, %s372
          %s376 = sshll.u32 %s375, 4
          %s377 = int_to_ptr.hbm [resolvable:$true] %s376
          %s378 = sshll.u32 %s371, 4
          %s379 = int_to_ptr.vmem [resolvable:$true] %s378
          %384 = dma.hbm_to_vmem [thread:$0]  %s377, 32, %s379, %s368, 16, 16, 1
        $region52: #{tpu_custom_call.1} parent=43 // pred_fallthru
          _
      $region44: #{tpu_custom_call.1} parent=5 // pred_fallthru
        _
      %p385 = scmp.le.s32.totalorder 1, %s26
      %p386 = scmp.lt.s32.totalorder %s26, 3
      %p387 = pnand %p385, %p386
      %p388 = pneg %p387
      // Predicated region
      $region53: #{tpu_custom_call.1} parent=5 // pred_check
        _
      $region54: #{tpu_custom_call.1} parent=5 // pred_check_branch
        %390 = sbr.rel (%p387) target = $region56
      $region55: #{tpu_custom_call.1} parent=5 // pred_region
        %s391 = ssub.s32 %s26, 1
        %s392 = sand.u32 %s60, 1
        %s393 = scalar_lea.sflag [#allocation3], %s392
        %s394 = sand.u32 %s60, 1
        %s395 = smul.addr %s394, 16
        %s396 = scalar_lea.vmem [#allocation2], %s395
        // Predicated region
        $region57: #{tpu_custom_call.1} parent=55 // pred_check
          %p397 = pneg %p73
        $region58: #{tpu_custom_call.1} parent=55 // pred_check_branch
          %399 = sbr.rel (%p397) target = $region60
        $region59: #{tpu_custom_call.1} parent=55 // pred_region
          %401 = dma.done %s393, 256
        $region60: #{tpu_custom_call.1} parent=55 // pred_fallthru
          _
        %s402 = sand.u32 %s31, 1
        %s403 = scalar_lea.sflag [#allocation6], %s402
        %s404 = sand.u32 %s86, 1
        %s405 = smul.addr %s404, 2
        %s406 = scalar_lea.vmem [#allocation5], %s405
        // Predicated region
        $region61: #{tpu_custom_call.1} parent=55 // pred_check
          %p407 = pneg %p99
        $region62: #{tpu_custom_call.1} parent=55 // pred_check_branch
          %409 = sbr.rel (%p407) target = $region64
        $region63: #{tpu_custom_call.1} parent=55 // pred_region
          %411 = dma.done %s403, 32
        $region64: #{tpu_custom_call.1} parent=55 // pred_fallthru
          _
        // Predicated region
        $region65: #{tpu_custom_call.1} parent=55 // pred_check
          %p412 = pneg %p120
        $region66: #{tpu_custom_call.1} parent=55 // pred_check_branch
          %414 = sbr.rel (%p412) target = $region68
        $region67: #{tpu_custom_call.1} parent=55 // pred_region
          %416 = dma.done [#allocation6], 16
        $region68: #{tpu_custom_call.1} parent=55 // pred_fallthru
          _
        // Predicated region
        $region69: #{tpu_custom_call.1} parent=55 // pred_check
          %p417 = pneg %p141
        $region70: #{tpu_custom_call.1} parent=55 // pred_check_branch
          %419 = sbr.rel (%p417) target = $region72
        $region71: #{tpu_custom_call.1} parent=55 // pred_region
          %421 = dma.done [#allocation9], 16
        $region72: #{tpu_custom_call.1} parent=55 // pred_fallthru
          _
        // Predicated region
        $region73: #{tpu_custom_call.1} parent=55 // pred_check
          %p422 = pneg %p162
        $region74: #{tpu_custom_call.1} parent=55 // pred_check_branch
          %424 = sbr.rel (%p422) target = $region76
        $region75: #{tpu_custom_call.1} parent=55 // pred_region
          %426 = dma.done [#allocation9], 256
        $region76: #{tpu_custom_call.1} parent=55 // pred_fallthru
          _
        // Predicated region
        $region77: #{tpu_custom_call.1} parent=55 // pred_check
          %p427 = pneg %p204
        $region78: #{tpu_custom_call.1} parent=55 // pred_check_branch
          %429 = sbr.rel (%p427) target = $region80
        $region79: #{tpu_custom_call.1} parent=55 // pred_region
          %431 = dma.done [#allocation12], 256
        $region80: #{tpu_custom_call.1} parent=55 // pred_fallthru
          _
        // Predicated region
        $region81: #{tpu_custom_call.1} parent=55 // pred_check
          %p432 = pneg %p225
        $region82: #{tpu_custom_call.1} parent=55 // pred_check_branch
          %434 = sbr.rel (%p432) target = $region84
        $region83: #{tpu_custom_call.1} parent=55 // pred_region
          %436 = dma.done [#allocation12], 256
        $region84: #{tpu_custom_call.1} parent=55 // pred_fallthru
          _
        %p437 = pneg %p47
        %p438 = pneg %p44
        %s439 = sand.u32 %s60, 1
        %s440 = scalar_lea.sflag [#allocation3], %s439
        %s441 = sand.u32 %s60, 1
        %s442 = smul.addr %s441, 16
        %s443 = scalar_lea.vmem [#allocation2], %s442
        %p444 = pneg %p73
        %p445 = pneg %p70
        %s446 = sand.u32 %s31, 1
        %s447 = scalar_lea.sflag [#allocation6], %s446
        %s448 = sand.u32 %s86, 1
        %s449 = smul.addr %s448, 2
        %s450 = scalar_lea.vmem [#allocation5], %s449
        %p451 = pneg %p99
        %p452 = pneg %p96
        %p453 = pneg %p120
        %p454 = pneg %p117
        %p455 = pneg %p141
        %p456 = pneg %p138
        %p457 = pneg %p162
        %p458 = pneg %p159
        %p459 = pneg %p183
        %p460 = pneg %p180
        %p461 = pneg %p204
        %p462 = pneg %p201
        %p463 = pneg %p225
        %p464 = pneg %p222
        %p465 = pneg %p251
        %p466 = pneg %p248
        %s467 = sand.u32 %s238, 1
        %s468 = scalar_lea.sflag [#allocation4], %s467
        %s469 = sand.u32 %s238, 1
        %s470 = smul.addr %s469, 16
        %s471 = scalar_lea.vmem [#allocation14], %s470
        %s472 = smul.u32 2, %s31
        %s473 = smul.u32 2, %s31
        %s474 = smul.u32 2, %s31
        %v476 = vld [vmem:[%s396] sm:$0xff]
        %v477 = vld [vmem:[%s396 + $0x8] sm:$0xff]
        %v478 = vld [vmem:[%s406] sm:$0x1]
        %v479 = vld [vmem:[%s406 + $0x1] sm:$0x1]
        %vm480 = vcmp.gt.f32.partialorder %v478, 0.5
        %vm481 = vcmp.gt.f32.partialorder %v479, 0.5
        %v482 = vsel %vm480, 0.0, -1e+30
        %v483 = vsel %vm481, 0.0, -1e+30
        %v484 = vld [vmem:[#allocation7] sm:$0x1]
        %v485 = vmul.f32 %v476, %v476
        %v486 = vmul.f32 %v477, %v477
        %vm487 = vcmask 261120
        %v488 = vsel %vm487, %v485, 0.0
        %489 = vadd.xlane.f32.xlu0 %v488
        %v490 = vpop.xlane.xlu0 %489
        %v491 = vsel %vm487, %v486, 0.0
        %492 = vadd.xlane.f32.xlu0 %v491
        %v493 = vpop.xlane.xlu0 %492
        %v494 = vrcp.pop 32.0
        %v495 = vmul.f32 32.0, %v494
        %v496 = vsub.f32 1.0, %v495
        %v497 = vmul.f32 %v494, %v496
        %v498 = vadd.f32 %v494, %v497
        %vm499 = vweird.f32 %v494
        %v500 = vsel %vm499, %v494, %v498
        %v501 = vmul.f32 %v490, %v500
        %v502 = vmul.f32 %v493, %v500
        %v503 = vadd.f32 %v501, 1e-06
        %v504 = vadd.f32 %v502, 1e-06
        %v505 = vrsqrt.pop %v503
        %v506 = vmul.f32 %v505, %v503
        %v507 = vmul.f32 %v506, %v505
        %v508 = vmul.f32 0.5, %v507
        %v509 = vsub.f32 1.5, %v508
        %v510 = vmul.f32 %v505, %v509
        %vm511 = vweird.f32 %v503
        %vm512 = vweird.f32 %v505
        %vm513 = vmor %vm511, %vm512
        %v514 = vsel %vm513, %v505, %v510
        %v515 = vrsqrt.pop %v504
        %v516 = vmul.f32 %v515, %v504
        %v517 = vmul.f32 %v516, %v515
        %v518 = vmul.f32 0.5, %v517
        %v519 = vsub.f32 1.5, %v518
        %v520 = vmul.f32 %v515, %v519
        %vm521 = vweird.f32 %v504
        %vm522 = vweird.f32 %v515
        %vm523 = vmor %vm521, %vm522
        %v524 = vsel %vm523, %v515, %v520
        %v525 = vmul.f32 %v476, %v514
        %v526 = vmul.f32 %v477, %v524
        %v528 = vperm.slane %v484, 0
        %v530 = vmul.f32 %v525, %v528
        %v531 = vmul.f32 %v526, %v528
        %v532 = vpack.c.bf16 %v531, %v530
        %v533 = vld [vmem:[#allocation10] sm:$0xf]
        %v534 = vld [vmem:[#allocation10 + $0x4] sm:$0xf]
        %v535 = vld [vmem:[#allocation10 + $0x8] sm:$0xf]
        %v536 = vld [vmem:[#allocation10 + $0xc] sm:$0xf]
        %v541 = vunpack.c.l.b16 %v533
        %v542 = vunpack.c.l.b16 %v534
        %v543 = vunpack.c.l.b16 %v535
        %v544 = vunpack.c.l.b16 %v536
        %v545 = vpack.c.b16 %v542, %v541
        %v546 = vpack.c.b16 %v544, %v543
        %v550 = vsel %vm487, %v532, 0
        %552 = vmatpush.bf16.msra.mxu0 0
        %553 = vmatpush.bf16.msra.mxu0 0
        %554 = vmatpush.bf16.msra.mxu0 0
        %555 = vmatpush.bf16.msra.mxu0 0
        %556 = vmatpush.bf16.msra.mxu0 0
        %557 = vmatpush.bf16.msra.mxu0 0
        %558 = vmatpush.bf16.msra.mxu0 %v546
        %559 = vmatpush.bf16.msra.mxu0 %v545
        %560 = vmatmul.bf16.gmra.mxu0 %v550
        %v561 = vpop.f32.mrf.mxu0
        %v562 = vadd.f32 0.0, %v561
        %v563 = vpop.f32.mrf.mxu0
        %v564 = vadd.f32 0.0, %v563
        %565 = vdwg.mxu0
        %v566 = vpack.c.bf16 %v562, %v562
        %v567 = vpack.c.bf16 %v564, %v564
        %v568 = vld [vmem:[%s0] sm:$0x1]
        %v569 = vld [vmem:[%s0 + $0x1] sm:$0x1]
        %572 = vrot.lane.b32.xlu0 %v566, 120
        %v573 = vpop.permute.xlu0 %572
        %574 = vrot.lane.b32.xlu0 %v567, 120
        %v575 = vpop.permute.xlu0 %574
        %v578 = vpack.i.b16 %v573, %v566
        %v579 = vshrl.u32 %v566, 16
        %v580 = vshrl.u32 %v573, 16
        %v581 = vpack.i.b16 %v580, %v579
        %v584 = vpack.i.b16 %v575, %v567
        %v585 = vshrl.u32 %v567, 16
        %v586 = vshrl.u32 %v575, 16
        %v587 = vpack.i.b16 %v586, %v585
        %v590 = vunpack.c.l.s4 1983009808
        %v591 = vunpack.c.0.s8 %v590
        %v592 = vperm.slane %v578, %v591
        %v593 = vrot.slane %v592, 4
        %vm594 = vcmask 1047556
        %v595 = vsel %vm594, 0, %v593
        %v597 = vunpack.c.l.s4 1934713408
        %v598 = vunpack.c.0.s8 %v597
        %v599 = vperm.slane %v592, %v598
        %v601 = vunpack.c.l.s4 1934713408
        %v602 = vunpack.c.0.s8 %v601
        %v603 = vperm.slane %v595, %v602
        %v604 = vrot.slane %v599, 4
        %v605 = vsel %vm594, 0, %v604
        %v606 = vrot.slane %v603, 4
        %v607 = vsel %vm594, 0, %v606
        %v610 = vunpack.c.l.s4 1983009808
        %v611 = vunpack.c.0.s8 %v610
        %v612 = vperm.slane %v581, %v611
        %v613 = vrot.slane %v612, 4
        %v614 = vsel %vm594, 0, %v613
        %v616 = vunpack.c.l.s4 1934713408
        %v617 = vunpack.c.0.s8 %v616
        %v618 = vperm.slane %v612, %v617
        %v620 = vunpack.c.l.s4 1934713408
        %v621 = vunpack.c.0.s8 %v620
        %v622 = vperm.slane %v614, %v621
        %v623 = vrot.slane %v618, 4
        %v624 = vsel %vm594, 0, %v623
        %v625 = vrot.slane %v622, 4
        %v626 = vsel %vm594, 0, %v625
        %v629 = vunpack.c.l.s4 1983009808
        %v630 = vunpack.c.0.s8 %v629
        %v631 = vperm.slane %v584, %v630
        %v632 = vrot.slane %v631, 4
        %v633 = vsel %vm594, 0, %v632
        %v635 = vunpack.c.l.s4 1934713408
        %v636 = vunpack.c.0.s8 %v635
        %v637 = vperm.slane %v631, %v636
        %v639 = vunpack.c.l.s4 1934713408
        %v640 = vunpack.c.0.s8 %v639
        %v641 = vperm.slane %v633, %v640
        %v642 = vrot.slane %v637, 4
        %v643 = vsel %vm594, 0, %v642
        %v644 = vrot.slane %v641, 4
        %v645 = vsel %vm594, 0, %v644
        %v648 = vunpack.c.l.s4 1983009808
        %v649 = vunpack.c.0.s8 %v648
        %v650 = vperm.slane %v587, %v649
        %v651 = vrot.slane %v650, 4
        %v652 = vsel %vm594, 0, %v651
        %v654 = vunpack.c.l.s4 1934713408
        %v655 = vunpack.c.0.s8 %v654
        %v656 = vperm.slane %v650, %v655
        %v658 = vunpack.c.l.s4 1934713408
        %v659 = vunpack.c.0.s8 %v658
        %v660 = vperm.slane %v652, %v659
        %v661 = vrot.slane %v656, 4
        %v662 = vsel %vm594, 0, %v661
        %v663 = vrot.slane %v660, 4
        %v664 = vsel %vm594, 0, %v663
        %v665 = vsel %vm594, %v606, %v599
        %v667 = vunpack.c.l.s4 1983009808
        %v668 = vunpack.c.0.s8 %v667
        %v669 = vperm.slane %v665, %v668
        %v670 = vrot.slane %v607, 4
        %v671 = vsel %vm594, %v670, %v605
        %v673 = vunpack.c.l.s4 1983009808
        %v674 = vunpack.c.0.s8 %v673
        %v675 = vperm.slane %v671, %v674
        %v676 = vrot.slane %v675, 4
        %v677 = vsel %vm594, %v676, %v669
        %v679 = vunpack.c.l.s4 1934713408
        %v680 = vunpack.c.0.s8 %v679
        %v681 = vperm.slane %v677, %v680
        %v682 = vsel %vm594, %v625, %v618
        %v684 = vunpack.c.l.s4 1983009808
        %v685 = vunpack.c.0.s8 %v684
        %v686 = vperm.slane %v682, %v685
        %v687 = vrot.slane %v626, 4
        %v688 = vsel %vm594, %v687, %v624
        %v690 = vunpack.c.l.s4 1983009808
        %v691 = vunpack.c.0.s8 %v690
        %v692 = vperm.slane %v688, %v691
        %v693 = vrot.slane %v692, 4
        %v694 = vsel %vm594, %v693, %v686
        %v696 = vunpack.c.l.s4 1934713408
        %v697 = vunpack.c.0.s8 %v696
        %v698 = vperm.slane %v694, %v697
        %v699 = vsel %vm594, %v644, %v637
        %v701 = vunpack.c.l.s4 1983009808
        %v702 = vunpack.c.0.s8 %v701
        %v703 = vperm.slane %v699, %v702
        %v704 = vrot.slane %v645, 4
        %v705 = vsel %vm594, %v704, %v643
        %v707 = vunpack.c.l.s4 1983009808
        %v708 = vunpack.c.0.s8 %v707
        %v709 = vperm.slane %v705, %v708
        %v710 = vrot.slane %v709, 4
        %v711 = vsel %vm594, %v710, %v703
        %v713 = vunpack.c.l.s4 1934713408
        %v714 = vunpack.c.0.s8 %v713
        %v715 = vperm.slane %v711, %v714
        %v716 = vsel %vm594, %v663, %v656
        %v718 = vunpack.c.l.s4 1983009808
        %v719 = vunpack.c.0.s8 %v718
        %v720 = vperm.slane %v716, %v719
        %v721 = vrot.slane %v664, 4
        %v722 = vsel %vm594, %v721, %v662
        %v724 = vunpack.c.l.s4 1983009808
        %v725 = vunpack.c.0.s8 %v724
        %v726 = vperm.slane %v722, %v725
        %v727 = vrot.slane %v726, 4
        %v728 = vsel %vm594, %v727, %v720
        %v730 = vunpack.c.l.s4 1934713408
        %v731 = vunpack.c.0.s8 %v730
        %v732 = vperm.slane %v728, %v731
        %v735 = vpack.i.b16 %v698, %v681
        %v736 = vshrl.u32 %v681, 16
        %v737 = vshrl.u32 %v698, 16
        %v738 = vpack.i.b16 %v737, %v736
        %v741 = vpack.i.b16 %v732, %v715
        %v742 = vshrl.u32 %v715, 16
        %v743 = vshrl.u32 %v732, 16
        %v744 = vpack.i.b16 %v743, %v742
        %745 = vrot.lane.b32.xlu0 %v566, 112
        %v746 = vpop.permute.xlu0 %745
        %747 = vrot.lane.b32.xlu0 %v567, 112
        %v748 = vpop.permute.xlu0 %747
        %749 = vrot.lane.b32.xlu0 %v573, 112
        %v750 = vpop.permute.xlu0 %749
        %751 = vrot.lane.b32.xlu0 %v575, 112
        %v752 = vpop.permute.xlu0 %751
        %v755 = vpack.i.b16 %v750, %v746
        %v756 = vshrl.u32 %v746, 16
        %v757 = vshrl.u32 %v750, 16
        %v758 = vpack.i.b16 %v757, %v756
        %v761 = vpack.i.b16 %v752, %v748
        %v762 = vshrl.u32 %v748, 16
        %v763 = vshrl.u32 %v752, 16
        %v764 = vpack.i.b16 %v763, %v762
        %v767 = vunpack.c.l.s4 1983009808
        %v768 = vunpack.c.0.s8 %v767
        %v769 = vperm.slane %v755, %v768
        %v770 = vrot.slane %v769, 4
        %v771 = vsel %vm594, 0, %v770
        %v773 = vunpack.c.l.s4 1934713408
        %v774 = vunpack.c.0.s8 %v773
        %v775 = vperm.slane %v769, %v774
        %v777 = vunpack.c.l.s4 1934713408
        %v778 = vunpack.c.0.s8 %v777
        %v779 = vperm.slane %v771, %v778
        %v780 = vrot.slane %v775, 4
        %v781 = vsel %vm594, 0, %v780
        %v782 = vrot.slane %v779, 4
        %v783 = vsel %vm594, 0, %v782
        %v786 = vunpack.c.l.s4 1983009808
        %v787 = vunpack.c.0.s8 %v786
        %v788 = vperm.slane %v758, %v787
        %v789 = vrot.slane %v788, 4
        %v790 = vsel %vm594, 0, %v789
        %v792 = vunpack.c.l.s4 1934713408
        %v793 = vunpack.c.0.s8 %v792
        %v794 = vperm.slane %v788, %v793
        %v796 = vunpack.c.l.s4 1934713408
        %v797 = vunpack.c.0.s8 %v796
        %v798 = vperm.slane %v790, %v797
        %v799 = vrot.slane %v794, 4
        %v800 = vsel %vm594, 0, %v799
        %v801 = vrot.slane %v798, 4
        %v802 = vsel %vm594, 0, %v801
        %v805 = vunpack.c.l.s4 1983009808
        %v806 = vunpack.c.0.s8 %v805
        %v807 = vperm.slane %v761, %v806
        %v808 = vrot.slane %v807, 4
        %v809 = vsel %vm594, 0, %v808
        %v811 = vunpack.c.l.s4 1934713408
        %v812 = vunpack.c.0.s8 %v811
        %v813 = vperm.slane %v807, %v812
        %v815 = vunpack.c.l.s4 1934713408
        %v816 = vunpack.c.0.s8 %v815
        %v817 = vperm.slane %v809, %v816
        %v818 = vrot.slane %v813, 4
        %v819 = vsel %vm594, 0, %v818
        %v820 = vrot.slane %v817, 4
        %v821 = vsel %vm594, 0, %v820
        %v824 = vunpack.c.l.s4 1983009808
        %v825 = vunpack.c.0.s8 %v824
        %v826 = vperm.slane %v764, %v825
        %v827 = vrot.slane %v826, 4
        %v828 = vsel %vm594, 0, %v827
        %v830 = vunpack.c.l.s4 1934713408
        %v831 = vunpack.c.0.s8 %v830
        %v832 = vperm.slane %v826, %v831
        %v834 = vunpack.c.l.s4 1934713408
        %v835 = vunpack.c.0.s8 %v834
        %v836 = vperm.slane %v828, %v835
        %v837 = vrot.slane %v832, 4
        %v838 = vsel %vm594, 0, %v837
        %v839 = vrot.slane %v836, 4
        %v840 = vsel %vm594, 0, %v839
        %v841 = vsel %vm594, %v782, %v775
        %v843 = vunpack.c.l.s4 1983009808
        %v844 = vunpack.c.0.s8 %v843
        %v845 = vperm.slane %v841, %v844
        %v846 = vrot.slane %v783, 4
        %v847 = vsel %vm594, %v846, %v781
        %v849 = vunpack.c.l.s4 1983009808
        %v850 = vunpack.c.0.s8 %v849
        %v851 = vperm.slane %v847, %v850
        %v852 = vrot.slane %v851, 4
        %v853 = vsel %vm594, %v852, %v845
        %v855 = vunpack.c.l.s4 1934713408
        %v856 = vunpack.c.0.s8 %v855
        %v857 = vperm.slane %v853, %v856
        %v858 = vsel %vm594, %v801, %v794
        %v860 = vunpack.c.l.s4 1983009808
        %v861 = vunpack.c.0.s8 %v860
        %v862 = vperm.slane %v858, %v861
        %v863 = vrot.slane %v802, 4
        %v864 = vsel %vm594, %v863, %v800
        %v866 = vunpack.c.l.s4 1983009808
        %v867 = vunpack.c.0.s8 %v866
        %v868 = vperm.slane %v864, %v867
        %v869 = vrot.slane %v868, 4
        %v870 = vsel %vm594, %v869, %v862
        %v872 = vunpack.c.l.s4 1934713408
        %v873 = vunpack.c.0.s8 %v872
        %v874 = vperm.slane %v870, %v873
        %v875 = vsel %vm594, %v820, %v813
        %v877 = vunpack.c.l.s4 1983009808
        %v878 = vunpack.c.0.s8 %v877
        %v879 = vperm.slane %v875, %v878
        %v880 = vrot.slane %v821, 4
        %v881 = vsel %vm594, %v880, %v819
        %v883 = vunpack.c.l.s4 1983009808
        %v884 = vunpack.c.0.s8 %v883
        %v885 = vperm.slane %v881, %v884
        %v886 = vrot.slane %v885, 4
        %v887 = vsel %vm594, %v886, %v879
        %v889 = vunpack.c.l.s4 1934713408
        %v890 = vunpack.c.0.s8 %v889
        %v891 = vperm.slane %v887, %v890
        %v892 = vsel %vm594, %v839, %v832
        %v894 = vunpack.c.l.s4 1983009808
        %v895 = vunpack.c.0.s8 %v894
        %v896 = vperm.slane %v892, %v895
        %v897 = vrot.slane %v840, 4
        %v898 = vsel %vm594, %v897, %v838
        %v900 = vunpack.c.l.s4 1983009808
        %v901 = vunpack.c.0.s8 %v900
        %v902 = vperm.slane %v898, %v901
        %v903 = vrot.slane %v902, 4
        %v904 = vsel %vm594, %v903, %v896
        %v906 = vunpack.c.l.s4 1934713408
        %v907 = vunpack.c.0.s8 %v906
        %v908 = vperm.slane %v904, %v907
        %v911 = vpack.i.b16 %v874, %v857
        %v912 = vshrl.u32 %v857, 16
        %v913 = vshrl.u32 %v874, 16
        %v914 = vpack.i.b16 %v913, %v912
        %v917 = vpack.i.b16 %v908, %v891
        %v918 = vshrl.u32 %v891, 16
        %v919 = vshrl.u32 %v908, 16
        %v920 = vpack.i.b16 %v919, %v918
        %921 = vrot.lane.b32.xlu0 %v566, 96
        %v922 = vpop.permute.xlu0 %921
        %923 = vrot.lane.b32.xlu0 %v567, 96
        %v924 = vpop.permute.xlu0 %923
        %925 = vrot.lane.b32.xlu0 %v573, 96
        %v926 = vpop.permute.xlu0 %925
        %927 = vrot.lane.b32.xlu0 %v575, 96
        %v928 = vpop.permute.xlu0 %927
        %v931 = vpack.i.b16 %v926, %v922
        %v932 = vshrl.u32 %v922, 16
        %v933 = vshrl.u32 %v926, 16
        %v934 = vpack.i.b16 %v933, %v932
        %v937 = vpack.i.b16 %v928, %v924
        %v938 = vshrl.u32 %v924, 16
        %v939 = vshrl.u32 %v928, 16
        %v940 = vpack.i.b16 %v939, %v938
        %v943 = vunpack.c.l.s4 1983009808
        %v944 = vunpack.c.0.s8 %v943
        %v945 = vperm.slane %v931, %v944
        %v946 = vrot.slane %v945, 4
        %v947 = vsel %vm594, 0, %v946
        %v949 = vunpack.c.l.s4 1934713408
        %v950 = vunpack.c.0.s8 %v949
        %v951 = vperm.slane %v945, %v950
        %v953 = vunpack.c.l.s4 1934713408
        %v954 = vunpack.c.0.s8 %v953
        %v955 = vperm.slane %v947, %v954
        %v956 = vrot.slane %v951, 4
        %v957 = vsel %vm594, 0, %v956
        %v958 = vrot.slane %v955, 4
        %v959 = vsel %vm594, 0, %v958
        %v962 = vunpack.c.l.s4 1983009808
        %v963 = vunpack.c.0.s8 %v962
        %v964 = vperm.slane %v934, %v963
        %v965 = vrot.slane %v964, 4
        %v966 = vsel %vm594, 0, %v965
        %v968 = vunpack.c.l.s4 1934713408
        %v969 = vunpack.c.0.s8 %v968
        %v970 = vperm.slane %v964, %v969
        %v972 = vunpack.c.l.s4 1934713408
        %v973 = vunpack.c.0.s8 %v972
        %v974 = vperm.slane %v966, %v973
        %v975 = vrot.slane %v970, 4
        %v976 = vsel %vm594, 0, %v975
        %v977 = vrot.slane %v974, 4
        %v978 = vsel %vm594, 0, %v977
        %v981 = vunpack.c.l.s4 1983009808
        %v982 = vunpack.c.0.s8 %v981
        %v983 = vperm.slane %v937, %v982
        %v984 = vrot.slane %v983, 4
        %v985 = vsel %vm594, 0, %v984
        %v987 = vunpack.c.l.s4 1934713408
        %v988 = vunpack.c.0.s8 %v987
        %v989 = vperm.slane %v983, %v988
        %v991 = vunpack.c.l.s4 1934713408
        %v992 = vunpack.c.0.s8 %v991
        %v993 = vperm.slane %v985, %v992
        %v994 = vrot.slane %v989, 4
        %v995 = vsel %vm594, 0, %v994
        %v996 = vrot.slane %v993, 4
        %v997 = vsel %vm594, 0, %v996
        %v1000 = vunpack.c.l.s4 1983009808
        %v1001 = vunpack.c.0.s8 %v1000
        %v1002 = vperm.slane %v940, %v1001
        %v1003 = vrot.slane %v1002, 4
        %v1004 = vsel %vm594, 0, %v1003
        %v1006 = vunpack.c.l.s4 1934713408
        %v1007 = vunpack.c.0.s8 %v1006
        %v1008 = vperm.slane %v1002, %v1007
        %v1010 = vunpack.c.l.s4 1934713408
        %v1011 = vunpack.c.0.s8 %v1010
        %v1012 = vperm.slane %v1004, %v1011
        %v1013 = vrot.slane %v1008, 4
        %v1014 = vsel %vm594, 0, %v1013
        %v1015 = vrot.slane %v1012, 4
        %v1016 = vsel %vm594, 0, %v1015
        %v1017 = vsel %vm594, %v958, %v951
        %v1019 = vunpack.c.l.s4 1983009808
        %v1020 = vunpack.c.0.s8 %v1019
        %v1021 = vperm.slane %v1017, %v1020
        %v1022 = vrot.slane %v959, 4
        %v1023 = vsel %vm594, %v1022, %v957
        %v1025 = vunpack.c.l.s4 1983009808
        %v1026 = vunpack.c.0.s8 %v1025
        %v1027 = vperm.slane %v1023, %v1026
        %v1028 = vrot.slane %v1027, 4
        %v1029 = vsel %vm594, %v1028, %v1021
        %v1031 = vunpack.c.l.s4 1934713408
        %v1032 = vunpack.c.0.s8 %v1031
        %v1033 = vperm.slane %v1029, %v1032
        %v1034 = vsel %vm594, %v977, %v970
        %v1036 = vunpack.c.l.s4 1983009808
        %v1037 = vunpack.c.0.s8 %v1036
        %v1038 = vperm.slane %v1034, %v1037
        %v1039 = vrot.slane %v978, 4
        %v1040 = vsel %vm594, %v1039, %v976
        %v1042 = vunpack.c.l.s4 1983009808
        %v1043 = vunpack.c.0.s8 %v1042
        %v1044 = vperm.slane %v1040, %v1043
        %v1045 = vrot.slane %v1044, 4
        %v1046 = vsel %vm594, %v1045, %v1038
        %v1048 = vunpack.c.l.s4 1934713408
        %v1049 = vunpack.c.0.s8 %v1048
        %v1050 = vperm.slane %v1046, %v1049
        %v1051 = vsel %vm594, %v996, %v989
        %v1053 = vunpack.c.l.s4 1983009808
        %v1054 = vunpack.c.0.s8 %v1053
        %v1055 = vperm.slane %v1051, %v1054
        %v1056 = vrot.slane %v997, 4
        %v1057 = vsel %vm594, %v1056, %v995
        %v1059 = vunpack.c.l.s4 1983009808
        %v1060 = vunpack.c.0.s8 %v1059
        %v1061 = vperm.slane %v1057, %v1060
        %v1062 = vrot.slane %v1061, 4
        %v1063 = vsel %vm594, %v1062, %v1055
        %v1065 = vunpack.c.l.s4 1934713408
        %v1066 = vunpack.c.0.s8 %v1065
        %v1067 = vperm.slane %v1063, %v1066
        %v1068 = vsel %vm594, %v1015, %v1008
        %v1070 = vunpack.c.l.s4 1983009808
        %v1071 = vunpack.c.0.s8 %v1070
        %v1072 = vperm.slane %v1068, %v1071
        %v1073 = vrot.slane %v1016, 4
        %v1074 = vsel %vm594, %v1073, %v1014
        %v1076 = vunpack.c.l.s4 1983009808
        %v1077 = vunpack.c.0.s8 %v1076
        %v1078 = vperm.slane %v1074, %v1077
        %v1079 = vrot.slane %v1078, 4
        %v1080 = vsel %vm594, %v1079, %v1072
        %v1082 = vunpack.c.l.s4 1934713408
        %v1083 = vunpack.c.0.s8 %v1082
        %v1084 = vperm.slane %v1080, %v1083
        %v1087 = vpack.i.b16 %v1050, %v1033
        %v1088 = vshrl.u32 %v1033, 16
        %v1089 = vshrl.u32 %v1050, 16
        %v1090 = vpack.i.b16 %v1089, %v1088
        %v1093 = vpack.i.b16 %v1084, %v1067
        %v1094 = vshrl.u32 %v1067, 16
        %v1095 = vshrl.u32 %v1084, 16
        %v1096 = vpack.i.b16 %v1095, %v1094
        %1097 = vrot.lane.b32.xlu0 %v566, 80
        %v1098 = vpop.permute.xlu0 %1097
        %1099 = vrot.lane.b32.xlu0 %v567, 80
        %v1100 = vpop.permute.xlu0 %1099
        %1101 = vrot.lane.b32.xlu0 %v573, 80
        %v1102 = vpop.permute.xlu0 %1101
        %1103 = vrot.lane.b32.xlu0 %v575, 80
        %v1104 = vpop.permute.xlu0 %1103
        %v1107 = vpack.i.b16 %v1102, %v1098
        %v1108 = vshrl.u32 %v1098, 16
        %v1109 = vshrl.u32 %v1102, 16
        %v1110 = vpack.i.b16 %v1109, %v1108
        %v1113 = vpack.i.b16 %v1104, %v1100
        %v1114 = vshrl.u32 %v1100, 16
        %v1115 = vshrl.u32 %v1104, 16
        %v1116 = vpack.i.b16 %v1115, %v1114
        %v1119 = vunpack.c.l.s4 1983009808
        %v1120 = vunpack.c.0.s8 %v1119
        %v1121 = vperm.slane %v1107, %v1120
        %v1122 = vrot.slane %v1121, 4
        %v1123 = vsel %vm594, 0, %v1122
        %v1125 = vunpack.c.l.s4 1934713408
        %v1126 = vunpack.c.0.s8 %v1125
        %v1127 = vperm.slane %v1121, %v1126
        %v1129 = vunpack.c.l.s4 1934713408
        %v1130 = vunpack.c.0.s8 %v1129
        %v1131 = vperm.slane %v1123, %v1130
        %v1132 = vrot.slane %v1127, 4
        %v1133 = vsel %vm594, 0, %v1132
        %v1134 = vrot.slane %v1131, 4
        %v1135 = vsel %vm594, 0, %v1134
        %v1138 = vunpack.c.l.s4 1983009808
        %v1139 = vunpack.c.0.s8 %v1138
        %v1140 = vperm.slane %v1110, %v1139
        %v1141 = vrot.slane %v1140, 4
        %v1142 = vsel %vm594, 0, %v1141
        %v1144 = vunpack.c.l.s4 1934713408
        %v1145 = vunpack.c.0.s8 %v1144
        %v1146 = vperm.slane %v1140, %v1145
        %v1148 = vunpack.c.l.s4 1934713408
        %v1149 = vunpack.c.0.s8 %v1148
        %v1150 = vperm.slane %v1142, %v1149
        %v1151 = vrot.slane %v1146, 4
        %v1152 = vsel %vm594, 0, %v1151
        %v1153 = vrot.slane %v1150, 4
        %v1154 = vsel %vm594, 0, %v1153
        %v1157 = vunpack.c.l.s4 1983009808
        %v1158 = vunpack.c.0.s8 %v1157
        %v1159 = vperm.slane %v1113, %v1158
        %v1160 = vrot.slane %v1159, 4
        %v1161 = vsel %vm594, 0, %v1160
        %v1163 = vunpack.c.l.s4 1934713408
        %v1164 = vunpack.c.0.s8 %v1163
        %v1165 = vperm.slane %v1159, %v1164
        %v1167 = vunpack.c.l.s4 1934713408
        %v1168 = vunpack.c.0.s8 %v1167
        %v1169 = vperm.slane %v1161, %v1168
        %v1170 = vrot.slane %v1165, 4
        %v1171 = vsel %vm594, 0, %v1170
        %v1172 = vrot.slane %v1169, 4
        %v1173 = vsel %vm594, 0, %v1172
        %v1176 = vunpack.c.l.s4 1983009808
        %v1177 = vunpack.c.0.s8 %v1176
        %v1178 = vperm.slane %v1116, %v1177
        %v1179 = vrot.slane %v1178, 4
        %v1180 = vsel %vm594, 0, %v1179
        %v1182 = vunpack.c.l.s4 1934713408
        %v1183 = vunpack.c.0.s8 %v1182
        %v1184 = vperm.slane %v1178, %v1183
        %v1186 = vunpack.c.l.s4 1934713408
        %v1187 = vunpack.c.0.s8 %v1186
        %v1188 = vperm.slane %v1180, %v1187
        %v1189 = vrot.slane %v1184, 4
        %v1190 = vsel %vm594, 0, %v1189
        %v1191 = vrot.slane %v1188, 4
        %v1192 = vsel %vm594, 0, %v1191
        %v1193 = vsel %vm594, %v1134, %v1127
        %v1195 = vunpack.c.l.s4 1983009808
        %v1196 = vunpack.c.0.s8 %v1195
        %v1197 = vperm.slane %v1193, %v1196
        %v1198 = vrot.slane %v1135, 4
        %v1199 = vsel %vm594, %v1198, %v1133
        %v1201 = vunpack.c.l.s4 1983009808
        %v1202 = vunpack.c.0.s8 %v1201
        %v1203 = vperm.slane %v1199, %v1202
        %v1204 = vrot.slane %v1203, 4
        %v1205 = vsel %vm594, %v1204, %v1197
        %v1207 = vunpack.c.l.s4 1934713408
        %v1208 = vunpack.c.0.s8 %v1207
        %v1209 = vperm.slane %v1205, %v1208
        %v1210 = vsel %vm594, %v1153, %v1146
        %v1212 = vunpack.c.l.s4 1983009808
        %v1213 = vunpack.c.0.s8 %v1212
        %v1214 = vperm.slane %v1210, %v1213
        %v1215 = vrot.slane %v1154, 4
        %v1216 = vsel %vm594, %v1215, %v1152
        %v1218 = vunpack.c.l.s4 1983009808
        %v1219 = vunpack.c.0.s8 %v1218
        %v1220 = vperm.slane %v1216, %v1219
        %v1221 = vrot.slane %v1220, 4
        %v1222 = vsel %vm594, %v1221, %v1214
        %v1224 = vunpack.c.l.s4 1934713408
        %v1225 = vunpack.c.0.s8 %v1224
        %v1226 = vperm.slane %v1222, %v1225
        %v1227 = vsel %vm594, %v1172, %v1165
        %v1229 = vunpack.c.l.s4 1983009808
        %v1230 = vunpack.c.0.s8 %v1229
        %v1231 = vperm.slane %v1227, %v1230
        %v1232 = vrot.slane %v1173, 4
        %v1233 = vsel %vm594, %v1232, %v1171
        %v1235 = vunpack.c.l.s4 1983009808
        %v1236 = vunpack.c.0.s8 %v1235
        %v1237 = vperm.slane %v1233, %v1236
        %v1238 = vrot.slane %v1237, 4
        %v1239 = vsel %vm594, %v1238, %v1231
        %v1241 = vunpack.c.l.s4 1934713408
        %v1242 = vunpack.c.0.s8 %v1241
        %v1243 = vperm.slane %v1239, %v1242
        %v1244 = vsel %vm594, %v1191, %v1184
        %v1246 = vunpack.c.l.s4 1983009808
        %v1247 = vunpack.c.0.s8 %v1246
        %v1248 = vperm.slane %v1244, %v1247
        %v1249 = vrot.slane %v1192, 4
        %v1250 = vsel %vm594, %v1249, %v1190
        %v1252 = vunpack.c.l.s4 1983009808
        %v1253 = vunpack.c.0.s8 %v1252
        %v1254 = vperm.slane %v1250, %v1253
        %v1255 = vrot.slane %v1254, 4
        %v1256 = vsel %vm594, %v1255, %v1248
        %v1258 = vunpack.c.l.s4 1934713408
        %v1259 = vunpack.c.0.s8 %v1258
        %v1260 = vperm.slane %v1256, %v1259
        %v1263 = vpack.i.b16 %v1226, %v1209
        %v1264 = vshrl.u32 %v1209, 16
        %v1265 = vshrl.u32 %v1226, 16
        %v1266 = vpack.i.b16 %v1265, %v1264
        %v1269 = vpack.i.b16 %v1260, %v1243
        %v1270 = vshrl.u32 %v1243, 16
        %v1271 = vshrl.u32 %v1260, 16
        %v1272 = vpack.i.b16 %v1271, %v1270
        %1273 = vrot.lane.b32.xlu0 %v566, 64
        %v1274 = vpop.permute.xlu0 %1273
        %1275 = vrot.lane.b32.xlu0 %v567, 64
        %v1276 = vpop.permute.xlu0 %1275
        %1277 = vrot.lane.b32.xlu0 %v573, 64
        %v1278 = vpop.permute.xlu0 %1277
        %1279 = vrot.lane.b32.xlu0 %v575, 64
        %v1280 = vpop.permute.xlu0 %1279
        %v1283 = vpack.i.b16 %v1278, %v1274
        %v1284 = vshrl.u32 %v1274, 16
        %v1285 = vshrl.u32 %v1278, 16
        %v1286 = vpack.i.b16 %v1285, %v1284
        %v1289 = vpack.i.b16 %v1280, %v1276
        %v1290 = vshrl.u32 %v1276, 16
        %v1291 = vshrl.u32 %v1280, 16
        %v1292 = vpack.i.b16 %v1291, %v1290
        %v1295 = vunpack.c.l.s4 1983009808
        %v1296 = vunpack.c.0.s8 %v1295
        %v1297 = vperm.slane %v1283, %v1296
        %v1298 = vrot.slane %v1297, 4
        %v1299 = vsel %vm594, 0, %v1298
        %v1301 = vunpack.c.l.s4 1934713408
        %v1302 = vunpack.c.0.s8 %v1301
        %v1303 = vperm.slane %v1297, %v1302
        %v1305 = vunpack.c.l.s4 1934713408
        %v1306 = vunpack.c.0.s8 %v1305
        %v1307 = vperm.slane %v1299, %v1306
        %v1308 = vrot.slane %v1303, 4
        %v1309 = vsel %vm594, 0, %v1308
        %v1310 = vrot.slane %v1307, 4
        %v1311 = vsel %vm594, 0, %v1310
        %v1314 = vunpack.c.l.s4 1983009808
        %v1315 = vunpack.c.0.s8 %v1314
        %v1316 = vperm.slane %v1286, %v1315
        %v1317 = vrot.slane %v1316, 4
        %v1318 = vsel %vm594, 0, %v1317
        %v1320 = vunpack.c.l.s4 1934713408
        %v1321 = vunpack.c.0.s8 %v1320
        %v1322 = vperm.slane %v1316, %v1321
        %v1324 = vunpack.c.l.s4 1934713408
        %v1325 = vunpack.c.0.s8 %v1324
        %v1326 = vperm.slane %v1318, %v1325
        %v1327 = vrot.slane %v1322, 4
        %v1328 = vsel %vm594, 0, %v1327
        %v1329 = vrot.slane %v1326, 4
        %v1330 = vsel %vm594, 0, %v1329
        %v1333 = vunpack.c.l.s4 1983009808
        %v1334 = vunpack.c.0.s8 %v1333
        %v1335 = vperm.slane %v1289, %v1334
        %v1336 = vrot.slane %v1335, 4
        %v1337 = vsel %vm594, 0, %v1336
        %v1339 = vunpack.c.l.s4 1934713408
        %v1340 = vunpack.c.0.s8 %v1339
        %v1341 = vperm.slane %v1335, %v1340
        %v1343 = vunpack.c.l.s4 1934713408
        %v1344 = vunpack.c.0.s8 %v1343
        %v1345 = vperm.slane %v1337, %v1344
        %v1346 = vrot.slane %v1341, 4
        %v1347 = vsel %vm594, 0, %v1346
        %v1348 = vrot.slane %v1345, 4
        %v1349 = vsel %vm594, 0, %v1348
        %v1352 = vunpack.c.l.s4 1983009808
        %v1353 = vunpack.c.0.s8 %v1352
        %v1354 = vperm.slane %v1292, %v1353
        %v1355 = vrot.slane %v1354, 4
        %v1356 = vsel %vm594, 0, %v1355
        %v1358 = vunpack.c.l.s4 1934713408
        %v1359 = vunpack.c.0.s8 %v1358
        %v1360 = vperm.slane %v1354, %v1359
        %v1362 = vunpack.c.l.s4 1934713408
        %v1363 = vunpack.c.0.s8 %v1362
        %v1364 = vperm.slane %v1356, %v1363
        %v1365 = vrot.slane %v1360, 4
        %v1366 = vsel %vm594, 0, %v1365
        %v1367 = vrot.slane %v1364, 4
        %v1368 = vsel %vm594, 0, %v1367
        %v1369 = vsel %vm594, %v1310, %v1303
        %v1371 = vunpack.c.l.s4 1983009808
        %v1372 = vunpack.c.0.s8 %v1371
        %v1373 = vperm.slane %v1369, %v1372
        %v1374 = vrot.slane %v1311, 4
        %v1375 = vsel %vm594, %v1374, %v1309
        %v1377 = vunpack.c.l.s4 1983009808
        %v1378 = vunpack.c.0.s8 %v1377
        %v1379 = vperm.slane %v1375, %v1378
        %v1380 = vrot.slane %v1379, 4
        %v1381 = vsel %vm594, %v1380, %v1373
        %v1383 = vunpack.c.l.s4 1934713408
        %v1384 = vunpack.c.0.s8 %v1383
        %v1385 = vperm.slane %v1381, %v1384
        %v1386 = vsel %vm594, %v1329, %v1322
        %v1388 = vunpack.c.l.s4 1983009808
        %v1389 = vunpack.c.0.s8 %v1388
        %v1390 = vperm.slane %v1386, %v1389
        %v1391 = vrot.slane %v1330, 4
        %v1392 = vsel %vm594, %v1391, %v1328
        %v1394 = vunpack.c.l.s4 1983009808
        %v1395 = vunpack.c.0.s8 %v1394
        %v1396 = vperm.slane %v1392, %v1395
        %v1397 = vrot.slane %v1396, 4
        %v1398 = vsel %vm594, %v1397, %v1390
        %v1400 = vunpack.c.l.s4 1934713408
        %v1401 = vunpack.c.0.s8 %v1400
        %v1402 = vperm.slane %v1398, %v1401
        %v1403 = vsel %vm594, %v1348, %v1341
        %v1405 = vunpack.c.l.s4 1983009808
        %v1406 = vunpack.c.0.s8 %v1405
        %v1407 = vperm.slane %v1403, %v1406
        %v1408 = vrot.slane %v1349, 4
        %v1409 = vsel %vm594, %v1408, %v1347
        %v1411 = vunpack.c.l.s4 1983009808
        %v1412 = vunpack.c.0.s8 %v1411
        %v1413 = vperm.slane %v1409, %v1412
        %v1414 = vrot.slane %v1413, 4
        %v1415 = vsel %vm594, %v1414, %v1407
        %v1417 = vunpack.c.l.s4 1934713408
        %v1418 = vunpack.c.0.s8 %v1417
        %v1419 = vperm.slane %v1415, %v1418
        %v1420 = vsel %vm594, %v1367, %v1360
        %v1422 = vunpack.c.l.s4 1983009808
        %v1423 = vunpack.c.0.s8 %v1422
        %v1424 = vperm.slane %v1420, %v1423
        %v1425 = vrot.slane %v1368, 4
        %v1426 = vsel %vm594, %v1425, %v1366
        %v1428 = vunpack.c.l.s4 1983009808
        %v1429 = vunpack.c.0.s8 %v1428
        %v1430 = vperm.slane %v1426, %v1429
        %v1431 = vrot.slane %v1430, 4
        %v1432 = vsel %vm594, %v1431, %v1424
        %v1434 = vunpack.c.l.s4 1934713408
        %v1435 = vunpack.c.0.s8 %v1434
        %v1436 = vperm.slane %v1432, %v1435
        %v1439 = vpack.i.b16 %v1402, %v1385
        %v1440 = vshrl.u32 %v1385, 16
        %v1441 = vshrl.u32 %v1402, 16
        %v1442 = vpack.i.b16 %v1441, %v1440
        %v1445 = vpack.i.b16 %v1436, %v1419
        %v1446 = vshrl.u32 %v1419, 16
        %v1447 = vshrl.u32 %v1436, 16
        %v1448 = vpack.i.b16 %v1447, %v1446
        %v1451 = vperm.slane %v482, 0
        %v1452 = vperm.slane %v483, 0
        %vm1455 = vcmask 64512
        %v1457 = vsel %vm1455, %v735, 0
        %v1460 = vsel %vm1455, %v1087, 0
        %1462 = vmatpush.bf16.xpose.msra.mxu0 0
        %1463 = vmatpush.bf16.xpose.msra.mxu0 0
        %1464 = vmatpush.bf16.xpose.msra.mxu0 0
        %1465 = vmatpush.bf16.xpose.msra.mxu0 0
        %1466 = vmatpush.bf16.xpose.msra.mxu0 0
        %1467 = vmatpush.bf16.xpose.msra.mxu0 0
        %1468 = vmatpush.bf16.xpose.msra.mxu0 0
        %1469 = vmatpush.bf16.xpose.msra.mxu0 %v1460
        %1470 = vmatmul.bf16.gmra.mxu0 %v1457
        %v1471 = vpop.f32.mrf.mxu0
        %v1472 = vadd.f32 %v1451, %v1471
        %v1473 = vpop.f32.mrf.mxu0
        %1474 = vdwg.mxu0
        %v1476 = vsel %vm1455, %v738, 0
        %v1479 = vsel %vm1455, %v1090, 0
        %1481 = vmatpush.bf16.xpose.msra.mxu0 0
        %1482 = vmatpush.bf16.xpose.msra.mxu0 0
        %1483 = vmatpush.bf16.xpose.msra.mxu0 0
        %1484 = vmatpush.bf16.xpose.msra.mxu0 0
        %1485 = vmatpush.bf16.xpose.msra.mxu0 0
        %1486 = vmatpush.bf16.xpose.msra.mxu0 0
        %1487 = vmatpush.bf16.xpose.msra.mxu0 0
        %1488 = vmatpush.bf16.xpose.msra.mxu0 %v1479
        %1489 = vmatmul.bf16.gmra.mxu0 %v1476
        %v1490 = vpop.f32.mrf.mxu0
        %v1491 = vadd.f32 %v1451, %v1490
        %v1492 = vpop.f32.mrf.mxu0
        %1493 = vdwg.mxu0
        %v1495 = vsel %vm1455, %v741, 0
        %v1498 = vsel %vm1455, %v1093, 0
        %1500 = vmatpush.bf16.xpose.msra.mxu0 0
        %1501 = vmatpush.bf16.xpose.msra.mxu0 0
        %1502 = vmatpush.bf16.xpose.msra.mxu0 0
        %1503 = vmatpush.bf16.xpose.msra.mxu0 0
        %1504 = vmatpush.bf16.xpose.msra.mxu0 0
        %1505 = vmatpush.bf16.xpose.msra.mxu0 0
        %1506 = vmatpush.bf16.xpose.msra.mxu0 0
        %1507 = vmatpush.bf16.xpose.msra.mxu0 %v1498
        %1508 = vmatmul.bf16.gmra.mxu0 %v1495
        %v1509 = vpop.f32.mrf.mxu0
        %v1510 = vadd.f32 %v1452, %v1509
        %v1511 = vpop.f32.mrf.mxu0
        %1512 = vdwg.mxu0
        %v1514 = vsel %vm1455, %v744, 0
        %v1517 = vsel %vm1455, %v1096, 0
        %1519 = vmatpush.bf16.xpose.msra.mxu0 0
        %1520 = vmatpush.bf16.xpose.msra.mxu0 0
        %1521 = vmatpush.bf16.xpose.msra.mxu0 0
        %1522 = vmatpush.bf16.xpose.msra.mxu0 0
        %1523 = vmatpush.bf16.xpose.msra.mxu0 0
        %1524 = vmatpush.bf16.xpose.msra.mxu0 0
        %1525 = vmatpush.bf16.xpose.msra.mxu0 0
        %1526 = vmatpush.bf16.xpose.msra.mxu0 %v1517
        %1527 = vmatmul.bf16.gmra.mxu0 %v1514
        %v1528 = vpop.f32.mrf.mxu0
        %v1529 = vadd.f32 %v1452, %v1528
        %v1530 = vpop.f32.mrf.mxu0
        %1531 = vdwg.mxu0
        %v1533 = vsel %vm1455, %v911, 0
        %v1536 = vsel %vm1455, %v1263, 0
        %1538 = vmatpush.bf16.xpose.msra.mxu0 0
        %1539 = vmatpush.bf16.xpose.msra.mxu0 0
        %1540 = vmatpush.bf16.xpose.msra.mxu0 0
        %1541 = vmatpush.bf16.xpose.msra.mxu0 0
        %1542 = vmatpush.bf16.xpose.msra.mxu0 0
        %1543 = vmatpush.bf16.xpose.msra.mxu0 0
        %1544 = vmatpush.bf16.xpose.msra.mxu0 0
        %1545 = vmatpush.bf16.xpose.msra.mxu0 %v1536
        %1546 = vmatmul.bf16.gmra.mxu0 %v1533
        %v1547 = vpop.f32.mrf.mxu0
        %v1548 = vadd.f32 %v1451, %v1547
        %v1549 = vpop.f32.mrf.mxu0
        %1550 = vdwg.mxu0
        %v1552 = vsel %vm1455, %v914, 0
        %v1555 = vsel %vm1455, %v1266, 0
        %1557 = vmatpush.bf16.xpose.msra.mxu0 0
        %1558 = vmatpush.bf16.xpose.msra.mxu0 0
        %1559 = vmatpush.bf16.xpose.msra.mxu0 0
        %1560 = vmatpush.bf16.xpose.msra.mxu0 0
        %1561 = vmatpush.bf16.xpose.msra.mxu0 0
        %1562 = vmatpush.bf16.xpose.msra.mxu0 0
        %1563 = vmatpush.bf16.xpose.msra.mxu0 0
        %1564 = vmatpush.bf16.xpose.msra.mxu0 %v1555
        %1565 = vmatmul.bf16.gmra.mxu0 %v1552
        %v1566 = vpop.f32.mrf.mxu0
        %v1567 = vadd.f32 %v1451, %v1566
        %v1568 = vpop.f32.mrf.mxu0
        %1569 = vdwg.mxu0
        %v1571 = vsel %vm1455, %v917, 0
        %v1574 = vsel %vm1455, %v1269, 0
        %1576 = vmatpush.bf16.xpose.msra.mxu0 0
        %1577 = vmatpush.bf16.xpose.msra.mxu0 0
        %1578 = vmatpush.bf16.xpose.msra.mxu0 0
        %1579 = vmatpush.bf16.xpose.msra.mxu0 0
        %1580 = vmatpush.bf16.xpose.msra.mxu0 0
        %1581 = vmatpush.bf16.xpose.msra.mxu0 0
        %1582 = vmatpush.bf16.xpose.msra.mxu0 0
        %1583 = vmatpush.bf16.xpose.msra.mxu0 %v1574
        %1584 = vmatmul.bf16.gmra.mxu0 %v1571
        %v1585 = vpop.f32.mrf.mxu0
        %v1586 = vadd.f32 %v1452, %v1585
        %v1587 = vpop.f32.mrf.mxu0
        %1588 = vdwg.mxu0
        %v1590 = vsel %vm1455, %v920, 0
        %v1593 = vsel %vm1455, %v1272, 0
        %1595 = vmatpush.bf16.xpose.msra.mxu0 0
        %1596 = vmatpush.bf16.xpose.msra.mxu0 0
        %1597 = vmatpush.bf16.xpose.msra.mxu0 0
        %1598 = vmatpush.bf16.xpose.msra.mxu0 0
        %1599 = vmatpush.bf16.xpose.msra.mxu0 0
        %1600 = vmatpush.bf16.xpose.msra.mxu0 0
        %1601 = vmatpush.bf16.xpose.msra.mxu0 0
        %1602 = vmatpush.bf16.xpose.msra.mxu0 %v1593
        %1603 = vmatmul.bf16.gmra.mxu0 %v1590
        %v1604 = vpop.f32.mrf.mxu0
        %v1605 = vadd.f32 %v1452, %v1604
        %v1606 = vpop.f32.mrf.mxu0
        %1607 = vdwg.mxu0
        %v1608 = vsel %vm1455, %v1472, -inf
        %1609 = vmax.xlane.f32.xlu0 %v1608
        %v1610 = vpop.xlane.xlu0 %1609
        %v1611 = vsel %vm1455, %v1491, -inf
        %1612 = vmax.xlane.f32.xlu0 %v1611
        %v1613 = vpop.xlane.xlu0 %1612
        %v1614 = vsel %vm1455, %v1510, -inf
        %1615 = vmax.xlane.f32.xlu0 %v1614
        %v1616 = vpop.xlane.xlu0 %1615
        %v1617 = vsel %vm1455, %v1529, -inf
        %1618 = vmax.xlane.f32.xlu0 %v1617
        %v1619 = vpop.xlane.xlu0 %1618
        %v1620 = vsub.f32 %v1472, %v1610
        %v1621 = vsub.f32 %v1491, %v1613
        %v1622 = vsub.f32 %v1510, %v1616
        %v1623 = vsub.f32 %v1529, %v1619
        %v1624 = vmul.f32 %v1620, 1.442695
        %v1625 = vpow.pop %v1624
        %v1626 = vmul.f32 %v1621, 1.442695
        %v1627 = vpow.pop %v1626
        %v1628 = vmul.f32 %v1622, 1.442695
        %v1629 = vpow.pop %v1628
        %v1630 = vmul.f32 %v1623, 1.442695
        %v1631 = vpow.pop %v1630
        %v1632 = vsel %vm1455, %v1625, 0.0
        %1633 = vadd.xlane.f32.xlu0 %v1632
        %v1634 = vpop.xlane.xlu0 %1633
        %v1635 = vsel %vm1455, %v1627, 0.0
        %1636 = vadd.xlane.f32.xlu0 %v1635
        %v1637 = vpop.xlane.xlu0 %1636
        %v1638 = vsel %vm1455, %v1629, 0.0
        %1639 = vadd.xlane.f32.xlu0 %v1638
        %v1640 = vpop.xlane.xlu0 %1639
        %v1641 = vsel %vm1455, %v1631, 0.0
        %1642 = vadd.xlane.f32.xlu0 %v1641
        %v1643 = vpop.xlane.xlu0 %1642
        %v1644 = vrcp.pop %v1634
        %v1645 = vrcp.pop %v1637
        %v1646 = vrcp.pop %v1640
        %v1647 = vrcp.pop %v1643
        %v1648 = vmul.f32 %v1625, %v1644
        %v1649 = vmul.f32 %v1627, %v1645
        %v1650 = vmul.f32 %v1629, %v1646
        %v1651 = vmul.f32 %v1631, %v1647
        %v1652 = vsel %vm1455, %v1548, -inf
        %1653 = vmax.xlane.f32.xlu0 %v1652
        %v1654 = vpop.xlane.xlu0 %1653
        %v1655 = vsel %vm1455, %v1567, -inf
        %1656 = vmax.xlane.f32.xlu0 %v1655
        %v1657 = vpop.xlane.xlu0 %1656
        %v1658 = vsel %vm1455, %v1586, -inf
        %1659 = vmax.xlane.f32.xlu0 %v1658
        %v1660 = vpop.xlane.xlu0 %1659
        %v1661 = vsel %vm1455, %v1605, -inf
        %1662 = vmax.xlane.f32.xlu0 %v1661
        %v1663 = vpop.xlane.xlu0 %1662
        %v1664 = vsub.f32 %v1548, %v1654
        %v1665 = vsub.f32 %v1567, %v1657
        %v1666 = vsub.f32 %v1586, %v1660
        %v1667 = vsub.f32 %v1605, %v1663
        %v1668 = vmul.f32 %v1664, 1.442695
        %v1669 = vpow.pop %v1668
        %v1670 = vmul.f32 %v1665, 1.442695
        %v1671 = vpow.pop %v1670
        %v1672 = vmul.f32 %v1666, 1.442695
        %v1673 = vpow.pop %v1672
        %v1674 = vmul.f32 %v1667, 1.442695
        %v1675 = vpow.pop %v1674
        %v1676 = vsel %vm1455, %v1669, 0.0
        %1677 = vadd.xlane.f32.xlu0 %v1676
        %v1678 = vpop.xlane.xlu0 %1677
        %v1679 = vsel %vm1455, %v1671, 0.0
        %1680 = vadd.xlane.f32.xlu0 %v1679
        %v1681 = vpop.xlane.xlu0 %1680
        %v1682 = vsel %vm1455, %v1673, 0.0
        %1683 = vadd.xlane.f32.xlu0 %v1682
        %v1684 = vpop.xlane.xlu0 %1683
        %v1685 = vsel %vm1455, %v1675, 0.0
        %1686 = vadd.xlane.f32.xlu0 %v1685
        %v1687 = vpop.xlane.xlu0 %1686
        %v1688 = vrcp.pop %v1678
        %v1689 = vrcp.pop %v1681
        %v1690 = vrcp.pop %v1684
        %v1691 = vrcp.pop %v1687
        %v1692 = vmul.f32 %v1669, %v1688
        %v1693 = vmul.f32 %v1671, %v1689
        %v1694 = vmul.f32 %v1673, %v1690
        %v1695 = vmul.f32 %v1675, %v1691
        %v1698 = vperm.slane %v568, 0
        %v1699 = vperm.slane %v569, 0
        %1700 = vset.pattern.permute.xlu0 0
        %1701 = vperm.xlu0 %1700, %v1698
        %v1702 = vpop.permute.xlu0 %1701
        %1704 = vset.pattern.permute.xlu0 0
        %1705 = vperm.xlu0 %1704, %v1699
        %v1706 = vpop.permute.xlu0 %1705
        %v1708 = vmul.f32 %v1702, %v1692
        %v1709 = vmul.f32 %v1706, %v1693
        %v1710 = vmul.f32 %v1702, %v1694
        %v1711 = vmul.f32 %v1706, %v1695
        %v1712 = vsub.f32 %v1648, %v1708
        %v1713 = vsub.f32 %v1649, %v1709
        %v1714 = vsub.f32 %v1650, %v1710
        %v1715 = vsub.f32 %v1651, %v1711
        %v1716 = vpack.c.bf16 %v1712, %v1712
        %v1717 = vpack.c.bf16 %v1713, %v1713
        %v1718 = vpack.c.bf16 %v1714, %v1714
        %v1719 = vpack.c.bf16 %v1715, %v1715
        %v1721 = vsel %vm1455, %v1716, 0
        %vm1723 = vcmask 1043456
        %v1725 = vsel %vm1723, %v1439, 0
        %1727 = vmatpush.bf16.msra.mxu0 0
        %1728 = vmatpush.bf16.msra.mxu0 0
        %1729 = vmatpush.bf16.msra.mxu0 0
        %1730 = vmatpush.bf16.msra.mxu0 0
        %1731 = vmatpush.bf16.msra.mxu0 0
        %1732 = vmatpush.bf16.msra.mxu0 0
        %1733 = vmatpush.bf16.msra.mxu0 0
        %1734 = vmatpush.bf16.msra.mxu0 %v1725
        %1735 = vmatmul.bf16.gmra.mxu0 %v1721
        %v1736 = vpop.f32.mrf.mxu0
        %v1737 = vadd.f32 0.0, %v1736
        %v1738 = vpop.f32.mrf.mxu0
        %1739 = vdwg.mxu0
        %v1741 = vsel %vm1455, %v1717, 0
        %v1744 = vsel %vm1723, %v1442, 0
        %1746 = vmatpush.bf16.msra.mxu0 0
        %1747 = vmatpush.bf16.msra.mxu0 0
        %1748 = vmatpush.bf16.msra.mxu0 0
        %1749 = vmatpush.bf16.msra.mxu0 0
        %1750 = vmatpush.bf16.msra.mxu0 0
        %1751 = vmatpush.bf16.msra.mxu0 0
        %1752 = vmatpush.bf16.msra.mxu0 0
        %1753 = vmatpush.bf16.msra.mxu0 %v1744
        %1754 = vmatmul.bf16.gmra.mxu0 %v1741
        %v1755 = vpop.f32.mrf.mxu0
        %v1756 = vadd.f32 0.0, %v1755
        %v1757 = vpop.f32.mrf.mxu0
        %1758 = vdwg.mxu0
        %v1760 = vsel %vm1455, %v1718, 0
        %v1763 = vsel %vm1723, %v1445, 0
        %1765 = vmatpush.bf16.msra.mxu0 0
        %1766 = vmatpush.bf16.msra.mxu0 0
        %1767 = vmatpush.bf16.msra.mxu0 0
        %1768 = vmatpush.bf16.msra.mxu0 0
        %1769 = vmatpush.bf16.msra.mxu0 0
        %1770 = vmatpush.bf16.msra.mxu0 0
        %1771 = vmatpush.bf16.msra.mxu0 0
        %1772 = vmatpush.bf16.msra.mxu0 %v1763
        %1773 = vmatmul.bf16.gmra.mxu0 %v1760
        %v1774 = vpop.f32.mrf.mxu0
        %v1775 = vadd.f32 0.0, %v1774
        %v1776 = vpop.f32.mrf.mxu0
        %1777 = vdwg.mxu0
        %v1779 = vsel %vm1455, %v1719, 0
        %v1782 = vsel %vm1723, %v1448, 0
        %1784 = vmatpush.bf16.msra.mxu0 0
        %1785 = vmatpush.bf16.msra.mxu0 0
        %1786 = vmatpush.bf16.msra.mxu0 0
        %1787 = vmatpush.bf16.msra.mxu0 0
        %1788 = vmatpush.bf16.msra.mxu0 0
        %1789 = vmatpush.bf16.msra.mxu0 0
        %1790 = vmatpush.bf16.msra.mxu0 0
        %1791 = vmatpush.bf16.msra.mxu0 %v1782
        %1792 = vmatmul.bf16.gmra.mxu0 %v1779
        %v1793 = vpop.f32.mrf.mxu0
        %v1794 = vadd.f32 0.0, %v1793
        %v1795 = vpop.f32.mrf.mxu0
        %1796 = vdwg.mxu0
        %v1797 = vmul.f32 %v1737, %v1737
        %v1798 = vmul.f32 %v1756, %v1756
        %v1799 = vmul.f32 %v1775, %v1775
        %v1800 = vmul.f32 %v1794, %v1794
        %v1801 = vsel %vm1455, %v1797, 0.0
        %1802 = vadd.xlane.f32.xlu0 %v1801
        %v1803 = vpop.xlane.xlu0 %1802
        %v1804 = vsel %vm1455, %v1798, 0.0
        %1805 = vadd.xlane.f32.xlu0 %v1804
        %v1806 = vpop.xlane.xlu0 %1805
        %v1807 = vsel %vm1455, %v1799, 0.0
        %1808 = vadd.xlane.f32.xlu0 %v1807
        %v1809 = vpop.xlane.xlu0 %1808
        %v1810 = vsel %vm1455, %v1800, 0.0
        %1811 = vadd.xlane.f32.xlu0 %v1810
        %v1812 = vpop.xlane.xlu0 %1811
        %v1813 = vrcp.pop 8.0
        %v1814 = vmul.f32 8.0, %v1813
        %v1815 = vsub.f32 1.0, %v1814
        %v1816 = vmul.f32 %v1813, %v1815
        %v1817 = vadd.f32 %v1813, %v1816
        %vm1818 = vweird.f32 %v1813
        %v1819 = vsel %vm1818, %v1813, %v1817
        %v1820 = vmul.f32 %v1803, %v1819
        %v1821 = vmul.f32 %v1806, %v1819
        %v1822 = vmul.f32 %v1809, %v1819
        %v1823 = vmul.f32 %v1812, %v1819
        %v1824 = vadd.f32 %v1820, 1e-06
        %v1825 = vadd.f32 %v1821, 1e-06
        %v1826 = vadd.f32 %v1822, 1e-06
        %v1827 = vadd.f32 %v1823, 1e-06
        %v1828 = vrsqrt.pop %v1824
        %v1829 = vmul.f32 %v1828, %v1824
        %v1830 = vmul.f32 %v1829, %v1828
        %v1831 = vmul.f32 0.5, %v1830
        %v1832 = vsub.f32 1.5, %v1831
        %v1833 = vmul.f32 %v1828, %v1832
        %vm1834 = vweird.f32 %v1824
        %vm1835 = vweird.f32 %v1828
        %vm1836 = vmor %vm1834, %vm1835
        %v1837 = vsel %vm1836, %v1828, %v1833
        %v1838 = vrsqrt.pop %v1825
        %v1839 = vmul.f32 %v1838, %v1825
        %v1840 = vmul.f32 %v1839, %v1838
        %v1841 = vmul.f32 0.5, %v1840
        %v1842 = vsub.f32 1.5, %v1841
        %v1843 = vmul.f32 %v1838, %v1842
        %vm1844 = vweird.f32 %v1825
        %vm1845 = vweird.f32 %v1838
        %vm1846 = vmor %vm1844, %vm1845
        %v1847 = vsel %vm1846, %v1838, %v1843
        %v1848 = vrsqrt.pop %v1826
        %v1849 = vmul.f32 %v1848, %v1826
        %v1850 = vmul.f32 %v1849, %v1848
        %v1851 = vmul.f32 0.5, %v1850
        %v1852 = vsub.f32 1.5, %v1851
        %v1853 = vmul.f32 %v1848, %v1852
        %vm1854 = vweird.f32 %v1826
        %vm1855 = vweird.f32 %v1848
        %vm1856 = vmor %vm1854, %vm1855
        %v1857 = vsel %vm1856, %v1848, %v1853
        %v1858 = vrsqrt.pop %v1827
        %v1859 = vmul.f32 %v1858, %v1827
        %v1860 = vmul.f32 %v1859, %v1858
        %v1861 = vmul.f32 0.5, %v1860
        %v1862 = vsub.f32 1.5, %v1861
        %v1863 = vmul.f32 %v1858, %v1862
        %vm1864 = vweird.f32 %v1827
        %vm1865 = vweird.f32 %v1858
        %vm1866 = vmor %vm1864, %vm1865
        %v1867 = vsel %vm1866, %v1858, %v1863
        %v1868 = vmul.f32 %v1737, %v1837
        %v1869 = vmul.f32 %v1756, %v1847
        %v1870 = vmul.f32 %v1775, %v1857
        %v1871 = vmul.f32 %v1794, %v1867
        %v1872 = vmul.f32 %v1868, 0.2
        %v1873 = vmul.f32 %v1869, 0.2
        %v1874 = vmul.f32 %v1870, 0.2
        %v1875 = vmul.f32 %v1871, 0.2
        %v1876 = vrot.slane %v1872, 4
        %vm1877 = vcmask 1047556
        %v1878 = vsel %vm1877, 0.0, %v1876
        %v1880 = vunpack.c.l.s4 1983009808
        %v1881 = vunpack.c.0.s8 %v1880
        %v1882 = vperm.slane %v1872, %v1881
        %v1884 = vunpack.c.l.s4 1983009808
        %v1885 = vunpack.c.0.s8 %v1884
        %v1886 = vperm.slane %v1878, %v1885
        %v1887 = vrot.slane %v1873, 4
        %v1888 = vsel %vm1877, 0.0, %v1887
        %v1890 = vunpack.c.l.s4 1983009808
        %v1891 = vunpack.c.0.s8 %v1890
        %v1892 = vperm.slane %v1873, %v1891
        %v1894 = vunpack.c.l.s4 1983009808
        %v1895 = vunpack.c.0.s8 %v1894
        %v1896 = vperm.slane %v1888, %v1895
        %v1897 = vrot.slane %v1892, 4
        %v1898 = vsel %vm1877, %v1897, %v1882
        %v1899 = vrot.slane %v1882, 4
        %v1900 = vsel %vm1877, %v1892, %v1899
        %v1902 = vunpack.c.l.s4 1934713408
        %v1903 = vunpack.c.0.s8 %v1902
        %v1904 = vperm.slane %v1898, %v1903
        %v1906 = vunpack.c.l.s4 1934713408
        %v1907 = vunpack.c.0.s8 %v1906
        %v1908 = vperm.slane %v1900, %v1907
        %v1909 = vrot.slane %v1896, 4
        %v1910 = vsel %vm1877, %v1909, %v1886
        %v1911 = vrot.slane %v1886, 4
        %v1912 = vsel %vm1877, %v1896, %v1911
        %v1914 = vunpack.c.l.s4 1934713408
        %v1915 = vunpack.c.0.s8 %v1914
        %v1916 = vperm.slane %v1910, %v1915
        %v1918 = vunpack.c.l.s4 1934713408
        %v1919 = vunpack.c.0.s8 %v1918
        %v1920 = vperm.slane %v1912, %v1919
        %v1921 = vrot.slane %v1904, 4
        %v1922 = vsel %vm1877, 0.0, %v1921
        %v1923 = vrot.slane %v1908, 4
        %v1924 = vsel %vm1877, 0.0, %v1923
        %v1925 = vrot.slane %v1916, 4
        %v1926 = vsel %vm1877, 0.0, %v1925
        %v1927 = vrot.slane %v1920, 4
        %v1928 = vsel %vm1877, 0.0, %v1927
        %v1929 = vrot.slane %v1874, 4
        %v1930 = vsel %vm1877, 0.0, %v1929
        %v1932 = vunpack.c.l.s4 1983009808
        %v1933 = vunpack.c.0.s8 %v1932
        %v1934 = vperm.slane %v1874, %v1933
        %v1936 = vunpack.c.l.s4 1983009808
        %v1937 = vunpack.c.0.s8 %v1936
        %v1938 = vperm.slane %v1930, %v1937
        %v1939 = vrot.slane %v1875, 4
        %v1940 = vsel %vm1877, 0.0, %v1939
        %v1942 = vunpack.c.l.s4 1983009808
        %v1943 = vunpack.c.0.s8 %v1942
        %v1944 = vperm.slane %v1875, %v1943
        %v1946 = vunpack.c.l.s4 1983009808
        %v1947 = vunpack.c.0.s8 %v1946
        %v1948 = vperm.slane %v1940, %v1947
        %v1949 = vrot.slane %v1944, 4
        %v1950 = vsel %vm1877, %v1949, %v1934
        %v1951 = vrot.slane %v1934, 4
        %v1952 = vsel %vm1877, %v1944, %v1951
        %v1954 = vunpack.c.l.s4 1934713408
        %v1955 = vunpack.c.0.s8 %v1954
        %v1956 = vperm.slane %v1950, %v1955
        %v1958 = vunpack.c.l.s4 1934713408
        %v1959 = vunpack.c.0.s8 %v1958
        %v1960 = vperm.slane %v1952, %v1959
        %v1961 = vrot.slane %v1948, 4
        %v1962 = vsel %vm1877, %v1961, %v1938
        %v1963 = vrot.slane %v1938, 4
        %v1964 = vsel %vm1877, %v1948, %v1963
        %v1966 = vunpack.c.l.s4 1934713408
        %v1967 = vunpack.c.0.s8 %v1966
        %v1968 = vperm.slane %v1962, %v1967
        %v1970 = vunpack.c.l.s4 1934713408
        %v1971 = vunpack.c.0.s8 %v1970
        %v1972 = vperm.slane %v1964, %v1971
        %v1973 = vrot.slane %v1956, 4
        %v1974 = vsel %vm1877, 0.0, %v1973
        %v1975 = vrot.slane %v1960, 4
        %v1976 = vsel %vm1877, 0.0, %v1975
        %v1977 = vrot.slane %v1968, 4
        %v1978 = vsel %vm1877, 0.0, %v1977
        %v1979 = vrot.slane %v1972, 4
        %v1980 = vsel %vm1877, 0.0, %v1979
        %v1981 = vsel %vm1877, %v1923, %v1904
        %v1983 = vunpack.c.l.s4 1983009808
        %v1984 = vunpack.c.0.s8 %v1983
        %v1985 = vperm.slane %v1981, %v1984
        %v1986 = vrot.slane %v1924, 4
        %v1987 = vsel %vm1877, %v1986, %v1922
        %v1989 = vunpack.c.l.s4 1983009808
        %v1990 = vunpack.c.0.s8 %v1989
        %v1991 = vperm.slane %v1987, %v1990
        %v1992 = vsel %vm1877, %v1927, %v1916
        %v1994 = vunpack.c.l.s4 1983009808
        %v1995 = vunpack.c.0.s8 %v1994
        %v1996 = vperm.slane %v1992, %v1995
        %v1997 = vrot.slane %v1928, 4
        %v1998 = vsel %vm1877, %v1997, %v1926
        %v2000 = vunpack.c.l.s4 1983009808
        %v2001 = vunpack.c.0.s8 %v2000
        %v2002 = vperm.slane %v1998, %v2001
        %v2003 = vrot.slane %v1991, 4
        %v2004 = vsel %vm1877, %v2003, %v1985
        %v2006 = vunpack.c.l.s4 1934713408
        %v2007 = vunpack.c.0.s8 %v2006
        %v2008 = vperm.slane %v2004, %v2007
        %v2009 = vrot.slane %v2002, 4
        %v2010 = vsel %vm1877, %v2009, %v1996
        %v2012 = vunpack.c.l.s4 1934713408
        %v2013 = vunpack.c.0.s8 %v2012
        %v2014 = vperm.slane %v2010, %v2013
        %v2015 = vrot.slane %v2014, 4
        %v2016 = vsel %vm1877, %v2015, %v2008
        %v2017 = vrot.slane %v2008, 4
        %v2018 = vsel %vm1877, %v2014, %v2017
        %v2019 = vsel %vm1877, %v1975, %v1956
        %v2021 = vunpack.c.l.s4 1983009808
        %v2022 = vunpack.c.0.s8 %v2021
        %v2023 = vperm.slane %v2019, %v2022
        %v2024 = vrot.slane %v1976, 4
        %v2025 = vsel %vm1877, %v2024, %v1974
        %v2027 = vunpack.c.l.s4 1983009808
        %v2028 = vunpack.c.0.s8 %v2027
        %v2029 = vperm.slane %v2025, %v2028
        %v2030 = vsel %vm1877, %v1979, %v1968
        %v2032 = vunpack.c.l.s4 1983009808
        %v2033 = vunpack.c.0.s8 %v2032
        %v2034 = vperm.slane %v2030, %v2033
        %v2035 = vrot.slane %v1980, 4
        %v2036 = vsel %vm1877, %v2035, %v1978
        %v2038 = vunpack.c.l.s4 1983009808
        %v2039 = vunpack.c.0.s8 %v2038
        %v2040 = vperm.slane %v2036, %v2039
        %v2041 = vrot.slane %v2029, 4
        %v2042 = vsel %vm1877, %v2041, %v2023
        %v2044 = vunpack.c.l.s4 1934713408
        %v2045 = vunpack.c.0.s8 %v2044
        %v2046 = vperm.slane %v2042, %v2045
        %v2047 = vrot.slane %v2040, 4
        %v2048 = vsel %vm1877, %v2047, %v2034
        %v2050 = vunpack.c.l.s4 1934713408
        %v2051 = vunpack.c.0.s8 %v2050
        %v2052 = vperm.slane %v2048, %v2051
        %v2053 = vrot.slane %v2052, 4
        %v2054 = vsel %vm1877, %v2053, %v2046
        %v2055 = vrot.slane %v2046, 4
        %v2056 = vsel %vm1877, %v2052, %v2055
        %2059 = vrot.lane.b32.xlu0 %v2018, 8
        %v2060 = vpop.permute.xlu0 %2059
        %2061 = vrot.lane.b32.xlu0 %v2056, 8
        %v2062 = vpop.permute.xlu0 %2061
        %v2065 = vsel %vm1455, %v2016, %v2060
        %v2066 = vsel %vm1455, %v2054, %v2062
        %v2067 = vpack.c.bf16 %v2066, %v2065
        %v2068 = vld [vmem:[%s6] sm:$0xf]
        %v2069 = vld [vmem:[%s6 + $0x4] sm:$0xf]
        %v2072 = vunpack.c.l.b16 %v2068
        %v2073 = vunpack.c.l.b16 %v2069
        %v2074 = vpack.c.b16 %v2073, %v2072
        %vm2076 = vcmask 130048
        %v2078 = vsel %vm2076, %v2067, 0
        %2080 = vmatpush.bf16.msra.mxu0 0
        %2081 = vmatpush.bf16.msra.mxu0 0
        %2082 = vmatpush.bf16.msra.mxu0 0
        %2083 = vmatpush.bf16.msra.mxu0 0
        %2084 = vmatpush.bf16.msra.mxu0 0
        %2085 = vmatpush.bf16.msra.mxu0 0
        %2086 = vmatpush.bf16.msra.mxu0 0
        %2087 = vmatpush.bf16.msra.mxu0 %v2074
        %2088 = vmatmul.bf16.gmra.mxu0 %v2078
        %v2089 = vpop.f32.mrf.mxu0
        %v2090 = vadd.f32 %v530, %v2089
        %v2091 = vpop.f32.mrf.mxu0
        %v2092 = vadd.f32 %v531, %v2091
        %2093 = vdwg.mxu0
        %v2094 = vld [vmem:[#allocation8] sm:$0x1]
        %v2095 = vmul.f32 %v2090, %v2090
        %v2096 = vmul.f32 %v2092, %v2092
        %v2097 = vsel %vm487, %v2095, 0.0
        %2098 = vadd.xlane.f32.xlu0 %v2097
        %v2099 = vpop.xlane.xlu0 %2098
        %v2100 = vsel %vm487, %v2096, 0.0
        %2101 = vadd.xlane.f32.xlu0 %v2100
        %v2102 = vpop.xlane.xlu0 %2101
        %v2103 = vmul.f32 %v2099, %v500
        %v2104 = vmul.f32 %v2102, %v500
        %v2105 = vadd.f32 %v2103, 1e-06
        %v2106 = vadd.f32 %v2104, 1e-06
        %v2107 = vrsqrt.pop %v2105
        %v2108 = vmul.f32 %v2107, %v2105
        %v2109 = vmul.f32 %v2108, %v2107
        %v2110 = vmul.f32 0.5, %v2109
        %v2111 = vsub.f32 1.5, %v2110
        %v2112 = vmul.f32 %v2107, %v2111
        %vm2113 = vweird.f32 %v2105
        %vm2114 = vweird.f32 %v2107
        %vm2115 = vmor %vm2113, %vm2114
        %v2116 = vsel %vm2115, %v2107, %v2112
        %v2117 = vrsqrt.pop %v2106
        %v2118 = vmul.f32 %v2117, %v2106
        %v2119 = vmul.f32 %v2118, %v2117
        %v2120 = vmul.f32 0.5, %v2119
        %v2121 = vsub.f32 1.5, %v2120
        %v2122 = vmul.f32 %v2117, %v2121
        %vm2123 = vweird.f32 %v2106
        %vm2124 = vweird.f32 %v2117
        %vm2125 = vmor %vm2123, %vm2124
        %v2126 = vsel %vm2125, %v2117, %v2122
        %v2127 = vmul.f32 %v2090, %v2116
        %v2128 = vmul.f32 %v2092, %v2126
        %v2130 = vperm.slane %v2094, 0
        %v2132 = vmul.f32 %v2127, %v2130
        %v2133 = vmul.f32 %v2128, %v2130
        %v2134 = vpack.c.bf16 %v2133, %v2132
        %v2135 = vld [vmem:[#allocation11] sm:$0xf]
        %v2136 = vld [vmem:[#allocation11 + $0x4] sm:$0xf]
        %v2137 = vld [vmem:[#allocation11 + $0x8] sm:$0xf]
        %v2138 = vld [vmem:[#allocation11 + $0xc] sm:$0xf]
        %v2143 = vunpack.c.l.b16 %v2135
        %v2144 = vunpack.c.l.b16 %v2136
        %v2145 = vunpack.c.l.b16 %v2137
        %v2146 = vunpack.c.l.b16 %v2138
        %v2147 = vpack.c.b16 %v2144, %v2143
        %v2148 = vpack.c.b16 %v2146, %v2145
        %v2152 = vsel %vm487, %v2134, 0
        %2154 = vmatpush.bf16.msra.mxu0 0
        %2155 = vmatpush.bf16.msra.mxu0 0
        %2156 = vmatpush.bf16.msra.mxu0 0
        %2157 = vmatpush.bf16.msra.mxu0 0
        %2158 = vmatpush.bf16.msra.mxu0 0
        %2159 = vmatpush.bf16.msra.mxu0 0
        %2160 = vmatpush.bf16.msra.mxu0 %v2148
        %2161 = vmatpush.bf16.msra.mxu0 %v2147
        %2162 = vmatmul.bf16.gmra.mxu0 %v2152
        %v2163 = vpop.f32.mrf.mxu0
        %v2164 = vadd.f32 0.0, %v2163
        %v2165 = vpop.f32.mrf.mxu0
        %v2166 = vadd.f32 0.0, %v2165
        %2167 = vdwg.mxu0
        %v2168 = vxor.u32 %v2164, 2147483648
        %v2169 = vxor.u32 %v2166, 2147483648
        %v2170 = vmul.f32 %v2168, 1.442695
        %v2171 = vpow.pop %v2170
        %v2172 = vmul.f32 %v2169, 1.442695
        %v2173 = vpow.pop %v2172
        %v2174 = vadd.f32 %v2171, 1.0
        %v2175 = vadd.f32 %v2173, 1.0
        %v2176 = vrcp.pop %v2174
        %v2177 = vmul.f32 %v2174, %v2176
        %v2178 = vsub.f32 1.0, %v2177
        %v2179 = vmul.f32 %v2176, %v2178
        %v2180 = vadd.f32 %v2176, %v2179
        %vm2181 = vweird.f32 %v2174
        %vm2182 = vweird.f32 %v2176
        %vm2183 = vmor %vm2181, %vm2182
        %v2184 = vsel %vm2183, %v2176, %v2180
        %v2185 = vand.u32 2147483647, %v2174
        %vm2186 = vcmp.eq.f32.partialorder %v2185, 8.507059e+37
        %v2187 = vand.u32 %v2174, 2147483648
        %v2188 = vor.u32 1.1754944e-38, %v2187
        %v2189 = vsel %vm2186, %v2188, %v2184
        %v2190 = vmul.f32 1.0, %v2189
        %v2191 = vrcp.pop %v2175
        %v2192 = vmul.f32 %v2175, %v2191
        %v2193 = vsub.f32 1.0, %v2192
        %v2194 = vmul.f32 %v2191, %v2193
        %v2195 = vadd.f32 %v2191, %v2194
        %vm2196 = vweird.f32 %v2175
        %vm2197 = vweird.f32 %v2191
        %vm2198 = vmor %vm2196, %vm2197
        %v2199 = vsel %vm2198, %v2191, %v2195
        %v2200 = vand.u32 2147483647, %v2175
        %vm2201 = vcmp.eq.f32.partialorder %v2200, 8.507059e+37
        %v2202 = vand.u32 %v2175, 2147483648
        %v2203 = vor.u32 1.1754944e-38, %v2202
        %v2204 = vsel %vm2201, %v2203, %v2199
        %v2205 = vmul.f32 1.0, %v2204
        %v2206 = vmul.f32 %v2164, %v2190
        %v2207 = vmul.f32 %v2166, %v2205
        %2210 = vrot.lane.b32.xlu0 %v2164, 96
        %v2211 = vpop.permute.xlu0 %2210
        %2212 = vrot.lane.b32.xlu0 %v2166, 96
        %v2213 = vpop.permute.xlu0 %2212
        %v2216 = vmul.f32 %v2206, %v2211
        %v2217 = vmul.f32 %v2207, %v2213
        %v2218 = vpack.c.bf16 %v2217, %v2216
        %v2219 = vld [vmem:[#allocation13] sm:$0xf]
        %v2220 = vld [vmem:[#allocation13 + $0x4] sm:$0xf]
        %v2221 = vld [vmem:[#allocation13 + $0x8] sm:$0xf]
        %v2222 = vld [vmem:[#allocation13 + $0xc] sm:$0xf]
        %v2227 = vunpack.c.l.b16 %v2219
        %v2228 = vunpack.c.l.b16 %v2220
        %v2229 = vunpack.c.l.b16 %v2221
        %v2230 = vunpack.c.l.b16 %v2222
        %v2231 = vpack.c.b16 %v2228, %v2227
        %v2232 = vpack.c.b16 %v2230, %v2229
        %v2236 = vsel %vm487, %v2218, 0
        %2238 = vmatpush.bf16.msra.mxu0 0
        %2239 = vmatpush.bf16.msra.mxu0 0
        %2240 = vmatpush.bf16.msra.mxu0 0
        %2241 = vmatpush.bf16.msra.mxu0 0
        %2242 = vmatpush.bf16.msra.mxu0 0
        %2243 = vmatpush.bf16.msra.mxu0 0
        %2244 = vmatpush.bf16.msra.mxu0 %v2232
        %2245 = vmatpush.bf16.msra.mxu0 %v2231
        %2246 = vmatmul.bf16.gmra.mxu0 %v2236
        %v2247 = vpop.f32.mrf.mxu0
        %v2248 = vadd.f32 %v2090, %v2247
        %v2249 = vpop.f32.mrf.mxu0
        %v2250 = vadd.f32 %v2092, %v2249
        %2251 = vdwg.mxu0
        %2252 = vst.msk [vmem:[%s471] sm:$0xff] %vm487, %v2248
        %2253 = vst.msk [vmem:[%s471 + $0x8] sm:$0xff] %vm487, %v2250
        %s2254 = sand.u32 %s238, 1
        %s2255 = scalar_lea.sflag [#allocation4], %s2254
        %s2256 = sand.u32 %s238, 1
        %s2257 = smul.addr %s2256, 16
        %s2258 = scalar_lea.vmem [#allocation14], %s2257
        // Predicated region
        $region85: #{tpu_custom_call.1} parent=55 // pred_check
          %p2259 = pneg %p248
        $region86: #{tpu_custom_call.1} parent=55 // pred_check_branch
          %2261 = sbr.rel (%p2259) target = $region88
        $region87: #{tpu_custom_call.1} parent=55 // pred_region
          %s2262 = smul.u32 2, %s31
          %2264 = vsyncadd %s2255, 0
          %s2265 = smul.addr %s2262, 8
          %s2266 = scalar_lea.hbm %s9, %s2265
          %s2267 = sshll.u32 %s2258, 4
          %s2268 = int_to_ptr.vmem [resolvable:$true] %s2267
          %s2269 = sshll.u32 %s2266, 4
          %s2270 = int_to_ptr.hbm [resolvable:$true] %s2269
          %2275 = dma.vmem_to_hbm [thread:$0]  %s2268, 256, %s2270, %s2255, 128, 128, 8
        $region88: #{tpu_custom_call.1} parent=55 // pred_fallthru
          _
      $region56: #{tpu_custom_call.1} parent=5 // pred_fallthru
        _
      %p2276 = scmp.le.s32.totalorder 2, %s26
      // Predicated region
      $region89: #{tpu_custom_call.1} parent=5 // pred_check
        %p2277 = pneg %p2276
      $region90: #{tpu_custom_call.1} parent=5 // pred_check_branch
        %2279 = sbr.rel (%p2277) target = $region92
      $region91: #{tpu_custom_call.1} parent=5 // pred_region
        %s2280 = ssub.s32 %s26, 2
        // Predicated region
        $region93: #{tpu_custom_call.1} parent=91 // pred_check
          %p2281 = pneg %p254
        $region94: #{tpu_custom_call.1} parent=91 // pred_check_branch
          %2283 = sbr.rel (%p2281) target = $region96
        $region95: #{tpu_custom_call.1} parent=91 // pred_region
          %s2284 = sand.u32 %s239, 1
          %s2285 = scalar_lea.sflag [#allocation4], %s2284
          %s2286 = sand.u32 %s239, 1
          %s2287 = smul.addr %s2286, 16
          %s2288 = scalar_lea.vmem [#allocation14], %s2287
          %2290 = dma.done %s2285, 256
        $region96: #{tpu_custom_call.1} parent=91 // pred_fallthru
          _
      $region92: #{tpu_custom_call.1} parent=5 // pred_fallthru
        _
    $region6: #{tpu_custom_call.1} parent=1 // loop_footer
      %s30 = sadd.s32 1, %s26
    $region7: #{tpu_custom_call.1} parent=1 // loop_footer_branch
      %25 = sbr.rel target = $region3
    $region8: #{tpu_custom_call.1} parent=1 // loop_exit
      _
    %2291 = vsyncpa [#allocation3], 1
    %s2292 = scalar_lea.sflag [#allocation3], 1
    %2293 = vsyncpa %s2292, 1
    %2294 = vsyncpa [#allocation6], 1
    %s2295 = scalar_lea.sflag [#allocation6], 1
    %2296 = vsyncpa %s2295, 1
    %2297 = vsyncpa [#allocation9], 1
    %2298 = vsyncpa [#allocation12], 1
    %2299 = vsyncpa [#allocation4], 1
    %s2300 = scalar_lea.sflag [#allocation4], 1
    %2301 = vsyncpa %s2300, 1

// kernel: tpu_custom_call.1
$region0: #{tpu_custom_call.1}
  #allocation0 [shape = 'u32[]', space=smem, size = 0x4, offset = 0x4, fixed_abs, tag = 'smem constant byte address 0x4 - core index']
  #allocation1 [shape = 'u32[72,128]{1,0:T(1,128)}', space=vmem, size = 0x9000, scoped, tag = 'internal scratch']
  %s0 = inlined_call_operand.vmem [shape: f32[2,1,1], index: 0, kind: input, shape index: {}]
  %s1 = inlined_call_operand.hbm [shape: f32[4,8,32], index: 1, kind: input, shape index: {}]
  %s2 = inlined_call_operand.hbm [shape: f32[4,1,8], index: 2, kind: input, shape index: {}]
  %s3 = inlined_call_operand.hbm [shape: f32[1,32], index: 3, kind: input, shape index: {}]
  %s4 = inlined_call_operand.hbm [shape: f32[1,32], index: 4, kind: input, shape index: {}]
  %s5 = inlined_call_operand.hbm [shape: bf16[32,80], index: 5, kind: input, shape index: {}]
  %s6 = inlined_call_operand.vmem [shape: bf16[16,32], index: 6, kind: input, shape index: {}]
  %s7 = inlined_call_operand.hbm [shape: bf16[32,64], index: 7, kind: input, shape index: {}]
  %s8 = inlined_call_operand.hbm [shape: bf16[32,32], index: 8, kind: input, shape index: {}]
  %s9 = inlined_call_operand.hbm [shape: f32[4,8,32], index: 9, kind: output, shape index: {}]
  %s10 = sld [smem:[#allocation0]]
  $region97: #{tpu_custom_call.1} parent=0
    _
  %s12 = ssub.s32 1, %s10
  %s13 = scalar_select 0, %s12, %s10
  $region1: #{tpu_custom_call.1} parent=0
    #allocation2 [shape = 'u8[16384]{0}', space=vmem, size = 0x4000, scoped, tag = 'input window, operand 1']
    #allocation3 [shape = 's32[2]{0}', space=sflag, size = 0x8, scoped, tag = 'scoped memory for tpu_custom_call.1']
    #allocation4 [shape = 's32[2]{0}', space=sflag, size = 0x8, scoped, tag = 'scoped memory for tpu_custom_call.1']
    #allocation5 [shape = 'u8[2048]{0}', space=vmem, size = 0x800, scoped, tag = 'input window, operand 2']
    #allocation6 [shape = 's32[2]{0}', space=sflag, size = 0x8, scoped, tag = 'scoped memory for tpu_custom_call.1']
    #allocation7 [shape = 'u8[512]{0}', space=vmem, size = 0x400, scoped, tag = 'input window, operand 3, single buffered']
    #allocation8 [shape = 'u8[512]{0}', space=vmem, size = 0x400, scoped, tag = 'input window, operand 4, single buffered']
    #allocation9 [shape = 's32[1]{0}', space=sflag, size = 0x4, scoped, tag = 'scoped memory for tpu_custom_call.1']
    #allocation10 [shape = 'u8[8192]{0}', space=vmem, size = 0x2000, scoped, tag = 'input window, operand 5, single buffered']
    #allocation11 [shape = 'u8[8192]{0}', space=vmem, size = 0x2000, scoped, tag = 'input window, operand 7, single buffered']
    #allocation12 [shape = 's32[1]{0}', space=sflag, size = 0x4, scoped, tag = 'scoped memory for tpu_custom_call.1']
    #allocation13 [shape = 'u8[8192]{0}', space=vmem, size = 0x2000, scoped, tag = 'input window, operand 8, single buffered']
    #allocation14 [shape = 'u8[16384]{0}', space=vmem, size = 0x4000, scoped, tag = 'output window, operand 0']
    %14 = vsyncpa [#allocation3], 0
    %s15 = scalar_lea.sflag [#allocation3], 1
    %16 = vsyncpa %s15, 0
    %17 = vsyncpa [#allocation6], 0
    %s18 = scalar_lea.sflag [#allocation6], 1
    %19 = vsyncpa %s18, 0
    %20 = vsyncpa [#allocation9], 0
    %21 = vsyncpa [#allocation12], 0
    %22 = vsyncpa [#allocation4], 0
    %s23 = scalar_lea.sflag [#allocation4], 1
    %24 = vsyncpa %s23, 0
    loop: start=0, step=1, limit=4
    $region2: #{tpu_custom_call.1} parent=1 // loop_pre_header
      _
    $region3: #{tpu_custom_call.1} parent=1 // loop_header
      %s26 = sphi 0, %s30
      %p27 = scmp.ge.s32.totalorder %s26, 4
      %s34 = sphi 0, %s34
      %s36 = sphi 0, %s34
      %s37 = sphi 0, %s36
      %s51 = sphi 0, %s37
      %s57 = sphi 0, %s59
      %s60 = sphi 0, %s57
      %s61 = sphi 0, %s60
      %s77 = sphi 0, %s61
      %s83 = sphi 0, %s85
      %s86 = sphi 0, %s83
      %s87 = sphi 0, %s86
      %s103 = sphi 0, %s87
      %s107 = sphi 0, %s107
      %s109 = sphi 0, %s107
      %s110 = sphi 0, %s109
      %s124 = sphi 0, %s110
      %s128 = sphi 0, %s128
      %s130 = sphi 0, %s128
      %s131 = sphi 0, %s130
      %s145 = sphi 0, %s131
      %s149 = sphi 0, %s149
      %s151 = sphi 0, %s149
      %s152 = sphi 0, %s151
      %s166 = sphi 0, %s152
      %s170 = sphi 0, %s170
      %s172 = sphi 0, %s170
      %s173 = sphi 0, %s172
      %s187 = sphi 0, %s173
      %s191 = sphi 0, %s191
      %s193 = sphi 0, %s191
      %s194 = sphi 0, %s193
      %s208 = sphi 0, %s194
      %s212 = sphi 0, %s212
      %s214 = sphi 0, %s212
      %s215 = sphi 0, %s214
      %s229 = sphi 0, %s215
      %s235 = sphi 0, %s237
      %s238 = sphi 0, %s235
      %s239 = sphi 0, %s238
      %s255 = sphi 0, %s239
    $region4: #{tpu_custom_call.1} parent=1 // loop_header_branch
      %29 = sbr.rel (%p27) target = $region8
    $region5: #{tpu_custom_call.1} parent=1 // loop_body
      %s31 = ssub.s32 %s26, 1
      %s32 = ssub.s32 %s26, 2
      %s33 = sadd.s32 %s26, 1
      %s35 = sadd.s32 %s34, 1
      %p38 = scmp.eq.s32.totalorder %s26, 1
      %p39 = scmp.ne.s32.totalorder %s34, %s36
      %p40 = scmp.eq.s32.totalorder %s26, 0
      %p41 = por %p39, %p40
      %p42 = scmp.ne.s32.totalorder %s34, %s36
      %p43 = scmp.eq.s32.totalorder %s31, 1
      %p44 = por %p42, %p43
      %p45 = scmp.ne.s32.totalorder %s36, %s37
      %p46 = scmp.eq.s32.totalorder %s31, 0
      %p47 = por %p45, %p46
      %p48 = scmp.ne.s32.totalorder %s36, %s37
      %p49 = scmp.eq.s32.totalorder %s32, 1
      %p50 = por %p48, %p49
      %p52 = scmp.ne.s32.totalorder %s37, %s51
      %p53 = scmp.eq.s32.totalorder %s32, 0
      %p54 = por %p52, %p53
      %s55 = ssub.s32 %s26, %s33
      %p56 = scmp.eq.s32.totalorder %s55, 0
      %s58 = sadd.s32 %s57, 1
      %s59 = scalar_select %p56, %s57, %s58
      %p62 = pneg %p56
      %p63 = scmp.eq.s32.totalorder %s26, 1
      %p64 = por %p62, %p63
      %p65 = scmp.ne.s32.totalorder %s57, %s60
      %p66 = scmp.eq.s32.totalorder %s26, 0
      %p67 = por %p65, %p66
      %p68 = scmp.ne.s32.totalorder %s57, %s60
      %p69 = scmp.eq.s32.totalorder %s31, 1
      %p70 = por %p68, %p69
      %p71 = scmp.ne.s32.totalorder %s60, %s61
      %p72 = scmp.eq.s32.totalorder %s31, 0
      %p73 = por %p71, %p72
      %p74 = scmp.ne.s32.totalorder %s60, %s61
      %p75 = scmp.eq.s32.totalorder %s32, 1
      %p76 = por %p74, %p75
      %p78 = scmp.ne.s32.totalorder %s61, %s77
      %p79 = scmp.eq.s32.totalorder %s32, 0
      %p80 = por %p78, %p79
      %s81 = ssub.s32 %s26, %s33
      %p82 = scmp.eq.s32.totalorder %s81, 0
      %s84 = sadd.s32 %s83, 1
      %s85 = scalar_select %p82, %s83, %s84
      %p88 = pneg %p82
      %p89 = scmp.eq.s32.totalorder %s26, 1
      %p90 = por %p88, %p89
      %p91 = scmp.ne.s32.totalorder %s83, %s86
      %p92 = scmp.eq.s32.totalorder %s26, 0
      %p93 = por %p91, %p92
      %p94 = scmp.ne.s32.totalorder %s83, %s86
      %p95 = scmp.eq.s32.totalorder %s31, 1
      %p96 = por %p94, %p95
      %p97 = scmp.ne.s32.totalorder %s86, %s87
      %p98 = scmp.eq.s32.totalorder %s31, 0
      %p99 = por %p97, %p98
      %p100 = scmp.ne.s32.totalorder %s86, %s87
      %p101 = scmp.eq.s32.totalorder %s32, 1
      %p102 = por %p100, %p101
      %p104 = scmp.ne.s32.totalorder %s87, %s103
      %p105 = scmp.eq.s32.totalorder %s32, 0
      %p106 = por %p104, %p105
      %s108 = sadd.s32 %s107, 1
      %p111 = scmp.eq.s32.totalorder %s26, 1
      %p112 = scmp.ne.s32.totalorder %s107, %s109
      %p113 = scmp.eq.s32.totalorder %s26, 0
      %p114 = por %p112, %p113
      %p115 = scmp.ne.s32.totalorder %s107, %s109
      %p116 = scmp.eq.s32.totalorder %s31, 1
      %p117 = por %p115, %p116
      %p118 = scmp.ne.s32.totalorder %s109, %s110
      %p119 = scmp.eq.s32.totalorder %s31, 0
      %p120 = por %p118, %p119
      %p121 = scmp.ne.s32.totalorder %s109, %s110
      %p122 = scmp.eq.s32.totalorder %s32, 1
      %p123 = por %p121, %p122
      %p125 = scmp.ne.s32.totalorder %s110, %s124
      %p126 = scmp.eq.s32.totalorder %s32, 0
      %p127 = por %p125, %p126
      %s129 = sadd.s32 %s128, 1
      %p132 = scmp.eq.s32.totalorder %s26, 1
      %p133 = scmp.ne.s32.totalorder %s128, %s130
      %p134 = scmp.eq.s32.totalorder %s26, 0
      %p135 = por %p133, %p134
      %p136 = scmp.ne.s32.totalorder %s128, %s130
      %p137 = scmp.eq.s32.totalorder %s31, 1
      %p138 = por %p136, %p137
      %p139 = scmp.ne.s32.totalorder %s130, %s131
      %p140 = scmp.eq.s32.totalorder %s31, 0
      %p141 = por %p139, %p140
      %p142 = scmp.ne.s32.totalorder %s130, %s131
      %p143 = scmp.eq.s32.totalorder %s32, 1
      %p144 = por %p142, %p143
      %p146 = scmp.ne.s32.totalorder %s131, %s145
      %p147 = scmp.eq.s32.totalorder %s32, 0
      %p148 = por %p146, %p147
      %s150 = sadd.s32 %s149, 1
      %p153 = scmp.eq.s32.totalorder %s26, 1
      %p154 = scmp.ne.s32.totalorder %s149, %s151
      %p155 = scmp.eq.s32.totalorder %s26, 0
      %p156 = por %p154, %p155
      %p157 = scmp.ne.s32.totalorder %s149, %s151
      %p158 = scmp.eq.s32.totalorder %s31, 1
      %p159 = por %p157, %p158
      %p160 = scmp.ne.s32.totalorder %s151, %s152
      %p161 = scmp.eq.s32.totalorder %s31, 0
      %p162 = por %p160, %p161
      %p163 = scmp.ne.s32.totalorder %s151, %s152
      %p164 = scmp.eq.s32.totalorder %s32, 1
      %p165 = por %p163, %p164
      %p167 = scmp.ne.s32.totalorder %s152, %s166
      %p168 = scmp.eq.s32.totalorder %s32, 0
      %p169 = por %p167, %p168
      %s171 = sadd.s32 %s170, 1
      %p174 = scmp.eq.s32.totalorder %s26, 1
      %p175 = scmp.ne.s32.totalorder %s170, %s172
      %p176 = scmp.eq.s32.totalorder %s26, 0
      %p177 = por %p175, %p176
      %p178 = scmp.ne.s32.totalorder %s170, %s172
      %p179 = scmp.eq.s32.totalorder %s31, 1
      %p180 = por %p178, %p179
      %p181 = scmp.ne.s32.totalorder %s172, %s173
      %p182 = scmp.eq.s32.totalorder %s31, 0
      %p183 = por %p181, %p182
      %p184 = scmp.ne.s32.totalorder %s172, %s173
      %p185 = scmp.eq.s32.totalorder %s32, 1
      %p186 = por %p184, %p185
      %p188 = scmp.ne.s32.totalorder %s173, %s187
      %p189 = scmp.eq.s32.totalorder %s32, 0
      %p190 = por %p188, %p189
      %s192 = sadd.s32 %s191, 1
      %p195 = scmp.eq.s32.totalorder %s26, 1
      %p196 = scmp.ne.s32.totalorder %s191, %s193
      %p197 = scmp.eq.s32.totalorder %s26, 0
      %p198 = por %p196, %p197
      %p199 = scmp.ne.s32.totalorder %s191, %s193
      %p200 = scmp.eq.s32.totalorder %s31, 1
      %p201 = por %p199, %p200
      %p202 = scmp.ne.s32.totalorder %s193, %s194
      %p203 = scmp.eq.s32.totalorder %s31, 0
      %p204 = por %p202, %p203
      %p205 = scmp.ne.s32.totalorder %s193, %s194
      %p206 = scmp.eq.s32.totalorder %s32, 1
      %p207 = por %p205, %p206
      %p209 = scmp.ne.s32.totalorder %s194, %s208
      %p210 = scmp.eq.s32.totalorder %s32, 0
      %p211 = por %p209, %p210
      %s213 = sadd.s32 %s212, 1
      %p216 = scmp.eq.s32.totalorder %s26, 1
      %p217 = scmp.ne.s32.totalorder %s212, %s214
      %p218 = scmp.eq.s32.totalorder %s26, 0
      %p219 = por %p217, %p218
      %p220 = scmp.ne.s32.totalorder %s212, %s214
      %p221 = scmp.eq.s32.totalorder %s31, 1
      %p222 = por %p220, %p221
      %p223 = scmp.ne.s32.totalorder %s214, %s215
      %p224 = scmp.eq.s32.totalorder %s31, 0
      %p225 = por %p223, %p224
      %p226 = scmp.ne.s32.totalorder %s214, %s215
      %p227 = scmp.eq.s32.totalorder %s32, 1
      %p228 = por %p226, %p227
      %p230 = scmp.ne.s32.totalorder %s215, %s229
      %p231 = scmp.eq.s32.totalorder %s32, 0
      %p232 = por %p230, %p231
      %s233 = ssub.s32 %s26, %s33
      %p234 = scmp.eq.s32.totalorder %s233, 0
      %s236 = sadd.s32 %s235, 1
      %s237 = scalar_select %p234, %s235, %s236
      %p240 = pneg %p234
      %p241 = scmp.eq.s32.totalorder %s26, 1
      %p242 = por %p240, %p241
      %p243 = scmp.ne.s32.totalorder %s235, %s238
      %p244 = scmp.eq.s32.totalorder %s26, 0
      %p245 = por %p243, %p244
      %p246 = scmp.ne.s32.totalorder %s235, %s238
      %p247 = scmp.eq.s32.totalorder %s31, 1
      %p248 = por %p246, %p247
      %p249 = scmp.ne.s32.totalorder %s238, %s239
      %p250 = scmp.eq.s32.totalorder %s31, 0
      %p251 = por %p249, %p250
      %p252 = scmp.ne.s32.totalorder %s238, %s239
      %p253 = scmp.eq.s32.totalorder %s32, 1
      %p254 = por %p252, %p253
      %p256 = scmp.ne.s32.totalorder %s239, %s255
      %p257 = scmp.eq.s32.totalorder %s32, 0
      %p258 = por %p256, %p257
      %p259 = scmp.le.s32.totalorder 1, %s26
      %p260 = scmp.lt.s32.totalorder %s26, 3
      %p261 = pnand %p259, %p260
      %p262 = pneg %p261
      // Predicated region
      $region9: #{tpu_custom_call.1} parent=5 // pred_check
        _
      $region10: #{tpu_custom_call.1} parent=5 // pred_check_branch
        %264 = sbr.rel (%p261) target = $region12
      $region11: #{tpu_custom_call.1} parent=5 // pred_region
        %s265 = ssub.s32 %s26, 1
        // Predicated region
        $region13: #{tpu_custom_call.1} parent=11 // pred_check
          %p266 = pneg %p47
        $region14: #{tpu_custom_call.1} parent=11 // pred_check_branch
          %268 = sbr.rel (%p266) target = $region16
        $region15: #{tpu_custom_call.1} parent=11 // pred_region
          _
        $region16: #{tpu_custom_call.1} parent=11 // pred_fallthru
          _
        // Predicated region
        $region17: #{tpu_custom_call.1} parent=11 // pred_check
          %p269 = pneg %p120
        $region18: #{tpu_custom_call.1} parent=11 // pred_check_branch
          %271 = sbr.rel (%p269) target = $region20
        $region19: #{tpu_custom_call.1} parent=11 // pred_region
          %273 = vsyncadd [#allocation6], 0
          %s275 = sshll.u32 %s3, 4
          %s276 = int_to_ptr.hbm [resolvable:$true] %s275
          %s277 = sshll.u32 [#allocation7], 4
          %s278 = int_to_ptr.vmem [resolvable:$true] %s277
          %280 = dma.hbm_to_vmem [thread:$0]  %s276, 16, %s278, [#allocation6]
        $region20: #{tpu_custom_call.1} parent=11 // pred_fallthru
          _
        // Predicated region
        $region21: #{tpu_custom_call.1} parent=11 // pred_check
          %p281 = pneg %p141
        $region22: #{tpu_custom_call.1} parent=11 // pred_check_branch
          %283 = sbr.rel (%p281) target = $region24
        $region23: #{tpu_custom_call.1} parent=11 // pred_region
          %285 = vsyncadd [#allocation9], 0
          %s287 = sshll.u32 %s4, 4
          %s288 = int_to_ptr.hbm [resolvable:$true] %s287
          %s289 = sshll.u32 [#allocation8], 4
          %s290 = int_to_ptr.vmem [resolvable:$true] %s289
          %292 = dma.hbm_to_vmem [thread:$0]  %s288, 16, %s290, [#allocation9]
        $region24: #{tpu_custom_call.1} parent=11 // pred_fallthru
          _
        // Predicated region
        $region25: #{tpu_custom_call.1} parent=11 // pred_check
          %p293 = pneg %p162
        $region26: #{tpu_custom_call.1} parent=11 // pred_check_branch
          %295 = sbr.rel (%p293) target = $region28
        $region27: #{tpu_custom_call.1} parent=11 // pred_region
          %297 = vsyncadd [#allocation9], 0
          %s298 = sshll.u32 %s5, 4
          %s299 = int_to_ptr.hbm [resolvable:$true] %s298
          %s300 = sshll.u32 [#allocation10], 4
          %s301 = int_to_ptr.vmem [resolvable:$true] %s300
          %306 = dma.hbm_to_vmem [thread:$0]  %s299, 256, %s301, [#allocation9], 64, 64, 4
        $region28: #{tpu_custom_call.1} parent=11 // pred_fallthru
          _
        // Predicated region
        $region29: #{tpu_custom_call.1} parent=11 // pred_check
          %p307 = pneg %p183
        $region30: #{tpu_custom_call.1} parent=11 // pred_check_branch
          %309 = sbr.rel (%p307) target = $region32
        $region31: #{tpu_custom_call.1} parent=11 // pred_region
          _
        $region32: #{tpu_custom_call.1} parent=11 // pred_fallthru
          _
        // Predicated region
        $region33: #{tpu_custom_call.1} parent=11 // pred_check
          %p310 = pneg %p204
        $region34: #{tpu_custom_call.1} parent=11 // pred_check_branch
          %312 = sbr.rel (%p310) target = $region36
        $region35: #{tpu_custom_call.1} parent=11 // pred_region
          %314 = vsyncadd [#allocation12], 0
          %s315 = sshll.u32 %s7, 4
          %s316 = int_to_ptr.hbm [resolvable:$true] %s315
          %s317 = sshll.u32 [#allocation11], 4
          %s318 = int_to_ptr.vmem [resolvable:$true] %s317
          %323 = dma.hbm_to_vmem [thread:$0]  %s316, 256, %s318, [#allocation12], 64, 64, 4
        $region36: #{tpu_custom_call.1} parent=11 // pred_fallthru
          _
        // Predicated region
        $region37: #{tpu_custom_call.1} parent=11 // pred_check
          %p324 = pneg %p225
        $region38: #{tpu_custom_call.1} parent=11 // pred_check_branch
          %326 = sbr.rel (%p324) target = $region40
        $region39: #{tpu_custom_call.1} parent=11 // pred_region
          %328 = vsyncadd [#allocation12], 0
          %s329 = sshll.u32 %s8, 4
          %s330 = int_to_ptr.hbm [resolvable:$true] %s329
          %s331 = sshll.u32 [#allocation13], 4
          %s332 = int_to_ptr.vmem [resolvable:$true] %s331
          %337 = dma.hbm_to_vmem [thread:$0]  %s330, 256, %s332, [#allocation12], 64, 64, 4
        $region40: #{tpu_custom_call.1} parent=11 // pred_fallthru
          _
      $region12: #{tpu_custom_call.1} parent=5 // pred_fallthru
        _
      %p338 = scmp.lt.s32.totalorder %s26, 2
      // Predicated region
      $region41: #{tpu_custom_call.1} parent=5 // pred_check
        %p339 = pneg %p338
      $region42: #{tpu_custom_call.1} parent=5 // pred_check_branch
        %341 = sbr.rel (%p339) target = $region44
      $region43: #{tpu_custom_call.1} parent=5 // pred_region
        // Predicated region
        $region45: #{tpu_custom_call.1} parent=43 // pred_check
          %p342 = pneg %p67
        $region46: #{tpu_custom_call.1} parent=43 // pred_check_branch
          %344 = sbr.rel (%p342) target = $region48
        $region47: #{tpu_custom_call.1} parent=43 // pred_region
          %s345 = sand.u32 %s57, 1
          %s346 = scalar_lea.sflag [#allocation3], %s345
          %s347 = sand.u32 %s57, 1
          %s348 = smul.addr %s347, 16
          %s349 = scalar_lea.vmem [#allocation2], %s348
          %s350 = smul.u32 2, %s26
          %352 = vsyncadd %s346, 0
          %s353 = smul.addr %s350, 8
          %s354 = scalar_lea.hbm %s1, %s353
          %s355 = sshll.u32 %s354, 4
          %s356 = int_to_ptr.hbm [resolvable:$true] %s355
          %s357 = sshll.u32 %s349, 4
          %s358 = int_to_ptr.vmem [resolvable:$true] %s357
          %363 = dma.hbm_to_vmem [thread:$0]  %s356, 256, %s358, %s346, 128, 128, 8
        $region48: #{tpu_custom_call.1} parent=43 // pred_fallthru
          _
        // Predicated region
        $region49: #{tpu_custom_call.1} parent=43 // pred_check
          %p364 = pneg %p93
        $region50: #{tpu_custom_call.1} parent=43 // pred_check_branch
          %366 = sbr.rel (%p364) target = $region52
        $region51: #{tpu_custom_call.1} parent=43 // pred_region
          %s367 = sand.u32 %s26, 1
          %s368 = scalar_lea.sflag [#allocation6], %s367
          %s369 = sand.u32 %s83, 1
          %s370 = smul.addr %s369, 2
          %s371 = scalar_lea.vmem [#allocation5], %s370
          %s372 = smul.u32 2, %s26
          %374 = vsyncadd %s368, 0
          %s375 = scalar_lea.hbm %s2, %s372
          %s376 = sshll.u32 %s375, 4
          %s377 = int_to_ptr.hbm [resolvable:$true] %s376
          %s378 = sshll.u32 %s371, 4
          %s379 = int_to_ptr.vmem [resolvable:$true] %s378
          %384 = dma.hbm_to_vmem [thread:$0]  %s377, 32, %s379, %s368, 16, 16, 1
        $region52: #{tpu_custom_call.1} parent=43 // pred_fallthru
          _
      $region44: #{tpu_custom_call.1} parent=5 // pred_fallthru
        _
      %p385 = scmp.le.s32.totalorder 1, %s26
      %p386 = scmp.lt.s32.totalorder %s26, 3
      %p387 = pnand %p385, %p386
      %p388 = pneg %p387
      // Predicated region
      $region53: #{tpu_custom_call.1} parent=5 // pred_check
        _
      $region54: #{tpu_custom_call.1} parent=5 // pred_check_branch
        %390 = sbr.rel (%p387) target = $region56
      $region55: #{tpu_custom_call.1} parent=5 // pred_region
        %s391 = ssub.s32 %s26, 1
        %s392 = sand.u32 %s60, 1
        %s393 = scalar_lea.sflag [#allocation3], %s392
        %s394 = sand.u32 %s60, 1
        %s395 = smul.addr %s394, 16
        %s396 = scalar_lea.vmem [#allocation2], %s395
        // Predicated region
        $region57: #{tpu_custom_call.1} parent=55 // pred_check
          %p397 = pneg %p73
        $region58: #{tpu_custom_call.1} parent=55 // pred_check_branch
          %399 = sbr.rel (%p397) target = $region60
        $region59: #{tpu_custom_call.1} parent=55 // pred_region
          %401 = dma.done %s393, 256
        $region60: #{tpu_custom_call.1} parent=55 // pred_fallthru
          _
        %s402 = sand.u32 %s31, 1
        %s403 = scalar_lea.sflag [#allocation6], %s402
        %s404 = sand.u32 %s86, 1
        %s405 = smul.addr %s404, 2
        %s406 = scalar_lea.vmem [#allocation5], %s405
        // Predicated region
        $region61: #{tpu_custom_call.1} parent=55 // pred_check
          %p407 = pneg %p99
        $region62: #{tpu_custom_call.1} parent=55 // pred_check_branch
          %409 = sbr.rel (%p407) target = $region64
        $region63: #{tpu_custom_call.1} parent=55 // pred_region
          %411 = dma.done %s403, 32
        $region64: #{tpu_custom_call.1} parent=55 // pred_fallthru
          _
        // Predicated region
        $region65: #{tpu_custom_call.1} parent=55 // pred_check
          %p412 = pneg %p120
        $region66: #{tpu_custom_call.1} parent=55 // pred_check_branch
          %414 = sbr.rel (%p412) target = $region68
        $region67: #{tpu_custom_call.1} parent=55 // pred_region
          %416 = dma.done [#allocation6], 16
        $region68: #{tpu_custom_call.1} parent=55 // pred_fallthru
          _
        // Predicated region
        $region69: #{tpu_custom_call.1} parent=55 // pred_check
          %p417 = pneg %p141
        $region70: #{tpu_custom_call.1} parent=55 // pred_check_branch
          %419 = sbr.rel (%p417) target = $region72
        $region71: #{tpu_custom_call.1} parent=55 // pred_region
          %421 = dma.done [#allocation9], 16
        $region72: #{tpu_custom_call.1} parent=55 // pred_fallthru
          _
        // Predicated region
        $region73: #{tpu_custom_call.1} parent=55 // pred_check
          %p422 = pneg %p162
        $region74: #{tpu_custom_call.1} parent=55 // pred_check_branch
          %424 = sbr.rel (%p422) target = $region76
        $region75: #{tpu_custom_call.1} parent=55 // pred_region
          %426 = dma.done [#allocation9], 256
        $region76: #{tpu_custom_call.1} parent=55 // pred_fallthru
          _
        // Predicated region
        $region77: #{tpu_custom_call.1} parent=55 // pred_check
          %p427 = pneg %p204
        $region78: #{tpu_custom_call.1} parent=55 // pred_check_branch
          %429 = sbr.rel (%p427) target = $region80
        $region79: #{tpu_custom_call.1} parent=55 // pred_region
          %431 = dma.done [#allocation12], 256
        $region80: #{tpu_custom_call.1} parent=55 // pred_fallthru
          _
        // Predicated region
        $region81: #{tpu_custom_call.1} parent=55 // pred_check
          %p432 = pneg %p225
        $region82: #{tpu_custom_call.1} parent=55 // pred_check_branch
          %434 = sbr.rel (%p432) target = $region84
        $region83: #{tpu_custom_call.1} parent=55 // pred_region
          %436 = dma.done [#allocation12], 256
        $region84: #{tpu_custom_call.1} parent=55 // pred_fallthru
          _
        %p437 = pneg %p47
        %p438 = pneg %p44
        %s439 = sand.u32 %s60, 1
        %s440 = scalar_lea.sflag [#allocation3], %s439
        %s441 = sand.u32 %s60, 1
        %s442 = smul.addr %s441, 16
        %s443 = scalar_lea.vmem [#allocation2], %s442
        %p444 = pneg %p73
        %p445 = pneg %p70
        %s446 = sand.u32 %s31, 1
        %s447 = scalar_lea.sflag [#allocation6], %s446
        %s448 = sand.u32 %s86, 1
        %s449 = smul.addr %s448, 2
        %s450 = scalar_lea.vmem [#allocation5], %s449
        %p451 = pneg %p99
        %p452 = pneg %p96
        %p453 = pneg %p120
        %p454 = pneg %p117
        %p455 = pneg %p141
        %p456 = pneg %p138
        %p457 = pneg %p162
        %p458 = pneg %p159
        %p459 = pneg %p183
        %p460 = pneg %p180
        %p461 = pneg %p204
        %p462 = pneg %p201
        %p463 = pneg %p225
        %p464 = pneg %p222
        %p465 = pneg %p251
        %p466 = pneg %p248
        %s467 = sand.u32 %s238, 1
        %s468 = scalar_lea.sflag [#allocation4], %s467
        %s469 = sand.u32 %s238, 1
        %s470 = smul.addr %s469, 16
        %s471 = scalar_lea.vmem [#allocation14], %s470
        %s472 = smul.u32 2, %s31
        %s473 = smul.u32 2, %s31
        %s474 = smul.u32 2, %s31
        %v476 = vld [vmem:[%s396] sm:$0xff]
        %v477 = vld [vmem:[%s396 + $0x8] sm:$0xff]
        %v478 = vld [vmem:[%s406] sm:$0x1]
        %v479 = vld [vmem:[%s406 + $0x1] sm:$0x1]
        %vm480 = vcmp.gt.f32.partialorder %v478, 0.5
        %vm481 = vcmp.gt.f32.partialorder %v479, 0.5
        %v482 = vsel %vm480, 0.0, -1e+30
        %v483 = vsel %vm481, 0.0, -1e+30
        %v484 = vld [vmem:[#allocation7] sm:$0x1]
        %v485 = vmul.f32 %v476, %v476
        %v486 = vmul.f32 %v477, %v477
        %vm487 = vcmask 261120
        %v488 = vsel %vm487, %v485, 0.0
        %489 = vadd.xlane.f32.xlu0 %v488
        %v490 = vpop.xlane.xlu0 %489
        %v491 = vsel %vm487, %v486, 0.0
        %492 = vadd.xlane.f32.xlu0 %v491
        %v493 = vpop.xlane.xlu0 %492
        %v494 = vrcp.pop 32.0
        %v495 = vmul.f32 32.0, %v494
        %v496 = vsub.f32 1.0, %v495
        %v497 = vmul.f32 %v494, %v496
        %v498 = vadd.f32 %v494, %v497
        %vm499 = vweird.f32 %v494
        %v500 = vsel %vm499, %v494, %v498
        %v501 = vmul.f32 %v490, %v500
        %v502 = vmul.f32 %v493, %v500
        %v503 = vadd.f32 %v501, 1e-06
        %v504 = vadd.f32 %v502, 1e-06
        %v505 = vrsqrt.pop %v503
        %v506 = vmul.f32 %v505, %v503
        %v507 = vmul.f32 %v506, %v505
        %v508 = vmul.f32 0.5, %v507
        %v509 = vsub.f32 1.5, %v508
        %v510 = vmul.f32 %v505, %v509
        %vm511 = vweird.f32 %v503
        %vm512 = vweird.f32 %v505
        %vm513 = vmor %vm511, %vm512
        %v514 = vsel %vm513, %v505, %v510
        %v515 = vrsqrt.pop %v504
        %v516 = vmul.f32 %v515, %v504
        %v517 = vmul.f32 %v516, %v515
        %v518 = vmul.f32 0.5, %v517
        %v519 = vsub.f32 1.5, %v518
        %v520 = vmul.f32 %v515, %v519
        %vm521 = vweird.f32 %v504
        %vm522 = vweird.f32 %v515
        %vm523 = vmor %vm521, %vm522
        %v524 = vsel %vm523, %v515, %v520
        %v525 = vmul.f32 %v476, %v514
        %v526 = vmul.f32 %v477, %v524
        %v528 = vperm.slane %v484, 0
        %v530 = vmul.f32 %v525, %v528
        %v531 = vmul.f32 %v526, %v528
        %v532 = vpack.c.bf16 %v531, %v530
        %v533 = vld [vmem:[#allocation10] sm:$0xf]
        %v534 = vld [vmem:[#allocation10 + $0x4] sm:$0xf]
        %v535 = vld [vmem:[#allocation10 + $0x8] sm:$0xf]
        %v536 = vld [vmem:[#allocation10 + $0xc] sm:$0xf]
        %v541 = vunpack.c.l.b16 %v533
        %v542 = vunpack.c.l.b16 %v534
        %v543 = vunpack.c.l.b16 %v535
        %v544 = vunpack.c.l.b16 %v536
        %v545 = vpack.c.b16 %v542, %v541
        %v546 = vpack.c.b16 %v544, %v543
        %v550 = vsel %vm487, %v532, 0
        %552 = vmatpush.bf16.msra.mxu0 0
        %553 = vmatpush.bf16.msra.mxu0 0
        %554 = vmatpush.bf16.msra.mxu0 0
        %555 = vmatpush.bf16.msra.mxu0 0
        %556 = vmatpush.bf16.msra.mxu0 0
        %557 = vmatpush.bf16.msra.mxu0 0
        %558 = vmatpush.bf16.msra.mxu0 %v546
        %559 = vmatpush.bf16.msra.mxu0 %v545
        %560 = vmatmul.bf16.gmra.mxu0 %v550
        %v561 = vpop.f32.mrf.mxu0
        %v562 = vadd.f32 0.0, %v561
        %v563 = vpop.f32.mrf.mxu0
        %v564 = vadd.f32 0.0, %v563
        %565 = vdwg.mxu0
        %v566 = vpack.c.bf16 %v562, %v562
        %v567 = vpack.c.bf16 %v564, %v564
        %v568 = vld [vmem:[%s0] sm:$0x1]
        %v569 = vld [vmem:[%s0 + $0x1] sm:$0x1]
        %v572 = vperm.slane %v482, 0
        %v573 = vperm.slane %v483, 0
        %v577 = vunpack.c.l.b16 %v566
        %v578 = vpack.c.b16 %v577, %v577
        %579 = vrot.lane.b32.xlu0 %v578, 96
        %v580 = vpop.permute.xlu0 %579
        %vm581 = vcmask 64512
        %v583 = vsel %vm581, %v566, 0
        %v586 = vsel %vm581, %v580, 0
        %588 = vmatpush.bf16.xpose.msra.mxu0 0
        %589 = vmatpush.bf16.xpose.msra.mxu0 0
        %590 = vmatpush.bf16.xpose.msra.mxu0 0
        %591 = vmatpush.bf16.xpose.msra.mxu0 0
        %592 = vmatpush.bf16.xpose.msra.mxu0 0
        %593 = vmatpush.bf16.xpose.msra.mxu0 0
        %594 = vmatpush.bf16.xpose.msra.mxu0 0
        %595 = vmatpush.bf16.xpose.msra.mxu0 %v586
        %596 = vmatmul.bf16.gmra.mxu0 %v583
        %v597 = vpop.f32.mrf.mxu0
        %v598 = vadd.f32 %v572, %v597
        %v599 = vpop.f32.mrf.mxu0
        %600 = vdwg.mxu0
        %v602 = vunpack.c.l.b16 %v567
        %v603 = vpack.c.b16 %v602, %v602
        %604 = vrot.lane.b32.xlu0 %v603, 96
        %v605 = vpop.permute.xlu0 %604
        %v607 = vsel %vm581, %v567, 0
        %v610 = vsel %vm581, %v605, 0
        %612 = vmatpush.bf16.xpose.msra.mxu0 0
        %613 = vmatpush.bf16.xpose.msra.mxu0 0
        %614 = vmatpush.bf16.xpose.msra.mxu0 0
        %615 = vmatpush.bf16.xpose.msra.mxu0 0
        %616 = vmatpush.bf16.xpose.msra.mxu0 0
        %617 = vmatpush.bf16.xpose.msra.mxu0 0
        %618 = vmatpush.bf16.xpose.msra.mxu0 0
        %619 = vmatpush.bf16.xpose.msra.mxu0 %v610
        %620 = vmatmul.bf16.gmra.mxu0 %v607
        %v621 = vpop.f32.mrf.mxu0
        %v622 = vadd.f32 %v573, %v621
        %v623 = vpop.f32.mrf.mxu0
        %624 = vdwg.mxu0
        %625 = vrot.lane.b32.xlu0 %v578, 112
        %v626 = vpop.permute.xlu0 %625
        %627 = vrot.lane.b32.xlu0 %v578, 80
        %v628 = vpop.permute.xlu0 %627
        %v630 = vsel %vm581, %v626, 0
        %v633 = vsel %vm581, %v628, 0
        %635 = vmatpush.bf16.xpose.msra.mxu0 0
        %636 = vmatpush.bf16.xpose.msra.mxu0 0
        %637 = vmatpush.bf16.xpose.msra.mxu0 0
        %638 = vmatpush.bf16.xpose.msra.mxu0 0
        %639 = vmatpush.bf16.xpose.msra.mxu0 0
        %640 = vmatpush.bf16.xpose.msra.mxu0 0
        %641 = vmatpush.bf16.xpose.msra.mxu0 0
        %642 = vmatpush.bf16.xpose.msra.mxu0 %v633
        %643 = vmatmul.bf16.gmra.mxu0 %v630
        %v644 = vpop.f32.mrf.mxu0
        %v645 = vadd.f32 %v572, %v644
        %v646 = vpop.f32.mrf.mxu0
        %647 = vdwg.mxu0
        %648 = vrot.lane.b32.xlu0 %v603, 112
        %v649 = vpop.permute.xlu0 %648
        %650 = vrot.lane.b32.xlu0 %v603, 80
        %v651 = vpop.permute.xlu0 %650
        %v653 = vsel %vm581, %v649, 0
        %v656 = vsel %vm581, %v651, 0
        %658 = vmatpush.bf16.xpose.msra.mxu0 0
        %659 = vmatpush.bf16.xpose.msra.mxu0 0
        %660 = vmatpush.bf16.xpose.msra.mxu0 0
        %661 = vmatpush.bf16.xpose.msra.mxu0 0
        %662 = vmatpush.bf16.xpose.msra.mxu0 0
        %663 = vmatpush.bf16.xpose.msra.mxu0 0
        %664 = vmatpush.bf16.xpose.msra.mxu0 0
        %665 = vmatpush.bf16.xpose.msra.mxu0 %v656
        %666 = vmatmul.bf16.gmra.mxu0 %v653
        %v667 = vpop.f32.mrf.mxu0
        %v668 = vadd.f32 %v573, %v667
        %v669 = vpop.f32.mrf.mxu0
        %670 = vdwg.mxu0
        %v671 = vsel %vm581, %v598, -inf
        %672 = vmax.xlane.f32.xlu0 %v671
        %v673 = vpop.xlane.xlu0 %672
        %v674 = vsel %vm581, %v622, -inf
        %675 = vmax.xlane.f32.xlu0 %v674
        %v676 = vpop.xlane.xlu0 %675
        %v677 = vsub.f32 %v598, %v673
        %v678 = vsub.f32 %v622, %v676
        %v679 = vmul.f32 %v677, 1.442695
        %v680 = vpow.pop %v679
        %v681 = vmul.f32 %v678, 1.442695
        %v682 = vpow.pop %v681
        %v683 = vsel %vm581, %v680, 0.0
        %684 = vadd.xlane.f32.xlu0 %v683
        %v685 = vpop.xlane.xlu0 %684
        %v686 = vsel %vm581, %v682, 0.0
        %687 = vadd.xlane.f32.xlu0 %v686
        %v688 = vpop.xlane.xlu0 %687
        %v689 = vrcp.pop %v685
        %v690 = vrcp.pop %v688
        %v691 = vmul.f32 %v680, %v689
        %v692 = vmul.f32 %v682, %v690
        %v693 = vsel %vm581, %v645, -inf
        %694 = vmax.xlane.f32.xlu0 %v693
        %v695 = vpop.xlane.xlu0 %694
        %v696 = vsel %vm581, %v668, -inf
        %697 = vmax.xlane.f32.xlu0 %v696
        %v698 = vpop.xlane.xlu0 %697
        %v699 = vsub.f32 %v645, %v695
        %v700 = vsub.f32 %v668, %v698
        %v701 = vmul.f32 %v699, 1.442695
        %v702 = vpow.pop %v701
        %v703 = vmul.f32 %v700, 1.442695
        %v704 = vpow.pop %v703
        %v705 = vsel %vm581, %v702, 0.0
        %706 = vadd.xlane.f32.xlu0 %v705
        %v707 = vpop.xlane.xlu0 %706
        %v708 = vsel %vm581, %v704, 0.0
        %709 = vadd.xlane.f32.xlu0 %v708
        %v710 = vpop.xlane.xlu0 %709
        %v711 = vrcp.pop %v707
        %v712 = vrcp.pop %v710
        %v713 = vmul.f32 %v702, %v711
        %v714 = vmul.f32 %v704, %v712
        %v716 = vperm.slane %v568, 0
        %717 = vset.pattern.permute.xlu0 0
        %718 = vperm.xlu0 %717, %v716
        %v719 = vpop.permute.xlu0 %718
        %v721 = vmul.f32 %v719, %v713
        %v722 = vmul.f32 %v719, %v714
        %v723 = vsub.f32 %v691, %v721
        %v724 = vsub.f32 %v692, %v722
        %v725 = vpack.c.bf16 %v723, %v723
        %v726 = vpack.c.bf16 %v724, %v724
        %727 = vrot.lane.b32.xlu0 %v578, 64
        %v728 = vpop.permute.xlu0 %727
        %v730 = vsel %vm581, %v725, 0
        %vm732 = vcmask 1043456
        %v734 = vsel %vm732, %v728, 0
        %736 = vmatpush.bf16.msra.mxu0 0
        %737 = vmatpush.bf16.msra.mxu0 0
        %738 = vmatpush.bf16.msra.mxu0 0
        %739 = vmatpush.bf16.msra.mxu0 0
        %740 = vmatpush.bf16.msra.mxu0 0
        %741 = vmatpush.bf16.msra.mxu0 0
        %742 = vmatpush.bf16.msra.mxu0 0
        %743 = vmatpush.bf16.msra.mxu0 %v734
        %744 = vmatmul.bf16.gmra.mxu0 %v730
        %v745 = vpop.f32.mrf.mxu0
        %v746 = vadd.f32 0.0, %v745
        %v747 = vpop.f32.mrf.mxu0
        %748 = vdwg.mxu0
        %749 = vrot.lane.b32.xlu0 %v603, 64
        %v750 = vpop.permute.xlu0 %749
        %v752 = vsel %vm581, %v726, 0
        %v755 = vsel %vm732, %v750, 0
        %757 = vmatpush.bf16.msra.mxu0 0
        %758 = vmatpush.bf16.msra.mxu0 0
        %759 = vmatpush.bf16.msra.mxu0 0
        %760 = vmatpush.bf16.msra.mxu0 0
        %761 = vmatpush.bf16.msra.mxu0 0
        %762 = vmatpush.bf16.msra.mxu0 0
        %763 = vmatpush.bf16.msra.mxu0 0
        %764 = vmatpush.bf16.msra.mxu0 %v755
        %765 = vmatmul.bf16.gmra.mxu0 %v752
        %v766 = vpop.f32.mrf.mxu0
        %v767 = vadd.f32 0.0, %v766
        %v768 = vpop.f32.mrf.mxu0
        %769 = vdwg.mxu0
        %v770 = vmul.f32 %v746, %v746
        %v771 = vmul.f32 %v767, %v767
        %v772 = vsel %vm581, %v770, 0.0
        %773 = vadd.xlane.f32.xlu0 %v772
        %v774 = vpop.xlane.xlu0 %773
        %v775 = vsel %vm581, %v771, 0.0
        %776 = vadd.xlane.f32.xlu0 %v775
        %v777 = vpop.xlane.xlu0 %776
        %v778 = vrcp.pop 8.0
        %v779 = vmul.f32 8.0, %v778
        %v780 = vsub.f32 1.0, %v779
        %v781 = vmul.f32 %v778, %v780
        %v782 = vadd.f32 %v778, %v781
        %vm783 = vweird.f32 %v778
        %v784 = vsel %vm783, %v778, %v782
        %v785 = vmul.f32 %v774, %v784
        %v786 = vmul.f32 %v777, %v784
        %v787 = vadd.f32 %v785, 1e-06
        %v788 = vadd.f32 %v786, 1e-06
        %v789 = vrsqrt.pop %v787
        %v790 = vmul.f32 %v789, %v787
        %v791 = vmul.f32 %v790, %v789
        %v792 = vmul.f32 0.5, %v791
        %v793 = vsub.f32 1.5, %v792
        %v794 = vmul.f32 %v789, %v793
        %vm795 = vweird.f32 %v787
        %vm796 = vweird.f32 %v789
        %vm797 = vmor %vm795, %vm796
        %v798 = vsel %vm797, %v789, %v794
        %v799 = vrsqrt.pop %v788
        %v800 = vmul.f32 %v799, %v788
        %v801 = vmul.f32 %v800, %v799
        %v802 = vmul.f32 0.5, %v801
        %v803 = vsub.f32 1.5, %v802
        %v804 = vmul.f32 %v799, %v803
        %vm805 = vweird.f32 %v788
        %vm806 = vweird.f32 %v799
        %vm807 = vmor %vm805, %vm806
        %v808 = vsel %vm807, %v799, %v804
        %v809 = vmul.f32 %v746, %v798
        %v810 = vmul.f32 %v767, %v808
        %v811 = vmul.f32 %v809, 0.2
        %v812 = vmul.f32 %v810, 0.2
        %813 = vrot.lane.b32.xlu0 %v578, 120
        %v814 = vpop.permute.xlu0 %813
        %815 = vrot.lane.b32.xlu0 %v578, 88
        %v816 = vpop.permute.xlu0 %815
        %v818 = vsel %vm581, %v814, 0
        %v821 = vsel %vm581, %v816, 0
        %823 = vmatpush.bf16.xpose.msra.mxu0 0
        %824 = vmatpush.bf16.xpose.msra.mxu0 0
        %825 = vmatpush.bf16.xpose.msra.mxu0 0
        %826 = vmatpush.bf16.xpose.msra.mxu0 0
        %827 = vmatpush.bf16.xpose.msra.mxu0 0
        %828 = vmatpush.bf16.xpose.msra.mxu0 0
        %829 = vmatpush.bf16.xpose.msra.mxu0 0
        %830 = vmatpush.bf16.xpose.msra.mxu0 %v821
        %831 = vmatmul.bf16.gmra.mxu0 %v818
        %v832 = vpop.f32.mrf.mxu0
        %v833 = vadd.f32 %v572, %v832
        %v834 = vpop.f32.mrf.mxu0
        %835 = vdwg.mxu0
        %836 = vrot.lane.b32.xlu0 %v603, 120
        %v837 = vpop.permute.xlu0 %836
        %838 = vrot.lane.b32.xlu0 %v603, 88
        %v839 = vpop.permute.xlu0 %838
        %v841 = vsel %vm581, %v837, 0
        %v844 = vsel %vm581, %v839, 0
        %846 = vmatpush.bf16.xpose.msra.mxu0 0
        %847 = vmatpush.bf16.xpose.msra.mxu0 0
        %848 = vmatpush.bf16.xpose.msra.mxu0 0
        %849 = vmatpush.bf16.xpose.msra.mxu0 0
        %850 = vmatpush.bf16.xpose.msra.mxu0 0
        %851 = vmatpush.bf16.xpose.msra.mxu0 0
        %852 = vmatpush.bf16.xpose.msra.mxu0 0
        %853 = vmatpush.bf16.xpose.msra.mxu0 %v844
        %854 = vmatmul.bf16.gmra.mxu0 %v841
        %v855 = vpop.f32.mrf.mxu0
        %v856 = vadd.f32 %v573, %v855
        %v857 = vpop.f32.mrf.mxu0
        %858 = vdwg.mxu0
        %859 = vrot.lane.b32.xlu0 %v578, 104
        %v860 = vpop.permute.xlu0 %859
        %861 = vrot.lane.b32.xlu0 %v578, 72
        %v862 = vpop.permute.xlu0 %861
        %v864 = vsel %vm581, %v860, 0
        %v867 = vsel %vm581, %v862, 0
        %869 = vmatpush.bf16.xpose.msra.mxu0 0
        %870 = vmatpush.bf16.xpose.msra.mxu0 0
        %871 = vmatpush.bf16.xpose.msra.mxu0 0
        %872 = vmatpush.bf16.xpose.msra.mxu0 0
        %873 = vmatpush.bf16.xpose.msra.mxu0 0
        %874 = vmatpush.bf16.xpose.msra.mxu0 0
        %875 = vmatpush.bf16.xpose.msra.mxu0 0
        %876 = vmatpush.bf16.xpose.msra.mxu0 %v867
        %877 = vmatmul.bf16.gmra.mxu0 %v864
        %v878 = vpop.f32.mrf.mxu0
        %v879 = vadd.f32 %v572, %v878
        %v880 = vpop.f32.mrf.mxu0
        %881 = vdwg.mxu0
        %882 = vrot.lane.b32.xlu0 %v603, 104
        %v883 = vpop.permute.xlu0 %882
        %884 = vrot.lane.b32.xlu0 %v603, 72
        %v885 = vpop.permute.xlu0 %884
        %v887 = vsel %vm581, %v883, 0
        %v890 = vsel %vm581, %v885, 0
        %892 = vmatpush.bf16.xpose.msra.mxu0 0
        %893 = vmatpush.bf16.xpose.msra.mxu0 0
        %894 = vmatpush.bf16.xpose.msra.mxu0 0
        %895 = vmatpush.bf16.xpose.msra.mxu0 0
        %896 = vmatpush.bf16.xpose.msra.mxu0 0
        %897 = vmatpush.bf16.xpose.msra.mxu0 0
        %898 = vmatpush.bf16.xpose.msra.mxu0 0
        %899 = vmatpush.bf16.xpose.msra.mxu0 %v890
        %900 = vmatmul.bf16.gmra.mxu0 %v887
        %v901 = vpop.f32.mrf.mxu0
        %v902 = vadd.f32 %v573, %v901
        %v903 = vpop.f32.mrf.mxu0
        %904 = vdwg.mxu0
        %v905 = vsel %vm581, %v833, -inf
        %906 = vmax.xlane.f32.xlu0 %v905
        %v907 = vpop.xlane.xlu0 %906
        %v908 = vsel %vm581, %v856, -inf
        %909 = vmax.xlane.f32.xlu0 %v908
        %v910 = vpop.xlane.xlu0 %909
        %v911 = vsub.f32 %v833, %v907
        %v912 = vsub.f32 %v856, %v910
        %v913 = vmul.f32 %v911, 1.442695
        %v914 = vpow.pop %v913
        %v915 = vmul.f32 %v912, 1.442695
        %v916 = vpow.pop %v915
        %v917 = vsel %vm581, %v914, 0.0
        %918 = vadd.xlane.f32.xlu0 %v917
        %v919 = vpop.xlane.xlu0 %918
        %v920 = vsel %vm581, %v916, 0.0
        %921 = vadd.xlane.f32.xlu0 %v920
        %v922 = vpop.xlane.xlu0 %921
        %v923 = vrcp.pop %v919
        %v924 = vrcp.pop %v922
        %v925 = vmul.f32 %v914, %v923
        %v926 = vmul.f32 %v916, %v924
        %v927 = vsel %vm581, %v879, -inf
        %928 = vmax.xlane.f32.xlu0 %v927
        %v929 = vpop.xlane.xlu0 %928
        %v930 = vsel %vm581, %v902, -inf
        %931 = vmax.xlane.f32.xlu0 %v930
        %v932 = vpop.xlane.xlu0 %931
        %v933 = vsub.f32 %v879, %v929
        %v934 = vsub.f32 %v902, %v932
        %v935 = vmul.f32 %v933, 1.442695
        %v936 = vpow.pop %v935
        %v937 = vmul.f32 %v934, 1.442695
        %v938 = vpow.pop %v937
        %v939 = vsel %vm581, %v936, 0.0
        %940 = vadd.xlane.f32.xlu0 %v939
        %v941 = vpop.xlane.xlu0 %940
        %v942 = vsel %vm581, %v938, 0.0
        %943 = vadd.xlane.f32.xlu0 %v942
        %v944 = vpop.xlane.xlu0 %943
        %v945 = vrcp.pop %v941
        %v946 = vrcp.pop %v944
        %v947 = vmul.f32 %v936, %v945
        %v948 = vmul.f32 %v938, %v946
        %v950 = vperm.slane %v569, 0
        %951 = vset.pattern.permute.xlu0 0
        %952 = vperm.xlu0 %951, %v950
        %v953 = vpop.permute.xlu0 %952
        %v955 = vmul.f32 %v953, %v947
        %v956 = vmul.f32 %v953, %v948
        %v957 = vsub.f32 %v925, %v955
        %v958 = vsub.f32 %v926, %v956
        %v959 = vpack.c.bf16 %v957, %v957
        %v960 = vpack.c.bf16 %v958, %v958
        %961 = vrot.lane.b32.xlu0 %v578, 56
        %v962 = vpop.permute.xlu0 %961
        %v964 = vsel %vm581, %v959, 0
        %v967 = vsel %vm732, %v962, 0
        %969 = vmatpush.bf16.msra.mxu0 0
        %970 = vmatpush.bf16.msra.mxu0 0
        %971 = vmatpush.bf16.msra.mxu0 0
        %972 = vmatpush.bf16.msra.mxu0 0
        %973 = vmatpush.bf16.msra.mxu0 0
        %974 = vmatpush.bf16.msra.mxu0 0
        %975 = vmatpush.bf16.msra.mxu0 0
        %976 = vmatpush.bf16.msra.mxu0 %v967
        %977 = vmatmul.bf16.gmra.mxu0 %v964
        %v978 = vpop.f32.mrf.mxu0
        %v979 = vadd.f32 0.0, %v978
        %v980 = vpop.f32.mrf.mxu0
        %981 = vdwg.mxu0
        %982 = vrot.lane.b32.xlu0 %v603, 56
        %v983 = vpop.permute.xlu0 %982
        %v985 = vsel %vm581, %v960, 0
        %v988 = vsel %vm732, %v983, 0
        %990 = vmatpush.bf16.msra.mxu0 0
        %991 = vmatpush.bf16.msra.mxu0 0
        %992 = vmatpush.bf16.msra.mxu0 0
        %993 = vmatpush.bf16.msra.mxu0 0
        %994 = vmatpush.bf16.msra.mxu0 0
        %995 = vmatpush.bf16.msra.mxu0 0
        %996 = vmatpush.bf16.msra.mxu0 0
        %997 = vmatpush.bf16.msra.mxu0 %v988
        %998 = vmatmul.bf16.gmra.mxu0 %v985
        %v999 = vpop.f32.mrf.mxu0
        %v1000 = vadd.f32 0.0, %v999
        %v1001 = vpop.f32.mrf.mxu0
        %1002 = vdwg.mxu0
        %v1003 = vmul.f32 %v979, %v979
        %v1004 = vmul.f32 %v1000, %v1000
        %v1005 = vsel %vm581, %v1003, 0.0
        %1006 = vadd.xlane.f32.xlu0 %v1005
        %v1007 = vpop.xlane.xlu0 %1006
        %v1008 = vsel %vm581, %v1004, 0.0
        %1009 = vadd.xlane.f32.xlu0 %v1008
        %v1010 = vpop.xlane.xlu0 %1009
        %v1011 = vmul.f32 %v1007, %v784
        %v1012 = vmul.f32 %v1010, %v784
        %v1013 = vadd.f32 %v1011, 1e-06
        %v1014 = vadd.f32 %v1012, 1e-06
        %v1015 = vrsqrt.pop %v1013
        %v1016 = vmul.f32 %v1015, %v1013
        %v1017 = vmul.f32 %v1016, %v1015
        %v1018 = vmul.f32 0.5, %v1017
        %v1019 = vsub.f32 1.5, %v1018
        %v1020 = vmul.f32 %v1015, %v1019
        %vm1021 = vweird.f32 %v1013
        %vm1022 = vweird.f32 %v1015
        %vm1023 = vmor %vm1021, %vm1022
        %v1024 = vsel %vm1023, %v1015, %v1020
        %v1025 = vrsqrt.pop %v1014
        %v1026 = vmul.f32 %v1025, %v1014
        %v1027 = vmul.f32 %v1026, %v1025
        %v1028 = vmul.f32 0.5, %v1027
        %v1029 = vsub.f32 1.5, %v1028
        %v1030 = vmul.f32 %v1025, %v1029
        %vm1031 = vweird.f32 %v1014
        %vm1032 = vweird.f32 %v1025
        %vm1033 = vmor %vm1031, %vm1032
        %v1034 = vsel %vm1033, %v1025, %v1030
        %v1035 = vmul.f32 %v979, %v1024
        %v1036 = vmul.f32 %v1000, %v1034
        %v1037 = vmul.f32 %v1035, 0.2
        %v1038 = vmul.f32 %v1036, 0.2
        %1041 = vrot.lane.b32.xlu0 %v1037, 8
        %v1042 = vpop.permute.xlu0 %1041
        %1043 = vrot.lane.b32.xlu0 %v1038, 8
        %v1044 = vpop.permute.xlu0 %1043
        %v1047 = vsel %vm581, %v811, %v1042
        %v1048 = vsel %vm581, %v812, %v1044
        %v1049 = vpack.c.bf16 %v1048, %v1047
        %v1050 = vld [vmem:[%s6] sm:$0xf]
        %v1051 = vld [vmem:[%s6 + $0x4] sm:$0xf]
        %v1054 = vunpack.c.l.b16 %v1050
        %v1055 = vunpack.c.l.b16 %v1051
        %v1056 = vpack.c.b16 %v1055, %v1054
        %vm1058 = vcmask 130048
        %v1060 = vsel %vm1058, %v1049, 0
        %1062 = vmatpush.bf16.msra.mxu0 0
        %1063 = vmatpush.bf16.msra.mxu0 0
        %1064 = vmatpush.bf16.msra.mxu0 0
        %1065 = vmatpush.bf16.msra.mxu0 0
        %1066 = vmatpush.bf16.msra.mxu0 0
        %1067 = vmatpush.bf16.msra.mxu0 0
        %1068 = vmatpush.bf16.msra.mxu0 0
        %1069 = vmatpush.bf16.msra.mxu0 %v1056
        %1070 = vmatmul.bf16.gmra.mxu0 %v1060
        %v1071 = vpop.f32.mrf.mxu0
        %v1072 = vadd.f32 %v530, %v1071
        %v1073 = vpop.f32.mrf.mxu0
        %v1074 = vadd.f32 %v531, %v1073
        %1075 = vdwg.mxu0
        %v1076 = vld [vmem:[#allocation8] sm:$0x1]
        %v1077 = vmul.f32 %v1072, %v1072
        %v1078 = vmul.f32 %v1074, %v1074
        %v1079 = vsel %vm487, %v1077, 0.0
        %1080 = vadd.xlane.f32.xlu0 %v1079
        %v1081 = vpop.xlane.xlu0 %1080
        %v1082 = vsel %vm487, %v1078, 0.0
        %1083 = vadd.xlane.f32.xlu0 %v1082
        %v1084 = vpop.xlane.xlu0 %1083
        %v1085 = vmul.f32 %v1081, %v500
        %v1086 = vmul.f32 %v1084, %v500
        %v1087 = vadd.f32 %v1085, 1e-06
        %v1088 = vadd.f32 %v1086, 1e-06
        %v1089 = vrsqrt.pop %v1087
        %v1090 = vmul.f32 %v1089, %v1087
        %v1091 = vmul.f32 %v1090, %v1089
        %v1092 = vmul.f32 0.5, %v1091
        %v1093 = vsub.f32 1.5, %v1092
        %v1094 = vmul.f32 %v1089, %v1093
        %vm1095 = vweird.f32 %v1087
        %vm1096 = vweird.f32 %v1089
        %vm1097 = vmor %vm1095, %vm1096
        %v1098 = vsel %vm1097, %v1089, %v1094
        %v1099 = vrsqrt.pop %v1088
        %v1100 = vmul.f32 %v1099, %v1088
        %v1101 = vmul.f32 %v1100, %v1099
        %v1102 = vmul.f32 0.5, %v1101
        %v1103 = vsub.f32 1.5, %v1102
        %v1104 = vmul.f32 %v1099, %v1103
        %vm1105 = vweird.f32 %v1088
        %vm1106 = vweird.f32 %v1099
        %vm1107 = vmor %vm1105, %vm1106
        %v1108 = vsel %vm1107, %v1099, %v1104
        %v1109 = vmul.f32 %v1072, %v1098
        %v1110 = vmul.f32 %v1074, %v1108
        %v1112 = vperm.slane %v1076, 0
        %v1114 = vmul.f32 %v1109, %v1112
        %v1115 = vmul.f32 %v1110, %v1112
        %v1116 = vpack.c.bf16 %v1115, %v1114
        %v1117 = vld [vmem:[#allocation11] sm:$0xf]
        %v1118 = vld [vmem:[#allocation11 + $0x4] sm:$0xf]
        %v1119 = vld [vmem:[#allocation11 + $0x8] sm:$0xf]
        %v1120 = vld [vmem:[#allocation11 + $0xc] sm:$0xf]
        %v1125 = vunpack.c.l.b16 %v1117
        %v1126 = vunpack.c.l.b16 %v1118
        %v1127 = vunpack.c.l.b16 %v1119
        %v1128 = vunpack.c.l.b16 %v1120
        %v1129 = vpack.c.b16 %v1126, %v1125
        %v1130 = vpack.c.b16 %v1128, %v1127
        %v1134 = vsel %vm487, %v1116, 0
        %1136 = vmatpush.bf16.msra.mxu0 0
        %1137 = vmatpush.bf16.msra.mxu0 0
        %1138 = vmatpush.bf16.msra.mxu0 0
        %1139 = vmatpush.bf16.msra.mxu0 0
        %1140 = vmatpush.bf16.msra.mxu0 0
        %1141 = vmatpush.bf16.msra.mxu0 0
        %1142 = vmatpush.bf16.msra.mxu0 %v1130
        %1143 = vmatpush.bf16.msra.mxu0 %v1129
        %1144 = vmatmul.bf16.gmra.mxu0 %v1134
        %v1145 = vpop.f32.mrf.mxu0
        %v1146 = vadd.f32 0.0, %v1145
        %v1147 = vpop.f32.mrf.mxu0
        %v1148 = vadd.f32 0.0, %v1147
        %1149 = vdwg.mxu0
        %v1150 = vxor.u32 %v1146, 2147483648
        %v1151 = vxor.u32 %v1148, 2147483648
        %v1152 = vmul.f32 %v1150, 1.442695
        %v1153 = vpow.pop %v1152
        %v1154 = vmul.f32 %v1151, 1.442695
        %v1155 = vpow.pop %v1154
        %v1156 = vadd.f32 %v1153, 1.0
        %v1157 = vadd.f32 %v1155, 1.0
        %v1158 = vrcp.pop %v1156
        %v1159 = vmul.f32 %v1156, %v1158
        %v1160 = vsub.f32 1.0, %v1159
        %v1161 = vmul.f32 %v1158, %v1160
        %v1162 = vadd.f32 %v1158, %v1161
        %vm1163 = vweird.f32 %v1156
        %vm1164 = vweird.f32 %v1158
        %vm1165 = vmor %vm1163, %vm1164
        %v1166 = vsel %vm1165, %v1158, %v1162
        %v1167 = vand.u32 2147483647, %v1156
        %vm1168 = vcmp.eq.f32.partialorder %v1167, 8.507059e+37
        %v1169 = vand.u32 %v1156, 2147483648
        %v1170 = vor.u32 1.1754944e-38, %v1169
        %v1171 = vsel %vm1168, %v1170, %v1166
        %v1172 = vmul.f32 1.0, %v1171
        %v1173 = vrcp.pop %v1157
        %v1174 = vmul.f32 %v1157, %v1173
        %v1175 = vsub.f32 1.0, %v1174
        %v1176 = vmul.f32 %v1173, %v1175
        %v1177 = vadd.f32 %v1173, %v1176
        %vm1178 = vweird.f32 %v1157
        %vm1179 = vweird.f32 %v1173
        %vm1180 = vmor %vm1178, %vm1179
        %v1181 = vsel %vm1180, %v1173, %v1177
        %v1182 = vand.u32 2147483647, %v1157
        %vm1183 = vcmp.eq.f32.partialorder %v1182, 8.507059e+37
        %v1184 = vand.u32 %v1157, 2147483648
        %v1185 = vor.u32 1.1754944e-38, %v1184
        %v1186 = vsel %vm1183, %v1185, %v1181
        %v1187 = vmul.f32 1.0, %v1186
        %v1188 = vmul.f32 %v1146, %v1172
        %v1189 = vmul.f32 %v1148, %v1187
        %1192 = vrot.lane.b32.xlu0 %v1146, 96
        %v1193 = vpop.permute.xlu0 %1192
        %1194 = vrot.lane.b32.xlu0 %v1148, 96
        %v1195 = vpop.permute.xlu0 %1194
        %v1198 = vmul.f32 %v1188, %v1193
        %v1199 = vmul.f32 %v1189, %v1195
        %v1200 = vpack.c.bf16 %v1199, %v1198
        %v1201 = vld [vmem:[#allocation13] sm:$0xf]
        %v1202 = vld [vmem:[#allocation13 + $0x4] sm:$0xf]
        %v1203 = vld [vmem:[#allocation13 + $0x8] sm:$0xf]
        %v1204 = vld [vmem:[#allocation13 + $0xc] sm:$0xf]
        %v1209 = vunpack.c.l.b16 %v1201
        %v1210 = vunpack.c.l.b16 %v1202
        %v1211 = vunpack.c.l.b16 %v1203
        %v1212 = vunpack.c.l.b16 %v1204
        %v1213 = vpack.c.b16 %v1210, %v1209
        %v1214 = vpack.c.b16 %v1212, %v1211
        %v1218 = vsel %vm487, %v1200, 0
        %1220 = vmatpush.bf16.msra.mxu0 0
        %1221 = vmatpush.bf16.msra.mxu0 0
        %1222 = vmatpush.bf16.msra.mxu0 0
        %1223 = vmatpush.bf16.msra.mxu0 0
        %1224 = vmatpush.bf16.msra.mxu0 0
        %1225 = vmatpush.bf16.msra.mxu0 0
        %1226 = vmatpush.bf16.msra.mxu0 %v1214
        %1227 = vmatpush.bf16.msra.mxu0 %v1213
        %1228 = vmatmul.bf16.gmra.mxu0 %v1218
        %v1229 = vpop.f32.mrf.mxu0
        %v1230 = vadd.f32 %v1072, %v1229
        %v1231 = vpop.f32.mrf.mxu0
        %v1232 = vadd.f32 %v1074, %v1231
        %1233 = vdwg.mxu0
        %1234 = vst.msk [vmem:[%s471] sm:$0xff] %vm487, %v1230
        %1235 = vst.msk [vmem:[%s471 + $0x8] sm:$0xff] %vm487, %v1232
        %s1236 = sand.u32 %s238, 1
        %s1237 = scalar_lea.sflag [#allocation4], %s1236
        %s1238 = sand.u32 %s238, 1
        %s1239 = smul.addr %s1238, 16
        %s1240 = scalar_lea.vmem [#allocation14], %s1239
        // Predicated region
        $region85: #{tpu_custom_call.1} parent=55 // pred_check
          %p1241 = pneg %p248
        $region86: #{tpu_custom_call.1} parent=55 // pred_check_branch
          %1243 = sbr.rel (%p1241) target = $region88
        $region87: #{tpu_custom_call.1} parent=55 // pred_region
          %s1244 = smul.u32 2, %s31
          %1246 = vsyncadd %s1237, 0
          %s1247 = smul.addr %s1244, 8
          %s1248 = scalar_lea.hbm %s9, %s1247
          %s1249 = sshll.u32 %s1240, 4
          %s1250 = int_to_ptr.vmem [resolvable:$true] %s1249
          %s1251 = sshll.u32 %s1248, 4
          %s1252 = int_to_ptr.hbm [resolvable:$true] %s1251
          %1257 = dma.vmem_to_hbm [thread:$0]  %s1250, 256, %s1252, %s1237, 128, 128, 8
        $region88: #{tpu_custom_call.1} parent=55 // pred_fallthru
          _
      $region56: #{tpu_custom_call.1} parent=5 // pred_fallthru
        _
      %p1258 = scmp.le.s32.totalorder 2, %s26
      // Predicated region
      $region89: #{tpu_custom_call.1} parent=5 // pred_check
        %p1259 = pneg %p1258
      $region90: #{tpu_custom_call.1} parent=5 // pred_check_branch
        %1261 = sbr.rel (%p1259) target = $region92
      $region91: #{tpu_custom_call.1} parent=5 // pred_region
        %s1262 = ssub.s32 %s26, 2
        // Predicated region
        $region93: #{tpu_custom_call.1} parent=91 // pred_check
          %p1263 = pneg %p254
        $region94: #{tpu_custom_call.1} parent=91 // pred_check_branch
          %1265 = sbr.rel (%p1263) target = $region96
        $region95: #{tpu_custom_call.1} parent=91 // pred_region
          %s1266 = sand.u32 %s239, 1
          %s1267 = scalar_lea.sflag [#allocation4], %s1266
          %s1268 = sand.u32 %s239, 1
          %s1269 = smul.addr %s1268, 16
          %s1270 = scalar_lea.vmem [#allocation14], %s1269
          %1272 = dma.done %s1267, 256
        $region96: #{tpu_custom_call.1} parent=91 // pred_fallthru
          _
      $region92: #{tpu_custom_call.1} parent=5 // pred_fallthru
        _
    $region6: #{tpu_custom_call.1} parent=1 // loop_footer
      %s30 = sadd.s32 1, %s26
    $region7: #{tpu_custom_call.1} parent=1 // loop_footer_branch
      %25 = sbr.rel target = $region3
    $region8: #{tpu_custom_call.1} parent=1 // loop_exit
      _
    %1273 = vsyncpa [#allocation3], 1
    %s1274 = scalar_lea.sflag [#allocation3], 1
    %1275 = vsyncpa %s1274, 1
    %1276 = vsyncpa [#allocation6], 1
    %s1277 = scalar_lea.sflag [#allocation6], 1
    %1278 = vsyncpa %s1277, 1
    %1279 = vsyncpa [#allocation9], 1
    %1280 = vsyncpa [#allocation12], 1
    %1281 = vsyncpa [#allocation4], 1
    %s1282 = scalar_lea.sflag [#allocation4], 1
    %1283 = vsyncpa %s1282, 1

// kernel: tpu_custom_call.1
$region0: #{tpu_custom_call.1}
  #allocation0 [shape = 'u32[]', space=smem, size = 0x4, offset = 0x4, fixed_abs, tag = 'smem constant byte address 0x4 - core index']
  #allocation1 [shape = 'u32[72,128]{1,0:T(1,128)}', space=vmem, size = 0x9000, scoped, tag = 'internal scratch']
  %s0 = inlined_call_operand.vmem [shape: f32[2,1,1], index: 0, kind: input, shape index: {}]
  %s1 = inlined_call_operand.hbm [shape: f32[4,8,32], index: 1, kind: input, shape index: {}]
  %s2 = inlined_call_operand.hbm [shape: f32[4,1,8], index: 2, kind: input, shape index: {}]
  %s3 = inlined_call_operand.hbm [shape: f32[1,32], index: 3, kind: input, shape index: {}]
  %s4 = inlined_call_operand.hbm [shape: f32[1,32], index: 4, kind: input, shape index: {}]
  %s5 = inlined_call_operand.hbm [shape: bf16[32,80], index: 5, kind: input, shape index: {}]
  %s6 = inlined_call_operand.vmem [shape: bf16[16,32], index: 6, kind: input, shape index: {}]
  %s7 = inlined_call_operand.hbm [shape: bf16[32,64], index: 7, kind: input, shape index: {}]
  %s8 = inlined_call_operand.hbm [shape: bf16[32,32], index: 8, kind: input, shape index: {}]
  %s9 = inlined_call_operand.hbm [shape: f32[4,8,32], index: 9, kind: output, shape index: {}]
  %s10 = sld [smem:[#allocation0]]
  $region97: #{tpu_custom_call.1} parent=0
    _
  %s12 = ssub.s32 1, %s10
  %s13 = scalar_select 0, %s12, %s10
  $region1: #{tpu_custom_call.1} parent=0
    #allocation2 [shape = 'u8[16384]{0}', space=vmem, size = 0x4000, scoped, tag = 'input window, operand 1']
    #allocation3 [shape = 's32[2]{0}', space=sflag, size = 0x8, scoped, tag = 'scoped memory for tpu_custom_call.1']
    #allocation4 [shape = 's32[2]{0}', space=sflag, size = 0x8, scoped, tag = 'scoped memory for tpu_custom_call.1']
    #allocation5 [shape = 'u8[2048]{0}', space=vmem, size = 0x800, scoped, tag = 'input window, operand 2']
    #allocation6 [shape = 's32[2]{0}', space=sflag, size = 0x8, scoped, tag = 'scoped memory for tpu_custom_call.1']
    #allocation7 [shape = 'u8[512]{0}', space=vmem, size = 0x400, scoped, tag = 'input window, operand 3, single buffered']
    #allocation8 [shape = 'u8[512]{0}', space=vmem, size = 0x400, scoped, tag = 'input window, operand 4, single buffered']
    #allocation9 [shape = 's32[1]{0}', space=sflag, size = 0x4, scoped, tag = 'scoped memory for tpu_custom_call.1']
    #allocation10 [shape = 'u8[8192]{0}', space=vmem, size = 0x2000, scoped, tag = 'input window, operand 5, single buffered']
    #allocation11 [shape = 'u8[8192]{0}', space=vmem, size = 0x2000, scoped, tag = 'input window, operand 7, single buffered']
    #allocation12 [shape = 's32[1]{0}', space=sflag, size = 0x4, scoped, tag = 'scoped memory for tpu_custom_call.1']
    #allocation13 [shape = 'u8[8192]{0}', space=vmem, size = 0x2000, scoped, tag = 'input window, operand 8, single buffered']
    #allocation14 [shape = 'u8[16384]{0}', space=vmem, size = 0x4000, scoped, tag = 'output window, operand 0']
    %14 = vsyncpa [#allocation3], 0
    %s15 = scalar_lea.sflag [#allocation3], 1
    %16 = vsyncpa %s15, 0
    %17 = vsyncpa [#allocation6], 0
    %s18 = scalar_lea.sflag [#allocation6], 1
    %19 = vsyncpa %s18, 0
    %20 = vsyncpa [#allocation9], 0
    %21 = vsyncpa [#allocation12], 0
    %22 = vsyncpa [#allocation4], 0
    %s23 = scalar_lea.sflag [#allocation4], 1
    %24 = vsyncpa %s23, 0
    loop: start=0, step=1, limit=4
    $region2: #{tpu_custom_call.1} parent=1 // loop_pre_header
      _
    $region3: #{tpu_custom_call.1} parent=1 // loop_header
      %s26 = sphi 0, %s30
      %p27 = scmp.ge.s32.totalorder %s26, 4
      %s34 = sphi 0, %s34
      %s36 = sphi 0, %s34
      %s37 = sphi 0, %s36
      %s51 = sphi 0, %s37
      %s57 = sphi 0, %s59
      %s60 = sphi 0, %s57
      %s61 = sphi 0, %s60
      %s77 = sphi 0, %s61
      %s83 = sphi 0, %s85
      %s86 = sphi 0, %s83
      %s87 = sphi 0, %s86
      %s103 = sphi 0, %s87
      %s107 = sphi 0, %s107
      %s109 = sphi 0, %s107
      %s110 = sphi 0, %s109
      %s124 = sphi 0, %s110
      %s128 = sphi 0, %s128
      %s130 = sphi 0, %s128
      %s131 = sphi 0, %s130
      %s145 = sphi 0, %s131
      %s149 = sphi 0, %s149
      %s151 = sphi 0, %s149
      %s152 = sphi 0, %s151
      %s166 = sphi 0, %s152
      %s170 = sphi 0, %s170
      %s172 = sphi 0, %s170
      %s173 = sphi 0, %s172
      %s187 = sphi 0, %s173
      %s191 = sphi 0, %s191
      %s193 = sphi 0, %s191
      %s194 = sphi 0, %s193
      %s208 = sphi 0, %s194
      %s212 = sphi 0, %s212
      %s214 = sphi 0, %s212
      %s215 = sphi 0, %s214
      %s229 = sphi 0, %s215
      %s235 = sphi 0, %s237
      %s238 = sphi 0, %s235
      %s239 = sphi 0, %s238
      %s255 = sphi 0, %s239
    $region4: #{tpu_custom_call.1} parent=1 // loop_header_branch
      %29 = sbr.rel (%p27) target = $region8
    $region5: #{tpu_custom_call.1} parent=1 // loop_body
      %s31 = ssub.s32 %s26, 1
      %s32 = ssub.s32 %s26, 2
      %s33 = sadd.s32 %s26, 1
      %s35 = sadd.s32 %s34, 1
      %p38 = scmp.eq.s32.totalorder %s26, 1
      %p39 = scmp.ne.s32.totalorder %s34, %s36
      %p40 = scmp.eq.s32.totalorder %s26, 0
      %p41 = por %p39, %p40
      %p42 = scmp.ne.s32.totalorder %s34, %s36
      %p43 = scmp.eq.s32.totalorder %s31, 1
      %p44 = por %p42, %p43
      %p45 = scmp.ne.s32.totalorder %s36, %s37
      %p46 = scmp.eq.s32.totalorder %s31, 0
      %p47 = por %p45, %p46
      %p48 = scmp.ne.s32.totalorder %s36, %s37
      %p49 = scmp.eq.s32.totalorder %s32, 1
      %p50 = por %p48, %p49
      %p52 = scmp.ne.s32.totalorder %s37, %s51
      %p53 = scmp.eq.s32.totalorder %s32, 0
      %p54 = por %p52, %p53
      %s55 = ssub.s32 %s26, %s33
      %p56 = scmp.eq.s32.totalorder %s55, 0
      %s58 = sadd.s32 %s57, 1
      %s59 = scalar_select %p56, %s57, %s58
      %p62 = pneg %p56
      %p63 = scmp.eq.s32.totalorder %s26, 1
      %p64 = por %p62, %p63
      %p65 = scmp.ne.s32.totalorder %s57, %s60
      %p66 = scmp.eq.s32.totalorder %s26, 0
      %p67 = por %p65, %p66
      %p68 = scmp.ne.s32.totalorder %s57, %s60
      %p69 = scmp.eq.s32.totalorder %s31, 1
      %p70 = por %p68, %p69
      %p71 = scmp.ne.s32.totalorder %s60, %s61
      %p72 = scmp.eq.s32.totalorder %s31, 0
      %p73 = por %p71, %p72
      %p74 = scmp.ne.s32.totalorder %s60, %s61
      %p75 = scmp.eq.s32.totalorder %s32, 1
      %p76 = por %p74, %p75
      %p78 = scmp.ne.s32.totalorder %s61, %s77
      %p79 = scmp.eq.s32.totalorder %s32, 0
      %p80 = por %p78, %p79
      %s81 = ssub.s32 %s26, %s33
      %p82 = scmp.eq.s32.totalorder %s81, 0
      %s84 = sadd.s32 %s83, 1
      %s85 = scalar_select %p82, %s83, %s84
      %p88 = pneg %p82
      %p89 = scmp.eq.s32.totalorder %s26, 1
      %p90 = por %p88, %p89
      %p91 = scmp.ne.s32.totalorder %s83, %s86
      %p92 = scmp.eq.s32.totalorder %s26, 0
      %p93 = por %p91, %p92
      %p94 = scmp.ne.s32.totalorder %s83, %s86
      %p95 = scmp.eq.s32.totalorder %s31, 1
      %p96 = por %p94, %p95
      %p97 = scmp.ne.s32.totalorder %s86, %s87
      %p98 = scmp.eq.s32.totalorder %s31, 0
      %p99 = por %p97, %p98
      %p100 = scmp.ne.s32.totalorder %s86, %s87
      %p101 = scmp.eq.s32.totalorder %s32, 1
      %p102 = por %p100, %p101
      %p104 = scmp.ne.s32.totalorder %s87, %s103
      %p105 = scmp.eq.s32.totalorder %s32, 0
      %p106 = por %p104, %p105
      %s108 = sadd.s32 %s107, 1
      %p111 = scmp.eq.s32.totalorder %s26, 1
      %p112 = scmp.ne.s32.totalorder %s107, %s109
      %p113 = scmp.eq.s32.totalorder %s26, 0
      %p114 = por %p112, %p113
      %p115 = scmp.ne.s32.totalorder %s107, %s109
      %p116 = scmp.eq.s32.totalorder %s31, 1
      %p117 = por %p115, %p116
      %p118 = scmp.ne.s32.totalorder %s109, %s110
      %p119 = scmp.eq.s32.totalorder %s31, 0
      %p120 = por %p118, %p119
      %p121 = scmp.ne.s32.totalorder %s109, %s110
      %p122 = scmp.eq.s32.totalorder %s32, 1
      %p123 = por %p121, %p122
      %p125 = scmp.ne.s32.totalorder %s110, %s124
      %p126 = scmp.eq.s32.totalorder %s32, 0
      %p127 = por %p125, %p126
      %s129 = sadd.s32 %s128, 1
      %p132 = scmp.eq.s32.totalorder %s26, 1
      %p133 = scmp.ne.s32.totalorder %s128, %s130
      %p134 = scmp.eq.s32.totalorder %s26, 0
      %p135 = por %p133, %p134
      %p136 = scmp.ne.s32.totalorder %s128, %s130
      %p137 = scmp.eq.s32.totalorder %s31, 1
      %p138 = por %p136, %p137
      %p139 = scmp.ne.s32.totalorder %s130, %s131
      %p140 = scmp.eq.s32.totalorder %s31, 0
      %p141 = por %p139, %p140
      %p142 = scmp.ne.s32.totalorder %s130, %s131
      %p143 = scmp.eq.s32.totalorder %s32, 1
      %p144 = por %p142, %p143
      %p146 = scmp.ne.s32.totalorder %s131, %s145
      %p147 = scmp.eq.s32.totalorder %s32, 0
      %p148 = por %p146, %p147
      %s150 = sadd.s32 %s149, 1
      %p153 = scmp.eq.s32.totalorder %s26, 1
      %p154 = scmp.ne.s32.totalorder %s149, %s151
      %p155 = scmp.eq.s32.totalorder %s26, 0
      %p156 = por %p154, %p155
      %p157 = scmp.ne.s32.totalorder %s149, %s151
      %p158 = scmp.eq.s32.totalorder %s31, 1
      %p159 = por %p157, %p158
      %p160 = scmp.ne.s32.totalorder %s151, %s152
      %p161 = scmp.eq.s32.totalorder %s31, 0
      %p162 = por %p160, %p161
      %p163 = scmp.ne.s32.totalorder %s151, %s152
      %p164 = scmp.eq.s32.totalorder %s32, 1
      %p165 = por %p163, %p164
      %p167 = scmp.ne.s32.totalorder %s152, %s166
      %p168 = scmp.eq.s32.totalorder %s32, 0
      %p169 = por %p167, %p168
      %s171 = sadd.s32 %s170, 1
      %p174 = scmp.eq.s32.totalorder %s26, 1
      %p175 = scmp.ne.s32.totalorder %s170, %s172
      %p176 = scmp.eq.s32.totalorder %s26, 0
      %p177 = por %p175, %p176
      %p178 = scmp.ne.s32.totalorder %s170, %s172
      %p179 = scmp.eq.s32.totalorder %s31, 1
      %p180 = por %p178, %p179
      %p181 = scmp.ne.s32.totalorder %s172, %s173
      %p182 = scmp.eq.s32.totalorder %s31, 0
      %p183 = por %p181, %p182
      %p184 = scmp.ne.s32.totalorder %s172, %s173
      %p185 = scmp.eq.s32.totalorder %s32, 1
      %p186 = por %p184, %p185
      %p188 = scmp.ne.s32.totalorder %s173, %s187
      %p189 = scmp.eq.s32.totalorder %s32, 0
      %p190 = por %p188, %p189
      %s192 = sadd.s32 %s191, 1
      %p195 = scmp.eq.s32.totalorder %s26, 1
      %p196 = scmp.ne.s32.totalorder %s191, %s193
      %p197 = scmp.eq.s32.totalorder %s26, 0
      %p198 = por %p196, %p197
      %p199 = scmp.ne.s32.totalorder %s191, %s193
      %p200 = scmp.eq.s32.totalorder %s31, 1
      %p201 = por %p199, %p200
      %p202 = scmp.ne.s32.totalorder %s193, %s194
      %p203 = scmp.eq.s32.totalorder %s31, 0
      %p204 = por %p202, %p203
      %p205 = scmp.ne.s32.totalorder %s193, %s194
      %p206 = scmp.eq.s32.totalorder %s32, 1
      %p207 = por %p205, %p206
      %p209 = scmp.ne.s32.totalorder %s194, %s208
      %p210 = scmp.eq.s32.totalorder %s32, 0
      %p211 = por %p209, %p210
      %s213 = sadd.s32 %s212, 1
      %p216 = scmp.eq.s32.totalorder %s26, 1
      %p217 = scmp.ne.s32.totalorder %s212, %s214
      %p218 = scmp.eq.s32.totalorder %s26, 0
      %p219 = por %p217, %p218
      %p220 = scmp.ne.s32.totalorder %s212, %s214
      %p221 = scmp.eq.s32.totalorder %s31, 1
      %p222 = por %p220, %p221
      %p223 = scmp.ne.s32.totalorder %s214, %s215
      %p224 = scmp.eq.s32.totalorder %s31, 0
      %p225 = por %p223, %p224
      %p226 = scmp.ne.s32.totalorder %s214, %s215
      %p227 = scmp.eq.s32.totalorder %s32, 1
      %p228 = por %p226, %p227
      %p230 = scmp.ne.s32.totalorder %s215, %s229
      %p231 = scmp.eq.s32.totalorder %s32, 0
      %p232 = por %p230, %p231
      %s233 = ssub.s32 %s26, %s33
      %p234 = scmp.eq.s32.totalorder %s233, 0
      %s236 = sadd.s32 %s235, 1
      %s237 = scalar_select %p234, %s235, %s236
      %p240 = pneg %p234
      %p241 = scmp.eq.s32.totalorder %s26, 1
      %p242 = por %p240, %p241
      %p243 = scmp.ne.s32.totalorder %s235, %s238
      %p244 = scmp.eq.s32.totalorder %s26, 0
      %p245 = por %p243, %p244
      %p246 = scmp.ne.s32.totalorder %s235, %s238
      %p247 = scmp.eq.s32.totalorder %s31, 1
      %p248 = por %p246, %p247
      %p249 = scmp.ne.s32.totalorder %s238, %s239
      %p250 = scmp.eq.s32.totalorder %s31, 0
      %p251 = por %p249, %p250
      %p252 = scmp.ne.s32.totalorder %s238, %s239
      %p253 = scmp.eq.s32.totalorder %s32, 1
      %p254 = por %p252, %p253
      %p256 = scmp.ne.s32.totalorder %s239, %s255
      %p257 = scmp.eq.s32.totalorder %s32, 0
      %p258 = por %p256, %p257
      %p259 = scmp.le.s32.totalorder 1, %s26
      %p260 = scmp.lt.s32.totalorder %s26, 3
      %p261 = pnand %p259, %p260
      %p262 = pneg %p261
      // Predicated region
      $region9: #{tpu_custom_call.1} parent=5 // pred_check
        _
      $region10: #{tpu_custom_call.1} parent=5 // pred_check_branch
        %264 = sbr.rel (%p261) target = $region12
      $region11: #{tpu_custom_call.1} parent=5 // pred_region
        %s265 = ssub.s32 %s26, 1
        // Predicated region
        $region13: #{tpu_custom_call.1} parent=11 // pred_check
          %p266 = pneg %p47
        $region14: #{tpu_custom_call.1} parent=11 // pred_check_branch
          %268 = sbr.rel (%p266) target = $region16
        $region15: #{tpu_custom_call.1} parent=11 // pred_region
          _
        $region16: #{tpu_custom_call.1} parent=11 // pred_fallthru
          _
        // Predicated region
        $region17: #{tpu_custom_call.1} parent=11 // pred_check
          %p269 = pneg %p120
        $region18: #{tpu_custom_call.1} parent=11 // pred_check_branch
          %271 = sbr.rel (%p269) target = $region20
        $region19: #{tpu_custom_call.1} parent=11 // pred_region
          %273 = vsyncadd [#allocation6], 0
          %s275 = sshll.u32 %s3, 4
          %s276 = int_to_ptr.hbm [resolvable:$true] %s275
          %s277 = sshll.u32 [#allocation7], 4
          %s278 = int_to_ptr.vmem [resolvable:$true] %s277
          %280 = dma.hbm_to_vmem [thread:$0]  %s276, 16, %s278, [#allocation6]
        $region20: #{tpu_custom_call.1} parent=11 // pred_fallthru
          _
        // Predicated region
        $region21: #{tpu_custom_call.1} parent=11 // pred_check
          %p281 = pneg %p141
        $region22: #{tpu_custom_call.1} parent=11 // pred_check_branch
          %283 = sbr.rel (%p281) target = $region24
        $region23: #{tpu_custom_call.1} parent=11 // pred_region
          %285 = vsyncadd [#allocation9], 0
          %s287 = sshll.u32 %s4, 4
          %s288 = int_to_ptr.hbm [resolvable:$true] %s287
          %s289 = sshll.u32 [#allocation8], 4
          %s290 = int_to_ptr.vmem [resolvable:$true] %s289
          %292 = dma.hbm_to_vmem [thread:$0]  %s288, 16, %s290, [#allocation9]
        $region24: #{tpu_custom_call.1} parent=11 // pred_fallthru
          _
        // Predicated region
        $region25: #{tpu_custom_call.1} parent=11 // pred_check
          %p293 = pneg %p162
        $region26: #{tpu_custom_call.1} parent=11 // pred_check_branch
          %295 = sbr.rel (%p293) target = $region28
        $region27: #{tpu_custom_call.1} parent=11 // pred_region
          %297 = vsyncadd [#allocation9], 0
          %s298 = sshll.u32 %s5, 4
          %s299 = int_to_ptr.hbm [resolvable:$true] %s298
          %s300 = sshll.u32 [#allocation10], 4
          %s301 = int_to_ptr.vmem [resolvable:$true] %s300
          %306 = dma.hbm_to_vmem [thread:$0]  %s299, 256, %s301, [#allocation9], 64, 64, 4
        $region28: #{tpu_custom_call.1} parent=11 // pred_fallthru
          _
        // Predicated region
        $region29: #{tpu_custom_call.1} parent=11 // pred_check
          %p307 = pneg %p183
        $region30: #{tpu_custom_call.1} parent=11 // pred_check_branch
          %309 = sbr.rel (%p307) target = $region32
        $region31: #{tpu_custom_call.1} parent=11 // pred_region
          _
        $region32: #{tpu_custom_call.1} parent=11 // pred_fallthru
          _
        // Predicated region
        $region33: #{tpu_custom_call.1} parent=11 // pred_check
          %p310 = pneg %p204
        $region34: #{tpu_custom_call.1} parent=11 // pred_check_branch
          %312 = sbr.rel (%p310) target = $region36
        $region35: #{tpu_custom_call.1} parent=11 // pred_region
          %314 = vsyncadd [#allocation12], 0
          %s315 = sshll.u32 %s7, 4
          %s316 = int_to_ptr.hbm [resolvable:$true] %s315
          %s317 = sshll.u32 [#allocation11], 4
          %s318 = int_to_ptr.vmem [resolvable:$true] %s317
          %323 = dma.hbm_to_vmem [thread:$0]  %s316, 256, %s318, [#allocation12], 64, 64, 4
        $region36: #{tpu_custom_call.1} parent=11 // pred_fallthru
          _
        // Predicated region
        $region37: #{tpu_custom_call.1} parent=11 // pred_check
          %p324 = pneg %p225
        $region38: #{tpu_custom_call.1} parent=11 // pred_check_branch
          %326 = sbr.rel (%p324) target = $region40
        $region39: #{tpu_custom_call.1} parent=11 // pred_region
          %328 = vsyncadd [#allocation12], 0
          %s329 = sshll.u32 %s8, 4
          %s330 = int_to_ptr.hbm [resolvable:$true] %s329
          %s331 = sshll.u32 [#allocation13], 4
          %s332 = int_to_ptr.vmem [resolvable:$true] %s331
          %337 = dma.hbm_to_vmem [thread:$0]  %s330, 256, %s332, [#allocation12], 64, 64, 4
        $region40: #{tpu_custom_call.1} parent=11 // pred_fallthru
          _
      $region12: #{tpu_custom_call.1} parent=5 // pred_fallthru
        _
      %p338 = scmp.lt.s32.totalorder %s26, 2
      // Predicated region
      $region41: #{tpu_custom_call.1} parent=5 // pred_check
        %p339 = pneg %p338
      $region42: #{tpu_custom_call.1} parent=5 // pred_check_branch
        %341 = sbr.rel (%p339) target = $region44
      $region43: #{tpu_custom_call.1} parent=5 // pred_region
        // Predicated region
        $region45: #{tpu_custom_call.1} parent=43 // pred_check
          %p342 = pneg %p67
        $region46: #{tpu_custom_call.1} parent=43 // pred_check_branch
          %344 = sbr.rel (%p342) target = $region48
        $region47: #{tpu_custom_call.1} parent=43 // pred_region
          %s345 = sand.u32 %s57, 1
          %s346 = scalar_lea.sflag [#allocation3], %s345
          %s347 = sand.u32 %s57, 1
          %s348 = smul.addr %s347, 16
          %s349 = scalar_lea.vmem [#allocation2], %s348
          %s350 = smul.u32 2, %s26
          %352 = vsyncadd %s346, 0
          %s353 = smul.addr %s350, 8
          %s354 = scalar_lea.hbm %s1, %s353
          %s355 = sshll.u32 %s354, 4
          %s356 = int_to_ptr.hbm [resolvable:$true] %s355
          %s357 = sshll.u32 %s349, 4
          %s358 = int_to_ptr.vmem [resolvable:$true] %s357
          %363 = dma.hbm_to_vmem [thread:$0]  %s356, 256, %s358, %s346, 128, 128, 8
        $region48: #{tpu_custom_call.1} parent=43 // pred_fallthru
          _
        // Predicated region
        $region49: #{tpu_custom_call.1} parent=43 // pred_check
          %p364 = pneg %p93
        $region50: #{tpu_custom_call.1} parent=43 // pred_check_branch
          %366 = sbr.rel (%p364) target = $region52
        $region51: #{tpu_custom_call.1} parent=43 // pred_region
          %s367 = sand.u32 %s26, 1
          %s368 = scalar_lea.sflag [#allocation6], %s367
          %s369 = sand.u32 %s83, 1
          %s370 = smul.addr %s369, 2
          %s371 = scalar_lea.vmem [#allocation5], %s370
          %s372 = smul.u32 2, %s26
          %374 = vsyncadd %s368, 0
          %s375 = scalar_lea.hbm %s2, %s372
          %s376 = sshll.u32 %s375, 4
          %s377 = int_to_ptr.hbm [resolvable:$true] %s376
          %s378 = sshll.u32 %s371, 4
          %s379 = int_to_ptr.vmem [resolvable:$true] %s378
          %384 = dma.hbm_to_vmem [thread:$0]  %s377, 32, %s379, %s368, 16, 16, 1
        $region52: #{tpu_custom_call.1} parent=43 // pred_fallthru
          _
      $region44: #{tpu_custom_call.1} parent=5 // pred_fallthru
        _
      %p385 = scmp.le.s32.totalorder 1, %s26
      %p386 = scmp.lt.s32.totalorder %s26, 3
      %p387 = pnand %p385, %p386
      %p388 = pneg %p387
      // Predicated region
      $region53: #{tpu_custom_call.1} parent=5 // pred_check
        _
      $region54: #{tpu_custom_call.1} parent=5 // pred_check_branch
        %390 = sbr.rel (%p387) target = $region56
      $region55: #{tpu_custom_call.1} parent=5 // pred_region
        %s391 = ssub.s32 %s26, 1
        %s392 = sand.u32 %s60, 1
        %s393 = scalar_lea.sflag [#allocation3], %s392
        %s394 = sand.u32 %s60, 1
        %s395 = smul.addr %s394, 16
        %s396 = scalar_lea.vmem [#allocation2], %s395
        // Predicated region
        $region57: #{tpu_custom_call.1} parent=55 // pred_check
          %p397 = pneg %p73
        $region58: #{tpu_custom_call.1} parent=55 // pred_check_branch
          %399 = sbr.rel (%p397) target = $region60
        $region59: #{tpu_custom_call.1} parent=55 // pred_region
          %401 = dma.done %s393, 256
        $region60: #{tpu_custom_call.1} parent=55 // pred_fallthru
          _
        %s402 = sand.u32 %s31, 1
        %s403 = scalar_lea.sflag [#allocation6], %s402
        %s404 = sand.u32 %s86, 1
        %s405 = smul.addr %s404, 2
        %s406 = scalar_lea.vmem [#allocation5], %s405
        // Predicated region
        $region61: #{tpu_custom_call.1} parent=55 // pred_check
          %p407 = pneg %p99
        $region62: #{tpu_custom_call.1} parent=55 // pred_check_branch
          %409 = sbr.rel (%p407) target = $region64
        $region63: #{tpu_custom_call.1} parent=55 // pred_region
          %411 = dma.done %s403, 32
        $region64: #{tpu_custom_call.1} parent=55 // pred_fallthru
          _
        // Predicated region
        $region65: #{tpu_custom_call.1} parent=55 // pred_check
          %p412 = pneg %p120
        $region66: #{tpu_custom_call.1} parent=55 // pred_check_branch
          %414 = sbr.rel (%p412) target = $region68
        $region67: #{tpu_custom_call.1} parent=55 // pred_region
          %416 = dma.done [#allocation6], 16
        $region68: #{tpu_custom_call.1} parent=55 // pred_fallthru
          _
        // Predicated region
        $region69: #{tpu_custom_call.1} parent=55 // pred_check
          %p417 = pneg %p141
        $region70: #{tpu_custom_call.1} parent=55 // pred_check_branch
          %419 = sbr.rel (%p417) target = $region72
        $region71: #{tpu_custom_call.1} parent=55 // pred_region
          %421 = dma.done [#allocation9], 16
        $region72: #{tpu_custom_call.1} parent=55 // pred_fallthru
          _
        // Predicated region
        $region73: #{tpu_custom_call.1} parent=55 // pred_check
          %p422 = pneg %p162
        $region74: #{tpu_custom_call.1} parent=55 // pred_check_branch
          %424 = sbr.rel (%p422) target = $region76
        $region75: #{tpu_custom_call.1} parent=55 // pred_region
          %426 = dma.done [#allocation9], 256
        $region76: #{tpu_custom_call.1} parent=55 // pred_fallthru
          _
        // Predicated region
        $region77: #{tpu_custom_call.1} parent=55 // pred_check
          %p427 = pneg %p204
        $region78: #{tpu_custom_call.1} parent=55 // pred_check_branch
          %429 = sbr.rel (%p427) target = $region80
        $region79: #{tpu_custom_call.1} parent=55 // pred_region
          %431 = dma.done [#allocation12], 256
        $region80: #{tpu_custom_call.1} parent=55 // pred_fallthru
          _
        // Predicated region
        $region81: #{tpu_custom_call.1} parent=55 // pred_check
          %p432 = pneg %p225
        $region82: #{tpu_custom_call.1} parent=55 // pred_check_branch
          %434 = sbr.rel (%p432) target = $region84
        $region83: #{tpu_custom_call.1} parent=55 // pred_region
          %436 = dma.done [#allocation12], 256
        $region84: #{tpu_custom_call.1} parent=55 // pred_fallthru
          _
        %p437 = pneg %p47
        %p438 = pneg %p44
        %s439 = sand.u32 %s60, 1
        %s440 = scalar_lea.sflag [#allocation3], %s439
        %s441 = sand.u32 %s60, 1
        %s442 = smul.addr %s441, 16
        %s443 = scalar_lea.vmem [#allocation2], %s442
        %p444 = pneg %p73
        %p445 = pneg %p70
        %s446 = sand.u32 %s31, 1
        %s447 = scalar_lea.sflag [#allocation6], %s446
        %s448 = sand.u32 %s86, 1
        %s449 = smul.addr %s448, 2
        %s450 = scalar_lea.vmem [#allocation5], %s449
        %p451 = pneg %p99
        %p452 = pneg %p96
        %p453 = pneg %p120
        %p454 = pneg %p117
        %p455 = pneg %p141
        %p456 = pneg %p138
        %p457 = pneg %p162
        %p458 = pneg %p159
        %p459 = pneg %p183
        %p460 = pneg %p180
        %p461 = pneg %p204
        %p462 = pneg %p201
        %p463 = pneg %p225
        %p464 = pneg %p222
        %p465 = pneg %p251
        %p466 = pneg %p248
        %s467 = sand.u32 %s238, 1
        %s468 = scalar_lea.sflag [#allocation4], %s467
        %s469 = sand.u32 %s238, 1
        %s470 = smul.addr %s469, 16
        %s471 = scalar_lea.vmem [#allocation14], %s470
        %s472 = smul.u32 2, %s31
        %s473 = smul.u32 2, %s31
        %s474 = smul.u32 2, %s31
        %v476 = vld [vmem:[%s396] sm:$0xff]
        %v477 = vld [vmem:[%s396 + $0x8] sm:$0xff]
        %v478 = vld [vmem:[%s406] sm:$0x1]
        %v479 = vld [vmem:[%s406 + $0x1] sm:$0x1]
        %vm480 = vcmp.gt.f32.partialorder %v478, 0.5
        %vm481 = vcmp.gt.f32.partialorder %v479, 0.5
        %v482 = vsel %vm480, 0.0, -1e+30
        %v483 = vsel %vm481, 0.0, -1e+30
        %v484 = vld [vmem:[#allocation7] sm:$0x1]
        %v485 = vmul.f32 %v476, %v476
        %v486 = vmul.f32 %v477, %v477
        %vm487 = vcmask 261120
        %v488 = vsel %vm487, %v485, 0.0
        %489 = vadd.xlane.f32.xlu0 %v488
        %v490 = vpop.xlane.xlu0 %489
        %v491 = vsel %vm487, %v486, 0.0
        %492 = vadd.xlane.f32.xlu0 %v491
        %v493 = vpop.xlane.xlu0 %492
        %v494 = vrcp.pop 32.0
        %v495 = vmul.f32 32.0, %v494
        %v496 = vsub.f32 1.0, %v495
        %v497 = vmul.f32 %v494, %v496
        %v498 = vadd.f32 %v494, %v497
        %vm499 = vweird.f32 %v494
        %v500 = vsel %vm499, %v494, %v498
        %v501 = vmul.f32 %v490, %v500
        %v502 = vmul.f32 %v493, %v500
        %v503 = vadd.f32 %v501, 1e-06
        %v504 = vadd.f32 %v502, 1e-06
        %v505 = vrsqrt.pop %v503
        %v506 = vmul.f32 %v505, %v503
        %v507 = vmul.f32 %v506, %v505
        %v508 = vmul.f32 0.5, %v507
        %v509 = vsub.f32 1.5, %v508
        %v510 = vmul.f32 %v505, %v509
        %vm511 = vweird.f32 %v503
        %vm512 = vweird.f32 %v505
        %vm513 = vmor %vm511, %vm512
        %v514 = vsel %vm513, %v505, %v510
        %v515 = vrsqrt.pop %v504
        %v516 = vmul.f32 %v515, %v504
        %v517 = vmul.f32 %v516, %v515
        %v518 = vmul.f32 0.5, %v517
        %v519 = vsub.f32 1.5, %v518
        %v520 = vmul.f32 %v515, %v519
        %vm521 = vweird.f32 %v504
        %vm522 = vweird.f32 %v515
        %vm523 = vmor %vm521, %vm522
        %v524 = vsel %vm523, %v515, %v520
        %v525 = vmul.f32 %v476, %v514
        %v526 = vmul.f32 %v477, %v524
        %v528 = vperm.slane %v484, 0
        %v530 = vmul.f32 %v525, %v528
        %v531 = vmul.f32 %v526, %v528
        %v532 = vpack.c.bf16 %v531, %v530
        %v533 = vld [vmem:[#allocation10] sm:$0xf]
        %v534 = vld [vmem:[#allocation10 + $0x4] sm:$0xf]
        %v535 = vld [vmem:[#allocation10 + $0x8] sm:$0xf]
        %v536 = vld [vmem:[#allocation10 + $0xc] sm:$0xf]
        %v541 = vunpack.c.l.b16 %v533
        %v542 = vunpack.c.l.b16 %v534
        %v543 = vunpack.c.l.b16 %v535
        %v544 = vunpack.c.l.b16 %v536
        %v545 = vpack.c.b16 %v542, %v541
        %v546 = vpack.c.b16 %v544, %v543
        %v550 = vsel %vm487, %v532, 0
        %552 = vmatpush.bf16.msra.mxu0 0
        %553 = vmatpush.bf16.msra.mxu0 0
        %554 = vmatpush.bf16.msra.mxu0 0
        %555 = vmatpush.bf16.msra.mxu0 0
        %556 = vmatpush.bf16.msra.mxu0 0
        %557 = vmatpush.bf16.msra.mxu0 0
        %558 = vmatpush.bf16.msra.mxu0 %v546
        %559 = vmatpush.bf16.msra.mxu0 %v545
        %560 = vmatmul.bf16.gmra.mxu0 %v550
        %v561 = vpop.f32.mrf.mxu0
        %v562 = vadd.f32 0.0, %v561
        %v563 = vpop.f32.mrf.mxu0
        %v564 = vadd.f32 0.0, %v563
        %565 = vdwg.mxu0
        %v566 = vpack.c.bf16 %v562, %v562
        %v567 = vpack.c.bf16 %v564, %v564
        %v568 = vld [vmem:[%s0] sm:$0x1]
        %v569 = vld [vmem:[%s0 + $0x1] sm:$0x1]
        %v572 = vperm.slane %v482, 0
        %v573 = vperm.slane %v483, 0
        %v577 = vunpack.c.l.b16 %v566
        %v578 = vpack.c.b16 %v577, %v577
        %579 = vrot.lane.b32.xlu0 %v578, 96
        %v580 = vpop.permute.xlu0 %579
        %vm581 = vcmask 64512
        %v583 = vsel %vm581, %v566, 0
        %v586 = vsel %vm581, %v580, 0
        %588 = vmatpush.bf16.xpose.msra.mxu0 0
        %589 = vmatpush.bf16.xpose.msra.mxu0 0
        %590 = vmatpush.bf16.xpose.msra.mxu0 0
        %591 = vmatpush.bf16.xpose.msra.mxu0 0
        %592 = vmatpush.bf16.xpose.msra.mxu0 0
        %593 = vmatpush.bf16.xpose.msra.mxu0 0
        %594 = vmatpush.bf16.xpose.msra.mxu0 0
        %595 = vmatpush.bf16.xpose.msra.mxu0 %v586
        %596 = vmatmul.bf16.gmra.mxu0 %v583
        %v597 = vpop.f32.mrf.mxu0
        %v598 = vadd.f32 %v572, %v597
        %v599 = vpop.f32.mrf.mxu0
        %600 = vdwg.mxu0
        %v602 = vunpack.c.l.b16 %v567
        %v603 = vpack.c.b16 %v602, %v602
        %604 = vrot.lane.b32.xlu0 %v603, 96
        %v605 = vpop.permute.xlu0 %604
        %v607 = vsel %vm581, %v567, 0
        %v610 = vsel %vm581, %v605, 0
        %612 = vmatpush.bf16.xpose.msra.mxu0 0
        %613 = vmatpush.bf16.xpose.msra.mxu0 0
        %614 = vmatpush.bf16.xpose.msra.mxu0 0
        %615 = vmatpush.bf16.xpose.msra.mxu0 0
        %616 = vmatpush.bf16.xpose.msra.mxu0 0
        %617 = vmatpush.bf16.xpose.msra.mxu0 0
        %618 = vmatpush.bf16.xpose.msra.mxu0 0
        %619 = vmatpush.bf16.xpose.msra.mxu0 %v610
        %620 = vmatmul.bf16.gmra.mxu0 %v607
        %v621 = vpop.f32.mrf.mxu0
        %v622 = vadd.f32 %v573, %v621
        %v623 = vpop.f32.mrf.mxu0
        %624 = vdwg.mxu0
        %625 = vrot.lane.b32.xlu0 %v578, 112
        %v626 = vpop.permute.xlu0 %625
        %627 = vrot.lane.b32.xlu0 %v578, 80
        %v628 = vpop.permute.xlu0 %627
        %v630 = vsel %vm581, %v626, 0
        %v633 = vsel %vm581, %v628, 0
        %635 = vmatpush.bf16.xpose.msra.mxu0 0
        %636 = vmatpush.bf16.xpose.msra.mxu0 0
        %637 = vmatpush.bf16.xpose.msra.mxu0 0
        %638 = vmatpush.bf16.xpose.msra.mxu0 0
        %639 = vmatpush.bf16.xpose.msra.mxu0 0
        %640 = vmatpush.bf16.xpose.msra.mxu0 0
        %641 = vmatpush.bf16.xpose.msra.mxu0 0
        %642 = vmatpush.bf16.xpose.msra.mxu0 %v633
        %643 = vmatmul.bf16.gmra.mxu0 %v630
        %v644 = vpop.f32.mrf.mxu0
        %v645 = vadd.f32 %v572, %v644
        %v646 = vpop.f32.mrf.mxu0
        %647 = vdwg.mxu0
        %648 = vrot.lane.b32.xlu0 %v603, 112
        %v649 = vpop.permute.xlu0 %648
        %650 = vrot.lane.b32.xlu0 %v603, 80
        %v651 = vpop.permute.xlu0 %650
        %v653 = vsel %vm581, %v649, 0
        %v656 = vsel %vm581, %v651, 0
        %658 = vmatpush.bf16.xpose.msra.mxu0 0
        %659 = vmatpush.bf16.xpose.msra.mxu0 0
        %660 = vmatpush.bf16.xpose.msra.mxu0 0
        %661 = vmatpush.bf16.xpose.msra.mxu0 0
        %662 = vmatpush.bf16.xpose.msra.mxu0 0
        %663 = vmatpush.bf16.xpose.msra.mxu0 0
        %664 = vmatpush.bf16.xpose.msra.mxu0 0
        %665 = vmatpush.bf16.xpose.msra.mxu0 %v656
        %666 = vmatmul.bf16.gmra.mxu0 %v653
        %v667 = vpop.f32.mrf.mxu0
        %v668 = vadd.f32 %v573, %v667
        %v669 = vpop.f32.mrf.mxu0
        %670 = vdwg.mxu0
        %v671 = vsel %vm581, %v598, -inf
        %672 = vmax.xlane.f32.xlu0 %v671
        %v673 = vpop.xlane.xlu0 %672
        %v674 = vsel %vm581, %v622, -inf
        %675 = vmax.xlane.f32.xlu0 %v674
        %v676 = vpop.xlane.xlu0 %675
        %v677 = vsub.f32 %v598, %v673
        %v678 = vsub.f32 %v622, %v676
        %v679 = vmul.f32 %v677, 1.442695
        %v680 = vpow.pop %v679
        %v681 = vmul.f32 %v678, 1.442695
        %v682 = vpow.pop %v681
        %v683 = vsel %vm581, %v680, 0.0
        %684 = vadd.xlane.f32.xlu0 %v683
        %v685 = vpop.xlane.xlu0 %684
        %v686 = vsel %vm581, %v682, 0.0
        %687 = vadd.xlane.f32.xlu0 %v686
        %v688 = vpop.xlane.xlu0 %687
        %v689 = vrcp.pop %v685
        %v690 = vrcp.pop %v688
        %v691 = vmul.f32 %v680, %v689
        %v692 = vmul.f32 %v682, %v690
        %v693 = vsel %vm581, %v645, -inf
        %694 = vmax.xlane.f32.xlu0 %v693
        %v695 = vpop.xlane.xlu0 %694
        %v696 = vsel %vm581, %v668, -inf
        %697 = vmax.xlane.f32.xlu0 %v696
        %v698 = vpop.xlane.xlu0 %697
        %v699 = vsub.f32 %v645, %v695
        %v700 = vsub.f32 %v668, %v698
        %v701 = vmul.f32 %v699, 1.442695
        %v702 = vpow.pop %v701
        %v703 = vmul.f32 %v700, 1.442695
        %v704 = vpow.pop %v703
        %v705 = vsel %vm581, %v702, 0.0
        %706 = vadd.xlane.f32.xlu0 %v705
        %v707 = vpop.xlane.xlu0 %706
        %v708 = vsel %vm581, %v704, 0.0
        %709 = vadd.xlane.f32.xlu0 %v708
        %v710 = vpop.xlane.xlu0 %709
        %v711 = vrcp.pop %v707
        %v712 = vrcp.pop %v710
        %v713 = vmul.f32 %v702, %v711
        %v714 = vmul.f32 %v704, %v712
        %v716 = vperm.slane %v568, 0
        %717 = vset.pattern.permute.xlu0 0
        %718 = vperm.xlu0 %717, %v716
        %v719 = vpop.permute.xlu0 %718
        %v721 = vmul.f32 %v719, %v713
        %v722 = vmul.f32 %v719, %v714
        %v723 = vsub.f32 %v691, %v721
        %v724 = vsub.f32 %v692, %v722
        %v725 = vpack.c.bf16 %v723, %v723
        %v726 = vpack.c.bf16 %v724, %v724
        %727 = vrot.lane.b32.xlu0 %v578, 64
        %v728 = vpop.permute.xlu0 %727
        %v730 = vsel %vm581, %v725, 0
        %vm732 = vcmask 1043456
        %v734 = vsel %vm732, %v728, 0
        %736 = vmatpush.bf16.msra.mxu0 0
        %737 = vmatpush.bf16.msra.mxu0 0
        %738 = vmatpush.bf16.msra.mxu0 0
        %739 = vmatpush.bf16.msra.mxu0 0
        %740 = vmatpush.bf16.msra.mxu0 0
        %741 = vmatpush.bf16.msra.mxu0 0
        %742 = vmatpush.bf16.msra.mxu0 0
        %743 = vmatpush.bf16.msra.mxu0 %v734
        %744 = vmatmul.bf16.gmra.mxu0 %v730
        %v745 = vpop.f32.mrf.mxu0
        %v746 = vadd.f32 0.0, %v745
        %v747 = vpop.f32.mrf.mxu0
        %748 = vdwg.mxu0
        %749 = vrot.lane.b32.xlu0 %v603, 64
        %v750 = vpop.permute.xlu0 %749
        %v752 = vsel %vm581, %v726, 0
        %v755 = vsel %vm732, %v750, 0
        %757 = vmatpush.bf16.msra.mxu0 0
        %758 = vmatpush.bf16.msra.mxu0 0
        %759 = vmatpush.bf16.msra.mxu0 0
        %760 = vmatpush.bf16.msra.mxu0 0
        %761 = vmatpush.bf16.msra.mxu0 0
        %762 = vmatpush.bf16.msra.mxu0 0
        %763 = vmatpush.bf16.msra.mxu0 0
        %764 = vmatpush.bf16.msra.mxu0 %v755
        %765 = vmatmul.bf16.gmra.mxu0 %v752
        %v766 = vpop.f32.mrf.mxu0
        %v767 = vadd.f32 0.0, %v766
        %v768 = vpop.f32.mrf.mxu0
        %769 = vdwg.mxu0
        %v770 = vmul.f32 %v746, %v746
        %v771 = vmul.f32 %v767, %v767
        %v772 = vsel %vm581, %v770, 0.0
        %773 = vadd.xlane.f32.xlu0 %v772
        %v774 = vpop.xlane.xlu0 %773
        %v775 = vsel %vm581, %v771, 0.0
        %776 = vadd.xlane.f32.xlu0 %v775
        %v777 = vpop.xlane.xlu0 %776
        %v778 = vrcp.pop 8.0
        %v779 = vmul.f32 8.0, %v778
        %v780 = vsub.f32 1.0, %v779
        %v781 = vmul.f32 %v778, %v780
        %v782 = vadd.f32 %v778, %v781
        %vm783 = vweird.f32 %v778
        %v784 = vsel %vm783, %v778, %v782
        %v785 = vmul.f32 %v774, %v784
        %v786 = vmul.f32 %v777, %v784
        %v787 = vadd.f32 %v785, 1e-06
        %v788 = vadd.f32 %v786, 1e-06
        %v789 = vrsqrt.pop %v787
        %v790 = vmul.f32 %v789, %v787
        %v791 = vmul.f32 %v790, %v789
        %v792 = vmul.f32 0.5, %v791
        %v793 = vsub.f32 1.5, %v792
        %v794 = vmul.f32 %v789, %v793
        %vm795 = vweird.f32 %v787
        %vm796 = vweird.f32 %v789
        %vm797 = vmor %vm795, %vm796
        %v798 = vsel %vm797, %v789, %v794
        %v799 = vrsqrt.pop %v788
        %v800 = vmul.f32 %v799, %v788
        %v801 = vmul.f32 %v800, %v799
        %v802 = vmul.f32 0.5, %v801
        %v803 = vsub.f32 1.5, %v802
        %v804 = vmul.f32 %v799, %v803
        %vm805 = vweird.f32 %v788
        %vm806 = vweird.f32 %v799
        %vm807 = vmor %vm805, %vm806
        %v808 = vsel %vm807, %v799, %v804
        %v809 = vmul.f32 %v746, %v798
        %v810 = vmul.f32 %v767, %v808
        %v811 = vmul.f32 %v809, 0.2
        %v812 = vmul.f32 %v810, 0.2
        %813 = vrot.lane.b32.xlu0 %v578, 120
        %v814 = vpop.permute.xlu0 %813
        %815 = vrot.lane.b32.xlu0 %v578, 88
        %v816 = vpop.permute.xlu0 %815
        %v818 = vsel %vm581, %v814, 0
        %v821 = vsel %vm581, %v816, 0
        %823 = vmatpush.bf16.xpose.msra.mxu0 0
        %824 = vmatpush.bf16.xpose.msra.mxu0 0
        %825 = vmatpush.bf16.xpose.msra.mxu0 0
        %826 = vmatpush.bf16.xpose.msra.mxu0 0
        %827 = vmatpush.bf16.xpose.msra.mxu0 0
        %828 = vmatpush.bf16.xpose.msra.mxu0 0
        %829 = vmatpush.bf16.xpose.msra.mxu0 0
        %830 = vmatpush.bf16.xpose.msra.mxu0 %v821
        %831 = vmatmul.bf16.gmra.mxu0 %v818
        %v832 = vpop.f32.mrf.mxu0
        %v833 = vadd.f32 %v572, %v832
        %v834 = vpop.f32.mrf.mxu0
        %835 = vdwg.mxu0
        %836 = vrot.lane.b32.xlu0 %v603, 120
        %v837 = vpop.permute.xlu0 %836
        %838 = vrot.lane.b32.xlu0 %v603, 88
        %v839 = vpop.permute.xlu0 %838
        %v841 = vsel %vm581, %v837, 0
        %v844 = vsel %vm581, %v839, 0
        %846 = vmatpush.bf16.xpose.msra.mxu0 0
        %847 = vmatpush.bf16.xpose.msra.mxu0 0
        %848 = vmatpush.bf16.xpose.msra.mxu0 0
        %849 = vmatpush.bf16.xpose.msra.mxu0 0
        %850 = vmatpush.bf16.xpose.msra.mxu0 0
        %851 = vmatpush.bf16.xpose.msra.mxu0 0
        %852 = vmatpush.bf16.xpose.msra.mxu0 0
        %853 = vmatpush.bf16.xpose.msra.mxu0 %v844
        %854 = vmatmul.bf16.gmra.mxu0 %v841
        %v855 = vpop.f32.mrf.mxu0
        %v856 = vadd.f32 %v573, %v855
        %v857 = vpop.f32.mrf.mxu0
        %858 = vdwg.mxu0
        %859 = vrot.lane.b32.xlu0 %v578, 104
        %v860 = vpop.permute.xlu0 %859
        %861 = vrot.lane.b32.xlu0 %v578, 72
        %v862 = vpop.permute.xlu0 %861
        %v864 = vsel %vm581, %v860, 0
        %v867 = vsel %vm581, %v862, 0
        %869 = vmatpush.bf16.xpose.msra.mxu0 0
        %870 = vmatpush.bf16.xpose.msra.mxu0 0
        %871 = vmatpush.bf16.xpose.msra.mxu0 0
        %872 = vmatpush.bf16.xpose.msra.mxu0 0
        %873 = vmatpush.bf16.xpose.msra.mxu0 0
        %874 = vmatpush.bf16.xpose.msra.mxu0 0
        %875 = vmatpush.bf16.xpose.msra.mxu0 0
        %876 = vmatpush.bf16.xpose.msra.mxu0 %v867
        %877 = vmatmul.bf16.gmra.mxu0 %v864
        %v878 = vpop.f32.mrf.mxu0
        %v879 = vadd.f32 %v572, %v878
        %v880 = vpop.f32.mrf.mxu0
        %881 = vdwg.mxu0
        %882 = vrot.lane.b32.xlu0 %v603, 104
        %v883 = vpop.permute.xlu0 %882
        %884 = vrot.lane.b32.xlu0 %v603, 72
        %v885 = vpop.permute.xlu0 %884
        %v887 = vsel %vm581, %v883, 0
        %v890 = vsel %vm581, %v885, 0
        %892 = vmatpush.bf16.xpose.msra.mxu0 0
        %893 = vmatpush.bf16.xpose.msra.mxu0 0
        %894 = vmatpush.bf16.xpose.msra.mxu0 0
        %895 = vmatpush.bf16.xpose.msra.mxu0 0
        %896 = vmatpush.bf16.xpose.msra.mxu0 0
        %897 = vmatpush.bf16.xpose.msra.mxu0 0
        %898 = vmatpush.bf16.xpose.msra.mxu0 0
        %899 = vmatpush.bf16.xpose.msra.mxu0 %v890
        %900 = vmatmul.bf16.gmra.mxu0 %v887
        %v901 = vpop.f32.mrf.mxu0
        %v902 = vadd.f32 %v573, %v901
        %v903 = vpop.f32.mrf.mxu0
        %904 = vdwg.mxu0
        %v905 = vsel %vm581, %v833, -inf
        %906 = vmax.xlane.f32.xlu0 %v905
        %v907 = vpop.xlane.xlu0 %906
        %v908 = vsel %vm581, %v856, -inf
        %909 = vmax.xlane.f32.xlu0 %v908
        %v910 = vpop.xlane.xlu0 %909
        %v911 = vsub.f32 %v833, %v907
        %v912 = vsub.f32 %v856, %v910
        %v913 = vmul.f32 %v911, 1.442695
        %v914 = vpow.pop %v913
        %v915 = vmul.f32 %v912, 1.442695
        %v916 = vpow.pop %v915
        %v917 = vsel %vm581, %v914, 0.0
        %918 = vadd.xlane.f32.xlu0 %v917
        %v919 = vpop.xlane.xlu0 %918
        %v920 = vsel %vm581, %v916, 0.0
        %921 = vadd.xlane.f32.xlu0 %v920
        %v922 = vpop.xlane.xlu0 %921
        %v923 = vrcp.pop %v919
        %v924 = vrcp.pop %v922
        %v925 = vmul.f32 %v914, %v923
        %v926 = vmul.f32 %v916, %v924
        %v927 = vsel %vm581, %v879, -inf
        %928 = vmax.xlane.f32.xlu0 %v927
        %v929 = vpop.xlane.xlu0 %928
        %v930 = vsel %vm581, %v902, -inf
        %931 = vmax.xlane.f32.xlu0 %v930
        %v932 = vpop.xlane.xlu0 %931
        %v933 = vsub.f32 %v879, %v929
        %v934 = vsub.f32 %v902, %v932
        %v935 = vmul.f32 %v933, 1.442695
        %v936 = vpow.pop %v935
        %v937 = vmul.f32 %v934, 1.442695
        %v938 = vpow.pop %v937
        %v939 = vsel %vm581, %v936, 0.0
        %940 = vadd.xlane.f32.xlu0 %v939
        %v941 = vpop.xlane.xlu0 %940
        %v942 = vsel %vm581, %v938, 0.0
        %943 = vadd.xlane.f32.xlu0 %v942
        %v944 = vpop.xlane.xlu0 %943
        %v945 = vrcp.pop %v941
        %v946 = vrcp.pop %v944
        %v947 = vmul.f32 %v936, %v945
        %v948 = vmul.f32 %v938, %v946
        %v950 = vperm.slane %v569, 0
        %951 = vset.pattern.permute.xlu0 0
        %952 = vperm.xlu0 %951, %v950
        %v953 = vpop.permute.xlu0 %952
        %v955 = vmul.f32 %v953, %v947
        %v956 = vmul.f32 %v953, %v948
        %v957 = vsub.f32 %v925, %v955
        %v958 = vsub.f32 %v926, %v956
        %v959 = vpack.c.bf16 %v957, %v957
        %v960 = vpack.c.bf16 %v958, %v958
        %961 = vrot.lane.b32.xlu0 %v578, 56
        %v962 = vpop.permute.xlu0 %961
        %v964 = vsel %vm581, %v959, 0
        %v967 = vsel %vm732, %v962, 0
        %969 = vmatpush.bf16.msra.mxu0 0
        %970 = vmatpush.bf16.msra.mxu0 0
        %971 = vmatpush.bf16.msra.mxu0 0
        %972 = vmatpush.bf16.msra.mxu0 0
        %973 = vmatpush.bf16.msra.mxu0 0
        %974 = vmatpush.bf16.msra.mxu0 0
        %975 = vmatpush.bf16.msra.mxu0 0
        %976 = vmatpush.bf16.msra.mxu0 %v967
        %977 = vmatmul.bf16.gmra.mxu0 %v964
        %v978 = vpop.f32.mrf.mxu0
        %v979 = vadd.f32 0.0, %v978
        %v980 = vpop.f32.mrf.mxu0
        %981 = vdwg.mxu0
        %982 = vrot.lane.b32.xlu0 %v603, 56
        %v983 = vpop.permute.xlu0 %982
        %v985 = vsel %vm581, %v960, 0
        %v988 = vsel %vm732, %v983, 0
        %990 = vmatpush.bf16.msra.mxu0 0
        %991 = vmatpush.bf16.msra.mxu0 0
        %992 = vmatpush.bf16.msra.mxu0 0
        %993 = vmatpush.bf16.msra.mxu0 0
        %994 = vmatpush.bf16.msra.mxu0 0
        %995 = vmatpush.bf16.msra.mxu0 0
        %996 = vmatpush.bf16.msra.mxu0 0
        %997 = vmatpush.bf16.msra.mxu0 %v988
        %998 = vmatmul.bf16.gmra.mxu0 %v985
        %v999 = vpop.f32.mrf.mxu0
        %v1000 = vadd.f32 0.0, %v999
        %v1001 = vpop.f32.mrf.mxu0
        %1002 = vdwg.mxu0
        %v1003 = vmul.f32 %v979, %v979
        %v1004 = vmul.f32 %v1000, %v1000
        %v1005 = vsel %vm581, %v1003, 0.0
        %1006 = vadd.xlane.f32.xlu0 %v1005
        %v1007 = vpop.xlane.xlu0 %1006
        %v1008 = vsel %vm581, %v1004, 0.0
        %1009 = vadd.xlane.f32.xlu0 %v1008
        %v1010 = vpop.xlane.xlu0 %1009
        %v1011 = vmul.f32 %v1007, %v784
        %v1012 = vmul.f32 %v1010, %v784
        %v1013 = vadd.f32 %v1011, 1e-06
        %v1014 = vadd.f32 %v1012, 1e-06
        %v1015 = vrsqrt.pop %v1013
        %v1016 = vmul.f32 %v1015, %v1013
        %v1017 = vmul.f32 %v1016, %v1015
        %v1018 = vmul.f32 0.5, %v1017
        %v1019 = vsub.f32 1.5, %v1018
        %v1020 = vmul.f32 %v1015, %v1019
        %vm1021 = vweird.f32 %v1013
        %vm1022 = vweird.f32 %v1015
        %vm1023 = vmor %vm1021, %vm1022
        %v1024 = vsel %vm1023, %v1015, %v1020
        %v1025 = vrsqrt.pop %v1014
        %v1026 = vmul.f32 %v1025, %v1014
        %v1027 = vmul.f32 %v1026, %v1025
        %v1028 = vmul.f32 0.5, %v1027
        %v1029 = vsub.f32 1.5, %v1028
        %v1030 = vmul.f32 %v1025, %v1029
        %vm1031 = vweird.f32 %v1014
        %vm1032 = vweird.f32 %v1025
        %vm1033 = vmor %vm1031, %vm1032
        %v1034 = vsel %vm1033, %v1025, %v1030
        %v1035 = vmul.f32 %v979, %v1024
        %v1036 = vmul.f32 %v1000, %v1034
        %v1037 = vmul.f32 %v1035, 0.2
        %v1038 = vmul.f32 %v1036, 0.2
        %1041 = vrot.lane.b32.xlu0 %v1037, 8
        %v1042 = vpop.permute.xlu0 %1041
        %1043 = vrot.lane.b32.xlu0 %v1038, 8
        %v1044 = vpop.permute.xlu0 %1043
        %v1047 = vsel %vm581, %v811, %v1042
        %v1048 = vsel %vm581, %v812, %v1044
        %v1049 = vpack.c.bf16 %v1048, %v1047
        %v1050 = vld [vmem:[%s6] sm:$0xf]
        %v1051 = vld [vmem:[%s6 + $0x4] sm:$0xf]
        %v1054 = vunpack.c.l.b16 %v1050
        %v1055 = vunpack.c.l.b16 %v1051
        %v1056 = vpack.c.b16 %v1055, %v1054
        %vm1058 = vcmask 130048
        %v1060 = vsel %vm1058, %v1049, 0
        %1062 = vmatpush.bf16.msra.mxu0 0
        %1063 = vmatpush.bf16.msra.mxu0 0
        %1064 = vmatpush.bf16.msra.mxu0 0
        %1065 = vmatpush.bf16.msra.mxu0 0
        %1066 = vmatpush.bf16.msra.mxu0 0
        %1067 = vmatpush.bf16.msra.mxu0 0
        %1068 = vmatpush.bf16.msra.mxu0 0
        %1069 = vmatpush.bf16.msra.mxu0 %v1056
        %1070 = vmatmul.bf16.gmra.mxu0 %v1060
        %v1071 = vpop.f32.mrf.mxu0
        %v1072 = vadd.f32 %v530, %v1071
        %v1073 = vpop.f32.mrf.mxu0
        %v1074 = vadd.f32 %v531, %v1073
        %1075 = vdwg.mxu0
        %v1076 = vld [vmem:[#allocation8] sm:$0x1]
        %v1077 = vmul.f32 %v1072, %v1072
        %v1078 = vmul.f32 %v1074, %v1074
        %v1079 = vsel %vm487, %v1077, 0.0
        %1080 = vadd.xlane.f32.xlu0 %v1079
        %v1081 = vpop.xlane.xlu0 %1080
        %v1082 = vsel %vm487, %v1078, 0.0
        %1083 = vadd.xlane.f32.xlu0 %v1082
        %v1084 = vpop.xlane.xlu0 %1083
        %v1085 = vmul.f32 %v1081, %v500
        %v1086 = vmul.f32 %v1084, %v500
        %v1087 = vadd.f32 %v1085, 1e-06
        %v1088 = vadd.f32 %v1086, 1e-06
        %v1089 = vrsqrt.pop %v1087
        %v1090 = vmul.f32 %v1089, %v1087
        %v1091 = vmul.f32 %v1090, %v1089
        %v1092 = vmul.f32 0.5, %v1091
        %v1093 = vsub.f32 1.5, %v1092
        %v1094 = vmul.f32 %v1089, %v1093
        %vm1095 = vweird.f32 %v1087
        %vm1096 = vweird.f32 %v1089
        %vm1097 = vmor %vm1095, %vm1096
        %v1098 = vsel %vm1097, %v1089, %v1094
        %v1099 = vrsqrt.pop %v1088
        %v1100 = vmul.f32 %v1099, %v1088
        %v1101 = vmul.f32 %v1100, %v1099
        %v1102 = vmul.f32 0.5, %v1101
        %v1103 = vsub.f32 1.5, %v1102
        %v1104 = vmul.f32 %v1099, %v1103
        %vm1105 = vweird.f32 %v1088
        %vm1106 = vweird.f32 %v1099
        %vm1107 = vmor %vm1105, %vm1106
        %v1108 = vsel %vm1107, %v1099, %v1104
        %v1109 = vmul.f32 %v1072, %v1098
        %v1110 = vmul.f32 %v1074, %v1108
        %v1112 = vperm.slane %v1076, 0
        %v1114 = vmul.f32 %v1109, %v1112
        %v1115 = vmul.f32 %v1110, %v1112
        %v1116 = vpack.c.bf16 %v1115, %v1114
        %v1117 = vld [vmem:[#allocation11] sm:$0xf]
        %v1118 = vld [vmem:[#allocation11 + $0x4] sm:$0xf]
        %v1119 = vld [vmem:[#allocation11 + $0x8] sm:$0xf]
        %v1120 = vld [vmem:[#allocation11 + $0xc] sm:$0xf]
        %v1125 = vunpack.c.l.b16 %v1117
        %v1126 = vunpack.c.l.b16 %v1118
        %v1127 = vunpack.c.l.b16 %v1119
        %v1128 = vunpack.c.l.b16 %v1120
        %v1129 = vpack.c.b16 %v1126, %v1125
        %v1130 = vpack.c.b16 %v1128, %v1127
        %v1134 = vsel %vm487, %v1116, 0
        %1136 = vmatpush.bf16.msra.mxu0 0
        %1137 = vmatpush.bf16.msra.mxu0 0
        %1138 = vmatpush.bf16.msra.mxu0 0
        %1139 = vmatpush.bf16.msra.mxu0 0
        %1140 = vmatpush.bf16.msra.mxu0 0
        %1141 = vmatpush.bf16.msra.mxu0 0
        %1142 = vmatpush.bf16.msra.mxu0 %v1130
        %1143 = vmatpush.bf16.msra.mxu0 %v1129
        %1144 = vmatmul.bf16.gmra.mxu0 %v1134
        %v1145 = vpop.f32.mrf.mxu0
        %v1146 = vadd.f32 0.0, %v1145
        %v1147 = vpop.f32.mrf.mxu0
        %v1148 = vadd.f32 0.0, %v1147
        %1149 = vdwg.mxu0
        %v1150 = vxor.u32 %v1146, 2147483648
        %v1151 = vxor.u32 %v1148, 2147483648
        %v1152 = vmul.f32 %v1150, 1.442695
        %v1153 = vpow.pop %v1152
        %v1154 = vmul.f32 %v1151, 1.442695
        %v1155 = vpow.pop %v1154
        %v1156 = vadd.f32 %v1153, 1.0
        %v1157 = vadd.f32 %v1155, 1.0
        %v1158 = vrcp.pop %v1156
        %v1159 = vmul.f32 %v1156, %v1158
        %v1160 = vsub.f32 1.0, %v1159
        %v1161 = vmul.f32 %v1158, %v1160
        %v1162 = vadd.f32 %v1158, %v1161
        %vm1163 = vweird.f32 %v1156
        %vm1164 = vweird.f32 %v1158
        %vm1165 = vmor %vm1163, %vm1164
        %v1166 = vsel %vm1165, %v1158, %v1162
        %v1167 = vand.u32 2147483647, %v1156
        %vm1168 = vcmp.eq.f32.partialorder %v1167, 8.507059e+37
        %v1169 = vand.u32 %v1156, 2147483648
        %v1170 = vor.u32 1.1754944e-38, %v1169
        %v1171 = vsel %vm1168, %v1170, %v1166
        %v1172 = vmul.f32 1.0, %v1171
        %v1173 = vrcp.pop %v1157
        %v1174 = vmul.f32 %v1157, %v1173
        %v1175 = vsub.f32 1.0, %v1174
        %v1176 = vmul.f32 %v1173, %v1175
        %v1177 = vadd.f32 %v1173, %v1176
        %vm1178 = vweird.f32 %v1157
        %vm1179 = vweird.f32 %v1173
        %vm1180 = vmor %vm1178, %vm1179
        %v1181 = vsel %vm1180, %v1173, %v1177
        %v1182 = vand.u32 2147483647, %v1157
        %vm1183 = vcmp.eq.f32.partialorder %v1182, 8.507059e+37
        %v1184 = vand.u32 %v1157, 2147483648
        %v1185 = vor.u32 1.1754944e-38, %v1184
        %v1186 = vsel %vm1183, %v1185, %v1181
        %v1187 = vmul.f32 1.0, %v1186
        %v1188 = vmul.f32 %v1146, %v1172
        %v1189 = vmul.f32 %v1148, %v1187
        %1192 = vrot.lane.b32.xlu0 %v1146, 96
        %v1193 = vpop.permute.xlu0 %1192
        %1194 = vrot.lane.b32.xlu0 %v1148, 96
        %v1195 = vpop.permute.xlu0 %1194
        %v1198 = vmul.f32 %v1188, %v1193
        %v1199 = vmul.f32 %v1189, %v1195
        %v1200 = vpack.c.bf16 %v1199, %v1198
        %v1201 = vld [vmem:[#allocation13] sm:$0xf]
        %v1202 = vld [vmem:[#allocation13 + $0x4] sm:$0xf]
        %v1203 = vld [vmem:[#allocation13 + $0x8] sm:$0xf]
        %v1204 = vld [vmem:[#allocation13 + $0xc] sm:$0xf]
        %v1209 = vunpack.c.l.b16 %v1201
        %v1210 = vunpack.c.l.b16 %v1202
        %v1211 = vunpack.c.l.b16 %v1203
        %v1212 = vunpack.c.l.b16 %v1204
        %v1213 = vpack.c.b16 %v1210, %v1209
        %v1214 = vpack.c.b16 %v1212, %v1211
        %v1218 = vsel %vm487, %v1200, 0
        %1220 = vmatpush.bf16.msra.mxu0 0
        %1221 = vmatpush.bf16.msra.mxu0 0
        %1222 = vmatpush.bf16.msra.mxu0 0
        %1223 = vmatpush.bf16.msra.mxu0 0
        %1224 = vmatpush.bf16.msra.mxu0 0
        %1225 = vmatpush.bf16.msra.mxu0 0
        %1226 = vmatpush.bf16.msra.mxu0 %v1214
        %1227 = vmatpush.bf16.msra.mxu0 %v1213
        %1228 = vmatmul.bf16.gmra.mxu0 %v1218
        %v1229 = vpop.f32.mrf.mxu0
        %v1230 = vadd.f32 %v1072, %v1229
        %v1231 = vpop.f32.mrf.mxu0
        %v1232 = vadd.f32 %v1074, %v1231
        %1233 = vdwg.mxu0
        %1234 = vst.msk [vmem:[%s471] sm:$0xff] %vm487, %v1230
        %1235 = vst.msk [vmem:[%s471 + $0x8] sm:$0xff] %vm487, %v1232
        %s1236 = sand.u32 %s238, 1
        %s1237 = scalar_lea.sflag [#allocation4], %s1236
        %s1238 = sand.u32 %s238, 1
        %s1239 = smul.addr %s1238, 16
        %s1240 = scalar_lea.vmem [#allocation14], %s1239
        // Predicated region
        $region85: #{tpu_custom_call.1} parent=55 // pred_check
          %p1241 = pneg %p248
        $region86: #{tpu_custom_call.1} parent=55 // pred_check_branch
          %1243 = sbr.rel (%p1241) target = $region88
        $region87: #{tpu_custom_call.1} parent=55 // pred_region
          %s1244 = smul.u32 2, %s31
          %1246 = vsyncadd %s1237, 0
          %s1247 = smul.addr %s1244, 8
          %s1248 = scalar_lea.hbm %s9, %s1247
          %s1249 = sshll.u32 %s1240, 4
          %s1250 = int_to_ptr.vmem [resolvable:$true] %s1249
          %s1251 = sshll.u32 %s1248, 4
          %s1252 = int_to_ptr.hbm [resolvable:$true] %s1251
          %1257 = dma.vmem_to_hbm [thread:$0]  %s1250, 256, %s1252, %s1237, 128, 128, 8
        $region88: #{tpu_custom_call.1} parent=55 // pred_fallthru
          _
      $region56: #{tpu_custom_call.1} parent=5 // pred_fallthru
        _
      %p1258 = scmp.le.s32.totalorder 2, %s26
      // Predicated region
      $region89: #{tpu_custom_call.1} parent=5 // pred_check
        %p1259 = pneg %p1258
      $region90: #{tpu_custom_call.1} parent=5 // pred_check_branch
        %1261 = sbr.rel (%p1259) target = $region92
      $region91: #{tpu_custom_call.1} parent=5 // pred_region
        %s1262 = ssub.s32 %s26, 2
        // Predicated region
        $region93: #{tpu_custom_call.1} parent=91 // pred_check
          %p1263 = pneg %p254
        $region94: #{tpu_custom_call.1} parent=91 // pred_check_branch
          %1265 = sbr.rel (%p1263) target = $region96
        $region95: #{tpu_custom_call.1} parent=91 // pred_region
          %s1266 = sand.u32 %s239, 1
          %s1267 = scalar_lea.sflag [#allocation4], %s1266
          %s1268 = sand.u32 %s239, 1
          %s1269 = smul.addr %s1268, 16
          %s1270 = scalar_lea.vmem [#allocation14], %s1269
          %1272 = dma.done %s1267, 256
        $region96: #{tpu_custom_call.1} parent=91 // pred_fallthru
          _
      $region92: #{tpu_custom_call.1} parent=5 // pred_fallthru
        _
    $region6: #{tpu_custom_call.1} parent=1 // loop_footer
      %s30 = sadd.s32 1, %s26
    $region7: #{tpu_custom_call.1} parent=1 // loop_footer_branch
      %25 = sbr.rel target = $region3
    $region8: #{tpu_custom_call.1} parent=1 // loop_exit
      _
    %1273 = vsyncpa [#allocation3], 1
    %s1274 = scalar_lea.sflag [#allocation3], 1
    %1275 = vsyncpa %s1274, 1
    %1276 = vsyncpa [#allocation6], 1
    %s1277 = scalar_lea.sflag [#allocation6], 1
    %1278 = vsyncpa %s1277, 1
    %1279 = vsyncpa [#allocation9], 1
    %1280 = vsyncpa [#allocation12], 1
    %1281 = vsyncpa [#allocation4], 1
    %s1282 = scalar_lea.sflag [#allocation4], 1
    %1283 = vsyncpa %s1282, 1

</llo_original>
